<compile_context>
chip_gen: v5e
topology: v5e:2x2
jax: 0.10.0
libtpu: 0.0.40
codegen_flags: <defaults>
</compile_context>

<pallas_src>
import functools

import jax
import jax.numpy as jnp
import numpy as np
from jax.experimental import pallas as pl
from jax.experimental.pallas import tpu as pltpu

_BN_EPS = 1e-5
_VMEM_LIMIT = 32 * 1024 * 1024


def _round_up(x, m):
    return ((x + m - 1) // m) * m


# ---------------------------------------------------------------------------
# Fused kernel: whole GELayerS2 for one image per grid step.
# ---------------------------------------------------------------------------
def _gelayer_s2_kernel(
    xin_ref,    # (1, 2*halo + r1, cin)  padded flat input (stage-1 layout)
    w1_ref,     # (9, cin, mid)          conv1 weights, BN scale folded in
    b1_ref,     # (1, mid)               conv1 folded BN bias
    wd1_ref,    # (9, 1, mid)            dwconv1 (s2) weights, scale folded
    bd1_ref,    # (1, mid)
    wd2_ref,    # (9, 1, mid)            dwconv2 (s1) weights, scale folded
    bd2_ref,    # (1, mid)
    wsd_ref,    # (9, 1, cin)            shortcut depthwise weights, scale folded
    bsd_ref,    # (1, cin)
    g_ref,      # (r2, r1)               0/1 stride-2 gather matrix
    m1_ref,     # (r1, 1)                stage-1 valid-column mask
    m2_ref,     # (r2, 1)                stage-2 valid-column mask
    wcat_ref,   # (kcat, cout)           [conv2 w ; 0 ; shortcut-pw w ; 0], scale folded
    bcat_ref,   # (1, cout)              conv2 bias + shortcut-pw bias
    out_ref,    # (1, r2, cout)
    y1_ref,     # scratch (2*halo + r1, mid)   conv1 output (padded flat layout)
    y2_ref,     # scratch (2*halo + r2, mid)   dwconv1 output (padded flat layout)
    cat_ref,    # scratch (r2, kcat)           lane-packed [x1 | x2] for the fused 1x1
    *, halo, wpad1, wpad2, r1, r2, cin, mid, khalf):
    f32 = jnp.float32

    def taps(wpad):
        # tap index t = kh*3 + kw ; flat row shift s = (kh-1)*wpad + (kw-1)
        for kh in range(3):
            for kw in range(3):
                yield kh * 3 + kw, (kh - 1) * wpad + (kw - 1)

    # ---- conv1: dense 3x3 s1 (cin->mid) + BN + ReLU  (9 shifted MXU matmuls) ----
    acc = jnp.zeros((r1, mid), f32)
    for t, s in taps(wpad1):
        xw = xin_ref[0, halo + s: halo + s + r1, :]            # (r1, cin)
        acc = acc + jnp.dot(xw, w1_ref[t], preferred_element_type=f32)
    y1 = jnp.maximum(acc + b1_ref[...], 0.0) * m1_ref[...]     # (r1, mid)

    # Materialise with zero halo rows so dwconv1 taps are plain contiguous reads.
    y1_ref[0:halo, :] = jnp.zeros((halo, mid), f32)
    y1_ref[halo + r1: 2 * halo + r1, :] = jnp.zeros((halo, mid), f32)
    y1_ref[halo: halo + r1, :] = y1

    # ---- dwconv1: depthwise 3x3 stride-2 (mid) + BN -----------------------------
    f1 = jnp.zeros((r1, mid), f32)
    for t, s in taps(wpad1):
        f1 = f1 + y1_ref[halo + s: halo + s + r1, :] * wd1_ref[t]
    # Stride-2 spatial subsample as one gather-matmul; G also zeroes invalid rows.
    y2 = (jnp.dot(g_ref[...], f1, preferred_element_type=f32) + bd1_ref[...]) * m2_ref[...]

    y2_ref[0:halo, :] = jnp.zeros((halo, mid), f32)
    y2_ref[halo + r2: 2 * halo + r2, :] = jnp.zeros((halo, mid), f32)
    y2_ref[halo: halo + r2, :] = y2

    # ---- dwconv2: depthwise 3x3 stride-1 (mid) + BN + ReLU ----------------------
    f2 = jnp.zeros((r2, mid), f32)
    for t, s in taps(wpad2):
        f2 = f2 + y2_ref[halo + s: halo + s + r2, :] * wd2_ref[t]
    y3 = jnp.maximum(f2 + bd2_ref[...], 0.0) * m2_ref[...]     # (r2, mid)

    # ---- shortcut branch: depthwise 3x3 stride-2 (cin) + BN ---------------------
    fs = jnp.zeros((r1, cin), f32)
    for t, s in taps(wpad1):
        fs = fs + xin_ref[0, halo + s: halo + s + r1, :] * wsd_ref[t]
    x2 = (jnp.dot(g_ref[...], fs, preferred_element_type=f32) + bsd_ref[...]) * m2_ref[...]

    # ---- conv2 (1x1+BN) + shortcut 1x1 (+BN) + add + final ReLU -----------------
    # Pack [y3 | x2] at 128-aligned lane offsets and do ONE MXU dot against the
    # row-stacked (zero padded) weight matrix; add the combined bias once.
    cat_ref[...] = jnp.zeros(cat_ref.shape, f32)
    cat_ref[:, 0:mid] = y3
    cat_ref[:, khalf:khalf + cin] = x2
    out = jnp.dot(cat_ref[...], wcat_ref[...], preferred_element_type=f32) + bcat_ref[...]
    out_ref[0] = jnp.maximum(out, 0.0).astype(out_ref.dtype)


# ---------------------------------------------------------------------------
# Wrapper-side parameter preparation (cheap, constant-sized glue; no 9x inflation)
# ---------------------------------------------------------------------------
def _fold_bn(p):
    inv = 1.0 / jnp.sqrt(p["var"].astype(jnp.float32) + _BN_EPS)
    scale = p["gamma"].astype(jnp.float32) * inv
    bias = p["beta"].astype(jnp.float32) - p["mean"].astype(jnp.float32) * scale
    return scale, bias


def _prep_dw(w, scale):
    # PyTorch depthwise weight (C, 1, 3, 3) -> (9, 1, C), tap order t = kh*3 + kw,
    # with the BN scale folded in.
    c = w.shape[0]
    wt = jnp.transpose(w.reshape(c, 9), (1, 0)) * scale.reshape(1, c)
    return wt.reshape(9, 1, c)


# ---------------------------------------------------------------------------
# GELayerS2 forward (public wrapper, NCHW in / NCHW out, matching PyTorch)
# ---------------------------------------------------------------------------
@jax.jit
def gelayer_s2_forward(x_nchw, params):
    x = jnp.transpose(x_nchw, (0, 2, 3, 1)).astype(jnp.float32)     # NHWC
    n, h, w, cin = x.shape
    mid = params["conv1"]["w"].shape[0]
    cout = params["conv2"]["w"].shape[0]
    ho = (h - 1) // 2 + 1
    wo = (w - 1) // 2 + 1

    wpad1 = _round_up(w + 2, 8)        # stage-1 flat row width (multiple of 8)
    wpad2 = _round_up(wo + 2, 8)       # stage-2 flat row width
    r1 = h * wpad1                     # stage-1 rows
    r2 = ho * wpad2                    # stage-2 rows
    halo = _round_up(wpad1 + 1, 8)     # physical zero rows above/below each buffer
    khalf = _round_up(mid, 128)        # lane-aligned offset of the shortcut block
    kcat = khalf + _round_up(cin, 128)

    # Stage-1 flat input: zero columns [w, wpad1) + `halo` zero rows above/below.
    xin = jnp.pad(x, ((0, 0), (0, 0), (0, wpad1 - w), (0, 0)))
    xin = xin.reshape(n, r1, cin)
    xin = jnp.pad(xin, ((0, 0), (halo, halo), (0, 0)))

    # Fold BN into the conv weights (scale) and a single bias per stage.
    s1, b1 = _fold_bn(params["conv1"])
    sd1, bd1 = _fold_bn(params["dwconv1"])
    sd2, bd2 = _fold_bn(params["dwconv2"])
    s2, b2 = _fold_bn(params["conv2"])
    ssd, bsd = _fold_bn(params["short_dw"])
    ssp, bsp = _fold_bn(params["short_pw"])

    w1 = (jnp.transpose(params["conv1"]["w"], (2, 3, 1, 0)).reshape(9, cin, mid)
          * s1.reshape(1, 1, mid))
    wd1 = _prep_dw(params["dwconv1"]["w"], sd1)
    wd2 = _prep_dw(params["dwconv2"]["w"], sd2)
    wsd = _prep_dw(params["short_dw"]["w"], ssd)

    w2p = jnp.transpose(params["conv2"]["w"].reshape(cout, mid), (1, 0)) * s2.reshape(1, cout)
    wsp = jnp.transpose(params["short_pw"]["w"].reshape(cout, cin), (1, 0)) * ssp.reshape(1, cout)
    wcat = jnp.zeros((kcat, cout), jnp.float32)
    wcat = wcat.at[0:mid, :].set(w2p).at[khalf:khalf + cin, :].set(wsp)
    bcat = (b2 + bsp).reshape(1, cout)

    # Valid-column masks and the constant stride-2 gather matrix.
    m1 = ((jnp.arange(r1) % wpad1) < w).astype(jnp.float32).reshape(r1, 1)
    m2 = ((jnp.arange(r2) % wpad2) < wo).astype(jnp.float32).reshape(r2, 1)
    rows = jnp.arange(r2)
    src = 2 * (rows // wpad2) * wpad1 + 2 * (rows % wpad2)
    gvalid = ((rows % wpad2) < wo).astype(jnp.float32)
    g = jax.nn.one_hot(src, r1, dtype=jnp.float32) * gvalid[:, None]

    kern = functools.partial(
        _gelayer_s2_kernel,
        halo=halo, wpad1=wpad1, wpad2=wpad2, r1=r1, r2=r2,
        cin=cin, mid=mid, khalf=khalf)

    rep2 = lambda i: (0, 0)
    rep3 = lambda i: (0, 0, 0)
    out = pl.pallas_call(
        kern,
        out_shape=jax.ShapeDtypeStruct((n, r2, cout), jnp.float32),
        grid=(n,),
        in_specs=[
            pl.BlockSpec((1, 2 * halo + r1, cin), lambda i: (i, 0, 0)),
            pl.BlockSpec((9, cin, mid), rep3),
            pl.BlockSpec((1, mid), rep2),
            pl.BlockSpec((9, 1, mid), rep3),
            pl.BlockSpec((1, mid), rep2),
            pl.BlockSpec((9, 1, mid), rep3),
            pl.BlockSpec((1, mid), rep2),
            pl.BlockSpec((9, 1, cin), rep3),
            pl.BlockSpec((1, cin), rep2),
            pl.BlockSpec((r2, r1), rep2),
            pl.BlockSpec((r1, 1), rep2),
            pl.BlockSpec((r2, 1), rep2),
            pl.BlockSpec((kcat, cout), rep2),
            pl.BlockSpec((1, cout), rep2),
        ],
        out_specs=pl.BlockSpec((1, r2, cout), lambda i: (i, 0, 0)),
        scratch_shapes=[
            pltpu.VMEM((2 * halo + r1, mid), jnp.float32),
            pltpu.VMEM((2 * halo + r2, mid), jnp.float32),
            pltpu.VMEM((r2, kcat), jnp.float32),
        ],
        compiler_params=pltpu.CompilerParams(
            dimension_semantics=("parallel",),
            vmem_limit_bytes=_VMEM_LIMIT),
    )(xin, w1, b1.reshape(1, mid), wd1, bd1.reshape(1, mid), wd2,
      bd2.reshape(1, mid), wsd, bsd.reshape(1, cin), g, m1, m2, wcat, bcat)

    # flat stage-2 layout -> NHWC -> NCHW
    y = out.reshape(n, ho, wpad2, cout)[:, :, :wo, :]
    return jnp.transpose(y, (0, 3, 1, 2))


# ---------------------------------------------------------------------------
# Plain-JAX reference (inference-mode BN), used as a numerical self-check.
# ---------------------------------------------------------------------------
def _ref_forward(x, params):
    def conv(inp, w, stride, pad, groups=1):
        return jax.lax.conv_general_dilated(
            inp, w, (stride, stride), pad,
            dimension_numbers=("NCHW", "OIHW", "NCHW"),
            feature_group_count=groups)

    def bn(inp, p):
        s, b = _fold_bn(p)
        return inp * s.reshape(1, -1, 1, 1) + b.reshape(1, -1, 1, 1)

    p = params
    same = ((1, 1), (1, 1))
    none = ((0, 0), (0, 0))
    x1 = jax.nn.relu(bn(conv(x, p["conv1"]["w"], 1, same), p["conv1"]))
    x1 = bn(conv(x1, p["dwconv1"]["w"], 2, same, groups=x1.shape[1]), p["dwconv1"])
    x1 = jax.nn.relu(bn(conv(x1, p["dwconv2"]["w"], 1, same, groups=x1.shape[1]), p["dwconv2"]))
    x1 = bn(conv(x1, p["conv2"]["w"], 1, none), p["conv2"])
    x2 = bn(conv(x, p["short_dw"]["w"], 2, same, groups=x.shape[1]), p["short_dw"])
    x2 = bn(conv(x2, p["short_pw"]["w"], 1, none), p["short_pw"])
    return jax.nn.relu(x1 + x2)


# ---------------------------------------------------------------------------
# Deterministic parameter initialization (inference-mode BN stats)
# ---------------------------------------------------------------------------
def _init_conv_bn(key, cout, cin_per_group, ks):
    k1, k2, k3, k4, k5 = jax.random.split(key, 5)
    return {
        "w": 0.1 * jax.random.normal(k1, (cout, cin_per_group, ks, ks), jnp.float32),
        "gamma": 1.0 + 0.1 * jax.random.normal(k2, (cout,), jnp.float32),
        "beta": 0.1 * jax.random.normal(k3, (cout,), jnp.float32),
        "mean": 0.1 * jax.random.normal(k4, (cout,), jnp.float32),
        "var": 1.0 + 0.1 * jnp.abs(jax.random.normal(k5, (cout,), jnp.float32)),
    }


def init_gelayer_s2_params(key, in_chan, out_chan, exp_ratio=6):
    mid = in_chan * exp_ratio
    ks = jax.random.split(key, 6)
    return {
        "conv1":    _init_conv_bn(ks[0], mid, in_chan, 3),       # ConvBNLU(in, mid, 3, s=1)
        "dwconv1":  _init_conv_bn(ks[1], mid, 1, 3),             # dw 3x3 s=2 + BN
        "dwconv2":  _init_conv_bn(ks[2], mid, 1, 3),             # dw 3x3 s=1 + BN + ReLU
        "conv2":    _init_conv_bn(ks[3], out_chan, mid, 1),      # 1x1 + BN
        "short_dw": _init_conv_bn(ks[4], in_chan, 1, 3),         # dw 3x3 s=2 + BN
        "short_pw": _init_conv_bn(ks[5], out_chan, in_chan, 1),  # 1x1 + BN
    }


if __name__ == "__main__":
    key = jax.random.PRNGKey(0)
    k_x, k_p = jax.random.split(key)

    N, IN_CHAN, OUT_CHAN, H, W = 2, 16, 32, 16, 16
    x = jax.random.normal(k_x, (N, IN_CHAN, H, W), jnp.float32)   # NCHW, like PyTorch
    params = init_gelayer_s2_params(k_p, IN_CHAN, OUT_CHAN)

    out = jax.block_until_ready(gelayer_s2_forward(x, params))

    assert out.shape == (N, OUT_CHAN, H // 2, W // 2), out.shape
    assert bool(jnp.all(jnp.isfinite(out)))
    assert bool(jnp.all(out >= 0.0))   # final ReLU

    ref = jax.block_until_ready(_ref_forward(x, params))
    np.testing.assert_allclose(np.asarray(out), np.asarray(ref), rtol=2e-2, atol=2e-2)

    print("KERNEL_OK")
</pallas_src>

<mosaic_0001>
module attributes {stable_mosaic.version = 11 : i64} {
  func.func @_gelayer_s2_kernel(%arg0: i32, %arg1: memref<1x448x16xf32, #tpu.memory_space<vmem>>, %arg2: memref<9x16x96xf32, #tpu.memory_space<vmem>>, %arg3: memref<1x96xf32, #tpu.memory_space<vmem>>, %arg4: memref<9x1x96xf32, #tpu.memory_space<vmem>>, %arg5: memref<1x96xf32, #tpu.memory_space<vmem>>, %arg6: memref<9x1x96xf32, #tpu.memory_space<vmem>>, %arg7: memref<1x96xf32, #tpu.memory_space<vmem>>, %arg8: memref<9x1x16xf32, #tpu.memory_space<vmem>>, %arg9: memref<1x16xf32, #tpu.memory_space<vmem>>, %arg10: memref<128x384xf32, #tpu.memory_space<vmem>>, %arg11: memref<384x1xf32, #tpu.memory_space<vmem>>, %arg12: memref<128x1xf32, #tpu.memory_space<vmem>>, %arg13: memref<256x32xf32, #tpu.memory_space<vmem>>, %arg14: memref<1x32xf32, #tpu.memory_space<vmem>>, %arg15: memref<1x128x32xf32, #tpu.memory_space<vmem>>, %arg16: memref<448x96xf32, #tpu.memory_space<vmem>>, %arg17: memref<192x96xf32, #tpu.memory_space<vmem>>, %arg18: memref<128x256xf32, #tpu.memory_space<vmem>>) attributes {dimension_semantics = [#tpu.dimension_semantics<parallel>], iteration_bounds = array<i64: 2>, scalar_prefetch = 0 : i64, scratch_operands = 3 : i64, tpu.core_type = #tpu.core_type<tc>, window_params = [{transform_indices = @transform_0, window_bounds = array<i64: 1, 448, 16>}, {pipeline_mode = #tpu.pipeline_mode<synchronous>, transform_indices = @transform_1, window_bounds = array<i64: 9, 16, 96>}, {pipeline_mode = #tpu.pipeline_mode<synchronous>, transform_indices = @transform_2, window_bounds = array<i64: 1, 96>}, {pipeline_mode = #tpu.pipeline_mode<synchronous>, transform_indices = @transform_3, window_bounds = array<i64: 9, 1, 96>}, {pipeline_mode = #tpu.pipeline_mode<synchronous>, transform_indices = @transform_4, window_bounds = array<i64: 1, 96>}, {pipeline_mode = #tpu.pipeline_mode<synchronous>, transform_indices = @transform_5, window_bounds = array<i64: 9, 1, 96>}, {pipeline_mode = #tpu.pipeline_mode<synchronous>, transform_indices = @transform_6, window_bounds = array<i64: 1, 96>}, {pipeline_mode = #tpu.pipeline_mode<synchronous>, transform_indices = @transform_7, window_bounds = array<i64: 9, 1, 16>}, {pipeline_mode = #tpu.pipeline_mode<synchronous>, transform_indices = @transform_8, window_bounds = array<i64: 1, 16>}, {pipeline_mode = #tpu.pipeline_mode<synchronous>, transform_indices = @transform_9, window_bounds = array<i64: 128, 384>}, {pipeline_mode = #tpu.pipeline_mode<synchronous>, transform_indices = @transform_10, window_bounds = array<i64: 384, 1>}, {pipeline_mode = #tpu.pipeline_mode<synchronous>, transform_indices = @transform_11, window_bounds = array<i64: 128, 1>}, {pipeline_mode = #tpu.pipeline_mode<synchronous>, transform_indices = @transform_12, window_bounds = array<i64: 256, 32>}, {pipeline_mode = #tpu.pipeline_mode<synchronous>, transform_indices = @transform_13, window_bounds = array<i64: 1, 32>}, {transform_indices = @transform_14, window_bounds = array<i64: 1, 128, 32>}]} {
    %cst = arith.constant 0.000000e+00 : f32
    %0 = vector.broadcast %cst : f32 to vector<384x96xf32>
    %c0 = arith.constant 0 : index
    %c7 = arith.constant 7 : index
    %c0_0 = arith.constant 0 : index
    %1 = vector.load %arg1[%c0, %c7, %c0_0] : memref<1x448x16xf32, #tpu.memory_space<vmem>>, vector<1x384x16xf32>
    %2 = vector.shape_cast %1 : vector<1x384x16xf32> to vector<384x16xf32>
    %c0_1 = arith.constant 0 : index
    %c0_2 = arith.constant 0 : index
    %c0_3 = arith.constant 0 : index
    %3 = vector.load %arg2[%c0_1, %c0_2, %c0_3] : memref<9x16x96xf32, #tpu.memory_space<vmem>>, vector<1x16x96xf32>
    %4 = vector.shape_cast %3 : vector<1x16x96xf32> to vector<16x96xf32>
    %cst_4 = arith.constant dense<0.000000e+00> : vector<384x96xf32>
    %5 = tpu.matmul %2, %4, %cst_4 {dimension_numbers = #tpu.dot_dimension_numbers<[1], [0], [0], [1], [0, 0, 1, 1], [], []>} : vector<384x16xf32>, vector<16x96xf32>, vector<384x96xf32> -> vector<384x96xf32>
    %6 = arith.addf %0, %5 : vector<384x96xf32>
    %c0_5 = arith.constant 0 : index
    %c8 = arith.constant 8 : index
    %c0_6 = arith.constant 0 : index
    %7 = vector.load %arg1[%c0_5, %c8, %c0_6] : memref<1x448x16xf32, #tpu.memory_space<vmem>>, vector<1x384x16xf32>
    %8 = vector.shape_cast %7 : vector<1x384x16xf32> to vector<384x16xf32>
    %c1 = arith.constant 1 : index
    %c0_7 = arith.constant 0 : index
    %c0_8 = arith.constant 0 : index
    %9 = vector.load %arg2[%c1, %c0_7, %c0_8] : memref<9x16x96xf32, #tpu.memory_space<vmem>>, vector<1x16x96xf32>
    %10 = vector.shape_cast %9 : vector<1x16x96xf32> to vector<16x96xf32>
    %cst_9 = arith.constant dense<0.000000e+00> : vector<384x96xf32>
    %11 = tpu.matmul %8, %10, %cst_9 {dimension_numbers = #tpu.dot_dimension_numbers<[1], [0], [0], [1], [0, 0, 1, 1], [], []>} : vector<384x16xf32>, vector<16x96xf32>, vector<384x96xf32> -> vector<384x96xf32>
    %12 = arith.addf %6, %11 : vector<384x96xf32>
    %c0_10 = arith.constant 0 : index
    %c9 = arith.constant 9 : index
    %c0_11 = arith.constant 0 : index
    %13 = vector.load %arg1[%c0_10, %c9, %c0_11] : memref<1x448x16xf32, #tpu.memory_space<vmem>>, vector<1x384x16xf32>
    %14 = vector.shape_cast %13 : vector<1x384x16xf32> to vector<384x16xf32>
    %c2 = arith.constant 2 : index
    %c0_12 = arith.constant 0 : index
    %c0_13 = arith.constant 0 : index
    %15 = vector.load %arg2[%c2, %c0_12, %c0_13] : memref<9x16x96xf32, #tpu.memory_space<vmem>>, vector<1x16x96xf32>
    %16 = vector.shape_cast %15 : vector<1x16x96xf32> to vector<16x96xf32>
    %cst_14 = arith.constant dense<0.000000e+00> : vector<384x96xf32>
    %17 = tpu.matmul %14, %16, %cst_14 {dimension_numbers = #tpu.dot_dimension_numbers<[1], [0], [0], [1], [0, 0, 1, 1], [], []>} : vector<384x16xf32>, vector<16x96xf32>, vector<384x96xf32> -> vector<384x96xf32>
    %18 = arith.addf %12, %17 : vector<384x96xf32>
    %c0_15 = arith.constant 0 : index
    %c31 = arith.constant 31 : index
    %c0_16 = arith.constant 0 : index
    %19 = vector.load %arg1[%c0_15, %c31, %c0_16] : memref<1x448x16xf32, #tpu.memory_space<vmem>>, vector<1x384x16xf32>
    %20 = vector.shape_cast %19 : vector<1x384x16xf32> to vector<384x16xf32>
    %c3 = arith.constant 3 : index
    %c0_17 = arith.constant 0 : index
    %c0_18 = arith.constant 0 : index
    %21 = vector.load %arg2[%c3, %c0_17, %c0_18] : memref<9x16x96xf32, #tpu.memory_space<vmem>>, vector<1x16x96xf32>
    %22 = vector.shape_cast %21 : vector<1x16x96xf32> to vector<16x96xf32>
    %cst_19 = arith.constant dense<0.000000e+00> : vector<384x96xf32>
    %23 = tpu.matmul %20, %22, %cst_19 {dimension_numbers = #tpu.dot_dimension_numbers<[1], [0], [0], [1], [0, 0, 1, 1], [], []>} : vector<384x16xf32>, vector<16x96xf32>, vector<384x96xf32> -> vector<384x96xf32>
    %24 = arith.addf %18, %23 : vector<384x96xf32>
    %c0_20 = arith.constant 0 : index
    %c32 = arith.constant 32 : index
    %c0_21 = arith.constant 0 : index
    %25 = vector.load %arg1[%c0_20, %c32, %c0_21] : memref<1x448x16xf32, #tpu.memory_space<vmem>>, vector<1x384x16xf32>
    %26 = vector.shape_cast %25 : vector<1x384x16xf32> to vector<384x16xf32>
    %c4 = arith.constant 4 : index
    %c0_22 = arith.constant 0 : index
    %c0_23 = arith.constant 0 : index
    %27 = vector.load %arg2[%c4, %c0_22, %c0_23] : memref<9x16x96xf32, #tpu.memory_space<vmem>>, vector<1x16x96xf32>
    %28 = vector.shape_cast %27 : vector<1x16x96xf32> to vector<16x96xf32>
    %cst_24 = arith.constant dense<0.000000e+00> : vector<384x96xf32>
    %29 = tpu.matmul %26, %28, %cst_24 {dimension_numbers = #tpu.dot_dimension_numbers<[1], [0], [0], [1], [0, 0, 1, 1], [], []>} : vector<384x16xf32>, vector<16x96xf32>, vector<384x96xf32> -> vector<384x96xf32>
    %30 = arith.addf %24, %29 : vector<384x96xf32>
    %c0_25 = arith.constant 0 : index
    %c33 = arith.constant 33 : index
    %c0_26 = arith.constant 0 : index
    %31 = vector.load %arg1[%c0_25, %c33, %c0_26] : memref<1x448x16xf32, #tpu.memory_space<vmem>>, vector<1x384x16xf32>
    %32 = vector.shape_cast %31 : vector<1x384x16xf32> to vector<384x16xf32>
    %c5 = arith.constant 5 : index
    %c0_27 = arith.constant 0 : index
    %c0_28 = arith.constant 0 : index
    %33 = vector.load %arg2[%c5, %c0_27, %c0_28] : memref<9x16x96xf32, #tpu.memory_space<vmem>>, vector<1x16x96xf32>
    %34 = vector.shape_cast %33 : vector<1x16x96xf32> to vector<16x96xf32>
    %cst_29 = arith.constant dense<0.000000e+00> : vector<384x96xf32>
    %35 = tpu.matmul %32, %34, %cst_29 {dimension_numbers = #tpu.dot_dimension_numbers<[1], [0], [0], [1], [0, 0, 1, 1], [], []>} : vector<384x16xf32>, vector<16x96xf32>, vector<384x96xf32> -> vector<384x96xf32>
    %36 = arith.addf %30, %35 : vector<384x96xf32>
    %c0_30 = arith.constant 0 : index
    %c55 = arith.constant 55 : index
    %c0_31 = arith.constant 0 : index
    %37 = vector.load %arg1[%c0_30, %c55, %c0_31] : memref<1x448x16xf32, #tpu.memory_space<vmem>>, vector<1x384x16xf32>
    %38 = vector.shape_cast %37 : vector<1x384x16xf32> to vector<384x16xf32>
    %c6 = arith.constant 6 : index
    %c0_32 = arith.constant 0 : index
    %c0_33 = arith.constant 0 : index
    %39 = vector.load %arg2[%c6, %c0_32, %c0_33] : memref<9x16x96xf32, #tpu.memory_space<vmem>>, vector<1x16x96xf32>
    %40 = vector.shape_cast %39 : vector<1x16x96xf32> to vector<16x96xf32>
    %cst_34 = arith.constant dense<0.000000e+00> : vector<384x96xf32>
    %41 = tpu.matmul %38, %40, %cst_34 {dimension_numbers = #tpu.dot_dimension_numbers<[1], [0], [0], [1], [0, 0, 1, 1], [], []>} : vector<384x16xf32>, vector<16x96xf32>, vector<384x96xf32> -> vector<384x96xf32>
    %42 = arith.addf %36, %41 : vector<384x96xf32>
    %c0_35 = arith.constant 0 : index
    %c56 = arith.constant 56 : index
    %c0_36 = arith.constant 0 : index
    %43 = vector.load %arg1[%c0_35, %c56, %c0_36] : memref<1x448x16xf32, #tpu.memory_space<vmem>>, vector<1x384x16xf32>
    %44 = vector.shape_cast %43 : vector<1x384x16xf32> to vector<384x16xf32>
    %c7_37 = arith.constant 7 : index
    %c0_38 = arith.constant 0 : index
    %c0_39 = arith.constant 0 : index
    %45 = vector.load %arg2[%c7_37, %c0_38, %c0_39] : memref<9x16x96xf32, #tpu.memory_space<vmem>>, vector<1x16x96xf32>
    %46 = vector.shape_cast %45 : vector<1x16x96xf32> to vector<16x96xf32>
    %cst_40 = arith.constant dense<0.000000e+00> : vector<384x96xf32>
    %47 = tpu.matmul %44, %46, %cst_40 {dimension_numbers = #tpu.dot_dimension_numbers<[1], [0], [0], [1], [0, 0, 1, 1], [], []>} : vector<384x16xf32>, vector<16x96xf32>, vector<384x96xf32> -> vector<384x96xf32>
    %48 = arith.addf %42, %47 : vector<384x96xf32>
    %c0_41 = arith.constant 0 : index
    %c57 = arith.constant 57 : index
    %c0_42 = arith.constant 0 : index
    %49 = vector.load %arg1[%c0_41, %c57, %c0_42] : memref<1x448x16xf32, #tpu.memory_space<vmem>>, vector<1x384x16xf32>
    %50 = vector.shape_cast %49 : vector<1x384x16xf32> to vector<384x16xf32>
    %c8_43 = arith.constant 8 : index
    %c0_44 = arith.constant 0 : index
    %c0_45 = arith.constant 0 : index
    %51 = vector.load %arg2[%c8_43, %c0_44, %c0_45] : memref<9x16x96xf32, #tpu.memory_space<vmem>>, vector<1x16x96xf32>
    %52 = vector.shape_cast %51 : vector<1x16x96xf32> to vector<16x96xf32>
    %cst_46 = arith.constant dense<0.000000e+00> : vector<384x96xf32>
    %53 = tpu.matmul %50, %52, %cst_46 {dimension_numbers = #tpu.dot_dimension_numbers<[1], [0], [0], [1], [0, 0, 1, 1], [], []>} : vector<384x16xf32>, vector<16x96xf32>, vector<384x96xf32> -> vector<384x96xf32>
    %54 = arith.addf %48, %53 : vector<384x96xf32>
    %c0_47 = arith.constant 0 : index
    %c0_48 = arith.constant 0 : index
    %55 = vector.load %arg3[%c0_47, %c0_48] : memref<1x96xf32, #tpu.memory_space<vmem>>, vector<1x96xf32>
    %56 = vector.broadcast %55 : vector<1x96xf32> to vector<384x96xf32>
    %57 = arith.addf %54, %56 : vector<384x96xf32>
    %cst_49 = arith.constant 0.000000e+00 : f32
    %58 = vector.broadcast %cst_49 : f32 to vector<384x96xf32>
    %59 = arith.maximumf %57, %58 : vector<384x96xf32>
    %c0_50 = arith.constant 0 : index
    %c0_51 = arith.constant 0 : index
    %60 = vector.load %arg11[%c0_50, %c0_51] : memref<384x1xf32, #tpu.memory_space<vmem>>, vector<384x1xf32>
    %61 = vector.broadcast %60 : vector<384x1xf32> to vector<384x96xf32>
    %62 = arith.mulf %59, %61 : vector<384x96xf32>
    %cst_52 = arith.constant 0.000000e+00 : f32
    %63 = vector.broadcast %cst_52 : f32 to vector<32x96xf32>
    %c0_53 = arith.constant 0 : index
    %c0_54 = arith.constant 0 : index
    %64 = vector.load %arg16[%c0_53, %c0_54] : memref<448x96xf32, #tpu.memory_space<vmem>>, vector<32x96xf32>
    tpu.vector_store %arg16[%c0_53, %c0_54], %63 {strides = array<i32>} : memref<448x96xf32, #tpu.memory_space<vmem>>, vector<32x96xf32>,
    %cst_55 = arith.constant 0.000000e+00 : f32
    %65 = vector.broadcast %cst_55 : f32 to vector<32x96xf32>
    %c416 = arith.constant 416 : index
    %c0_56 = arith.constant 0 : index
    %66 = vector.load %arg16[%c416, %c0_56] : memref<448x96xf32, #tpu.memory_space<vmem>>, vector<32x96xf32>
    tpu.vector_store %arg16[%c416, %c0_56], %65 {strides = array<i32>} : memref<448x96xf32, #tpu.memory_space<vmem>>, vector<32x96xf32>,
    %c32_57 = arith.constant 32 : index
    %c0_58 = arith.constant 0 : index
    %67 = vector.load %arg16[%c32_57, %c0_58] : memref<448x96xf32, #tpu.memory_space<vmem>>, vector<384x96xf32>
    tpu.vector_store %arg16[%c32_57, %c0_58], %62 {strides = array<i32>} : memref<448x96xf32, #tpu.memory_space<vmem>>, vector<384x96xf32>,
    %cst_59 = arith.constant 0.000000e+00 : f32
    %68 = vector.broadcast %cst_59 : f32 to vector<384x96xf32>
    %c7_60 = arith.constant 7 : index
    %c0_61 = arith.constant 0 : index
    %69 = vector.load %arg16[%c7_60, %c0_61] : memref<448x96xf32, #tpu.memory_space<vmem>>, vector<384x96xf32>
    %c0_62 = arith.constant 0 : index
    %c0_63 = arith.constant 0 : index
    %c0_64 = arith.constant 0 : index
    %70 = vector.load %arg4[%c0_62, %c0_63, %c0_64] : memref<9x1x96xf32, #tpu.memory_space<vmem>>, vector<1x1x96xf32>
    %71 = vector.shape_cast %70 : vector<1x1x96xf32> to vector<1x96xf32>
    %72 = vector.broadcast %71 : vector<1x96xf32> to vector<384x96xf32>
    %73 = arith.mulf %69, %72 : vector<384x96xf32>
    %74 = arith.addf %68, %73 : vector<384x96xf32>
    %c8_65 = arith.constant 8 : index
    %c0_66 = arith.constant 0 : index
    %75 = vector.load %arg16[%c8_65, %c0_66] : memref<448x96xf32, #tpu.memory_space<vmem>>, vector<384x96xf32>
    %c1_67 = arith.constant 1 : index
    %c0_68 = arith.constant 0 : index
    %c0_69 = arith.constant 0 : index
    %76 = vector.load %arg4[%c1_67, %c0_68, %c0_69] : memref<9x1x96xf32, #tpu.memory_space<vmem>>, vector<1x1x96xf32>
    %77 = vector.shape_cast %76 : vector<1x1x96xf32> to vector<1x96xf32>
    %78 = vector.broadcast %77 : vector<1x96xf32> to vector<384x96xf32>
    %79 = arith.mulf %75, %78 : vector<384x96xf32>
    %80 = arith.addf %74, %79 : vector<384x96xf32>
    %c9_70 = arith.constant 9 : index
    %c0_71 = arith.constant 0 : index
    %81 = vector.load %arg16[%c9_70, %c0_71] : memref<448x96xf32, #tpu.memory_space<vmem>>, vector<384x96xf32>
    %c2_72 = arith.constant 2 : index
    %c0_73 = arith.constant 0 : index
    %c0_74 = arith.constant 0 : index
    %82 = vector.load %arg4[%c2_72, %c0_73, %c0_74] : memref<9x1x96xf32, #tpu.memory_space<vmem>>, vector<1x1x96xf32>
    %83 = vector.shape_cast %82 : vector<1x1x96xf32> to vector<1x96xf32>
    %84 = vector.broadcast %83 : vector<1x96xf32> to vector<384x96xf32>
    %85 = arith.mulf %81, %84 : vector<384x96xf32>
    %86 = arith.addf %80, %85 : vector<384x96xf32>
    %c31_75 = arith.constant 31 : index
    %c0_76 = arith.constant 0 : index
    %87 = vector.load %arg16[%c31_75, %c0_76] : memref<448x96xf32, #tpu.memory_space<vmem>>, vector<384x96xf32>
    %c3_77 = arith.constant 3 : index
    %c0_78 = arith.constant 0 : index
    %c0_79 = arith.constant 0 : index
    %88 = vector.load %arg4[%c3_77, %c0_78, %c0_79] : memref<9x1x96xf32, #tpu.memory_space<vmem>>, vector<1x1x96xf32>
    %89 = vector.shape_cast %88 : vector<1x1x96xf32> to vector<1x96xf32>
    %90 = vector.broadcast %89 : vector<1x96xf32> to vector<384x96xf32>
    %91 = arith.mulf %87, %90 : vector<384x96xf32>
    %92 = arith.addf %86, %91 : vector<384x96xf32>
    %c32_80 = arith.constant 32 : index
    %c0_81 = arith.constant 0 : index
    %93 = vector.load %arg16[%c32_80, %c0_81] : memref<448x96xf32, #tpu.memory_space<vmem>>, vector<384x96xf32>
    %c4_82 = arith.constant 4 : index
    %c0_83 = arith.constant 0 : index
    %c0_84 = arith.constant 0 : index
    %94 = vector.load %arg4[%c4_82, %c0_83, %c0_84] : memref<9x1x96xf32, #tpu.memory_space<vmem>>, vector<1x1x96xf32>
    %95 = vector.shape_cast %94 : vector<1x1x96xf32> to vector<1x96xf32>
    %96 = vector.broadcast %95 : vector<1x96xf32> to vector<384x96xf32>
    %97 = arith.mulf %93, %96 : vector<384x96xf32>
    %98 = arith.addf %92, %97 : vector<384x96xf32>
    %c33_85 = arith.constant 33 : index
    %c0_86 = arith.constant 0 : index
    %99 = vector.load %arg16[%c33_85, %c0_86] : memref<448x96xf32, #tpu.memory_space<vmem>>, vector<384x96xf32>
    %c5_87 = arith.constant 5 : index
    %c0_88 = arith.constant 0 : index
    %c0_89 = arith.constant 0 : index
    %100 = vector.load %arg4[%c5_87, %c0_88, %c0_89] : memref<9x1x96xf32, #tpu.memory_space<vmem>>, vector<1x1x96xf32>
    %101 = vector.shape_cast %100 : vector<1x1x96xf32> to vector<1x96xf32>
    %102 = vector.broadcast %101 : vector<1x96xf32> to vector<384x96xf32>
    %103 = arith.mulf %99, %102 : vector<384x96xf32>
    %104 = arith.addf %98, %103 : vector<384x96xf32>
    %c55_90 = arith.constant 55 : index
    %c0_91 = arith.constant 0 : index
    %105 = vector.load %arg16[%c55_90, %c0_91] : memref<448x96xf32, #tpu.memory_space<vmem>>, vector<384x96xf32>
    %c6_92 = arith.constant 6 : index
    %c0_93 = arith.constant 0 : index
    %c0_94 = arith.constant 0 : index
    %106 = vector.load %arg4[%c6_92, %c0_93, %c0_94] : memref<9x1x96xf32, #tpu.memory_space<vmem>>, vector<1x1x96xf32>
    %107 = vector.shape_cast %106 : vector<1x1x96xf32> to vector<1x96xf32>
    %108 = vector.broadcast %107 : vector<1x96xf32> to vector<384x96xf32>
    %109 = arith.mulf %105, %108 : vector<384x96xf32>
    %110 = arith.addf %104, %109 : vector<384x96xf32>
    %c56_95 = arith.constant 56 : index
    %c0_96 = arith.constant 0 : index
    %111 = vector.load %arg16[%c56_95, %c0_96] : memref<448x96xf32, #tpu.memory_space<vmem>>, vector<384x96xf32>
    %c7_97 = arith.constant 7 : index
    %c0_98 = arith.constant 0 : index
    %c0_99 = arith.constant 0 : index
    %112 = vector.load %arg4[%c7_97, %c0_98, %c0_99] : memref<9x1x96xf32, #tpu.memory_space<vmem>>, vector<1x1x96xf32>
    %113 = vector.shape_cast %112 : vector<1x1x96xf32> to vector<1x96xf32>
    %114 = vector.broadcast %113 : vector<1x96xf32> to vector<384x96xf32>
    %115 = arith.mulf %111, %114 : vector<384x96xf32>
    %116 = arith.addf %110, %115 : vector<384x96xf32>
    %c57_100 = arith.constant 57 : index
    %c0_101 = arith.constant 0 : index
    %117 = vector.load %arg16[%c57_100, %c0_101] : memref<448x96xf32, #tpu.memory_space<vmem>>, vector<384x96xf32>
    %c8_102 = arith.constant 8 : index
    %c0_103 = arith.constant 0 : index
    %c0_104 = arith.constant 0 : index
    %118 = vector.load %arg4[%c8_102, %c0_103, %c0_104] : memref<9x1x96xf32, #tpu.memory_space<vmem>>, vector<1x1x96xf32>
    %119 = vector.shape_cast %118 : vector<1x1x96xf32> to vector<1x96xf32>
    %120 = vector.broadcast %119 : vector<1x96xf32> to vector<384x96xf32>
    %121 = arith.mulf %117, %120 : vector<384x96xf32>
    %122 = arith.addf %116, %121 : vector<384x96xf32>
    %c0_105 = arith.constant 0 : index
    %c0_106 = arith.constant 0 : index
    %123 = vector.load %arg10[%c0_105, %c0_106] : memref<128x384xf32, #tpu.memory_space<vmem>>, vector<128x384xf32>
    %cst_107 = arith.constant dense<0.000000e+00> : vector<128x96xf32>
    %124 = tpu.matmul %123, %122, %cst_107 {dimension_numbers = #tpu.dot_dimension_numbers<[1], [0], [0], [1], [0, 0, 1, 1], [], []>} : vector<128x384xf32>, vector<384x96xf32>, vector<128x96xf32> -> vector<128x96xf32>
    %c0_108 = arith.constant 0 : index
    %c0_109 = arith.constant 0 : index
    %125 = vector.load %arg5[%c0_108, %c0_109] : memref<1x96xf32, #tpu.memory_space<vmem>>, vector<1x96xf32>
    %126 = vector.broadcast %125 : vector<1x96xf32> to vector<128x96xf32>
    %127 = arith.addf %124, %126 : vector<128x96xf32>
    %c0_110 = arith.constant 0 : index
    %c0_111 = arith.constant 0 : index
    %128 = vector.load %arg12[%c0_110, %c0_111] : memref<128x1xf32, #tpu.memory_space<vmem>>, vector<128x1xf32>
    %129 = vector.broadcast %128 : vector<128x1xf32> to vector<128x96xf32>
    %130 = arith.mulf %127, %129 : vector<128x96xf32>
    %cst_112 = arith.constant 0.000000e+00 : f32
    %131 = vector.broadcast %cst_112 : f32 to vector<32x96xf32>
    %c0_113 = arith.constant 0 : index
    %c0_114 = arith.constant 0 : index
    %132 = vector.load %arg17[%c0_113, %c0_114] : memref<192x96xf32, #tpu.memory_space<vmem>>, vector<32x96xf32>
    tpu.vector_store %arg17[%c0_113, %c0_114], %131 {strides = array<i32>} : memref<192x96xf32, #tpu.memory_space<vmem>>, vector<32x96xf32>,
    %cst_115 = arith.constant 0.000000e+00 : f32
    %133 = vector.broadcast %cst_115 : f32 to vector<32x96xf32>
    %c160 = arith.constant 160 : index
    %c0_116 = arith.constant 0 : index
    %134 = vector.load %arg17[%c160, %c0_116] : memref<192x96xf32, #tpu.memory_space<vmem>>, vector<32x96xf32>
    tpu.vector_store %arg17[%c160, %c0_116], %133 {strides = array<i32>} : memref<192x96xf32, #tpu.memory_space<vmem>>, vector<32x96xf32>,
    %c32_117 = arith.constant 32 : index
    %c0_118 = arith.constant 0 : index
    %135 = vector.load %arg17[%c32_117, %c0_118] : memref<192x96xf32, #tpu.memory_space<vmem>>, vector<128x96xf32>
    tpu.vector_store %arg17[%c32_117, %c0_118], %130 {strides = array<i32>} : memref<192x96xf32, #tpu.memory_space<vmem>>, vector<128x96xf32>,
    %cst_119 = arith.constant 0.000000e+00 : f32
    %136 = vector.broadcast %cst_119 : f32 to vector<128x96xf32>
    %c15 = arith.constant 15 : index
    %c0_120 = arith.constant 0 : index
    %137 = vector.load %arg17[%c15, %c0_120] : memref<192x96xf32, #tpu.memory_space<vmem>>, vector<128x96xf32>
    %c0_121 = arith.constant 0 : index
    %c0_122 = arith.constant 0 : index
    %c0_123 = arith.constant 0 : index
    %138 = vector.load %arg6[%c0_121, %c0_122, %c0_123] : memref<9x1x96xf32, #tpu.memory_space<vmem>>, vector<1x1x96xf32>
    %139 = vector.shape_cast %138 : vector<1x1x96xf32> to vector<1x96xf32>
    %140 = vector.broadcast %139 : vector<1x96xf32> to vector<128x96xf32>
    %141 = arith.mulf %137, %140 : vector<128x96xf32>
    %142 = arith.addf %136, %141 : vector<128x96xf32>
    %c16 = arith.constant 16 : index
    %c0_124 = arith.constant 0 : index
    %143 = vector.load %arg17[%c16, %c0_124] : memref<192x96xf32, #tpu.memory_space<vmem>>, vector<128x96xf32>
    %c1_125 = arith.constant 1 : index
    %c0_126 = arith.constant 0 : index
    %c0_127 = arith.constant 0 : index
    %144 = vector.load %arg6[%c1_125, %c0_126, %c0_127] : memref<9x1x96xf32, #tpu.memory_space<vmem>>, vector<1x1x96xf32>
    %145 = vector.shape_cast %144 : vector<1x1x96xf32> to vector<1x96xf32>
    %146 = vector.broadcast %145 : vector<1x96xf32> to vector<128x96xf32>
    %147 = arith.mulf %143, %146 : vector<128x96xf32>
    %148 = arith.addf %142, %147 : vector<128x96xf32>
    %c17 = arith.constant 17 : index
    %c0_128 = arith.constant 0 : index
    %149 = vector.load %arg17[%c17, %c0_128] : memref<192x96xf32, #tpu.memory_space<vmem>>, vector<128x96xf32>
    %c2_129 = arith.constant 2 : index
    %c0_130 = arith.constant 0 : index
    %c0_131 = arith.constant 0 : index
    %150 = vector.load %arg6[%c2_129, %c0_130, %c0_131] : memref<9x1x96xf32, #tpu.memory_space<vmem>>, vector<1x1x96xf32>
    %151 = vector.shape_cast %150 : vector<1x1x96xf32> to vector<1x96xf32>
    %152 = vector.broadcast %151 : vector<1x96xf32> to vector<128x96xf32>
    %153 = arith.mulf %149, %152 : vector<128x96xf32>
    %154 = arith.addf %148, %153 : vector<128x96xf32>
    %c31_132 = arith.constant 31 : index
    %c0_133 = arith.constant 0 : index
    %155 = vector.load %arg17[%c31_132, %c0_133] : memref<192x96xf32, #tpu.memory_space<vmem>>, vector<128x96xf32>
    %c3_134 = arith.constant 3 : index
    %c0_135 = arith.constant 0 : index
    %c0_136 = arith.constant 0 : index
    %156 = vector.load %arg6[%c3_134, %c0_135, %c0_136] : memref<9x1x96xf32, #tpu.memory_space<vmem>>, vector<1x1x96xf32>
    %157 = vector.shape_cast %156 : vector<1x1x96xf32> to vector<1x96xf32>
    %158 = vector.broadcast %157 : vector<1x96xf32> to vector<128x96xf32>
    %159 = arith.mulf %155, %158 : vector<128x96xf32>
    %160 = arith.addf %154, %159 : vector<128x96xf32>
    %c32_137 = arith.constant 32 : index
    %c0_138 = arith.constant 0 : index
    %161 = vector.load %arg17[%c32_137, %c0_138] : memref<192x96xf32, #tpu.memory_space<vmem>>, vector<128x96xf32>
    %c4_139 = arith.constant 4 : index
    %c0_140 = arith.constant 0 : index
    %c0_141 = arith.constant 0 : index
    %162 = vector.load %arg6[%c4_139, %c0_140, %c0_141] : memref<9x1x96xf32, #tpu.memory_space<vmem>>, vector<1x1x96xf32>
    %163 = vector.shape_cast %162 : vector<1x1x96xf32> to vector<1x96xf32>
    %164 = vector.broadcast %163 : vector<1x96xf32> to vector<128x96xf32>
    %165 = arith.mulf %161, %164 : vector<128x96xf32>
    %166 = arith.addf %160, %165 : vector<128x96xf32>
    %c33_142 = arith.constant 33 : index
    %c0_143 = arith.constant 0 : index
    %167 = vector.load %arg17[%c33_142, %c0_143] : memref<192x96xf32, #tpu.memory_space<vmem>>, vector<128x96xf32>
    %c5_144 = arith.constant 5 : index
    %c0_145 = arith.constant 0 : index
    %c0_146 = arith.constant 0 : index
    %168 = vector.load %arg6[%c5_144, %c0_145, %c0_146] : memref<9x1x96xf32, #tpu.memory_space<vmem>>, vector<1x1x96xf32>
    %169 = vector.shape_cast %168 : vector<1x1x96xf32> to vector<1x96xf32>
    %170 = vector.broadcast %169 : vector<1x96xf32> to vector<128x96xf32>
    %171 = arith.mulf %167, %170 : vector<128x96xf32>
    %172 = arith.addf %166, %171 : vector<128x96xf32>
    %c47 = arith.constant 47 : index
    %c0_147 = arith.constant 0 : index
    %173 = vector.load %arg17[%c47, %c0_147] : memref<192x96xf32, #tpu.memory_space<vmem>>, vector<128x96xf32>
    %c6_148 = arith.constant 6 : index
    %c0_149 = arith.constant 0 : index
    %c0_150 = arith.constant 0 : index
    %174 = vector.load %arg6[%c6_148, %c0_149, %c0_150] : memref<9x1x96xf32, #tpu.memory_space<vmem>>, vector<1x1x96xf32>
    %175 = vector.shape_cast %174 : vector<1x1x96xf32> to vector<1x96xf32>
    %176 = vector.broadcast %175 : vector<1x96xf32> to vector<128x96xf32>
    %177 = arith.mulf %173, %176 : vector<128x96xf32>
    %178 = arith.addf %172, %177 : vector<128x96xf32>
    %c48 = arith.constant 48 : index
    %c0_151 = arith.constant 0 : index
    %179 = vector.load %arg17[%c48, %c0_151] : memref<192x96xf32, #tpu.memory_space<vmem>>, vector<128x96xf32>
    %c7_152 = arith.constant 7 : index
    %c0_153 = arith.constant 0 : index
    %c0_154 = arith.constant 0 : index
    %180 = vector.load %arg6[%c7_152, %c0_153, %c0_154] : memref<9x1x96xf32, #tpu.memory_space<vmem>>, vector<1x1x96xf32>
    %181 = vector.shape_cast %180 : vector<1x1x96xf32> to vector<1x96xf32>
    %182 = vector.broadcast %181 : vector<1x96xf32> to vector<128x96xf32>
    %183 = arith.mulf %179, %182 : vector<128x96xf32>
    %184 = arith.addf %178, %183 : vector<128x96xf32>
    %c49 = arith.constant 49 : index
    %c0_155 = arith.constant 0 : index
    %185 = vector.load %arg17[%c49, %c0_155] : memref<192x96xf32, #tpu.memory_space<vmem>>, vector<128x96xf32>
    %c8_156 = arith.constant 8 : index
    %c0_157 = arith.constant 0 : index
    %c0_158 = arith.constant 0 : index
    %186 = vector.load %arg6[%c8_156, %c0_157, %c0_158] : memref<9x1x96xf32, #tpu.memory_space<vmem>>, vector<1x1x96xf32>
    %187 = vector.shape_cast %186 : vector<1x1x96xf32> to vector<1x96xf32>
    %188 = vector.broadcast %187 : vector<1x96xf32> to vector<128x96xf32>
    %189 = arith.mulf %185, %188 : vector<128x96xf32>
    %190 = arith.addf %184, %189 : vector<128x96xf32>
    %c0_159 = arith.constant 0 : index
    %c0_160 = arith.constant 0 : index
    %191 = vector.load %arg7[%c0_159, %c0_160] : memref<1x96xf32, #tpu.memory_space<vmem>>, vector<1x96xf32>
    %192 = vector.broadcast %191 : vector<1x96xf32> to vector<128x96xf32>
    %193 = arith.addf %190, %192 : vector<128x96xf32>
    %cst_161 = arith.constant 0.000000e+00 : f32
    %194 = vector.broadcast %cst_161 : f32 to vector<128x96xf32>
    %195 = arith.maximumf %193, %194 : vector<128x96xf32>
    %c0_162 = arith.constant 0 : index
    %c0_163 = arith.constant 0 : index
    %196 = vector.load %arg12[%c0_162, %c0_163] : memref<128x1xf32, #tpu.memory_space<vmem>>, vector<128x1xf32>
    %197 = vector.broadcast %196 : vector<128x1xf32> to vector<128x96xf32>
    %198 = arith.mulf %195, %197 : vector<128x96xf32>
    %cst_164 = arith.constant 0.000000e+00 : f32
    %199 = vector.broadcast %cst_164 : f32 to vector<384x16xf32>
    %c0_165 = arith.constant 0 : index
    %c7_166 = arith.constant 7 : index
    %c0_167 = arith.constant 0 : index
    %200 = vector.load %arg1[%c0_165, %c7_166, %c0_167] : memref<1x448x16xf32, #tpu.memory_space<vmem>>, vector<1x384x16xf32>
    %201 = vector.shape_cast %200 : vector<1x384x16xf32> to vector<384x16xf32>
    %c0_168 = arith.constant 0 : index
    %c0_169 = arith.constant 0 : index
    %c0_170 = arith.constant 0 : index
    %202 = vector.load %arg8[%c0_168, %c0_169, %c0_170] : memref<9x1x16xf32, #tpu.memory_space<vmem>>, vector<1x1x16xf32>
    %203 = vector.shape_cast %202 : vector<1x1x16xf32> to vector<1x16xf32>
    %204 = vector.broadcast %203 : vector<1x16xf32> to vector<384x16xf32>
    %205 = arith.mulf %201, %204 : vector<384x16xf32>
    %206 = arith.addf %199, %205 : vector<384x16xf32>
    %c0_171 = arith.constant 0 : index
    %c8_172 = arith.constant 8 : index
    %c0_173 = arith.constant 0 : index
    %207 = vector.load %arg1[%c0_171, %c8_172, %c0_173] : memref<1x448x16xf32, #tpu.memory_space<vmem>>, vector<1x384x16xf32>
    %208 = vector.shape_cast %207 : vector<1x384x16xf32> to vector<384x16xf32>
    %c1_174 = arith.constant 1 : index
    %c0_175 = arith.constant 0 : index
    %c0_176 = arith.constant 0 : index
    %209 = vector.load %arg8[%c1_174, %c0_175, %c0_176] : memref<9x1x16xf32, #tpu.memory_space<vmem>>, vector<1x1x16xf32>
    %210 = vector.shape_cast %209 : vector<1x1x16xf32> to vector<1x16xf32>
    %211 = vector.broadcast %210 : vector<1x16xf32> to vector<384x16xf32>
    %212 = arith.mulf %208, %211 : vector<384x16xf32>
    %213 = arith.addf %206, %212 : vector<384x16xf32>
    %c0_177 = arith.constant 0 : index
    %c9_178 = arith.constant 9 : index
    %c0_179 = arith.constant 0 : index
    %214 = vector.load %arg1[%c0_177, %c9_178, %c0_179] : memref<1x448x16xf32, #tpu.memory_space<vmem>>, vector<1x384x16xf32>
    %215 = vector.shape_cast %214 : vector<1x384x16xf32> to vector<384x16xf32>
    %c2_180 = arith.constant 2 : index
    %c0_181 = arith.constant 0 : index
    %c0_182 = arith.constant 0 : index
    %216 = vector.load %arg8[%c2_180, %c0_181, %c0_182] : memref<9x1x16xf32, #tpu.memory_space<vmem>>, vector<1x1x16xf32>
    %217 = vector.shape_cast %216 : vector<1x1x16xf32> to vector<1x16xf32>
    %218 = vector.broadcast %217 : vector<1x16xf32> to vector<384x16xf32>
    %219 = arith.mulf %215, %218 : vector<384x16xf32>
    %220 = arith.addf %213, %219 : vector<384x16xf32>
    %c0_183 = arith.constant 0 : index
    %c31_184 = arith.constant 31 : index
    %c0_185 = arith.constant 0 : index
    %221 = vector.load %arg1[%c0_183, %c31_184, %c0_185] : memref<1x448x16xf32, #tpu.memory_space<vmem>>, vector<1x384x16xf32>
    %222 = vector.shape_cast %221 : vector<1x384x16xf32> to vector<384x16xf32>
    %c3_186 = arith.constant 3 : index
    %c0_187 = arith.constant 0 : index
    %c0_188 = arith.constant 0 : index
    %223 = vector.load %arg8[%c3_186, %c0_187, %c0_188] : memref<9x1x16xf32, #tpu.memory_space<vmem>>, vector<1x1x16xf32>
    %224 = vector.shape_cast %223 : vector<1x1x16xf32> to vector<1x16xf32>
    %225 = vector.broadcast %224 : vector<1x16xf32> to vector<384x16xf32>
    %226 = arith.mulf %222, %225 : vector<384x16xf32>
    %227 = arith.addf %220, %226 : vector<384x16xf32>
    %c0_189 = arith.constant 0 : index
    %c32_190 = arith.constant 32 : index
    %c0_191 = arith.constant 0 : index
    %228 = vector.load %arg1[%c0_189, %c32_190, %c0_191] : memref<1x448x16xf32, #tpu.memory_space<vmem>>, vector<1x384x16xf32>
    %229 = vector.shape_cast %228 : vector<1x384x16xf32> to vector<384x16xf32>
    %c4_192 = arith.constant 4 : index
    %c0_193 = arith.constant 0 : index
    %c0_194 = arith.constant 0 : index
    %230 = vector.load %arg8[%c4_192, %c0_193, %c0_194] : memref<9x1x16xf32, #tpu.memory_space<vmem>>, vector<1x1x16xf32>
    %231 = vector.shape_cast %230 : vector<1x1x16xf32> to vector<1x16xf32>
    %232 = vector.broadcast %231 : vector<1x16xf32> to vector<384x16xf32>
    %233 = arith.mulf %229, %232 : vector<384x16xf32>
    %234 = arith.addf %227, %233 : vector<384x16xf32>
    %c0_195 = arith.constant 0 : index
    %c33_196 = arith.constant 33 : index
    %c0_197 = arith.constant 0 : index
    %235 = vector.load %arg1[%c0_195, %c33_196, %c0_197] : memref<1x448x16xf32, #tpu.memory_space<vmem>>, vector<1x384x16xf32>
    %236 = vector.shape_cast %235 : vector<1x384x16xf32> to vector<384x16xf32>
    %c5_198 = arith.constant 5 : index
    %c0_199 = arith.constant 0 : index
    %c0_200 = arith.constant 0 : index
    %237 = vector.load %arg8[%c5_198, %c0_199, %c0_200] : memref<9x1x16xf32, #tpu.memory_space<vmem>>, vector<1x1x16xf32>
    %238 = vector.shape_cast %237 : vector<1x1x16xf32> to vector<1x16xf32>
    %239 = vector.broadcast %238 : vector<1x16xf32> to vector<384x16xf32>
    %240 = arith.mulf %236, %239 : vector<384x16xf32>
    %241 = arith.addf %234, %240 : vector<384x16xf32>
    %c0_201 = arith.constant 0 : index
    %c55_202 = arith.constant 55 : index
    %c0_203 = arith.constant 0 : index
    %242 = vector.load %arg1[%c0_201, %c55_202, %c0_203] : memref<1x448x16xf32, #tpu.memory_space<vmem>>, vector<1x384x16xf32>
    %243 = vector.shape_cast %242 : vector<1x384x16xf32> to vector<384x16xf32>
    %c6_204 = arith.constant 6 : index
    %c0_205 = arith.constant 0 : index
    %c0_206 = arith.constant 0 : index
    %244 = vector.load %arg8[%c6_204, %c0_205, %c0_206] : memref<9x1x16xf32, #tpu.memory_space<vmem>>, vector<1x1x16xf32>
    %245 = vector.shape_cast %244 : vector<1x1x16xf32> to vector<1x16xf32>
    %246 = vector.broadcast %245 : vector<1x16xf32> to vector<384x16xf32>
    %247 = arith.mulf %243, %246 : vector<384x16xf32>
    %248 = arith.addf %241, %247 : vector<384x16xf32>
    %c0_207 = arith.constant 0 : index
    %c56_208 = arith.constant 56 : index
    %c0_209 = arith.constant 0 : index
    %249 = vector.load %arg1[%c0_207, %c56_208, %c0_209] : memref<1x448x16xf32, #tpu.memory_space<vmem>>, vector<1x384x16xf32>
    %250 = vector.shape_cast %249 : vector<1x384x16xf32> to vector<384x16xf32>
    %c7_210 = arith.constant 7 : index
    %c0_211 = arith.constant 0 : index
    %c0_212 = arith.constant 0 : index
    %251 = vector.load %arg8[%c7_210, %c0_211, %c0_212] : memref<9x1x16xf32, #tpu.memory_space<vmem>>, vector<1x1x16xf32>
    %252 = vector.shape_cast %251 : vector<1x1x16xf32> to vector<1x16xf32>
    %253 = vector.broadcast %252 : vector<1x16xf32> to vector<384x16xf32>
    %254 = arith.mulf %250, %253 : vector<384x16xf32>
    %255 = arith.addf %248, %254 : vector<384x16xf32>
    %c0_213 = arith.constant 0 : index
    %c57_214 = arith.constant 57 : index
    %c0_215 = arith.constant 0 : index
    %256 = vector.load %arg1[%c0_213, %c57_214, %c0_215] : memref<1x448x16xf32, #tpu.memory_space<vmem>>, vector<1x384x16xf32>
    %257 = vector.shape_cast %256 : vector<1x384x16xf32> to vector<384x16xf32>
    %c8_216 = arith.constant 8 : index
    %c0_217 = arith.constant 0 : index
    %c0_218 = arith.constant 0 : index
    %258 = vector.load %arg8[%c8_216, %c0_217, %c0_218] : memref<9x1x16xf32, #tpu.memory_space<vmem>>, vector<1x1x16xf32>
    %259 = vector.shape_cast %258 : vector<1x1x16xf32> to vector<1x16xf32>
    %260 = vector.broadcast %259 : vector<1x16xf32> to vector<384x16xf32>
    %261 = arith.mulf %257, %260 : vector<384x16xf32>
    %262 = arith.addf %255, %261 : vector<384x16xf32>
    %c0_219 = arith.constant 0 : index
    %c0_220 = arith.constant 0 : index
    %263 = vector.load %arg10[%c0_219, %c0_220] : memref<128x384xf32, #tpu.memory_space<vmem>>, vector<128x384xf32>
    %cst_221 = arith.constant dense<0.000000e+00> : vector<128x16xf32>
    %264 = tpu.matmul %263, %262, %cst_221 {dimension_numbers = #tpu.dot_dimension_numbers<[1], [0], [0], [1], [0, 0, 1, 1], [], []>} : vector<128x384xf32>, vector<384x16xf32>, vector<128x16xf32> -> vector<128x16xf32>
    %c0_222 = arith.constant 0 : index
    %c0_223 = arith.constant 0 : index
    %265 = vector.load %arg9[%c0_222, %c0_223] : memref<1x16xf32, #tpu.memory_space<vmem>>, vector<1x16xf32>
    %266 = vector.broadcast %265 : vector<1x16xf32> to vector<128x16xf32>
    %267 = arith.addf %264, %266 : vector<128x16xf32>
    %c0_224 = arith.constant 0 : index
    %c0_225 = arith.constant 0 : index
    %268 = vector.load %arg12[%c0_224, %c0_225] : memref<128x1xf32, #tpu.memory_space<vmem>>, vector<128x1xf32>
    %269 = vector.broadcast %268 : vector<128x1xf32> to vector<128x16xf32>
    %270 = arith.mulf %267, %269 : vector<128x16xf32>
    %cst_226 = arith.constant 0.000000e+00 : f32
    %271 = vector.broadcast %cst_226 : f32 to vector<128x256xf32>
    %c0_227 = arith.constant 0 : index
    %c0_228 = arith.constant 0 : index
    %272 = vector.load %arg18[%c0_227, %c0_228] : memref<128x256xf32, #tpu.memory_space<vmem>>, vector<128x256xf32>
    tpu.vector_store %arg18[%c0_227, %c0_228], %271 {strides = array<i32>} : memref<128x256xf32, #tpu.memory_space<vmem>>, vector<128x256xf32>,
    %c0_229 = arith.constant 0 : index
    %c0_230 = arith.constant 0 : index
    %273 = vector.load %arg18[%c0_229, %c0_230] : memref<128x256xf32, #tpu.memory_space<vmem>>, vector<128x96xf32>
    tpu.vector_store %arg18[%c0_229, %c0_230], %198 {strides = array<i32>} : memref<128x256xf32, #tpu.memory_space<vmem>>, vector<128x96xf32>,
    %c0_231 = arith.constant 0 : index
    %c128 = arith.constant 128 : index
    %274 = vector.load %arg18[%c0_231, %c128] : memref<128x256xf32, #tpu.memory_space<vmem>>, vector<128x16xf32>
    tpu.vector_store %arg18[%c0_231, %c128], %270 {strides = array<i32>} : memref<128x256xf32, #tpu.memory_space<vmem>>, vector<128x16xf32>,
    %c0_232 = arith.constant 0 : index
    %c0_233 = arith.constant 0 : index
    %275 = vector.load %arg18[%c0_232, %c0_233] : memref<128x256xf32, #tpu.memory_space<vmem>>, vector<128x256xf32>
    %c0_234 = arith.constant 0 : index
    %c0_235 = arith.constant 0 : index
    %276 = vector.load %arg13[%c0_234, %c0_235] : memref<256x32xf32, #tpu.memory_space<vmem>>, vector<256x32xf32>
    %cst_236 = arith.constant dense<0.000000e+00> : vector<128x32xf32>
    %277 = tpu.matmul %275, %276, %cst_236 {dimension_numbers = #tpu.dot_dimension_numbers<[1], [0], [0], [1], [0, 0, 1, 1], [], []>} : vector<128x256xf32>, vector<256x32xf32>, vector<128x32xf32> -> vector<128x32xf32>
    %c0_237 = arith.constant 0 : index
    %c0_238 = arith.constant 0 : index
    %278 = vector.load %arg14[%c0_237, %c0_238] : memref<1x32xf32, #tpu.memory_space<vmem>>, vector<1x32xf32>
    %279 = vector.broadcast %278 : vector<1x32xf32> to vector<128x32xf32>
    %280 = arith.addf %277, %279 : vector<128x32xf32>
    %cst_239 = arith.constant 0.000000e+00 : f32
    %281 = vector.broadcast %cst_239 : f32 to vector<128x32xf32>
    %282 = arith.maximumf %280, %281 : vector<128x32xf32>
    %c0_240 = arith.constant 0 : index
    %c0_241 = arith.constant 0 : index
    %c0_242 = arith.constant 0 : index
    %283 = vector.load %arg15[%c0_240, %c0_241, %c0_242] : memref<1x128x32xf32, #tpu.memory_space<vmem>>, vector<1x128x32xf32>
    %284 = vector.shape_cast %283 : vector<1x128x32xf32> to vector<128x32xf32>
    %285 = vector.shape_cast %282 : vector<128x32xf32> to vector<1x128x32xf32>
    tpu.vector_store %arg15[%c0_240, %c0_241, %c0_242], %285 {strides = array<i32>} : memref<1x128x32xf32, #tpu.memory_space<vmem>>, vector<1x128x32xf32>,
    return
  }
  func.func @transform_0(%arg0: i32) -> (i32, i32, i32) {
    %c0_i32 = arith.constant 0 : i32
    %c0_i32_0 = arith.constant 0 : i32
    %c0_i32_1 = arith.constant 0 : i32
    return %arg0, %c0_i32, %c0_i32_0 : i32, i32, i32
  }
  func.func @transform_1(%arg0: i32) -> (i32, i32, i32) {
    %c0_i32 = arith.constant 0 : i32
    %c0_i32_0 = arith.constant 0 : i32
    %c0_i32_1 = arith.constant 0 : i32
    %c0_i32_2 = arith.constant 0 : i32
    return %c0_i32, %c0_i32_0, %c0_i32_1 : i32, i32, i32
  }
  func.func @transform_2(%arg0: i32) -> (i32, i32) {
    %c0_i32 = arith.constant 0 : i32
    %c0_i32_0 = arith.constant 0 : i32
    %c0_i32_1 = arith.constant 0 : i32
    return %c0_i32, %c0_i32_0 : i32, i32
  }
  func.func @transform_3(%arg0: i32) -> (i32, i32, i32) {
    %c0_i32 = arith.constant 0 : i32
    %c0_i32_0 = arith.constant 0 : i32
    %c0_i32_1 = arith.constant 0 : i32
    %c0_i32_2 = arith.constant 0 : i32
    return %c0_i32, %c0_i32_0, %c0_i32_1 : i32, i32, i32
  }
  func.func @transform_4(%arg0: i32) -> (i32, i32) {
    %c0_i32 = arith.constant 0 : i32
    %c0_i32_0 = arith.constant 0 : i32
    %c0_i32_1 = arith.constant 0 : i32
    return %c0_i32, %c0_i32_0 : i32, i32
  }
  func.func @transform_5(%arg0: i32) -> (i32, i32, i32) {
    %c0_i32 = arith.constant 0 : i32
    %c0_i32_0 = arith.constant 0 : i32
    %c0_i32_1 = arith.constant 0 : i32
    %c0_i32_2 = arith.constant 0 : i32
    return %c0_i32, %c0_i32_0, %c0_i32_1 : i32, i32, i32
  }
  func.func @transform_6(%arg0: i32) -> (i32, i32) {
    %c0_i32 = arith.constant 0 : i32
    %c0_i32_0 = arith.constant 0 : i32
    %c0_i32_1 = arith.constant 0 : i32
    return %c0_i32, %c0_i32_0 : i32, i32
  }
  func.func @transform_7(%arg0: i32) -> (i32, i32, i32) {
    %c0_i32 = arith.constant 0 : i32
    %c0_i32_0 = arith.constant 0 : i32
    %c0_i32_1 = arith.constant 0 : i32
    %c0_i32_2 = arith.constant 0 : i32
    return %c0_i32, %c0_i32_0, %c0_i32_1 : i32, i32, i32
  }
  func.func @transform_8(%arg0: i32) -> (i32, i32) {
    %c0_i32 = arith.constant 0 : i32
    %c0_i32_0 = arith.constant 0 : i32
    %c0_i32_1 = arith.constant 0 : i32
    return %c0_i32, %c0_i32_0 : i32, i32
  }
  func.func @transform_9(%arg0: i32) -> (i32, i32) {
    %c0_i32 = arith.constant 0 : i32
    %c0_i32_0 = arith.constant 0 : i32
    %c0_i32_1 = arith.constant 0 : i32
    return %c0_i32, %c0_i32_0 : i32, i32
  }
  func.func @transform_10(%arg0: i32) -> (i32, i32) {
    %c0_i32 = arith.constant 0 : i32
    %c0_i32_0 = arith.constant 0 : i32
    %c0_i32_1 = arith.constant 0 : i32
    return %c0_i32, %c0_i32_0 : i32, i32
  }
  func.func @transform_11(%arg0: i32) -> (i32, i32) {
    %c0_i32 = arith.constant 0 : i32
    %c0_i32_0 = arith.constant 0 : i32
    %c0_i32_1 = arith.constant 0 : i32
    return %c0_i32, %c0_i32_0 : i32, i32
  }
  func.func @transform_12(%arg0: i32) -> (i32, i32) {
    %c0_i32 = arith.constant 0 : i32
    %c0_i32_0 = arith.constant 0 : i32
    %c0_i32_1 = arith.constant 0 : i32
    return %c0_i32, %c0_i32_0 : i32, i32
  }
  func.func @transform_13(%arg0: i32) -> (i32, i32) {
    %c0_i32 = arith.constant 0 : i32
    %c0_i32_0 = arith.constant 0 : i32
    %c0_i32_1 = arith.constant 0 : i32
    return %c0_i32, %c0_i32_0 : i32, i32
  }
  func.func @transform_14(%arg0: i32) -> (i32, i32, i32) {
    %c0_i32 = arith.constant 0 : i32
    %c0_i32_0 = arith.constant 0 : i32
    %c0_i32_1 = arith.constant 0 : i32
    return %arg0, %c0_i32, %c0_i32_0 : i32, i32, i32
  }
}

</mosaic_0001>

<llo_original>
// kernel: gelayer_s2_forward.1
$region0: #{gelayer_s2_forward.1}
  #allocation0 [shape = 'u32[]', space=smem, size = 0x4, offset = 0x4, fixed_abs, tag = 'smem constant byte address 0x4 - core index']
  #allocation1 [shape = 'u32[72,128]{1,0:T(1,128)}', space=vmem, size = 0x9000, scoped, tag = 'internal scratch']
  #allocation2 [shape = 'f32[448,96]{1,0:T(8,128)}', space=vmem, size = 0x38000, scoped, tag = 'scratch operand']
  #allocation3 [shape = 'f32[192,96]{1,0:T(8,128)}', space=vmem, size = 0x18000, scoped, tag = 'scratch operand']
  #allocation4 [shape = 'f32[128,256]{1,0:T(8,128)}', space=vmem, size = 0x20000, scoped, tag = 'scratch operand']
  %s0 = inlined_call_operand.vmem [shape: f32[2,448,16], index: 0, kind: input, shape index: {}]
  %s1 = inlined_call_operand.vmem [shape: f32[9,16,96], index: 1, kind: input, shape index: {}]
  %s2 = inlined_call_operand.vmem [shape: f32[1,96], index: 2, kind: input, shape index: {}]
  %s3 = inlined_call_operand.vmem [shape: f32[9,1,96], index: 3, kind: input, shape index: {}]
  %s4 = inlined_call_operand.vmem [shape: f32[1,96], index: 4, kind: input, shape index: {}]
  %s5 = inlined_call_operand.vmem [shape: f32[9,1,96], index: 5, kind: input, shape index: {}]
  %s6 = inlined_call_operand.vmem [shape: f32[1,96], index: 6, kind: input, shape index: {}]
  %s7 = inlined_call_operand.vmem [shape: f32[9,1,16], index: 7, kind: input, shape index: {}]
  %s8 = inlined_call_operand.vmem [shape: f32[1,16], index: 8, kind: input, shape index: {}]
  %s9 = inlined_call_operand.vmem [shape: f32[128,384], index: 9, kind: input, shape index: {}]
  %s10 = inlined_call_operand.vmem [shape: f32[384,1], index: 10, kind: input, shape index: {}]
  %s11 = inlined_call_operand.vmem [shape: f32[128,1], index: 11, kind: input, shape index: {}]
  %s12 = inlined_call_operand.vmem [shape: f32[256,32], index: 12, kind: input, shape index: {}]
  %s13 = inlined_call_operand.vmem [shape: f32[1,32], index: 13, kind: input, shape index: {}]
  %s14 = inlined_call_operand.vmem [shape: f32[2,128,32], index: 14, kind: output, shape index: {}]
  %s15 = sld [smem:[#allocation0]]
  $region89: #{gelayer_s2_forward.1} parent=0
    _
  %s17 = ssub.s32 1, %s15
  %s18 = scalar_select 0, %s17, %s15
  loop: start=0, step=1, limit=4
  $region2: #{gelayer_s2_forward.1} parent=0 // loop_pre_header
    _
  $region3: #{gelayer_s2_forward.1} parent=0 // loop_header
    %s20 = sphi 0, %s24
    %p21 = scmp.ge.s32.totalorder %s20, 4
    %s30 = sphi 0, %s32
    %s33 = sphi 0, %s30
    %s34 = sphi 0, %s33
    %s50 = sphi 0, %s34
    %s54 = sphi 0, %s54
    %s56 = sphi 0, %s54
    %s57 = sphi 0, %s56
    %s71 = sphi 0, %s57
    %s75 = sphi 0, %s75
    %s77 = sphi 0, %s75
    %s78 = sphi 0, %s77
    %s92 = sphi 0, %s78
    %s96 = sphi 0, %s96
    %s98 = sphi 0, %s96
    %s99 = sphi 0, %s98
    %s113 = sphi 0, %s99
    %s117 = sphi 0, %s117
    %s119 = sphi 0, %s117
    %s120 = sphi 0, %s119
    %s134 = sphi 0, %s120
    %s138 = sphi 0, %s138
    %s140 = sphi 0, %s138
    %s141 = sphi 0, %s140
    %s155 = sphi 0, %s141
    %s159 = sphi 0, %s159
    %s161 = sphi 0, %s159
    %s162 = sphi 0, %s161
    %s176 = sphi 0, %s162
    %s180 = sphi 0, %s180
    %s182 = sphi 0, %s180
    %s183 = sphi 0, %s182
    %s197 = sphi 0, %s183
    %s201 = sphi 0, %s201
    %s203 = sphi 0, %s201
    %s204 = sphi 0, %s203
    %s218 = sphi 0, %s204
    %s222 = sphi 0, %s222
    %s224 = sphi 0, %s222
    %s225 = sphi 0, %s224
    %s239 = sphi 0, %s225
    %s243 = sphi 0, %s243
    %s245 = sphi 0, %s243
    %s246 = sphi 0, %s245
    %s260 = sphi 0, %s246
    %s264 = sphi 0, %s264
    %s266 = sphi 0, %s264
    %s267 = sphi 0, %s266
    %s281 = sphi 0, %s267
    %s285 = sphi 0, %s285
    %s287 = sphi 0, %s285
    %s288 = sphi 0, %s287
    %s302 = sphi 0, %s288
    %s306 = sphi 0, %s306
    %s308 = sphi 0, %s306
    %s309 = sphi 0, %s308
    %s323 = sphi 0, %s309
    %s329 = sphi 0, %s331
    %s332 = sphi 0, %s329
    %s333 = sphi 0, %s332
    %s349 = sphi 0, %s333
  $region4: #{gelayer_s2_forward.1} parent=0 // loop_header_branch
    %23 = sbr.rel (%p21) target = $region8
  $region5: #{gelayer_s2_forward.1} parent=0 // loop_body
    %s25 = ssub.s32 %s20, 1
    %s26 = ssub.s32 %s20, 2
    %s27 = sadd.s32 %s20, 1
    %s28 = ssub.s32 %s20, %s27
    %p29 = scmp.eq.s32.totalorder %s28, 0
    %s31 = sadd.s32 %s30, 1
    %s32 = scalar_select %p29, %s30, %s31
    %p35 = pneg %p29
    %p36 = scmp.eq.s32.totalorder %s20, 1
    %p37 = por %p35, %p36
    %p38 = scmp.ne.s32.totalorder %s30, %s33
    %p39 = scmp.eq.s32.totalorder %s20, 0
    %p40 = por %p38, %p39
    %p41 = scmp.ne.s32.totalorder %s30, %s33
    %p42 = scmp.eq.s32.totalorder %s25, 1
    %p43 = por %p41, %p42
    %p44 = scmp.ne.s32.totalorder %s33, %s34
    %p45 = scmp.eq.s32.totalorder %s25, 0
    %p46 = por %p44, %p45
    %p47 = scmp.ne.s32.totalorder %s33, %s34
    %p48 = scmp.eq.s32.totalorder %s26, 1
    %p49 = por %p47, %p48
    %p51 = scmp.ne.s32.totalorder %s34, %s50
    %p52 = scmp.eq.s32.totalorder %s26, 0
    %p53 = por %p51, %p52
    %s55 = sadd.s32 %s54, 1
    %p58 = scmp.eq.s32.totalorder %s20, 1
    %p59 = scmp.ne.s32.totalorder %s54, %s56
    %p60 = scmp.eq.s32.totalorder %s20, 0
    %p61 = por %p59, %p60
    %p62 = scmp.ne.s32.totalorder %s54, %s56
    %p63 = scmp.eq.s32.totalorder %s25, 1
    %p64 = por %p62, %p63
    %p65 = scmp.ne.s32.totalorder %s56, %s57
    %p66 = scmp.eq.s32.totalorder %s25, 0
    %p67 = por %p65, %p66
    %p68 = scmp.ne.s32.totalorder %s56, %s57
    %p69 = scmp.eq.s32.totalorder %s26, 1
    %p70 = por %p68, %p69
    %p72 = scmp.ne.s32.totalorder %s57, %s71
    %p73 = scmp.eq.s32.totalorder %s26, 0
    %p74 = por %p72, %p73
    %s76 = sadd.s32 %s75, 1
    %p79 = scmp.eq.s32.totalorder %s20, 1
    %p80 = scmp.ne.s32.totalorder %s75, %s77
    %p81 = scmp.eq.s32.totalorder %s20, 0
    %p82 = por %p80, %p81
    %p83 = scmp.ne.s32.totalorder %s75, %s77
    %p84 = scmp.eq.s32.totalorder %s25, 1
    %p85 = por %p83, %p84
    %p86 = scmp.ne.s32.totalorder %s77, %s78
    %p87 = scmp.eq.s32.totalorder %s25, 0
    %p88 = por %p86, %p87
    %p89 = scmp.ne.s32.totalorder %s77, %s78
    %p90 = scmp.eq.s32.totalorder %s26, 1
    %p91 = por %p89, %p90
    %p93 = scmp.ne.s32.totalorder %s78, %s92
    %p94 = scmp.eq.s32.totalorder %s26, 0
    %p95 = por %p93, %p94
    %s97 = sadd.s32 %s96, 1
    %p100 = scmp.eq.s32.totalorder %s20, 1
    %p101 = scmp.ne.s32.totalorder %s96, %s98
    %p102 = scmp.eq.s32.totalorder %s20, 0
    %p103 = por %p101, %p102
    %p104 = scmp.ne.s32.totalorder %s96, %s98
    %p105 = scmp.eq.s32.totalorder %s25, 1
    %p106 = por %p104, %p105
    %p107 = scmp.ne.s32.totalorder %s98, %s99
    %p108 = scmp.eq.s32.totalorder %s25, 0
    %p109 = por %p107, %p108
    %p110 = scmp.ne.s32.totalorder %s98, %s99
    %p111 = scmp.eq.s32.totalorder %s26, 1
    %p112 = por %p110, %p111
    %p114 = scmp.ne.s32.totalorder %s99, %s113
    %p115 = scmp.eq.s32.totalorder %s26, 0
    %p116 = por %p114, %p115
    %s118 = sadd.s32 %s117, 1
    %p121 = scmp.eq.s32.totalorder %s20, 1
    %p122 = scmp.ne.s32.totalorder %s117, %s119
    %p123 = scmp.eq.s32.totalorder %s20, 0
    %p124 = por %p122, %p123
    %p125 = scmp.ne.s32.totalorder %s117, %s119
    %p126 = scmp.eq.s32.totalorder %s25, 1
    %p127 = por %p125, %p126
    %p128 = scmp.ne.s32.totalorder %s119, %s120
    %p129 = scmp.eq.s32.totalorder %s25, 0
    %p130 = por %p128, %p129
    %p131 = scmp.ne.s32.totalorder %s119, %s120
    %p132 = scmp.eq.s32.totalorder %s26, 1
    %p133 = por %p131, %p132
    %p135 = scmp.ne.s32.totalorder %s120, %s134
    %p136 = scmp.eq.s32.totalorder %s26, 0
    %p137 = por %p135, %p136
    %s139 = sadd.s32 %s138, 1
    %p142 = scmp.eq.s32.totalorder %s20, 1
    %p143 = scmp.ne.s32.totalorder %s138, %s140
    %p144 = scmp.eq.s32.totalorder %s20, 0
    %p145 = por %p143, %p144
    %p146 = scmp.ne.s32.totalorder %s138, %s140
    %p147 = scmp.eq.s32.totalorder %s25, 1
    %p148 = por %p146, %p147
    %p149 = scmp.ne.s32.totalorder %s140, %s141
    %p150 = scmp.eq.s32.totalorder %s25, 0
    %p151 = por %p149, %p150
    %p152 = scmp.ne.s32.totalorder %s140, %s141
    %p153 = scmp.eq.s32.totalorder %s26, 1
    %p154 = por %p152, %p153
    %p156 = scmp.ne.s32.totalorder %s141, %s155
    %p157 = scmp.eq.s32.totalorder %s26, 0
    %p158 = por %p156, %p157
    %s160 = sadd.s32 %s159, 1
    %p163 = scmp.eq.s32.totalorder %s20, 1
    %p164 = scmp.ne.s32.totalorder %s159, %s161
    %p165 = scmp.eq.s32.totalorder %s20, 0
    %p166 = por %p164, %p165
    %p167 = scmp.ne.s32.totalorder %s159, %s161
    %p168 = scmp.eq.s32.totalorder %s25, 1
    %p169 = por %p167, %p168
    %p170 = scmp.ne.s32.totalorder %s161, %s162
    %p171 = scmp.eq.s32.totalorder %s25, 0
    %p172 = por %p170, %p171
    %p173 = scmp.ne.s32.totalorder %s161, %s162
    %p174 = scmp.eq.s32.totalorder %s26, 1
    %p175 = por %p173, %p174
    %p177 = scmp.ne.s32.totalorder %s162, %s176
    %p178 = scmp.eq.s32.totalorder %s26, 0
    %p179 = por %p177, %p178
    %s181 = sadd.s32 %s180, 1
    %p184 = scmp.eq.s32.totalorder %s20, 1
    %p185 = scmp.ne.s32.totalorder %s180, %s182
    %p186 = scmp.eq.s32.totalorder %s20, 0
    %p187 = por %p185, %p186
    %p188 = scmp.ne.s32.totalorder %s180, %s182
    %p189 = scmp.eq.s32.totalorder %s25, 1
    %p190 = por %p188, %p189
    %p191 = scmp.ne.s32.totalorder %s182, %s183
    %p192 = scmp.eq.s32.totalorder %s25, 0
    %p193 = por %p191, %p192
    %p194 = scmp.ne.s32.totalorder %s182, %s183
    %p195 = scmp.eq.s32.totalorder %s26, 1
    %p196 = por %p194, %p195
    %p198 = scmp.ne.s32.totalorder %s183, %s197
    %p199 = scmp.eq.s32.totalorder %s26, 0
    %p200 = por %p198, %p199
    %s202 = sadd.s32 %s201, 1
    %p205 = scmp.eq.s32.totalorder %s20, 1
    %p206 = scmp.ne.s32.totalorder %s201, %s203
    %p207 = scmp.eq.s32.totalorder %s20, 0
    %p208 = por %p206, %p207
    %p209 = scmp.ne.s32.totalorder %s201, %s203
    %p210 = scmp.eq.s32.totalorder %s25, 1
    %p211 = por %p209, %p210
    %p212 = scmp.ne.s32.totalorder %s203, %s204
    %p213 = scmp.eq.s32.totalorder %s25, 0
    %p214 = por %p212, %p213
    %p215 = scmp.ne.s32.totalorder %s203, %s204
    %p216 = scmp.eq.s32.totalorder %s26, 1
    %p217 = por %p215, %p216
    %p219 = scmp.ne.s32.totalorder %s204, %s218
    %p220 = scmp.eq.s32.totalorder %s26, 0
    %p221 = por %p219, %p220
    %s223 = sadd.s32 %s222, 1
    %p226 = scmp.eq.s32.totalorder %s20, 1
    %p227 = scmp.ne.s32.totalorder %s222, %s224
    %p228 = scmp.eq.s32.totalorder %s20, 0
    %p229 = por %p227, %p228
    %p230 = scmp.ne.s32.totalorder %s222, %s224
    %p231 = scmp.eq.s32.totalorder %s25, 1
    %p232 = por %p230, %p231
    %p233 = scmp.ne.s32.totalorder %s224, %s225
    %p234 = scmp.eq.s32.totalorder %s25, 0
    %p235 = por %p233, %p234
    %p236 = scmp.ne.s32.totalorder %s224, %s225
    %p237 = scmp.eq.s32.totalorder %s26, 1
    %p238 = por %p236, %p237
    %p240 = scmp.ne.s32.totalorder %s225, %s239
    %p241 = scmp.eq.s32.totalorder %s26, 0
    %p242 = por %p240, %p241
    %s244 = sadd.s32 %s243, 1
    %p247 = scmp.eq.s32.totalorder %s20, 1
    %p248 = scmp.ne.s32.totalorder %s243, %s245
    %p249 = scmp.eq.s32.totalorder %s20, 0
    %p250 = por %p248, %p249
    %p251 = scmp.ne.s32.totalorder %s243, %s245
    %p252 = scmp.eq.s32.totalorder %s25, 1
    %p253 = por %p251, %p252
    %p254 = scmp.ne.s32.totalorder %s245, %s246
    %p255 = scmp.eq.s32.totalorder %s25, 0
    %p256 = por %p254, %p255
    %p257 = scmp.ne.s32.totalorder %s245, %s246
    %p258 = scmp.eq.s32.totalorder %s26, 1
    %p259 = por %p257, %p258
    %p261 = scmp.ne.s32.totalorder %s246, %s260
    %p262 = scmp.eq.s32.totalorder %s26, 0
    %p263 = por %p261, %p262
    %s265 = sadd.s32 %s264, 1
    %p268 = scmp.eq.s32.totalorder %s20, 1
    %p269 = scmp.ne.s32.totalorder %s264, %s266
    %p270 = scmp.eq.s32.totalorder %s20, 0
    %p271 = por %p269, %p270
    %p272 = scmp.ne.s32.totalorder %s264, %s266
    %p273 = scmp.eq.s32.totalorder %s25, 1
    %p274 = por %p272, %p273
    %p275 = scmp.ne.s32.totalorder %s266, %s267
    %p276 = scmp.eq.s32.totalorder %s25, 0
    %p277 = por %p275, %p276
    %p278 = scmp.ne.s32.totalorder %s266, %s267
    %p279 = scmp.eq.s32.totalorder %s26, 1
    %p280 = por %p278, %p279
    %p282 = scmp.ne.s32.totalorder %s267, %s281
    %p283 = scmp.eq.s32.totalorder %s26, 0
    %p284 = por %p282, %p283
    %s286 = sadd.s32 %s285, 1
    %p289 = scmp.eq.s32.totalorder %s20, 1
    %p290 = scmp.ne.s32.totalorder %s285, %s287
    %p291 = scmp.eq.s32.totalorder %s20, 0
    %p292 = por %p290, %p291
    %p293 = scmp.ne.s32.totalorder %s285, %s287
    %p294 = scmp.eq.s32.totalorder %s25, 1
    %p295 = por %p293, %p294
    %p296 = scmp.ne.s32.totalorder %s287, %s288
    %p297 = scmp.eq.s32.totalorder %s25, 0
    %p298 = por %p296, %p297
    %p299 = scmp.ne.s32.totalorder %s287, %s288
    %p300 = scmp.eq.s32.totalorder %s26, 1
    %p301 = por %p299, %p300
    %p303 = scmp.ne.s32.totalorder %s288, %s302
    %p304 = scmp.eq.s32.totalorder %s26, 0
    %p305 = por %p303, %p304
    %s307 = sadd.s32 %s306, 1
    %p310 = scmp.eq.s32.totalorder %s20, 1
    %p311 = scmp.ne.s32.totalorder %s306, %s308
    %p312 = scmp.eq.s32.totalorder %s20, 0
    %p313 = por %p311, %p312
    %p314 = scmp.ne.s32.totalorder %s306, %s308
    %p315 = scmp.eq.s32.totalorder %s25, 1
    %p316 = por %p314, %p315
    %p317 = scmp.ne.s32.totalorder %s308, %s309
    %p318 = scmp.eq.s32.totalorder %s25, 0
    %p319 = por %p317, %p318
    %p320 = scmp.ne.s32.totalorder %s308, %s309
    %p321 = scmp.eq.s32.totalorder %s26, 1
    %p322 = por %p320, %p321
    %p324 = scmp.ne.s32.totalorder %s309, %s323
    %p325 = scmp.eq.s32.totalorder %s26, 0
    %p326 = por %p324, %p325
    %s327 = ssub.s32 %s20, %s27
    %p328 = scmp.eq.s32.totalorder %s327, 0
    %s330 = sadd.s32 %s329, 1
    %s331 = scalar_select %p328, %s329, %s330
    %p334 = pneg %p328
    %p335 = scmp.eq.s32.totalorder %s20, 1
    %p336 = por %p334, %p335
    %p337 = scmp.ne.s32.totalorder %s329, %s332
    %p338 = scmp.eq.s32.totalorder %s20, 0
    %p339 = por %p337, %p338
    %p340 = scmp.ne.s32.totalorder %s329, %s332
    %p341 = scmp.eq.s32.totalorder %s25, 1
    %p342 = por %p340, %p341
    %p343 = scmp.ne.s32.totalorder %s332, %s333
    %p344 = scmp.eq.s32.totalorder %s25, 0
    %p345 = por %p343, %p344
    %p346 = scmp.ne.s32.totalorder %s332, %s333
    %p347 = scmp.eq.s32.totalorder %s26, 1
    %p348 = por %p346, %p347
    %p350 = scmp.ne.s32.totalorder %s333, %s349
    %p351 = scmp.eq.s32.totalorder %s26, 0
    %p352 = por %p350, %p351
    %p353 = scmp.le.s32.totalorder 1, %s20
    %p354 = scmp.lt.s32.totalorder %s20, 3
    %p355 = pnand %p353, %p354
    %p356 = pneg %p355
    // Predicated region
    $region9: #{gelayer_s2_forward.1} parent=5 // pred_check
      _
    $region10: #{gelayer_s2_forward.1} parent=5 // pred_check_branch
      %358 = sbr.rel (%p355) target = $region12
    $region11: #{gelayer_s2_forward.1} parent=5 // pred_region
      %s359 = ssub.s32 %s20, 1
      // Predicated region
      $region13: #{gelayer_s2_forward.1} parent=11 // pred_check
        %p360 = pneg %p67
      $region14: #{gelayer_s2_forward.1} parent=11 // pred_check_branch
        %362 = sbr.rel (%p360) target = $region16
      $region15: #{gelayer_s2_forward.1} parent=11 // pred_region
        _
      $region16: #{gelayer_s2_forward.1} parent=11 // pred_fallthru
        _
      // Predicated region
      $region17: #{gelayer_s2_forward.1} parent=11 // pred_check
        %p363 = pneg %p88
      $region18: #{gelayer_s2_forward.1} parent=11 // pred_check_branch
        %365 = sbr.rel (%p363) target = $region20
      $region19: #{gelayer_s2_forward.1} parent=11 // pred_region
        _
      $region20: #{gelayer_s2_forward.1} parent=11 // pred_fallthru
        _
      // Predicated region
      $region21: #{gelayer_s2_forward.1} parent=11 // pred_check
        %p366 = pneg %p109
      $region22: #{gelayer_s2_forward.1} parent=11 // pred_check_branch
        %368 = sbr.rel (%p366) target = $region24
      $region23: #{gelayer_s2_forward.1} parent=11 // pred_region
        _
      $region24: #{gelayer_s2_forward.1} parent=11 // pred_fallthru
        _
      // Predicated region
      $region25: #{gelayer_s2_forward.1} parent=11 // pred_check
        %p369 = pneg %p130
      $region26: #{gelayer_s2_forward.1} parent=11 // pred_check_branch
        %371 = sbr.rel (%p369) target = $region28
      $region27: #{gelayer_s2_forward.1} parent=11 // pred_region
        _
      $region28: #{gelayer_s2_forward.1} parent=11 // pred_fallthru
        _
      // Predicated region
      $region29: #{gelayer_s2_forward.1} parent=11 // pred_check
        %p372 = pneg %p151
      $region30: #{gelayer_s2_forward.1} parent=11 // pred_check_branch
        %374 = sbr.rel (%p372) target = $region32
      $region31: #{gelayer_s2_forward.1} parent=11 // pred_region
        _
      $region32: #{gelayer_s2_forward.1} parent=11 // pred_fallthru
        _
      // Predicated region
      $region33: #{gelayer_s2_forward.1} parent=11 // pred_check
        %p375 = pneg %p172
      $region34: #{gelayer_s2_forward.1} parent=11 // pred_check_branch
        %377 = sbr.rel (%p375) target = $region36
      $region35: #{gelayer_s2_forward.1} parent=11 // pred_region
        _
      $region36: #{gelayer_s2_forward.1} parent=11 // pred_fallthru
        _
      // Predicated region
      $region37: #{gelayer_s2_forward.1} parent=11 // pred_check
        %p378 = pneg %p193
      $region38: #{gelayer_s2_forward.1} parent=11 // pred_check_branch
        %380 = sbr.rel (%p378) target = $region40
      $region39: #{gelayer_s2_forward.1} parent=11 // pred_region
        _
      $region40: #{gelayer_s2_forward.1} parent=11 // pred_fallthru
        _
      // Predicated region
      $region41: #{gelayer_s2_forward.1} parent=11 // pred_check
        %p381 = pneg %p214
      $region42: #{gelayer_s2_forward.1} parent=11 // pred_check_branch
        %383 = sbr.rel (%p381) target = $region44
      $region43: #{gelayer_s2_forward.1} parent=11 // pred_region
        _
      $region44: #{gelayer_s2_forward.1} parent=11 // pred_fallthru
        _
      // Predicated region
      $region45: #{gelayer_s2_forward.1} parent=11 // pred_check
        %p384 = pneg %p235
      $region46: #{gelayer_s2_forward.1} parent=11 // pred_check_branch
        %386 = sbr.rel (%p384) target = $region48
      $region47: #{gelayer_s2_forward.1} parent=11 // pred_region
        _
      $region48: #{gelayer_s2_forward.1} parent=11 // pred_fallthru
        _
      // Predicated region
      $region49: #{gelayer_s2_forward.1} parent=11 // pred_check
        %p387 = pneg %p256
      $region50: #{gelayer_s2_forward.1} parent=11 // pred_check_branch
        %389 = sbr.rel (%p387) target = $region52
      $region51: #{gelayer_s2_forward.1} parent=11 // pred_region
        _
      $region52: #{gelayer_s2_forward.1} parent=11 // pred_fallthru
        _
      // Predicated region
      $region53: #{gelayer_s2_forward.1} parent=11 // pred_check
        %p390 = pneg %p277
      $region54: #{gelayer_s2_forward.1} parent=11 // pred_check_branch
        %392 = sbr.rel (%p390) target = $region56
      $region55: #{gelayer_s2_forward.1} parent=11 // pred_region
        _
      $region56: #{gelayer_s2_forward.1} parent=11 // pred_fallthru
        _
      // Predicated region
      $region57: #{gelayer_s2_forward.1} parent=11 // pred_check
        %p393 = pneg %p298
      $region58: #{gelayer_s2_forward.1} parent=11 // pred_check_branch
        %395 = sbr.rel (%p393) target = $region60
      $region59: #{gelayer_s2_forward.1} parent=11 // pred_region
        _
      $region60: #{gelayer_s2_forward.1} parent=11 // pred_fallthru
        _
      // Predicated region
      $region61: #{gelayer_s2_forward.1} parent=11 // pred_check
        %p396 = pneg %p319
      $region62: #{gelayer_s2_forward.1} parent=11 // pred_check_branch
        %398 = sbr.rel (%p396) target = $region64
      $region63: #{gelayer_s2_forward.1} parent=11 // pred_region
        _
      $region64: #{gelayer_s2_forward.1} parent=11 // pred_fallthru
        _
    $region12: #{gelayer_s2_forward.1} parent=5 // pred_fallthru
      _
    %p399 = scmp.lt.s32.totalorder %s20, 2
    // Predicated region
    $region65: #{gelayer_s2_forward.1} parent=5 // pred_check
      %p400 = pneg %p399
    $region66: #{gelayer_s2_forward.1} parent=5 // pred_check_branch
      %402 = sbr.rel (%p400) target = $region68
    $region67: #{gelayer_s2_forward.1} parent=5 // pred_region
      // Predicated region
      $region69: #{gelayer_s2_forward.1} parent=67 // pred_check
        %p403 = pneg %p40
      $region70: #{gelayer_s2_forward.1} parent=67 // pred_check_branch
        %405 = sbr.rel (%p403) target = $region72
      $region71: #{gelayer_s2_forward.1} parent=67 // pred_region
        %p406 = scmp.lt.s32.totalorder %s20, 1
        %s407 = scalar_select %p406, %s20, 1
        %s408 = smul.addr %s407, 56
        %s409 = smul.addr %s408, 8
        %s410 = scalar_lea.vmem %s0, %s409
      $region72: #{gelayer_s2_forward.1} parent=67 // pred_fallthru
        _
    $region68: #{gelayer_s2_forward.1} parent=5 // pred_fallthru
      _
    %p411 = scmp.le.s32.totalorder 1, %s20
    %p412 = scmp.lt.s32.totalorder %s20, 3
    %p413 = pnand %p411, %p412
    %p414 = pneg %p413
    // Predicated region
    $region73: #{gelayer_s2_forward.1} parent=5 // pred_check
      _
    $region74: #{gelayer_s2_forward.1} parent=5 // pred_check_branch
      %416 = sbr.rel (%p413) target = $region76
    $region75: #{gelayer_s2_forward.1} parent=5 // pred_region
      %s417 = ssub.s32 %s20, 1
      %p418 = scmp.lt.s32.totalorder %s25, 1
      %s419 = scalar_select %p418, %s25, 1
      %s420 = smul.addr %s419, 56
      %s421 = smul.addr %s420, 8
      %s422 = scalar_lea.vmem %s0, %s421
      %p423 = pneg %p46
      %p424 = pneg %p43
      %p425 = pneg %p67
      %p426 = pneg %p64
      %p427 = pneg %p88
      %p428 = pneg %p85
      %p429 = pneg %p109
      %p430 = pneg %p106
      %p431 = pneg %p130
      %p432 = pneg %p127
      %p433 = pneg %p151
      %p434 = pneg %p148
      %p435 = pneg %p172
      %p436 = pneg %p169
      %p437 = pneg %p193
      %p438 = pneg %p190
      %p439 = pneg %p214
      %p440 = pneg %p211
      %p441 = pneg %p235
      %p442 = pneg %p232
      %p443 = pneg %p256
      %p444 = pneg %p253
      %p445 = pneg %p277
      %p446 = pneg %p274
      %p447 = pneg %p298
      %p448 = pneg %p295
      %p449 = pneg %p319
      %p450 = pneg %p316
      %p451 = pneg %p345
      %p452 = pneg %p342
      %p453 = scmp.lt.s32.totalorder %s25, 1
      %s454 = scalar_select %p453, %s25, 1
      %s455 = smul.addr %s454, 16
      %s456 = smul.addr %s455, 8
      %s457 = scalar_lea.vmem %s14, %s456
      %p458 = scmp.lt.s32.totalorder %s25, 1
      %s459 = scalar_select %p458, %s25, 1
      %s460 = smul.addr %s459, 56
      %s461 = smul.addr %s460, 8
      %s462 = scalar_lea.vmem %s0, %s461
      %p463 = scmp.lt.s32.totalorder %s25, 1
      %s464 = scalar_select %p463, %s25, 1
      %s465 = smul.addr %s464, 16
      %s466 = smul.addr %s465, 8
      %s467 = scalar_lea.vmem %s14, %s466
      %v468 = vld [vmem:[%s462 + $0x7] sm:$0xff]
      %v469 = vld [vmem:[%s462 + $0xf] sm:$0xff]
      %v470 = vld [vmem:[%s462 + $0x17] sm:$0xff]
      %v471 = vld [vmem:[%s462 + $0x1f] sm:$0xff]
      %v472 = vld [vmem:[%s462 + $0x27] sm:$0xff]
      %v473 = vld [vmem:[%s462 + $0x2f] sm:$0xff]
      %v474 = vld [vmem:[%s462 + $0x37] sm:$0xff]
      %v475 = vld [vmem:[%s462 + $0x3f] sm:$0xff]
      %v476 = vld [vmem:[%s462 + $0x47] sm:$0xff]
      %v477 = vld [vmem:[%s462 + $0x4f] sm:$0xff]
      %v478 = vld [vmem:[%s462 + $0x57] sm:$0xff]
      %v479 = vld [vmem:[%s462 + $0x5f] sm:$0xff]
      %v480 = vld [vmem:[%s462 + $0x67] sm:$0xff]
      %v481 = vld [vmem:[%s462 + $0x6f] sm:$0xff]
      %v482 = vld [vmem:[%s462 + $0x77] sm:$0xff]
      %v483 = vld [vmem:[%s462 + $0x7f] sm:$0xff]
      %v484 = vld [vmem:[%s462 + $0x87] sm:$0xff]
      %v485 = vld [vmem:[%s462 + $0x8f] sm:$0xff]
      %v486 = vld [vmem:[%s462 + $0x97] sm:$0xff]
      %v487 = vld [vmem:[%s462 + $0x9f] sm:$0xff]
      %v488 = vld [vmem:[%s462 + $0xa7] sm:$0xff]
      %v489 = vld [vmem:[%s462 + $0xaf] sm:$0xff]
      %v490 = vld [vmem:[%s462 + $0xb7] sm:$0xff]
      %v491 = vld [vmem:[%s462 + $0xbf] sm:$0xff]
      %v492 = vld [vmem:[%s462 + $0xc7] sm:$0xff]
      %v493 = vld [vmem:[%s462 + $0xcf] sm:$0xff]
      %v494 = vld [vmem:[%s462 + $0xd7] sm:$0xff]
      %v495 = vld [vmem:[%s462 + $0xdf] sm:$0xff]
      %v496 = vld [vmem:[%s462 + $0xe7] sm:$0xff]
      %v497 = vld [vmem:[%s462 + $0xef] sm:$0xff]
      %v498 = vld [vmem:[%s462 + $0xf7] sm:$0xff]
      %v499 = vld [vmem:[%s462 + $0xff] sm:$0xff]
      %v500 = vld [vmem:[%s462 + $0x107] sm:$0xff]
      %v501 = vld [vmem:[%s462 + $0x10f] sm:$0xff]
      %v502 = vld [vmem:[%s462 + $0x117] sm:$0xff]
      %v503 = vld [vmem:[%s462 + $0x11f] sm:$0xff]
      %v504 = vld [vmem:[%s462 + $0x127] sm:$0xff]
      %v505 = vld [vmem:[%s462 + $0x12f] sm:$0xff]
      %v506 = vld [vmem:[%s462 + $0x137] sm:$0xff]
      %v507 = vld [vmem:[%s462 + $0x13f] sm:$0xff]
      %v508 = vld [vmem:[%s462 + $0x147] sm:$0xff]
      %v509 = vld [vmem:[%s462 + $0x14f] sm:$0xff]
      %v510 = vld [vmem:[%s462 + $0x157] sm:$0xff]
      %v511 = vld [vmem:[%s462 + $0x15f] sm:$0xff]
      %v512 = vld [vmem:[%s462 + $0x167] sm:$0xff]
      %v513 = vld [vmem:[%s462 + $0x16f] sm:$0xff]
      %v514 = vld [vmem:[%s462 + $0x177] sm:$0xff]
      %v515 = vld [vmem:[%s462 + $0x17f] sm:$0xff]
      %v516 = vld [vmem:[%s1] sm:$0xff]
      %v517 = vld [vmem:[%s1 + $0x8] sm:$0xff]
      %v518 = vld [vmem:[%s462 + $0x8] sm:$0xff]
      %v519 = vld [vmem:[%s462 + $0x10] sm:$0xff]
      %v520 = vld [vmem:[%s462 + $0x18] sm:$0xff]
      %v521 = vld [vmem:[%s462 + $0x20] sm:$0xff]
      %v522 = vld [vmem:[%s462 + $0x28] sm:$0xff]
      %v523 = vld [vmem:[%s462 + $0x30] sm:$0xff]
      %v524 = vld [vmem:[%s462 + $0x38] sm:$0xff]
      %v525 = vld [vmem:[%s462 + $0x40] sm:$0xff]
      %v526 = vld [vmem:[%s462 + $0x48] sm:$0xff]
      %v527 = vld [vmem:[%s462 + $0x50] sm:$0xff]
      %v528 = vld [vmem:[%s462 + $0x58] sm:$0xff]
      %v529 = vld [vmem:[%s462 + $0x60] sm:$0xff]
      %v530 = vld [vmem:[%s462 + $0x68] sm:$0xff]
      %v531 = vld [vmem:[%s462 + $0x70] sm:$0xff]
      %v532 = vld [vmem:[%s462 + $0x78] sm:$0xff]
      %v533 = vld [vmem:[%s462 + $0x80] sm:$0xff]
      %v534 = vld [vmem:[%s462 + $0x88] sm:$0xff]
      %v535 = vld [vmem:[%s462 + $0x90] sm:$0xff]
      %v536 = vld [vmem:[%s462 + $0x98] sm:$0xff]
      %v537 = vld [vmem:[%s462 + $0xa0] sm:$0xff]
      %v538 = vld [vmem:[%s462 + $0xa8] sm:$0xff]
      %v539 = vld [vmem:[%s462 + $0xb0] sm:$0xff]
      %v540 = vld [vmem:[%s462 + $0xb8] sm:$0xff]
      %v541 = vld [vmem:[%s462 + $0xc0] sm:$0xff]
      %v542 = vld [vmem:[%s462 + $0xc8] sm:$0xff]
      %v543 = vld [vmem:[%s462 + $0xd0] sm:$0xff]
      %v544 = vld [vmem:[%s462 + $0xd8] sm:$0xff]
      %v545 = vld [vmem:[%s462 + $0xe0] sm:$0xff]
      %v546 = vld [vmem:[%s462 + $0xe8] sm:$0xff]
      %v547 = vld [vmem:[%s462 + $0xf0] sm:$0xff]
      %v548 = vld [vmem:[%s462 + $0xf8] sm:$0xff]
      %v549 = vld [vmem:[%s462 + $0x100] sm:$0xff]
      %v550 = vld [vmem:[%s462 + $0x108] sm:$0xff]
      %v551 = vld [vmem:[%s462 + $0x110] sm:$0xff]
      %v552 = vld [vmem:[%s462 + $0x118] sm:$0xff]
      %v553 = vld [vmem:[%s462 + $0x120] sm:$0xff]
      %v554 = vld [vmem:[%s462 + $0x128] sm:$0xff]
      %v555 = vld [vmem:[%s462 + $0x130] sm:$0xff]
      %v556 = vld [vmem:[%s462 + $0x138] sm:$0xff]
      %v557 = vld [vmem:[%s462 + $0x140] sm:$0xff]
      %v558 = vld [vmem:[%s462 + $0x148] sm:$0xff]
      %v559 = vld [vmem:[%s462 + $0x150] sm:$0xff]
      %v560 = vld [vmem:[%s462 + $0x158] sm:$0xff]
      %v561 = vld [vmem:[%s462 + $0x160] sm:$0xff]
      %v562 = vld [vmem:[%s462 + $0x168] sm:$0xff]
      %v563 = vld [vmem:[%s462 + $0x170] sm:$0xff]
      %v564 = vld [vmem:[%s462 + $0x178] sm:$0xff]
      %v565 = vld [vmem:[%s462 + $0x180] sm:$0xff]
      %s566 = scalar_lea.vmem %s1, 16
      %v567 = vld [vmem:[%s566] sm:$0xff]
      %v568 = vld [vmem:[%s566 + $0x8] sm:$0xff]
      %vm569 = vcmask 130048
      %v571 = vsel %vm569, %v518, 0
      %v574 = vsel %vm569, %v519, 0
      %v577 = vsel %vm569, %v520, 0
      %v580 = vsel %vm569, %v521, 0
      %v583 = vsel %vm569, %v522, 0
      %v586 = vsel %vm569, %v523, 0
      %v589 = vsel %vm569, %v524, 0
      %v592 = vsel %vm569, %v525, 0
      %v595 = vsel %vm569, %v526, 0
      %v598 = vsel %vm569, %v527, 0
      %v601 = vsel %vm569, %v528, 0
      %v604 = vsel %vm569, %v529, 0
      %v607 = vsel %vm569, %v530, 0
      %v610 = vsel %vm569, %v531, 0
      %v613 = vsel %vm569, %v532, 0
      %v616 = vsel %vm569, %v533, 0
      %v619 = vsel %vm569, %v534, 0
      %v622 = vsel %vm569, %v535, 0
      %v625 = vsel %vm569, %v536, 0
      %v628 = vsel %vm569, %v537, 0
      %v631 = vsel %vm569, %v538, 0
      %v634 = vsel %vm569, %v539, 0
      %v637 = vsel %vm569, %v540, 0
      %v640 = vsel %vm569, %v541, 0
      %v643 = vsel %vm569, %v542, 0
      %v646 = vsel %vm569, %v543, 0
      %v649 = vsel %vm569, %v544, 0
      %v652 = vsel %vm569, %v545, 0
      %v655 = vsel %vm569, %v546, 0
      %v658 = vsel %vm569, %v547, 0
      %v661 = vsel %vm569, %v548, 0
      %v664 = vsel %vm569, %v549, 0
      %v667 = vsel %vm569, %v550, 0
      %v670 = vsel %vm569, %v551, 0
      %v673 = vsel %vm569, %v552, 0
      %v676 = vsel %vm569, %v553, 0
      %v679 = vsel %vm569, %v554, 0
      %v682 = vsel %vm569, %v555, 0
      %v685 = vsel %vm569, %v556, 0
      %v688 = vsel %vm569, %v557, 0
      %v691 = vsel %vm569, %v558, 0
      %v694 = vsel %vm569, %v559, 0
      %v697 = vsel %vm569, %v560, 0
      %v700 = vsel %vm569, %v561, 0
      %v703 = vsel %vm569, %v562, 0
      %v706 = vsel %vm569, %v563, 0
      %v709 = vsel %vm569, %v564, 0
      %v712 = vsel %vm569, %v565, 0
      %714 = vmatpush.msra.mxu0 0.0
      %715 = vmatpush.msra.mxu0 0.0
      %716 = vmatpush.msra.mxu0 0.0
      %717 = vmatpush.msra.mxu0 0.0
      %718 = vmatpush.msra.mxu0 0.0
      %719 = vmatpush.msra.mxu0 0.0
      %720 = vmatpush.msra.mxu0 0.0
      %721 = vmatpush.msra.mxu0 0.0
      %722 = vmatpush.msra.mxu0 0.0
      %723 = vmatpush.msra.mxu0 0.0
      %724 = vmatpush.msra.mxu0 0.0
      %725 = vmatpush.msra.mxu0 0.0
      %726 = vmatpush.msra.mxu0 0.0
      %727 = vmatpush.msra.mxu0 0.0
      %728 = vmatpush.msra.mxu0 %v568
      %729 = vmatpush.msra.mxu0 %v567
      %730 = vmatmul.f32.gmra.mxu0 %v571
      %v731 = vpop.f32.mrf.mxu0
      %v732 = vadd.f32 0.0, %v731
      %733 = vmatmul.f32.gmra.mxu0 %v574
      %v734 = vpop.f32.mrf.mxu0
      %v735 = vadd.f32 0.0, %v734
      %736 = vmatmul.f32.gmra.mxu0 %v577
      %v737 = vpop.f32.mrf.mxu0
      %v738 = vadd.f32 0.0, %v737
      %739 = vmatmul.f32.gmra.mxu0 %v580
      %v740 = vpop.f32.mrf.mxu0
      %v741 = vadd.f32 0.0, %v740
      %742 = vmatmul.f32.gmra.mxu0 %v583
      %v743 = vpop.f32.mrf.mxu0
      %v744 = vadd.f32 0.0, %v743
      %745 = vmatmul.f32.gmra.mxu0 %v586
      %v746 = vpop.f32.mrf.mxu0
      %v747 = vadd.f32 0.0, %v746
      %748 = vmatmul.f32.gmra.mxu0 %v589
      %v749 = vpop.f32.mrf.mxu0
      %v750 = vadd.f32 0.0, %v749
      %751 = vmatmul.f32.gmra.mxu0 %v592
      %v752 = vpop.f32.mrf.mxu0
      %v753 = vadd.f32 0.0, %v752
      %754 = vmatmul.f32.gmra.mxu0 %v595
      %v755 = vpop.f32.mrf.mxu0
      %v756 = vadd.f32 0.0, %v755
      %757 = vmatmul.f32.gmra.mxu0 %v598
      %v758 = vpop.f32.mrf.mxu0
      %v759 = vadd.f32 0.0, %v758
      %760 = vmatmul.f32.gmra.mxu0 %v601
      %v761 = vpop.f32.mrf.mxu0
      %v762 = vadd.f32 0.0, %v761
      %763 = vmatmul.f32.gmra.mxu0 %v604
      %v764 = vpop.f32.mrf.mxu0
      %v765 = vadd.f32 0.0, %v764
      %766 = vmatmul.f32.gmra.mxu0 %v607
      %v767 = vpop.f32.mrf.mxu0
      %v768 = vadd.f32 0.0, %v767
      %769 = vmatmul.f32.gmra.mxu0 %v610
      %v770 = vpop.f32.mrf.mxu0
      %v771 = vadd.f32 0.0, %v770
      %772 = vmatmul.f32.gmra.mxu0 %v613
      %v773 = vpop.f32.mrf.mxu0
      %v774 = vadd.f32 0.0, %v773
      %775 = vmatmul.f32.gmra.mxu0 %v616
      %v776 = vpop.f32.mrf.mxu0
      %v777 = vadd.f32 0.0, %v776
      %778 = vmatmul.f32.gmra.mxu0 %v619
      %v779 = vpop.f32.mrf.mxu0
      %v780 = vadd.f32 0.0, %v779
      %781 = vmatmul.f32.gmra.mxu0 %v622
      %v782 = vpop.f32.mrf.mxu0
      %v783 = vadd.f32 0.0, %v782
      %784 = vmatmul.f32.gmra.mxu0 %v625
      %v785 = vpop.f32.mrf.mxu0
      %v786 = vadd.f32 0.0, %v785
      %787 = vmatmul.f32.gmra.mxu0 %v628
      %v788 = vpop.f32.mrf.mxu0
      %v789 = vadd.f32 0.0, %v788
      %790 = vmatmul.f32.gmra.mxu0 %v631
      %v791 = vpop.f32.mrf.mxu0
      %v792 = vadd.f32 0.0, %v791
      %793 = vmatmul.f32.gmra.mxu0 %v634
      %v794 = vpop.f32.mrf.mxu0
      %v795 = vadd.f32 0.0, %v794
      %796 = vmatmul.f32.gmra.mxu0 %v637
      %v797 = vpop.f32.mrf.mxu0
      %v798 = vadd.f32 0.0, %v797
      %799 = vmatmul.f32.gmra.mxu0 %v640
      %v800 = vpop.f32.mrf.mxu0
      %v801 = vadd.f32 0.0, %v800
      %802 = vmatmul.f32.gmra.mxu0 %v643
      %v803 = vpop.f32.mrf.mxu0
      %v804 = vadd.f32 0.0, %v803
      %805 = vmatmul.f32.gmra.mxu0 %v646
      %v806 = vpop.f32.mrf.mxu0
      %v807 = vadd.f32 0.0, %v806
      %808 = vmatmul.f32.gmra.mxu0 %v649
      %v809 = vpop.f32.mrf.mxu0
      %v810 = vadd.f32 0.0, %v809
      %811 = vmatmul.f32.gmra.mxu0 %v652
      %v812 = vpop.f32.mrf.mxu0
      %v813 = vadd.f32 0.0, %v812
      %814 = vmatmul.f32.gmra.mxu0 %v655
      %v815 = vpop.f32.mrf.mxu0
      %v816 = vadd.f32 0.0, %v815
      %817 = vmatmul.f32.gmra.mxu0 %v658
      %v818 = vpop.f32.mrf.mxu0
      %v819 = vadd.f32 0.0, %v818
      %820 = vmatmul.f32.gmra.mxu0 %v661
      %v821 = vpop.f32.mrf.mxu0
      %v822 = vadd.f32 0.0, %v821
      %823 = vmatmul.f32.gmra.mxu0 %v664
      %v824 = vpop.f32.mrf.mxu0
      %v825 = vadd.f32 0.0, %v824
      %826 = vmatmul.f32.gmra.mxu0 %v667
      %v827 = vpop.f32.mrf.mxu0
      %v828 = vadd.f32 0.0, %v827
      %829 = vmatmul.f32.gmra.mxu0 %v670
      %v830 = vpop.f32.mrf.mxu0
      %v831 = vadd.f32 0.0, %v830
      %832 = vmatmul.f32.gmra.mxu0 %v673
      %v833 = vpop.f32.mrf.mxu0
      %v834 = vadd.f32 0.0, %v833
      %835 = vmatmul.f32.gmra.mxu0 %v676
      %v836 = vpop.f32.mrf.mxu0
      %v837 = vadd.f32 0.0, %v836
      %838 = vmatmul.f32.gmra.mxu0 %v679
      %v839 = vpop.f32.mrf.mxu0
      %v840 = vadd.f32 0.0, %v839
      %841 = vmatmul.f32.gmra.mxu0 %v682
      %v842 = vpop.f32.mrf.mxu0
      %v843 = vadd.f32 0.0, %v842
      %844 = vmatmul.f32.gmra.mxu0 %v685
      %v845 = vpop.f32.mrf.mxu0
      %v846 = vadd.f32 0.0, %v845
      %847 = vmatmul.f32.gmra.mxu0 %v688
      %v848 = vpop.f32.mrf.mxu0
      %v849 = vadd.f32 0.0, %v848
      %850 = vmatmul.f32.gmra.mxu0 %v691
      %v851 = vpop.f32.mrf.mxu0
      %v852 = vadd.f32 0.0, %v851
      %853 = vmatmul.f32.gmra.mxu0 %v694
      %v854 = vpop.f32.mrf.mxu0
      %v855 = vadd.f32 0.0, %v854
      %856 = vmatmul.f32.gmra.mxu0 %v697
      %v857 = vpop.f32.mrf.mxu0
      %v858 = vadd.f32 0.0, %v857
      %859 = vmatmul.f32.gmra.mxu0 %v700
      %v860 = vpop.f32.mrf.mxu0
      %v861 = vadd.f32 0.0, %v860
      %862 = vmatmul.f32.gmra.mxu0 %v703
      %v863 = vpop.f32.mrf.mxu0
      %v864 = vadd.f32 0.0, %v863
      %865 = vmatmul.f32.gmra.mxu0 %v706
      %v866 = vpop.f32.mrf.mxu0
      %v867 = vadd.f32 0.0, %v866
      %868 = vmatmul.f32.gmra.mxu0 %v709
      %v869 = vpop.f32.mrf.mxu0
      %v870 = vadd.f32 0.0, %v869
      %871 = vmatmul.f32.gmra.mxu0 %v712
      %v872 = vpop.f32.mrf.mxu0
      %v873 = vadd.f32 0.0, %v872
      %874 = vdwg.mxu0
      %v876 = vsel %vm569, %v468, 0
      %v879 = vsel %vm569, %v469, 0
      %v882 = vsel %vm569, %v470, 0
      %v885 = vsel %vm569, %v471, 0
      %v888 = vsel %vm569, %v472, 0
      %v891 = vsel %vm569, %v473, 0
      %v894 = vsel %vm569, %v474, 0
      %v897 = vsel %vm569, %v475, 0
      %v900 = vsel %vm569, %v476, 0
      %v903 = vsel %vm569, %v477, 0
      %v906 = vsel %vm569, %v478, 0
      %v909 = vsel %vm569, %v479, 0
      %v912 = vsel %vm569, %v480, 0
      %v915 = vsel %vm569, %v481, 0
      %v918 = vsel %vm569, %v482, 0
      %v921 = vsel %vm569, %v483, 0
      %v924 = vsel %vm569, %v484, 0
      %v927 = vsel %vm569, %v485, 0
      %v930 = vsel %vm569, %v486, 0
      %v933 = vsel %vm569, %v487, 0
      %v936 = vsel %vm569, %v488, 0
      %v939 = vsel %vm569, %v489, 0
      %v942 = vsel %vm569, %v490, 0
      %v945 = vsel %vm569, %v491, 0
      %v948 = vsel %vm569, %v492, 0
      %v951 = vsel %vm569, %v493, 0
      %v954 = vsel %vm569, %v494, 0
      %v957 = vsel %vm569, %v495, 0
      %v960 = vsel %vm569, %v496, 0
      %v963 = vsel %vm569, %v497, 0
      %v966 = vsel %vm569, %v498, 0
      %v969 = vsel %vm569, %v499, 0
      %v972 = vsel %vm569, %v500, 0
      %v975 = vsel %vm569, %v501, 0
      %v978 = vsel %vm569, %v502, 0
      %v981 = vsel %vm569, %v503, 0
      %v984 = vsel %vm569, %v504, 0
      %v987 = vsel %vm569, %v505, 0
      %v990 = vsel %vm569, %v506, 0
      %v993 = vsel %vm569, %v507, 0
      %v996 = vsel %vm569, %v508, 0
      %v999 = vsel %vm569, %v509, 0
      %v1002 = vsel %vm569, %v510, 0
      %v1005 = vsel %vm569, %v511, 0
      %v1008 = vsel %vm569, %v512, 0
      %v1011 = vsel %vm569, %v513, 0
      %v1014 = vsel %vm569, %v514, 0
      %v1017 = vsel %vm569, %v515, 0
      %1019 = vmatpush.msra.mxu0 0.0
      %1020 = vmatpush.msra.mxu0 0.0
      %1021 = vmatpush.msra.mxu0 0.0
      %1022 = vmatpush.msra.mxu0 0.0
      %1023 = vmatpush.msra.mxu0 0.0
      %1024 = vmatpush.msra.mxu0 0.0
      %1025 = vmatpush.msra.mxu0 0.0
      %1026 = vmatpush.msra.mxu0 0.0
      %1027 = vmatpush.msra.mxu0 0.0
      %1028 = vmatpush.msra.mxu0 0.0
      %1029 = vmatpush.msra.mxu0 0.0
      %1030 = vmatpush.msra.mxu0 0.0
      %1031 = vmatpush.msra.mxu0 0.0
      %1032 = vmatpush.msra.mxu0 0.0
      %1033 = vmatpush.msra.mxu0 %v517
      %1034 = vmatpush.msra.mxu0 %v516
      %1035 = vmatmul.f32.gmra.mxu0 %v876
      %v1036 = vpop.f32.mrf.mxu0
      %v1037 = vadd.f32 %v732, %v1036
      %1038 = vmatmul.f32.gmra.mxu0 %v879
      %v1039 = vpop.f32.mrf.mxu0
      %v1040 = vadd.f32 %v735, %v1039
      %1041 = vmatmul.f32.gmra.mxu0 %v882
      %v1042 = vpop.f32.mrf.mxu0
      %v1043 = vadd.f32 %v738, %v1042
      %1044 = vmatmul.f32.gmra.mxu0 %v885
      %v1045 = vpop.f32.mrf.mxu0
      %v1046 = vadd.f32 %v741, %v1045
      %1047 = vmatmul.f32.gmra.mxu0 %v888
      %v1048 = vpop.f32.mrf.mxu0
      %v1049 = vadd.f32 %v744, %v1048
      %1050 = vmatmul.f32.gmra.mxu0 %v891
      %v1051 = vpop.f32.mrf.mxu0
      %v1052 = vadd.f32 %v747, %v1051
      %1053 = vmatmul.f32.gmra.mxu0 %v894
      %v1054 = vpop.f32.mrf.mxu0
      %v1055 = vadd.f32 %v750, %v1054
      %1056 = vmatmul.f32.gmra.mxu0 %v897
      %v1057 = vpop.f32.mrf.mxu0
      %v1058 = vadd.f32 %v753, %v1057
      %1059 = vmatmul.f32.gmra.mxu0 %v900
      %v1060 = vpop.f32.mrf.mxu0
      %v1061 = vadd.f32 %v756, %v1060
      %1062 = vmatmul.f32.gmra.mxu0 %v903
      %v1063 = vpop.f32.mrf.mxu0
      %v1064 = vadd.f32 %v759, %v1063
      %1065 = vmatmul.f32.gmra.mxu0 %v906
      %v1066 = vpop.f32.mrf.mxu0
      %v1067 = vadd.f32 %v762, %v1066
      %1068 = vmatmul.f32.gmra.mxu0 %v909
      %v1069 = vpop.f32.mrf.mxu0
      %v1070 = vadd.f32 %v765, %v1069
      %1071 = vmatmul.f32.gmra.mxu0 %v912
      %v1072 = vpop.f32.mrf.mxu0
      %v1073 = vadd.f32 %v768, %v1072
      %1074 = vmatmul.f32.gmra.mxu0 %v915
      %v1075 = vpop.f32.mrf.mxu0
      %v1076 = vadd.f32 %v771, %v1075
      %1077 = vmatmul.f32.gmra.mxu0 %v918
      %v1078 = vpop.f32.mrf.mxu0
      %v1079 = vadd.f32 %v774, %v1078
      %1080 = vmatmul.f32.gmra.mxu0 %v921
      %v1081 = vpop.f32.mrf.mxu0
      %v1082 = vadd.f32 %v777, %v1081
      %1083 = vmatmul.f32.gmra.mxu0 %v924
      %v1084 = vpop.f32.mrf.mxu0
      %v1085 = vadd.f32 %v780, %v1084
      %1086 = vmatmul.f32.gmra.mxu0 %v927
      %v1087 = vpop.f32.mrf.mxu0
      %v1088 = vadd.f32 %v783, %v1087
      %1089 = vmatmul.f32.gmra.mxu0 %v930
      %v1090 = vpop.f32.mrf.mxu0
      %v1091 = vadd.f32 %v786, %v1090
      %1092 = vmatmul.f32.gmra.mxu0 %v933
      %v1093 = vpop.f32.mrf.mxu0
      %v1094 = vadd.f32 %v789, %v1093
      %1095 = vmatmul.f32.gmra.mxu0 %v936
      %v1096 = vpop.f32.mrf.mxu0
      %v1097 = vadd.f32 %v792, %v1096
      %1098 = vmatmul.f32.gmra.mxu0 %v939
      %v1099 = vpop.f32.mrf.mxu0
      %v1100 = vadd.f32 %v795, %v1099
      %1101 = vmatmul.f32.gmra.mxu0 %v942
      %v1102 = vpop.f32.mrf.mxu0
      %v1103 = vadd.f32 %v798, %v1102
      %1104 = vmatmul.f32.gmra.mxu0 %v945
      %v1105 = vpop.f32.mrf.mxu0
      %v1106 = vadd.f32 %v801, %v1105
      %1107 = vmatmul.f32.gmra.mxu0 %v948
      %v1108 = vpop.f32.mrf.mxu0
      %v1109 = vadd.f32 %v804, %v1108
      %1110 = vmatmul.f32.gmra.mxu0 %v951
      %v1111 = vpop.f32.mrf.mxu0
      %v1112 = vadd.f32 %v807, %v1111
      %1113 = vmatmul.f32.gmra.mxu0 %v954
      %v1114 = vpop.f32.mrf.mxu0
      %v1115 = vadd.f32 %v810, %v1114
      %1116 = vmatmul.f32.gmra.mxu0 %v957
      %v1117 = vpop.f32.mrf.mxu0
      %v1118 = vadd.f32 %v813, %v1117
      %1119 = vmatmul.f32.gmra.mxu0 %v960
      %v1120 = vpop.f32.mrf.mxu0
      %v1121 = vadd.f32 %v816, %v1120
      %1122 = vmatmul.f32.gmra.mxu0 %v963
      %v1123 = vpop.f32.mrf.mxu0
      %v1124 = vadd.f32 %v819, %v1123
      %1125 = vmatmul.f32.gmra.mxu0 %v966
      %v1126 = vpop.f32.mrf.mxu0
      %v1127 = vadd.f32 %v822, %v1126
      %1128 = vmatmul.f32.gmra.mxu0 %v969
      %v1129 = vpop.f32.mrf.mxu0
      %v1130 = vadd.f32 %v825, %v1129
      %1131 = vmatmul.f32.gmra.mxu0 %v972
      %v1132 = vpop.f32.mrf.mxu0
      %v1133 = vadd.f32 %v828, %v1132
      %1134 = vmatmul.f32.gmra.mxu0 %v975
      %v1135 = vpop.f32.mrf.mxu0
      %v1136 = vadd.f32 %v831, %v1135
      %1137 = vmatmul.f32.gmra.mxu0 %v978
      %v1138 = vpop.f32.mrf.mxu0
      %v1139 = vadd.f32 %v834, %v1138
      %1140 = vmatmul.f32.gmra.mxu0 %v981
      %v1141 = vpop.f32.mrf.mxu0
      %v1142 = vadd.f32 %v837, %v1141
      %1143 = vmatmul.f32.gmra.mxu0 %v984
      %v1144 = vpop.f32.mrf.mxu0
      %v1145 = vadd.f32 %v840, %v1144
      %1146 = vmatmul.f32.gmra.mxu0 %v987
      %v1147 = vpop.f32.mrf.mxu0
      %v1148 = vadd.f32 %v843, %v1147
      %1149 = vmatmul.f32.gmra.mxu0 %v990
      %v1150 = vpop.f32.mrf.mxu0
      %v1151 = vadd.f32 %v846, %v1150
      %1152 = vmatmul.f32.gmra.mxu0 %v993
      %v1153 = vpop.f32.mrf.mxu0
      %v1154 = vadd.f32 %v849, %v1153
      %1155 = vmatmul.f32.gmra.mxu0 %v996
      %v1156 = vpop.f32.mrf.mxu0
      %v1157 = vadd.f32 %v852, %v1156
      %1158 = vmatmul.f32.gmra.mxu0 %v999
      %v1159 = vpop.f32.mrf.mxu0
      %v1160 = vadd.f32 %v855, %v1159
      %1161 = vmatmul.f32.gmra.mxu0 %v1002
      %v1162 = vpop.f32.mrf.mxu0
      %v1163 = vadd.f32 %v858, %v1162
      %1164 = vmatmul.f32.gmra.mxu0 %v1005
      %v1165 = vpop.f32.mrf.mxu0
      %v1166 = vadd.f32 %v861, %v1165
      %1167 = vmatmul.f32.gmra.mxu0 %v1008
      %v1168 = vpop.f32.mrf.mxu0
      %v1169 = vadd.f32 %v864, %v1168
      %1170 = vmatmul.f32.gmra.mxu0 %v1011
      %v1171 = vpop.f32.mrf.mxu0
      %v1172 = vadd.f32 %v867, %v1171
      %1173 = vmatmul.f32.gmra.mxu0 %v1014
      %v1174 = vpop.f32.mrf.mxu0
      %v1175 = vadd.f32 %v870, %v1174
      %1176 = vmatmul.f32.gmra.mxu0 %v1017
      %v1177 = vpop.f32.mrf.mxu0
      %v1178 = vadd.f32 %v873, %v1177
      %1179 = vdwg.mxu0
      %v1180 = vld [vmem:[%s462 + $0x9] sm:$0xff]
      %v1181 = vld [vmem:[%s462 + $0x11] sm:$0xff]
      %v1182 = vld [vmem:[%s462 + $0x19] sm:$0xff]
      %v1183 = vld [vmem:[%s462 + $0x21] sm:$0xff]
      %v1184 = vld [vmem:[%s462 + $0x29] sm:$0xff]
      %v1185 = vld [vmem:[%s462 + $0x31] sm:$0xff]
      %v1186 = vld [vmem:[%s462 + $0x39] sm:$0xff]
      %v1187 = vld [vmem:[%s462 + $0x41] sm:$0xff]
      %v1188 = vld [vmem:[%s462 + $0x49] sm:$0xff]
      %v1189 = vld [vmem:[%s462 + $0x51] sm:$0xff]
      %v1190 = vld [vmem:[%s462 + $0x59] sm:$0xff]
      %v1191 = vld [vmem:[%s462 + $0x61] sm:$0xff]
      %v1192 = vld [vmem:[%s462 + $0x69] sm:$0xff]
      %v1193 = vld [vmem:[%s462 + $0x71] sm:$0xff]
      %v1194 = vld [vmem:[%s462 + $0x79] sm:$0xff]
      %v1195 = vld [vmem:[%s462 + $0x81] sm:$0xff]
      %v1196 = vld [vmem:[%s462 + $0x89] sm:$0xff]
      %v1197 = vld [vmem:[%s462 + $0x91] sm:$0xff]
      %v1198 = vld [vmem:[%s462 + $0x99] sm:$0xff]
      %v1199 = vld [vmem:[%s462 + $0xa1] sm:$0xff]
      %v1200 = vld [vmem:[%s462 + $0xa9] sm:$0xff]
      %v1201 = vld [vmem:[%s462 + $0xb1] sm:$0xff]
      %v1202 = vld [vmem:[%s462 + $0xb9] sm:$0xff]
      %v1203 = vld [vmem:[%s462 + $0xc1] sm:$0xff]
      %v1204 = vld [vmem:[%s462 + $0xc9] sm:$0xff]
      %v1205 = vld [vmem:[%s462 + $0xd1] sm:$0xff]
      %v1206 = vld [vmem:[%s462 + $0xd9] sm:$0xff]
      %v1207 = vld [vmem:[%s462 + $0xe1] sm:$0xff]
      %v1208 = vld [vmem:[%s462 + $0xe9] sm:$0xff]
      %v1209 = vld [vmem:[%s462 + $0xf1] sm:$0xff]
      %v1210 = vld [vmem:[%s462 + $0xf9] sm:$0xff]
      %v1211 = vld [vmem:[%s462 + $0x101] sm:$0xff]
      %v1212 = vld [vmem:[%s462 + $0x109] sm:$0xff]
      %v1213 = vld [vmem:[%s462 + $0x111] sm:$0xff]
      %v1214 = vld [vmem:[%s462 + $0x119] sm:$0xff]
      %v1215 = vld [vmem:[%s462 + $0x121] sm:$0xff]
      %v1216 = vld [vmem:[%s462 + $0x129] sm:$0xff]
      %v1217 = vld [vmem:[%s462 + $0x131] sm:$0xff]
      %v1218 = vld [vmem:[%s462 + $0x139] sm:$0xff]
      %v1219 = vld [vmem:[%s462 + $0x141] sm:$0xff]
      %v1220 = vld [vmem:[%s462 + $0x149] sm:$0xff]
      %v1221 = vld [vmem:[%s462 + $0x151] sm:$0xff]
      %v1222 = vld [vmem:[%s462 + $0x159] sm:$0xff]
      %v1223 = vld [vmem:[%s462 + $0x161] sm:$0xff]
      %v1224 = vld [vmem:[%s462 + $0x169] sm:$0xff]
      %v1225 = vld [vmem:[%s462 + $0x171] sm:$0xff]
      %v1226 = vld [vmem:[%s462 + $0x179] sm:$0xff]
      %v1227 = vld [vmem:[%s462 + $0x181] sm:$0xff]
      %s1228 = scalar_lea.vmem %s1, 32
      %v1229 = vld [vmem:[%s1228] sm:$0xff]
      %v1230 = vld [vmem:[%s1228 + $0x8] sm:$0xff]
      %v1232 = vsel %vm569, %v1180, 0
      %v1235 = vsel %vm569, %v1181, 0
      %v1238 = vsel %vm569, %v1182, 0
      %v1241 = vsel %vm569, %v1183, 0
      %v1244 = vsel %vm569, %v1184, 0
      %v1247 = vsel %vm569, %v1185, 0
      %v1250 = vsel %vm569, %v1186, 0
      %v1253 = vsel %vm569, %v1187, 0
      %v1256 = vsel %vm569, %v1188, 0
      %v1259 = vsel %vm569, %v1189, 0
      %v1262 = vsel %vm569, %v1190, 0
      %v1265 = vsel %vm569, %v1191, 0
      %v1268 = vsel %vm569, %v1192, 0
      %v1271 = vsel %vm569, %v1193, 0
      %v1274 = vsel %vm569, %v1194, 0
      %v1277 = vsel %vm569, %v1195, 0
      %v1280 = vsel %vm569, %v1196, 0
      %v1283 = vsel %vm569, %v1197, 0
      %v1286 = vsel %vm569, %v1198, 0
      %v1289 = vsel %vm569, %v1199, 0
      %v1292 = vsel %vm569, %v1200, 0
      %v1295 = vsel %vm569, %v1201, 0
      %v1298 = vsel %vm569, %v1202, 0
      %v1301 = vsel %vm569, %v1203, 0
      %v1304 = vsel %vm569, %v1204, 0
      %v1307 = vsel %vm569, %v1205, 0
      %v1310 = vsel %vm569, %v1206, 0
      %v1313 = vsel %vm569, %v1207, 0
      %v1316 = vsel %vm569, %v1208, 0
      %v1319 = vsel %vm569, %v1209, 0
      %v1322 = vsel %vm569, %v1210, 0
      %v1325 = vsel %vm569, %v1211, 0
      %v1328 = vsel %vm569, %v1212, 0
      %v1331 = vsel %vm569, %v1213, 0
      %v1334 = vsel %vm569, %v1214, 0
      %v1337 = vsel %vm569, %v1215, 0
      %v1340 = vsel %vm569, %v1216, 0
      %v1343 = vsel %vm569, %v1217, 0
      %v1346 = vsel %vm569, %v1218, 0
      %v1349 = vsel %vm569, %v1219, 0
      %v1352 = vsel %vm569, %v1220, 0
      %v1355 = vsel %vm569, %v1221, 0
      %v1358 = vsel %vm569, %v1222, 0
      %v1361 = vsel %vm569, %v1223, 0
      %v1364 = vsel %vm569, %v1224, 0
      %v1367 = vsel %vm569, %v1225, 0
      %v1370 = vsel %vm569, %v1226, 0
      %v1373 = vsel %vm569, %v1227, 0
      %1375 = vmatpush.msra.mxu0 0.0
      %1376 = vmatpush.msra.mxu0 0.0
      %1377 = vmatpush.msra.mxu0 0.0
      %1378 = vmatpush.msra.mxu0 0.0
      %1379 = vmatpush.msra.mxu0 0.0
      %1380 = vmatpush.msra.mxu0 0.0
      %1381 = vmatpush.msra.mxu0 0.0
      %1382 = vmatpush.msra.mxu0 0.0
      %1383 = vmatpush.msra.mxu0 0.0
      %1384 = vmatpush.msra.mxu0 0.0
      %1385 = vmatpush.msra.mxu0 0.0
      %1386 = vmatpush.msra.mxu0 0.0
      %1387 = vmatpush.msra.mxu0 0.0
      %1388 = vmatpush.msra.mxu0 0.0
      %1389 = vmatpush.msra.mxu0 %v1230
      %1390 = vmatpush.msra.mxu0 %v1229
      %1391 = vmatmul.f32.gmra.mxu0 %v1232
      %v1392 = vpop.f32.mrf.mxu0
      %v1393 = vadd.f32 0.0, %v1392
      %1394 = vmatmul.f32.gmra.mxu0 %v1235
      %v1395 = vpop.f32.mrf.mxu0
      %v1396 = vadd.f32 0.0, %v1395
      %1397 = vmatmul.f32.gmra.mxu0 %v1238
      %v1398 = vpop.f32.mrf.mxu0
      %v1399 = vadd.f32 0.0, %v1398
      %1400 = vmatmul.f32.gmra.mxu0 %v1241
      %v1401 = vpop.f32.mrf.mxu0
      %v1402 = vadd.f32 0.0, %v1401
      %1403 = vmatmul.f32.gmra.mxu0 %v1244
      %v1404 = vpop.f32.mrf.mxu0
      %v1405 = vadd.f32 0.0, %v1404
      %1406 = vmatmul.f32.gmra.mxu0 %v1247
      %v1407 = vpop.f32.mrf.mxu0
      %v1408 = vadd.f32 0.0, %v1407
      %1409 = vmatmul.f32.gmra.mxu0 %v1250
      %v1410 = vpop.f32.mrf.mxu0
      %v1411 = vadd.f32 0.0, %v1410
      %1412 = vmatmul.f32.gmra.mxu0 %v1253
      %v1413 = vpop.f32.mrf.mxu0
      %v1414 = vadd.f32 0.0, %v1413
      %1415 = vmatmul.f32.gmra.mxu0 %v1256
      %v1416 = vpop.f32.mrf.mxu0
      %v1417 = vadd.f32 0.0, %v1416
      %1418 = vmatmul.f32.gmra.mxu0 %v1259
      %v1419 = vpop.f32.mrf.mxu0
      %v1420 = vadd.f32 0.0, %v1419
      %1421 = vmatmul.f32.gmra.mxu0 %v1262
      %v1422 = vpop.f32.mrf.mxu0
      %v1423 = vadd.f32 0.0, %v1422
      %1424 = vmatmul.f32.gmra.mxu0 %v1265
      %v1425 = vpop.f32.mrf.mxu0
      %v1426 = vadd.f32 0.0, %v1425
      %1427 = vmatmul.f32.gmra.mxu0 %v1268
      %v1428 = vpop.f32.mrf.mxu0
      %v1429 = vadd.f32 0.0, %v1428
      %1430 = vmatmul.f32.gmra.mxu0 %v1271
      %v1431 = vpop.f32.mrf.mxu0
      %v1432 = vadd.f32 0.0, %v1431
      %1433 = vmatmul.f32.gmra.mxu0 %v1274
      %v1434 = vpop.f32.mrf.mxu0
      %v1435 = vadd.f32 0.0, %v1434
      %1436 = vmatmul.f32.gmra.mxu0 %v1277
      %v1437 = vpop.f32.mrf.mxu0
      %v1438 = vadd.f32 0.0, %v1437
      %1439 = vmatmul.f32.gmra.mxu0 %v1280
      %v1440 = vpop.f32.mrf.mxu0
      %v1441 = vadd.f32 0.0, %v1440
      %1442 = vmatmul.f32.gmra.mxu0 %v1283
      %v1443 = vpop.f32.mrf.mxu0
      %v1444 = vadd.f32 0.0, %v1443
      %1445 = vmatmul.f32.gmra.mxu0 %v1286
      %v1446 = vpop.f32.mrf.mxu0
      %v1447 = vadd.f32 0.0, %v1446
      %1448 = vmatmul.f32.gmra.mxu0 %v1289
      %v1449 = vpop.f32.mrf.mxu0
      %v1450 = vadd.f32 0.0, %v1449
      %1451 = vmatmul.f32.gmra.mxu0 %v1292
      %v1452 = vpop.f32.mrf.mxu0
      %v1453 = vadd.f32 0.0, %v1452
      %1454 = vmatmul.f32.gmra.mxu0 %v1295
      %v1455 = vpop.f32.mrf.mxu0
      %v1456 = vadd.f32 0.0, %v1455
      %1457 = vmatmul.f32.gmra.mxu0 %v1298
      %v1458 = vpop.f32.mrf.mxu0
      %v1459 = vadd.f32 0.0, %v1458
      %1460 = vmatmul.f32.gmra.mxu0 %v1301
      %v1461 = vpop.f32.mrf.mxu0
      %v1462 = vadd.f32 0.0, %v1461
      %1463 = vmatmul.f32.gmra.mxu0 %v1304
      %v1464 = vpop.f32.mrf.mxu0
      %v1465 = vadd.f32 0.0, %v1464
      %1466 = vmatmul.f32.gmra.mxu0 %v1307
      %v1467 = vpop.f32.mrf.mxu0
      %v1468 = vadd.f32 0.0, %v1467
      %1469 = vmatmul.f32.gmra.mxu0 %v1310
      %v1470 = vpop.f32.mrf.mxu0
      %v1471 = vadd.f32 0.0, %v1470
      %1472 = vmatmul.f32.gmra.mxu0 %v1313
      %v1473 = vpop.f32.mrf.mxu0
      %v1474 = vadd.f32 0.0, %v1473
      %1475 = vmatmul.f32.gmra.mxu0 %v1316
      %v1476 = vpop.f32.mrf.mxu0
      %v1477 = vadd.f32 0.0, %v1476
      %1478 = vmatmul.f32.gmra.mxu0 %v1319
      %v1479 = vpop.f32.mrf.mxu0
      %v1480 = vadd.f32 0.0, %v1479
      %1481 = vmatmul.f32.gmra.mxu0 %v1322
      %v1482 = vpop.f32.mrf.mxu0
      %v1483 = vadd.f32 0.0, %v1482
      %1484 = vmatmul.f32.gmra.mxu0 %v1325
      %v1485 = vpop.f32.mrf.mxu0
      %v1486 = vadd.f32 0.0, %v1485
      %1487 = vmatmul.f32.gmra.mxu0 %v1328
      %v1488 = vpop.f32.mrf.mxu0
      %v1489 = vadd.f32 0.0, %v1488
      %1490 = vmatmul.f32.gmra.mxu0 %v1331
      %v1491 = vpop.f32.mrf.mxu0
      %v1492 = vadd.f32 0.0, %v1491
      %1493 = vmatmul.f32.gmra.mxu0 %v1334
      %v1494 = vpop.f32.mrf.mxu0
      %v1495 = vadd.f32 0.0, %v1494
      %1496 = vmatmul.f32.gmra.mxu0 %v1337
      %v1497 = vpop.f32.mrf.mxu0
      %v1498 = vadd.f32 0.0, %v1497
      %1499 = vmatmul.f32.gmra.mxu0 %v1340
      %v1500 = vpop.f32.mrf.mxu0
      %v1501 = vadd.f32 0.0, %v1500
      %1502 = vmatmul.f32.gmra.mxu0 %v1343
      %v1503 = vpop.f32.mrf.mxu0
      %v1504 = vadd.f32 0.0, %v1503
      %1505 = vmatmul.f32.gmra.mxu0 %v1346
      %v1506 = vpop.f32.mrf.mxu0
      %v1507 = vadd.f32 0.0, %v1506
      %1508 = vmatmul.f32.gmra.mxu0 %v1349
      %v1509 = vpop.f32.mrf.mxu0
      %v1510 = vadd.f32 0.0, %v1509
      %1511 = vmatmul.f32.gmra.mxu0 %v1352
      %v1512 = vpop.f32.mrf.mxu0
      %v1513 = vadd.f32 0.0, %v1512
      %1514 = vmatmul.f32.gmra.mxu0 %v1355
      %v1515 = vpop.f32.mrf.mxu0
      %v1516 = vadd.f32 0.0, %v1515
      %1517 = vmatmul.f32.gmra.mxu0 %v1358
      %v1518 = vpop.f32.mrf.mxu0
      %v1519 = vadd.f32 0.0, %v1518
      %1520 = vmatmul.f32.gmra.mxu0 %v1361
      %v1521 = vpop.f32.mrf.mxu0
      %v1522 = vadd.f32 0.0, %v1521
      %1523 = vmatmul.f32.gmra.mxu0 %v1364
      %v1524 = vpop.f32.mrf.mxu0
      %v1525 = vadd.f32 0.0, %v1524
      %1526 = vmatmul.f32.gmra.mxu0 %v1367
      %v1527 = vpop.f32.mrf.mxu0
      %v1528 = vadd.f32 0.0, %v1527
      %1529 = vmatmul.f32.gmra.mxu0 %v1370
      %v1530 = vpop.f32.mrf.mxu0
      %v1531 = vadd.f32 0.0, %v1530
      %1532 = vmatmul.f32.gmra.mxu0 %v1373
      %v1533 = vpop.f32.mrf.mxu0
      %v1534 = vadd.f32 0.0, %v1533
      %1535 = vdwg.mxu0
      %v1536 = vadd.f32 %v1037, %v1393
      %v1537 = vadd.f32 %v1040, %v1396
      %v1538 = vadd.f32 %v1043, %v1399
      %v1539 = vadd.f32 %v1046, %v1402
      %v1540 = vadd.f32 %v1049, %v1405
      %v1541 = vadd.f32 %v1052, %v1408
      %v1542 = vadd.f32 %v1055, %v1411
      %v1543 = vadd.f32 %v1058, %v1414
      %v1544 = vadd.f32 %v1061, %v1417
      %v1545 = vadd.f32 %v1064, %v1420
      %v1546 = vadd.f32 %v1067, %v1423
      %v1547 = vadd.f32 %v1070, %v1426
      %v1548 = vadd.f32 %v1073, %v1429
      %v1549 = vadd.f32 %v1076, %v1432
      %v1550 = vadd.f32 %v1079, %v1435
      %v1551 = vadd.f32 %v1082, %v1438
      %v1552 = vadd.f32 %v1085, %v1441
      %v1553 = vadd.f32 %v1088, %v1444
      %v1554 = vadd.f32 %v1091, %v1447
      %v1555 = vadd.f32 %v1094, %v1450
      %v1556 = vadd.f32 %v1097, %v1453
      %v1557 = vadd.f32 %v1100, %v1456
      %v1558 = vadd.f32 %v1103, %v1459
      %v1559 = vadd.f32 %v1106, %v1462
      %v1560 = vadd.f32 %v1109, %v1465
      %v1561 = vadd.f32 %v1112, %v1468
      %v1562 = vadd.f32 %v1115, %v1471
      %v1563 = vadd.f32 %v1118, %v1474
      %v1564 = vadd.f32 %v1121, %v1477
      %v1565 = vadd.f32 %v1124, %v1480
      %v1566 = vadd.f32 %v1127, %v1483
      %v1567 = vadd.f32 %v1130, %v1486
      %v1568 = vadd.f32 %v1133, %v1489
      %v1569 = vadd.f32 %v1136, %v1492
      %v1570 = vadd.f32 %v1139, %v1495
      %v1571 = vadd.f32 %v1142, %v1498
      %v1572 = vadd.f32 %v1145, %v1501
      %v1573 = vadd.f32 %v1148, %v1504
      %v1574 = vadd.f32 %v1151, %v1507
      %v1575 = vadd.f32 %v1154, %v1510
      %v1576 = vadd.f32 %v1157, %v1513
      %v1577 = vadd.f32 %v1160, %v1516
      %v1578 = vadd.f32 %v1163, %v1519
      %v1579 = vadd.f32 %v1166, %v1522
      %v1580 = vadd.f32 %v1169, %v1525
      %v1581 = vadd.f32 %v1172, %v1528
      %v1582 = vadd.f32 %v1175, %v1531
      %v1583 = vadd.f32 %v1178, %v1534
      %v1584 = vld [vmem:[%s462 + $0x1f] sm:$0xff]
      %v1585 = vld [vmem:[%s462 + $0x27] sm:$0xff]
      %v1586 = vld [vmem:[%s462 + $0x2f] sm:$0xff]
      %v1587 = vld [vmem:[%s462 + $0x37] sm:$0xff]
      %v1588 = vld [vmem:[%s462 + $0x3f] sm:$0xff]
      %v1589 = vld [vmem:[%s462 + $0x47] sm:$0xff]
      %v1590 = vld [vmem:[%s462 + $0x4f] sm:$0xff]
      %v1591 = vld [vmem:[%s462 + $0x57] sm:$0xff]
      %v1592 = vld [vmem:[%s462 + $0x5f] sm:$0xff]
      %v1593 = vld [vmem:[%s462 + $0x67] sm:$0xff]
      %v1594 = vld [vmem:[%s462 + $0x6f] sm:$0xff]
      %v1595 = vld [vmem:[%s462 + $0x77] sm:$0xff]
      %v1596 = vld [vmem:[%s462 + $0x7f] sm:$0xff]
      %v1597 = vld [vmem:[%s462 + $0x87] sm:$0xff]
      %v1598 = vld [vmem:[%s462 + $0x8f] sm:$0xff]
      %v1599 = vld [vmem:[%s462 + $0x97] sm:$0xff]
      %v1600 = vld [vmem:[%s462 + $0x9f] sm:$0xff]
      %v1601 = vld [vmem:[%s462 + $0xa7] sm:$0xff]
      %v1602 = vld [vmem:[%s462 + $0xaf] sm:$0xff]
      %v1603 = vld [vmem:[%s462 + $0xb7] sm:$0xff]
      %v1604 = vld [vmem:[%s462 + $0xbf] sm:$0xff]
      %v1605 = vld [vmem:[%s462 + $0xc7] sm:$0xff]
      %v1606 = vld [vmem:[%s462 + $0xcf] sm:$0xff]
      %v1607 = vld [vmem:[%s462 + $0xd7] sm:$0xff]
      %v1608 = vld [vmem:[%s462 + $0xdf] sm:$0xff]
      %v1609 = vld [vmem:[%s462 + $0xe7] sm:$0xff]
      %v1610 = vld [vmem:[%s462 + $0xef] sm:$0xff]
      %v1611 = vld [vmem:[%s462 + $0xf7] sm:$0xff]
      %v1612 = vld [vmem:[%s462 + $0xff] sm:$0xff]
      %v1613 = vld [vmem:[%s462 + $0x107] sm:$0xff]
      %v1614 = vld [vmem:[%s462 + $0x10f] sm:$0xff]
      %v1615 = vld [vmem:[%s462 + $0x117] sm:$0xff]
      %v1616 = vld [vmem:[%s462 + $0x11f] sm:$0xff]
      %v1617 = vld [vmem:[%s462 + $0x127] sm:$0xff]
      %v1618 = vld [vmem:[%s462 + $0x12f] sm:$0xff]
      %v1619 = vld [vmem:[%s462 + $0x137] sm:$0xff]
      %v1620 = vld [vmem:[%s462 + $0x13f] sm:$0xff]
      %v1621 = vld [vmem:[%s462 + $0x147] sm:$0xff]
      %v1622 = vld [vmem:[%s462 + $0x14f] sm:$0xff]
      %v1623 = vld [vmem:[%s462 + $0x157] sm:$0xff]
      %v1624 = vld [vmem:[%s462 + $0x15f] sm:$0xff]
      %v1625 = vld [vmem:[%s462 + $0x167] sm:$0xff]
      %v1626 = vld [vmem:[%s462 + $0x16f] sm:$0xff]
      %v1627 = vld [vmem:[%s462 + $0x177] sm:$0xff]
      %v1628 = vld [vmem:[%s462 + $0x17f] sm:$0xff]
      %v1629 = vld [vmem:[%s462 + $0x187] sm:$0xff]
      %v1630 = vld [vmem:[%s462 + $0x18f] sm:$0xff]
      %v1631 = vld [vmem:[%s462 + $0x197] sm:$0xff]
      %s1632 = scalar_lea.vmem %s1, 48
      %v1633 = vld [vmem:[%s1632] sm:$0xff]
      %v1634 = vld [vmem:[%s1632 + $0x8] sm:$0xff]
      %v1636 = vsel %vm569, %v1584, 0
      %v1639 = vsel %vm569, %v1585, 0
      %v1642 = vsel %vm569, %v1586, 0
      %v1645 = vsel %vm569, %v1587, 0
      %v1648 = vsel %vm569, %v1588, 0
      %v1651 = vsel %vm569, %v1589, 0
      %v1654 = vsel %vm569, %v1590, 0
      %v1657 = vsel %vm569, %v1591, 0
      %v1660 = vsel %vm569, %v1592, 0
      %v1663 = vsel %vm569, %v1593, 0
      %v1666 = vsel %vm569, %v1594, 0
      %v1669 = vsel %vm569, %v1595, 0
      %v1672 = vsel %vm569, %v1596, 0
      %v1675 = vsel %vm569, %v1597, 0
      %v1678 = vsel %vm569, %v1598, 0
      %v1681 = vsel %vm569, %v1599, 0
      %v1684 = vsel %vm569, %v1600, 0
      %v1687 = vsel %vm569, %v1601, 0
      %v1690 = vsel %vm569, %v1602, 0
      %v1693 = vsel %vm569, %v1603, 0
      %v1696 = vsel %vm569, %v1604, 0
      %v1699 = vsel %vm569, %v1605, 0
      %v1702 = vsel %vm569, %v1606, 0
      %v1705 = vsel %vm569, %v1607, 0
      %v1708 = vsel %vm569, %v1608, 0
      %v1711 = vsel %vm569, %v1609, 0
      %v1714 = vsel %vm569, %v1610, 0
      %v1717 = vsel %vm569, %v1611, 0
      %v1720 = vsel %vm569, %v1612, 0
      %v1723 = vsel %vm569, %v1613, 0
      %v1726 = vsel %vm569, %v1614, 0
      %v1729 = vsel %vm569, %v1615, 0
      %v1732 = vsel %vm569, %v1616, 0
      %v1735 = vsel %vm569, %v1617, 0
      %v1738 = vsel %vm569, %v1618, 0
      %v1741 = vsel %vm569, %v1619, 0
      %v1744 = vsel %vm569, %v1620, 0
      %v1747 = vsel %vm569, %v1621, 0
      %v1750 = vsel %vm569, %v1622, 0
      %v1753 = vsel %vm569, %v1623, 0
      %v1756 = vsel %vm569, %v1624, 0
      %v1759 = vsel %vm569, %v1625, 0
      %v1762 = vsel %vm569, %v1626, 0
      %v1765 = vsel %vm569, %v1627, 0
      %v1768 = vsel %vm569, %v1628, 0
      %v1771 = vsel %vm569, %v1629, 0
      %v1774 = vsel %vm569, %v1630, 0
      %v1777 = vsel %vm569, %v1631, 0
      %1779 = vmatpush.msra.mxu0 0.0
      %1780 = vmatpush.msra.mxu0 0.0
      %1781 = vmatpush.msra.mxu0 0.0
      %1782 = vmatpush.msra.mxu0 0.0
      %1783 = vmatpush.msra.mxu0 0.0
      %1784 = vmatpush.msra.mxu0 0.0
      %1785 = vmatpush.msra.mxu0 0.0
      %1786 = vmatpush.msra.mxu0 0.0
      %1787 = vmatpush.msra.mxu0 0.0
      %1788 = vmatpush.msra.mxu0 0.0
      %1789 = vmatpush.msra.mxu0 0.0
      %1790 = vmatpush.msra.mxu0 0.0
      %1791 = vmatpush.msra.mxu0 0.0
      %1792 = vmatpush.msra.mxu0 0.0
      %1793 = vmatpush.msra.mxu0 %v1634
      %1794 = vmatpush.msra.mxu0 %v1633
      %1795 = vmatmul.f32.gmra.mxu0 %v1636
      %v1796 = vpop.f32.mrf.mxu0
      %v1797 = vadd.f32 0.0, %v1796
      %1798 = vmatmul.f32.gmra.mxu0 %v1639
      %v1799 = vpop.f32.mrf.mxu0
      %v1800 = vadd.f32 0.0, %v1799
      %1801 = vmatmul.f32.gmra.mxu0 %v1642
      %v1802 = vpop.f32.mrf.mxu0
      %v1803 = vadd.f32 0.0, %v1802
      %1804 = vmatmul.f32.gmra.mxu0 %v1645
      %v1805 = vpop.f32.mrf.mxu0
      %v1806 = vadd.f32 0.0, %v1805
      %1807 = vmatmul.f32.gmra.mxu0 %v1648
      %v1808 = vpop.f32.mrf.mxu0
      %v1809 = vadd.f32 0.0, %v1808
      %1810 = vmatmul.f32.gmra.mxu0 %v1651
      %v1811 = vpop.f32.mrf.mxu0
      %v1812 = vadd.f32 0.0, %v1811
      %1813 = vmatmul.f32.gmra.mxu0 %v1654
      %v1814 = vpop.f32.mrf.mxu0
      %v1815 = vadd.f32 0.0, %v1814
      %1816 = vmatmul.f32.gmra.mxu0 %v1657
      %v1817 = vpop.f32.mrf.mxu0
      %v1818 = vadd.f32 0.0, %v1817
      %1819 = vmatmul.f32.gmra.mxu0 %v1660
      %v1820 = vpop.f32.mrf.mxu0
      %v1821 = vadd.f32 0.0, %v1820
      %1822 = vmatmul.f32.gmra.mxu0 %v1663
      %v1823 = vpop.f32.mrf.mxu0
      %v1824 = vadd.f32 0.0, %v1823
      %1825 = vmatmul.f32.gmra.mxu0 %v1666
      %v1826 = vpop.f32.mrf.mxu0
      %v1827 = vadd.f32 0.0, %v1826
      %1828 = vmatmul.f32.gmra.mxu0 %v1669
      %v1829 = vpop.f32.mrf.mxu0
      %v1830 = vadd.f32 0.0, %v1829
      %1831 = vmatmul.f32.gmra.mxu0 %v1672
      %v1832 = vpop.f32.mrf.mxu0
      %v1833 = vadd.f32 0.0, %v1832
      %1834 = vmatmul.f32.gmra.mxu0 %v1675
      %v1835 = vpop.f32.mrf.mxu0
      %v1836 = vadd.f32 0.0, %v1835
      %1837 = vmatmul.f32.gmra.mxu0 %v1678
      %v1838 = vpop.f32.mrf.mxu0
      %v1839 = vadd.f32 0.0, %v1838
      %1840 = vmatmul.f32.gmra.mxu0 %v1681
      %v1841 = vpop.f32.mrf.mxu0
      %v1842 = vadd.f32 0.0, %v1841
      %1843 = vmatmul.f32.gmra.mxu0 %v1684
      %v1844 = vpop.f32.mrf.mxu0
      %v1845 = vadd.f32 0.0, %v1844
      %1846 = vmatmul.f32.gmra.mxu0 %v1687
      %v1847 = vpop.f32.mrf.mxu0
      %v1848 = vadd.f32 0.0, %v1847
      %1849 = vmatmul.f32.gmra.mxu0 %v1690
      %v1850 = vpop.f32.mrf.mxu0
      %v1851 = vadd.f32 0.0, %v1850
      %1852 = vmatmul.f32.gmra.mxu0 %v1693
      %v1853 = vpop.f32.mrf.mxu0
      %v1854 = vadd.f32 0.0, %v1853
      %1855 = vmatmul.f32.gmra.mxu0 %v1696
      %v1856 = vpop.f32.mrf.mxu0
      %v1857 = vadd.f32 0.0, %v1856
      %1858 = vmatmul.f32.gmra.mxu0 %v1699
      %v1859 = vpop.f32.mrf.mxu0
      %v1860 = vadd.f32 0.0, %v1859
      %1861 = vmatmul.f32.gmra.mxu0 %v1702
      %v1862 = vpop.f32.mrf.mxu0
      %v1863 = vadd.f32 0.0, %v1862
      %1864 = vmatmul.f32.gmra.mxu0 %v1705
      %v1865 = vpop.f32.mrf.mxu0
      %v1866 = vadd.f32 0.0, %v1865
      %1867 = vmatmul.f32.gmra.mxu0 %v1708
      %v1868 = vpop.f32.mrf.mxu0
      %v1869 = vadd.f32 0.0, %v1868
      %1870 = vmatmul.f32.gmra.mxu0 %v1711
      %v1871 = vpop.f32.mrf.mxu0
      %v1872 = vadd.f32 0.0, %v1871
      %1873 = vmatmul.f32.gmra.mxu0 %v1714
      %v1874 = vpop.f32.mrf.mxu0
      %v1875 = vadd.f32 0.0, %v1874
      %1876 = vmatmul.f32.gmra.mxu0 %v1717
      %v1877 = vpop.f32.mrf.mxu0
      %v1878 = vadd.f32 0.0, %v1877
      %1879 = vmatmul.f32.gmra.mxu0 %v1720
      %v1880 = vpop.f32.mrf.mxu0
      %v1881 = vadd.f32 0.0, %v1880
      %1882 = vmatmul.f32.gmra.mxu0 %v1723
      %v1883 = vpop.f32.mrf.mxu0
      %v1884 = vadd.f32 0.0, %v1883
      %1885 = vmatmul.f32.gmra.mxu0 %v1726
      %v1886 = vpop.f32.mrf.mxu0
      %v1887 = vadd.f32 0.0, %v1886
      %1888 = vmatmul.f32.gmra.mxu0 %v1729
      %v1889 = vpop.f32.mrf.mxu0
      %v1890 = vadd.f32 0.0, %v1889
      %1891 = vmatmul.f32.gmra.mxu0 %v1732
      %v1892 = vpop.f32.mrf.mxu0
      %v1893 = vadd.f32 0.0, %v1892
      %1894 = vmatmul.f32.gmra.mxu0 %v1735
      %v1895 = vpop.f32.mrf.mxu0
      %v1896 = vadd.f32 0.0, %v1895
      %1897 = vmatmul.f32.gmra.mxu0 %v1738
      %v1898 = vpop.f32.mrf.mxu0
      %v1899 = vadd.f32 0.0, %v1898
      %1900 = vmatmul.f32.gmra.mxu0 %v1741
      %v1901 = vpop.f32.mrf.mxu0
      %v1902 = vadd.f32 0.0, %v1901
      %1903 = vmatmul.f32.gmra.mxu0 %v1744
      %v1904 = vpop.f32.mrf.mxu0
      %v1905 = vadd.f32 0.0, %v1904
      %1906 = vmatmul.f32.gmra.mxu0 %v1747
      %v1907 = vpop.f32.mrf.mxu0
      %v1908 = vadd.f32 0.0, %v1907
      %1909 = vmatmul.f32.gmra.mxu0 %v1750
      %v1910 = vpop.f32.mrf.mxu0
      %v1911 = vadd.f32 0.0, %v1910
      %1912 = vmatmul.f32.gmra.mxu0 %v1753
      %v1913 = vpop.f32.mrf.mxu0
      %v1914 = vadd.f32 0.0, %v1913
      %1915 = vmatmul.f32.gmra.mxu0 %v1756
      %v1916 = vpop.f32.mrf.mxu0
      %v1917 = vadd.f32 0.0, %v1916
      %1918 = vmatmul.f32.gmra.mxu0 %v1759
      %v1919 = vpop.f32.mrf.mxu0
      %v1920 = vadd.f32 0.0, %v1919
      %1921 = vmatmul.f32.gmra.mxu0 %v1762
      %v1922 = vpop.f32.mrf.mxu0
      %v1923 = vadd.f32 0.0, %v1922
      %1924 = vmatmul.f32.gmra.mxu0 %v1765
      %v1925 = vpop.f32.mrf.mxu0
      %v1926 = vadd.f32 0.0, %v1925
      %1927 = vmatmul.f32.gmra.mxu0 %v1768
      %v1928 = vpop.f32.mrf.mxu0
      %v1929 = vadd.f32 0.0, %v1928
      %1930 = vmatmul.f32.gmra.mxu0 %v1771
      %v1931 = vpop.f32.mrf.mxu0
      %v1932 = vadd.f32 0.0, %v1931
      %1933 = vmatmul.f32.gmra.mxu0 %v1774
      %v1934 = vpop.f32.mrf.mxu0
      %v1935 = vadd.f32 0.0, %v1934
      %1936 = vmatmul.f32.gmra.mxu0 %v1777
      %v1937 = vpop.f32.mrf.mxu0
      %v1938 = vadd.f32 0.0, %v1937
      %1939 = vdwg.mxu0
      %v1940 = vadd.f32 %v1536, %v1797
      %v1941 = vadd.f32 %v1537, %v1800
      %v1942 = vadd.f32 %v1538, %v1803
      %v1943 = vadd.f32 %v1539, %v1806
      %v1944 = vadd.f32 %v1540, %v1809
      %v1945 = vadd.f32 %v1541, %v1812
      %v1946 = vadd.f32 %v1542, %v1815
      %v1947 = vadd.f32 %v1543, %v1818
      %v1948 = vadd.f32 %v1544, %v1821
      %v1949 = vadd.f32 %v1545, %v1824
      %v1950 = vadd.f32 %v1546, %v1827
      %v1951 = vadd.f32 %v1547, %v1830
      %v1952 = vadd.f32 %v1548, %v1833
      %v1953 = vadd.f32 %v1549, %v1836
      %v1954 = vadd.f32 %v1550, %v1839
      %v1955 = vadd.f32 %v1551, %v1842
      %v1956 = vadd.f32 %v1552, %v1845
      %v1957 = vadd.f32 %v1553, %v1848
      %v1958 = vadd.f32 %v1554, %v1851
      %v1959 = vadd.f32 %v1555, %v1854
      %v1960 = vadd.f32 %v1556, %v1857
      %v1961 = vadd.f32 %v1557, %v1860
      %v1962 = vadd.f32 %v1558, %v1863
      %v1963 = vadd.f32 %v1559, %v1866
      %v1964 = vadd.f32 %v1560, %v1869
      %v1965 = vadd.f32 %v1561, %v1872
      %v1966 = vadd.f32 %v1562, %v1875
      %v1967 = vadd.f32 %v1563, %v1878
      %v1968 = vadd.f32 %v1564, %v1881
      %v1969 = vadd.f32 %v1565, %v1884
      %v1970 = vadd.f32 %v1566, %v1887
      %v1971 = vadd.f32 %v1567, %v1890
      %v1972 = vadd.f32 %v1568, %v1893
      %v1973 = vadd.f32 %v1569, %v1896
      %v1974 = vadd.f32 %v1570, %v1899
      %v1975 = vadd.f32 %v1571, %v1902
      %v1976 = vadd.f32 %v1572, %v1905
      %v1977 = vadd.f32 %v1573, %v1908
      %v1978 = vadd.f32 %v1574, %v1911
      %v1979 = vadd.f32 %v1575, %v1914
      %v1980 = vadd.f32 %v1576, %v1917
      %v1981 = vadd.f32 %v1577, %v1920
      %v1982 = vadd.f32 %v1578, %v1923
      %v1983 = vadd.f32 %v1579, %v1926
      %v1984 = vadd.f32 %v1580, %v1929
      %v1985 = vadd.f32 %v1581, %v1932
      %v1986 = vadd.f32 %v1582, %v1935
      %v1987 = vadd.f32 %v1583, %v1938
      %v1988 = vld [vmem:[%s462 + $0x20] sm:$0xff]
      %v1989 = vld [vmem:[%s462 + $0x28] sm:$0xff]
      %v1990 = vld [vmem:[%s462 + $0x30] sm:$0xff]
      %v1991 = vld [vmem:[%s462 + $0x38] sm:$0xff]
      %v1992 = vld [vmem:[%s462 + $0x40] sm:$0xff]
      %v1993 = vld [vmem:[%s462 + $0x48] sm:$0xff]
      %v1994 = vld [vmem:[%s462 + $0x50] sm:$0xff]
      %v1995 = vld [vmem:[%s462 + $0x58] sm:$0xff]
      %v1996 = vld [vmem:[%s462 + $0x60] sm:$0xff]
      %v1997 = vld [vmem:[%s462 + $0x68] sm:$0xff]
      %v1998 = vld [vmem:[%s462 + $0x70] sm:$0xff]
      %v1999 = vld [vmem:[%s462 + $0x78] sm:$0xff]
      %v2000 = vld [vmem:[%s462 + $0x80] sm:$0xff]
      %v2001 = vld [vmem:[%s462 + $0x88] sm:$0xff]
      %v2002 = vld [vmem:[%s462 + $0x90] sm:$0xff]
      %v2003 = vld [vmem:[%s462 + $0x98] sm:$0xff]
      %v2004 = vld [vmem:[%s462 + $0xa0] sm:$0xff]
      %v2005 = vld [vmem:[%s462 + $0xa8] sm:$0xff]
      %v2006 = vld [vmem:[%s462 + $0xb0] sm:$0xff]
      %v2007 = vld [vmem:[%s462 + $0xb8] sm:$0xff]
      %v2008 = vld [vmem:[%s462 + $0xc0] sm:$0xff]
      %v2009 = vld [vmem:[%s462 + $0xc8] sm:$0xff]
      %v2010 = vld [vmem:[%s462 + $0xd0] sm:$0xff]
      %v2011 = vld [vmem:[%s462 + $0xd8] sm:$0xff]
      %v2012 = vld [vmem:[%s462 + $0xe0] sm:$0xff]
      %v2013 = vld [vmem:[%s462 + $0xe8] sm:$0xff]
      %v2014 = vld [vmem:[%s462 + $0xf0] sm:$0xff]
      %v2015 = vld [vmem:[%s462 + $0xf8] sm:$0xff]
      %v2016 = vld [vmem:[%s462 + $0x100] sm:$0xff]
      %v2017 = vld [vmem:[%s462 + $0x108] sm:$0xff]
      %v2018 = vld [vmem:[%s462 + $0x110] sm:$0xff]
      %v2019 = vld [vmem:[%s462 + $0x118] sm:$0xff]
      %v2020 = vld [vmem:[%s462 + $0x120] sm:$0xff]
      %v2021 = vld [vmem:[%s462 + $0x128] sm:$0xff]
      %v2022 = vld [vmem:[%s462 + $0x130] sm:$0xff]
      %v2023 = vld [vmem:[%s462 + $0x138] sm:$0xff]
      %v2024 = vld [vmem:[%s462 + $0x140] sm:$0xff]
      %v2025 = vld [vmem:[%s462 + $0x148] sm:$0xff]
      %v2026 = vld [vmem:[%s462 + $0x150] sm:$0xff]
      %v2027 = vld [vmem:[%s462 + $0x158] sm:$0xff]
      %v2028 = vld [vmem:[%s462 + $0x160] sm:$0xff]
      %v2029 = vld [vmem:[%s462 + $0x168] sm:$0xff]
      %v2030 = vld [vmem:[%s462 + $0x170] sm:$0xff]
      %v2031 = vld [vmem:[%s462 + $0x178] sm:$0xff]
      %v2032 = vld [vmem:[%s462 + $0x180] sm:$0xff]
      %v2033 = vld [vmem:[%s462 + $0x188] sm:$0xff]
      %v2034 = vld [vmem:[%s462 + $0x190] sm:$0xff]
      %v2035 = vld [vmem:[%s462 + $0x198] sm:$0xff]
      %s2036 = scalar_lea.vmem %s1, 64
      %v2037 = vld [vmem:[%s2036] sm:$0xff]
      %v2038 = vld [vmem:[%s2036 + $0x8] sm:$0xff]
      %v2040 = vsel %vm569, %v1988, 0
      %v2043 = vsel %vm569, %v1989, 0
      %v2046 = vsel %vm569, %v1990, 0
      %v2049 = vsel %vm569, %v1991, 0
      %v2052 = vsel %vm569, %v1992, 0
      %v2055 = vsel %vm569, %v1993, 0
      %v2058 = vsel %vm569, %v1994, 0
      %v2061 = vsel %vm569, %v1995, 0
      %v2064 = vsel %vm569, %v1996, 0
      %v2067 = vsel %vm569, %v1997, 0
      %v2070 = vsel %vm569, %v1998, 0
      %v2073 = vsel %vm569, %v1999, 0
      %v2076 = vsel %vm569, %v2000, 0
      %v2079 = vsel %vm569, %v2001, 0
      %v2082 = vsel %vm569, %v2002, 0
      %v2085 = vsel %vm569, %v2003, 0
      %v2088 = vsel %vm569, %v2004, 0
      %v2091 = vsel %vm569, %v2005, 0
      %v2094 = vsel %vm569, %v2006, 0
      %v2097 = vsel %vm569, %v2007, 0
      %v2100 = vsel %vm569, %v2008, 0
      %v2103 = vsel %vm569, %v2009, 0
      %v2106 = vsel %vm569, %v2010, 0
      %v2109 = vsel %vm569, %v2011, 0
      %v2112 = vsel %vm569, %v2012, 0
      %v2115 = vsel %vm569, %v2013, 0
      %v2118 = vsel %vm569, %v2014, 0
      %v2121 = vsel %vm569, %v2015, 0
      %v2124 = vsel %vm569, %v2016, 0
      %v2127 = vsel %vm569, %v2017, 0
      %v2130 = vsel %vm569, %v2018, 0
      %v2133 = vsel %vm569, %v2019, 0
      %v2136 = vsel %vm569, %v2020, 0
      %v2139 = vsel %vm569, %v2021, 0
      %v2142 = vsel %vm569, %v2022, 0
      %v2145 = vsel %vm569, %v2023, 0
      %v2148 = vsel %vm569, %v2024, 0
      %v2151 = vsel %vm569, %v2025, 0
      %v2154 = vsel %vm569, %v2026, 0
      %v2157 = vsel %vm569, %v2027, 0
      %v2160 = vsel %vm569, %v2028, 0
      %v2163 = vsel %vm569, %v2029, 0
      %v2166 = vsel %vm569, %v2030, 0
      %v2169 = vsel %vm569, %v2031, 0
      %v2172 = vsel %vm569, %v2032, 0
      %v2175 = vsel %vm569, %v2033, 0
      %v2178 = vsel %vm569, %v2034, 0
      %v2181 = vsel %vm569, %v2035, 0
      %2183 = vmatpush.msra.mxu0 0.0
      %2184 = vmatpush.msra.mxu0 0.0
      %2185 = vmatpush.msra.mxu0 0.0
      %2186 = vmatpush.msra.mxu0 0.0
      %2187 = vmatpush.msra.mxu0 0.0
      %2188 = vmatpush.msra.mxu0 0.0
      %2189 = vmatpush.msra.mxu0 0.0
      %2190 = vmatpush.msra.mxu0 0.0
      %2191 = vmatpush.msra.mxu0 0.0
      %2192 = vmatpush.msra.mxu0 0.0
      %2193 = vmatpush.msra.mxu0 0.0
      %2194 = vmatpush.msra.mxu0 0.0
      %2195 = vmatpush.msra.mxu0 0.0
      %2196 = vmatpush.msra.mxu0 0.0
      %2197 = vmatpush.msra.mxu0 %v2038
      %2198 = vmatpush.msra.mxu0 %v2037
      %2199 = vmatmul.f32.gmra.mxu0 %v2040
      %v2200 = vpop.f32.mrf.mxu0
      %v2201 = vadd.f32 0.0, %v2200
      %2202 = vmatmul.f32.gmra.mxu0 %v2043
      %v2203 = vpop.f32.mrf.mxu0
      %v2204 = vadd.f32 0.0, %v2203
      %2205 = vmatmul.f32.gmra.mxu0 %v2046
      %v2206 = vpop.f32.mrf.mxu0
      %v2207 = vadd.f32 0.0, %v2206
      %2208 = vmatmul.f32.gmra.mxu0 %v2049
      %v2209 = vpop.f32.mrf.mxu0
      %v2210 = vadd.f32 0.0, %v2209
      %2211 = vmatmul.f32.gmra.mxu0 %v2052
      %v2212 = vpop.f32.mrf.mxu0
      %v2213 = vadd.f32 0.0, %v2212
      %2214 = vmatmul.f32.gmra.mxu0 %v2055
      %v2215 = vpop.f32.mrf.mxu0
      %v2216 = vadd.f32 0.0, %v2215
      %2217 = vmatmul.f32.gmra.mxu0 %v2058
      %v2218 = vpop.f32.mrf.mxu0
      %v2219 = vadd.f32 0.0, %v2218
      %2220 = vmatmul.f32.gmra.mxu0 %v2061
      %v2221 = vpop.f32.mrf.mxu0
      %v2222 = vadd.f32 0.0, %v2221
      %2223 = vmatmul.f32.gmra.mxu0 %v2064
      %v2224 = vpop.f32.mrf.mxu0
      %v2225 = vadd.f32 0.0, %v2224
      %2226 = vmatmul.f32.gmra.mxu0 %v2067
      %v2227 = vpop.f32.mrf.mxu0
      %v2228 = vadd.f32 0.0, %v2227
      %2229 = vmatmul.f32.gmra.mxu0 %v2070
      %v2230 = vpop.f32.mrf.mxu0
      %v2231 = vadd.f32 0.0, %v2230
      %2232 = vmatmul.f32.gmra.mxu0 %v2073
      %v2233 = vpop.f32.mrf.mxu0
      %v2234 = vadd.f32 0.0, %v2233
      %2235 = vmatmul.f32.gmra.mxu0 %v2076
      %v2236 = vpop.f32.mrf.mxu0
      %v2237 = vadd.f32 0.0, %v2236
      %2238 = vmatmul.f32.gmra.mxu0 %v2079
      %v2239 = vpop.f32.mrf.mxu0
      %v2240 = vadd.f32 0.0, %v2239
      %2241 = vmatmul.f32.gmra.mxu0 %v2082
      %v2242 = vpop.f32.mrf.mxu0
      %v2243 = vadd.f32 0.0, %v2242
      %2244 = vmatmul.f32.gmra.mxu0 %v2085
      %v2245 = vpop.f32.mrf.mxu0
      %v2246 = vadd.f32 0.0, %v2245
      %2247 = vmatmul.f32.gmra.mxu0 %v2088
      %v2248 = vpop.f32.mrf.mxu0
      %v2249 = vadd.f32 0.0, %v2248
      %2250 = vmatmul.f32.gmra.mxu0 %v2091
      %v2251 = vpop.f32.mrf.mxu0
      %v2252 = vadd.f32 0.0, %v2251
      %2253 = vmatmul.f32.gmra.mxu0 %v2094
      %v2254 = vpop.f32.mrf.mxu0
      %v2255 = vadd.f32 0.0, %v2254
      %2256 = vmatmul.f32.gmra.mxu0 %v2097
      %v2257 = vpop.f32.mrf.mxu0
      %v2258 = vadd.f32 0.0, %v2257
      %2259 = vmatmul.f32.gmra.mxu0 %v2100
      %v2260 = vpop.f32.mrf.mxu0
      %v2261 = vadd.f32 0.0, %v2260
      %2262 = vmatmul.f32.gmra.mxu0 %v2103
      %v2263 = vpop.f32.mrf.mxu0
      %v2264 = vadd.f32 0.0, %v2263
      %2265 = vmatmul.f32.gmra.mxu0 %v2106
      %v2266 = vpop.f32.mrf.mxu0
      %v2267 = vadd.f32 0.0, %v2266
      %2268 = vmatmul.f32.gmra.mxu0 %v2109
      %v2269 = vpop.f32.mrf.mxu0
      %v2270 = vadd.f32 0.0, %v2269
      %2271 = vmatmul.f32.gmra.mxu0 %v2112
      %v2272 = vpop.f32.mrf.mxu0
      %v2273 = vadd.f32 0.0, %v2272
      %2274 = vmatmul.f32.gmra.mxu0 %v2115
      %v2275 = vpop.f32.mrf.mxu0
      %v2276 = vadd.f32 0.0, %v2275
      %2277 = vmatmul.f32.gmra.mxu0 %v2118
      %v2278 = vpop.f32.mrf.mxu0
      %v2279 = vadd.f32 0.0, %v2278
      %2280 = vmatmul.f32.gmra.mxu0 %v2121
      %v2281 = vpop.f32.mrf.mxu0
      %v2282 = vadd.f32 0.0, %v2281
      %2283 = vmatmul.f32.gmra.mxu0 %v2124
      %v2284 = vpop.f32.mrf.mxu0
      %v2285 = vadd.f32 0.0, %v2284
      %2286 = vmatmul.f32.gmra.mxu0 %v2127
      %v2287 = vpop.f32.mrf.mxu0
      %v2288 = vadd.f32 0.0, %v2287
      %2289 = vmatmul.f32.gmra.mxu0 %v2130
      %v2290 = vpop.f32.mrf.mxu0
      %v2291 = vadd.f32 0.0, %v2290
      %2292 = vmatmul.f32.gmra.mxu0 %v2133
      %v2293 = vpop.f32.mrf.mxu0
      %v2294 = vadd.f32 0.0, %v2293
      %2295 = vmatmul.f32.gmra.mxu0 %v2136
      %v2296 = vpop.f32.mrf.mxu0
      %v2297 = vadd.f32 0.0, %v2296
      %2298 = vmatmul.f32.gmra.mxu0 %v2139
      %v2299 = vpop.f32.mrf.mxu0
      %v2300 = vadd.f32 0.0, %v2299
      %2301 = vmatmul.f32.gmra.mxu0 %v2142
      %v2302 = vpop.f32.mrf.mxu0
      %v2303 = vadd.f32 0.0, %v2302
      %2304 = vmatmul.f32.gmra.mxu0 %v2145
      %v2305 = vpop.f32.mrf.mxu0
      %v2306 = vadd.f32 0.0, %v2305
      %2307 = vmatmul.f32.gmra.mxu0 %v2148
      %v2308 = vpop.f32.mrf.mxu0
      %v2309 = vadd.f32 0.0, %v2308
      %2310 = vmatmul.f32.gmra.mxu0 %v2151
      %v2311 = vpop.f32.mrf.mxu0
      %v2312 = vadd.f32 0.0, %v2311
      %2313 = vmatmul.f32.gmra.mxu0 %v2154
      %v2314 = vpop.f32.mrf.mxu0
      %v2315 = vadd.f32 0.0, %v2314
      %2316 = vmatmul.f32.gmra.mxu0 %v2157
      %v2317 = vpop.f32.mrf.mxu0
      %v2318 = vadd.f32 0.0, %v2317
      %2319 = vmatmul.f32.gmra.mxu0 %v2160
      %v2320 = vpop.f32.mrf.mxu0
      %v2321 = vadd.f32 0.0, %v2320
      %2322 = vmatmul.f32.gmra.mxu0 %v2163
      %v2323 = vpop.f32.mrf.mxu0
      %v2324 = vadd.f32 0.0, %v2323
      %2325 = vmatmul.f32.gmra.mxu0 %v2166
      %v2326 = vpop.f32.mrf.mxu0
      %v2327 = vadd.f32 0.0, %v2326
      %2328 = vmatmul.f32.gmra.mxu0 %v2169
      %v2329 = vpop.f32.mrf.mxu0
      %v2330 = vadd.f32 0.0, %v2329
      %2331 = vmatmul.f32.gmra.mxu0 %v2172
      %v2332 = vpop.f32.mrf.mxu0
      %v2333 = vadd.f32 0.0, %v2332
      %2334 = vmatmul.f32.gmra.mxu0 %v2175
      %v2335 = vpop.f32.mrf.mxu0
      %v2336 = vadd.f32 0.0, %v2335
      %2337 = vmatmul.f32.gmra.mxu0 %v2178
      %v2338 = vpop.f32.mrf.mxu0
      %v2339 = vadd.f32 0.0, %v2338
      %2340 = vmatmul.f32.gmra.mxu0 %v2181
      %v2341 = vpop.f32.mrf.mxu0
      %v2342 = vadd.f32 0.0, %v2341
      %2343 = vdwg.mxu0
      %v2344 = vadd.f32 %v1940, %v2201
      %v2345 = vadd.f32 %v1941, %v2204
      %v2346 = vadd.f32 %v1942, %v2207
      %v2347 = vadd.f32 %v1943, %v2210
      %v2348 = vadd.f32 %v1944, %v2213
      %v2349 = vadd.f32 %v1945, %v2216
      %v2350 = vadd.f32 %v1946, %v2219
      %v2351 = vadd.f32 %v1947, %v2222
      %v2352 = vadd.f32 %v1948, %v2225
      %v2353 = vadd.f32 %v1949, %v2228
      %v2354 = vadd.f32 %v1950, %v2231
      %v2355 = vadd.f32 %v1951, %v2234
      %v2356 = vadd.f32 %v1952, %v2237
      %v2357 = vadd.f32 %v1953, %v2240
      %v2358 = vadd.f32 %v1954, %v2243
      %v2359 = vadd.f32 %v1955, %v2246
      %v2360 = vadd.f32 %v1956, %v2249
      %v2361 = vadd.f32 %v1957, %v2252
      %v2362 = vadd.f32 %v1958, %v2255
      %v2363 = vadd.f32 %v1959, %v2258
      %v2364 = vadd.f32 %v1960, %v2261
      %v2365 = vadd.f32 %v1961, %v2264
      %v2366 = vadd.f32 %v1962, %v2267
      %v2367 = vadd.f32 %v1963, %v2270
      %v2368 = vadd.f32 %v1964, %v2273
      %v2369 = vadd.f32 %v1965, %v2276
      %v2370 = vadd.f32 %v1966, %v2279
      %v2371 = vadd.f32 %v1967, %v2282
      %v2372 = vadd.f32 %v1968, %v2285
      %v2373 = vadd.f32 %v1969, %v2288
      %v2374 = vadd.f32 %v1970, %v2291
      %v2375 = vadd.f32 %v1971, %v2294
      %v2376 = vadd.f32 %v1972, %v2297
      %v2377 = vadd.f32 %v1973, %v2300
      %v2378 = vadd.f32 %v1974, %v2303
      %v2379 = vadd.f32 %v1975, %v2306
      %v2380 = vadd.f32 %v1976, %v2309
      %v2381 = vadd.f32 %v1977, %v2312
      %v2382 = vadd.f32 %v1978, %v2315
      %v2383 = vadd.f32 %v1979, %v2318
      %v2384 = vadd.f32 %v1980, %v2321
      %v2385 = vadd.f32 %v1981, %v2324
      %v2386 = vadd.f32 %v1982, %v2327
      %v2387 = vadd.f32 %v1983, %v2330
      %v2388 = vadd.f32 %v1984, %v2333
      %v2389 = vadd.f32 %v1985, %v2336
      %v2390 = vadd.f32 %v1986, %v2339
      %v2391 = vadd.f32 %v1987, %v2342
      %v2392 = vld [vmem:[%s462 + $0x21] sm:$0xff]
      %v2393 = vld [vmem:[%s462 + $0x29] sm:$0xff]
      %v2394 = vld [vmem:[%s462 + $0x31] sm:$0xff]
      %v2395 = vld [vmem:[%s462 + $0x39] sm:$0xff]
      %v2396 = vld [vmem:[%s462 + $0x41] sm:$0xff]
      %v2397 = vld [vmem:[%s462 + $0x49] sm:$0xff]
      %v2398 = vld [vmem:[%s462 + $0x51] sm:$0xff]
      %v2399 = vld [vmem:[%s462 + $0x59] sm:$0xff]
      %v2400 = vld [vmem:[%s462 + $0x61] sm:$0xff]
      %v2401 = vld [vmem:[%s462 + $0x69] sm:$0xff]
      %v2402 = vld [vmem:[%s462 + $0x71] sm:$0xff]
      %v2403 = vld [vmem:[%s462 + $0x79] sm:$0xff]
      %v2404 = vld [vmem:[%s462 + $0x81] sm:$0xff]
      %v2405 = vld [vmem:[%s462 + $0x89] sm:$0xff]
      %v2406 = vld [vmem:[%s462 + $0x91] sm:$0xff]
      %v2407 = vld [vmem:[%s462 + $0x99] sm:$0xff]
      %v2408 = vld [vmem:[%s462 + $0xa1] sm:$0xff]
      %v2409 = vld [vmem:[%s462 + $0xa9] sm:$0xff]
      %v2410 = vld [vmem:[%s462 + $0xb1] sm:$0xff]
      %v2411 = vld [vmem:[%s462 + $0xb9] sm:$0xff]
      %v2412 = vld [vmem:[%s462 + $0xc1] sm:$0xff]
      %v2413 = vld [vmem:[%s462 + $0xc9] sm:$0xff]
      %v2414 = vld [vmem:[%s462 + $0xd1] sm:$0xff]
      %v2415 = vld [vmem:[%s462 + $0xd9] sm:$0xff]
      %v2416 = vld [vmem:[%s462 + $0xe1] sm:$0xff]
      %v2417 = vld [vmem:[%s462 + $0xe9] sm:$0xff]
      %v2418 = vld [vmem:[%s462 + $0xf1] sm:$0xff]
      %v2419 = vld [vmem:[%s462 + $0xf9] sm:$0xff]
      %v2420 = vld [vmem:[%s462 + $0x101] sm:$0xff]
      %v2421 = vld [vmem:[%s462 + $0x109] sm:$0xff]
      %v2422 = vld [vmem:[%s462 + $0x111] sm:$0xff]
      %v2423 = vld [vmem:[%s462 + $0x119] sm:$0xff]
      %v2424 = vld [vmem:[%s462 + $0x121] sm:$0xff]
      %v2425 = vld [vmem:[%s462 + $0x129] sm:$0xff]
      %v2426 = vld [vmem:[%s462 + $0x131] sm:$0xff]
      %v2427 = vld [vmem:[%s462 + $0x139] sm:$0xff]
      %v2428 = vld [vmem:[%s462 + $0x141] sm:$0xff]
      %v2429 = vld [vmem:[%s462 + $0x149] sm:$0xff]
      %v2430 = vld [vmem:[%s462 + $0x151] sm:$0xff]
      %v2431 = vld [vmem:[%s462 + $0x159] sm:$0xff]
      %v2432 = vld [vmem:[%s462 + $0x161] sm:$0xff]
      %v2433 = vld [vmem:[%s462 + $0x169] sm:$0xff]
      %v2434 = vld [vmem:[%s462 + $0x171] sm:$0xff]
      %v2435 = vld [vmem:[%s462 + $0x179] sm:$0xff]
      %v2436 = vld [vmem:[%s462 + $0x181] sm:$0xff]
      %v2437 = vld [vmem:[%s462 + $0x189] sm:$0xff]
      %v2438 = vld [vmem:[%s462 + $0x191] sm:$0xff]
      %v2439 = vld [vmem:[%s462 + $0x199] sm:$0xff]
      %s2440 = scalar_lea.vmem %s1, 80
      %v2441 = vld [vmem:[%s2440] sm:$0xff]
      %v2442 = vld [vmem:[%s2440 + $0x8] sm:$0xff]
      %v2444 = vsel %vm569, %v2392, 0
      %v2447 = vsel %vm569, %v2393, 0
      %v2450 = vsel %vm569, %v2394, 0
      %v2453 = vsel %vm569, %v2395, 0
      %v2456 = vsel %vm569, %v2396, 0
      %v2459 = vsel %vm569, %v2397, 0
      %v2462 = vsel %vm569, %v2398, 0
      %v2465 = vsel %vm569, %v2399, 0
      %v2468 = vsel %vm569, %v2400, 0
      %v2471 = vsel %vm569, %v2401, 0
      %v2474 = vsel %vm569, %v2402, 0
      %v2477 = vsel %vm569, %v2403, 0
      %v2480 = vsel %vm569, %v2404, 0
      %v2483 = vsel %vm569, %v2405, 0
      %v2486 = vsel %vm569, %v2406, 0
      %v2489 = vsel %vm569, %v2407, 0
      %v2492 = vsel %vm569, %v2408, 0
      %v2495 = vsel %vm569, %v2409, 0
      %v2498 = vsel %vm569, %v2410, 0
      %v2501 = vsel %vm569, %v2411, 0
      %v2504 = vsel %vm569, %v2412, 0
      %v2507 = vsel %vm569, %v2413, 0
      %v2510 = vsel %vm569, %v2414, 0
      %v2513 = vsel %vm569, %v2415, 0
      %v2516 = vsel %vm569, %v2416, 0
      %v2519 = vsel %vm569, %v2417, 0
      %v2522 = vsel %vm569, %v2418, 0
      %v2525 = vsel %vm569, %v2419, 0
      %v2528 = vsel %vm569, %v2420, 0
      %v2531 = vsel %vm569, %v2421, 0
      %v2534 = vsel %vm569, %v2422, 0
      %v2537 = vsel %vm569, %v2423, 0
      %v2540 = vsel %vm569, %v2424, 0
      %v2543 = vsel %vm569, %v2425, 0
      %v2546 = vsel %vm569, %v2426, 0
      %v2549 = vsel %vm569, %v2427, 0
      %v2552 = vsel %vm569, %v2428, 0
      %v2555 = vsel %vm569, %v2429, 0
      %v2558 = vsel %vm569, %v2430, 0
      %v2561 = vsel %vm569, %v2431, 0
      %v2564 = vsel %vm569, %v2432, 0
      %v2567 = vsel %vm569, %v2433, 0
      %v2570 = vsel %vm569, %v2434, 0
      %v2573 = vsel %vm569, %v2435, 0
      %v2576 = vsel %vm569, %v2436, 0
      %v2579 = vsel %vm569, %v2437, 0
      %v2582 = vsel %vm569, %v2438, 0
      %v2585 = vsel %vm569, %v2439, 0
      %2587 = vmatpush.msra.mxu0 0.0
      %2588 = vmatpush.msra.mxu0 0.0
      %2589 = vmatpush.msra.mxu0 0.0
      %2590 = vmatpush.msra.mxu0 0.0
      %2591 = vmatpush.msra.mxu0 0.0
      %2592 = vmatpush.msra.mxu0 0.0
      %2593 = vmatpush.msra.mxu0 0.0
      %2594 = vmatpush.msra.mxu0 0.0
      %2595 = vmatpush.msra.mxu0 0.0
      %2596 = vmatpush.msra.mxu0 0.0
      %2597 = vmatpush.msra.mxu0 0.0
      %2598 = vmatpush.msra.mxu0 0.0
      %2599 = vmatpush.msra.mxu0 0.0
      %2600 = vmatpush.msra.mxu0 0.0
      %2601 = vmatpush.msra.mxu0 %v2442
      %2602 = vmatpush.msra.mxu0 %v2441
      %2603 = vmatmul.f32.gmra.mxu0 %v2444
      %v2604 = vpop.f32.mrf.mxu0
      %v2605 = vadd.f32 0.0, %v2604
      %2606 = vmatmul.f32.gmra.mxu0 %v2447
      %v2607 = vpop.f32.mrf.mxu0
      %v2608 = vadd.f32 0.0, %v2607
      %2609 = vmatmul.f32.gmra.mxu0 %v2450
      %v2610 = vpop.f32.mrf.mxu0
      %v2611 = vadd.f32 0.0, %v2610
      %2612 = vmatmul.f32.gmra.mxu0 %v2453
      %v2613 = vpop.f32.mrf.mxu0
      %v2614 = vadd.f32 0.0, %v2613
      %2615 = vmatmul.f32.gmra.mxu0 %v2456
      %v2616 = vpop.f32.mrf.mxu0
      %v2617 = vadd.f32 0.0, %v2616
      %2618 = vmatmul.f32.gmra.mxu0 %v2459
      %v2619 = vpop.f32.mrf.mxu0
      %v2620 = vadd.f32 0.0, %v2619
      %2621 = vmatmul.f32.gmra.mxu0 %v2462
      %v2622 = vpop.f32.mrf.mxu0
      %v2623 = vadd.f32 0.0, %v2622
      %2624 = vmatmul.f32.gmra.mxu0 %v2465
      %v2625 = vpop.f32.mrf.mxu0
      %v2626 = vadd.f32 0.0, %v2625
      %2627 = vmatmul.f32.gmra.mxu0 %v2468
      %v2628 = vpop.f32.mrf.mxu0
      %v2629 = vadd.f32 0.0, %v2628
      %2630 = vmatmul.f32.gmra.mxu0 %v2471
      %v2631 = vpop.f32.mrf.mxu0
      %v2632 = vadd.f32 0.0, %v2631
      %2633 = vmatmul.f32.gmra.mxu0 %v2474
      %v2634 = vpop.f32.mrf.mxu0
      %v2635 = vadd.f32 0.0, %v2634
      %2636 = vmatmul.f32.gmra.mxu0 %v2477
      %v2637 = vpop.f32.mrf.mxu0
      %v2638 = vadd.f32 0.0, %v2637
      %2639 = vmatmul.f32.gmra.mxu0 %v2480
      %v2640 = vpop.f32.mrf.mxu0
      %v2641 = vadd.f32 0.0, %v2640
      %2642 = vmatmul.f32.gmra.mxu0 %v2483
      %v2643 = vpop.f32.mrf.mxu0
      %v2644 = vadd.f32 0.0, %v2643
      %2645 = vmatmul.f32.gmra.mxu0 %v2486
      %v2646 = vpop.f32.mrf.mxu0
      %v2647 = vadd.f32 0.0, %v2646
      %2648 = vmatmul.f32.gmra.mxu0 %v2489
      %v2649 = vpop.f32.mrf.mxu0
      %v2650 = vadd.f32 0.0, %v2649
      %2651 = vmatmul.f32.gmra.mxu0 %v2492
      %v2652 = vpop.f32.mrf.mxu0
      %v2653 = vadd.f32 0.0, %v2652
      %2654 = vmatmul.f32.gmra.mxu0 %v2495
      %v2655 = vpop.f32.mrf.mxu0
      %v2656 = vadd.f32 0.0, %v2655
      %2657 = vmatmul.f32.gmra.mxu0 %v2498
      %v2658 = vpop.f32.mrf.mxu0
      %v2659 = vadd.f32 0.0, %v2658
      %2660 = vmatmul.f32.gmra.mxu0 %v2501
      %v2661 = vpop.f32.mrf.mxu0
      %v2662 = vadd.f32 0.0, %v2661
      %2663 = vmatmul.f32.gmra.mxu0 %v2504
      %v2664 = vpop.f32.mrf.mxu0
      %v2665 = vadd.f32 0.0, %v2664
      %2666 = vmatmul.f32.gmra.mxu0 %v2507
      %v2667 = vpop.f32.mrf.mxu0
      %v2668 = vadd.f32 0.0, %v2667
      %2669 = vmatmul.f32.gmra.mxu0 %v2510
      %v2670 = vpop.f32.mrf.mxu0
      %v2671 = vadd.f32 0.0, %v2670
      %2672 = vmatmul.f32.gmra.mxu0 %v2513
      %v2673 = vpop.f32.mrf.mxu0
      %v2674 = vadd.f32 0.0, %v2673
      %2675 = vmatmul.f32.gmra.mxu0 %v2516
      %v2676 = vpop.f32.mrf.mxu0
      %v2677 = vadd.f32 0.0, %v2676
      %2678 = vmatmul.f32.gmra.mxu0 %v2519
      %v2679 = vpop.f32.mrf.mxu0
      %v2680 = vadd.f32 0.0, %v2679
      %2681 = vmatmul.f32.gmra.mxu0 %v2522
      %v2682 = vpop.f32.mrf.mxu0
      %v2683 = vadd.f32 0.0, %v2682
      %2684 = vmatmul.f32.gmra.mxu0 %v2525
      %v2685 = vpop.f32.mrf.mxu0
      %v2686 = vadd.f32 0.0, %v2685
      %2687 = vmatmul.f32.gmra.mxu0 %v2528
      %v2688 = vpop.f32.mrf.mxu0
      %v2689 = vadd.f32 0.0, %v2688
      %2690 = vmatmul.f32.gmra.mxu0 %v2531
      %v2691 = vpop.f32.mrf.mxu0
      %v2692 = vadd.f32 0.0, %v2691
      %2693 = vmatmul.f32.gmra.mxu0 %v2534
      %v2694 = vpop.f32.mrf.mxu0
      %v2695 = vadd.f32 0.0, %v2694
      %2696 = vmatmul.f32.gmra.mxu0 %v2537
      %v2697 = vpop.f32.mrf.mxu0
      %v2698 = vadd.f32 0.0, %v2697
      %2699 = vmatmul.f32.gmra.mxu0 %v2540
      %v2700 = vpop.f32.mrf.mxu0
      %v2701 = vadd.f32 0.0, %v2700
      %2702 = vmatmul.f32.gmra.mxu0 %v2543
      %v2703 = vpop.f32.mrf.mxu0
      %v2704 = vadd.f32 0.0, %v2703
      %2705 = vmatmul.f32.gmra.mxu0 %v2546
      %v2706 = vpop.f32.mrf.mxu0
      %v2707 = vadd.f32 0.0, %v2706
      %2708 = vmatmul.f32.gmra.mxu0 %v2549
      %v2709 = vpop.f32.mrf.mxu0
      %v2710 = vadd.f32 0.0, %v2709
      %2711 = vmatmul.f32.gmra.mxu0 %v2552
      %v2712 = vpop.f32.mrf.mxu0
      %v2713 = vadd.f32 0.0, %v2712
      %2714 = vmatmul.f32.gmra.mxu0 %v2555
      %v2715 = vpop.f32.mrf.mxu0
      %v2716 = vadd.f32 0.0, %v2715
      %2717 = vmatmul.f32.gmra.mxu0 %v2558
      %v2718 = vpop.f32.mrf.mxu0
      %v2719 = vadd.f32 0.0, %v2718
      %2720 = vmatmul.f32.gmra.mxu0 %v2561
      %v2721 = vpop.f32.mrf.mxu0
      %v2722 = vadd.f32 0.0, %v2721
      %2723 = vmatmul.f32.gmra.mxu0 %v2564
      %v2724 = vpop.f32.mrf.mxu0
      %v2725 = vadd.f32 0.0, %v2724
      %2726 = vmatmul.f32.gmra.mxu0 %v2567
      %v2727 = vpop.f32.mrf.mxu0
      %v2728 = vadd.f32 0.0, %v2727
      %2729 = vmatmul.f32.gmra.mxu0 %v2570
      %v2730 = vpop.f32.mrf.mxu0
      %v2731 = vadd.f32 0.0, %v2730
      %2732 = vmatmul.f32.gmra.mxu0 %v2573
      %v2733 = vpop.f32.mrf.mxu0
      %v2734 = vadd.f32 0.0, %v2733
      %2735 = vmatmul.f32.gmra.mxu0 %v2576
      %v2736 = vpop.f32.mrf.mxu0
      %v2737 = vadd.f32 0.0, %v2736
      %2738 = vmatmul.f32.gmra.mxu0 %v2579
      %v2739 = vpop.f32.mrf.mxu0
      %v2740 = vadd.f32 0.0, %v2739
      %2741 = vmatmul.f32.gmra.mxu0 %v2582
      %v2742 = vpop.f32.mrf.mxu0
      %v2743 = vadd.f32 0.0, %v2742
      %2744 = vmatmul.f32.gmra.mxu0 %v2585
      %v2745 = vpop.f32.mrf.mxu0
      %v2746 = vadd.f32 0.0, %v2745
      %2747 = vdwg.mxu0
      %v2748 = vadd.f32 %v2344, %v2605
      %v2749 = vadd.f32 %v2345, %v2608
      %v2750 = vadd.f32 %v2346, %v2611
      %v2751 = vadd.f32 %v2347, %v2614
      %v2752 = vadd.f32 %v2348, %v2617
      %v2753 = vadd.f32 %v2349, %v2620
      %v2754 = vadd.f32 %v2350, %v2623
      %v2755 = vadd.f32 %v2351, %v2626
      %v2756 = vadd.f32 %v2352, %v2629
      %v2757 = vadd.f32 %v2353, %v2632
      %v2758 = vadd.f32 %v2354, %v2635
      %v2759 = vadd.f32 %v2355, %v2638
      %v2760 = vadd.f32 %v2356, %v2641
      %v2761 = vadd.f32 %v2357, %v2644
      %v2762 = vadd.f32 %v2358, %v2647
      %v2763 = vadd.f32 %v2359, %v2650
      %v2764 = vadd.f32 %v2360, %v2653
      %v2765 = vadd.f32 %v2361, %v2656
      %v2766 = vadd.f32 %v2362, %v2659
      %v2767 = vadd.f32 %v2363, %v2662
      %v2768 = vadd.f32 %v2364, %v2665
      %v2769 = vadd.f32 %v2365, %v2668
      %v2770 = vadd.f32 %v2366, %v2671
      %v2771 = vadd.f32 %v2367, %v2674
      %v2772 = vadd.f32 %v2368, %v2677
      %v2773 = vadd.f32 %v2369, %v2680
      %v2774 = vadd.f32 %v2370, %v2683
      %v2775 = vadd.f32 %v2371, %v2686
      %v2776 = vadd.f32 %v2372, %v2689
      %v2777 = vadd.f32 %v2373, %v2692
      %v2778 = vadd.f32 %v2374, %v2695
      %v2779 = vadd.f32 %v2375, %v2698
      %v2780 = vadd.f32 %v2376, %v2701
      %v2781 = vadd.f32 %v2377, %v2704
      %v2782 = vadd.f32 %v2378, %v2707
      %v2783 = vadd.f32 %v2379, %v2710
      %v2784 = vadd.f32 %v2380, %v2713
      %v2785 = vadd.f32 %v2381, %v2716
      %v2786 = vadd.f32 %v2382, %v2719
      %v2787 = vadd.f32 %v2383, %v2722
      %v2788 = vadd.f32 %v2384, %v2725
      %v2789 = vadd.f32 %v2385, %v2728
      %v2790 = vadd.f32 %v2386, %v2731
      %v2791 = vadd.f32 %v2387, %v2734
      %v2792 = vadd.f32 %v2388, %v2737
      %v2793 = vadd.f32 %v2389, %v2740
      %v2794 = vadd.f32 %v2390, %v2743
      %v2795 = vadd.f32 %v2391, %v2746
      %v2796 = vld [vmem:[%s462 + $0x37] sm:$0xff]
      %v2797 = vld [vmem:[%s462 + $0x3f] sm:$0xff]
      %v2798 = vld [vmem:[%s462 + $0x47] sm:$0xff]
      %v2799 = vld [vmem:[%s462 + $0x4f] sm:$0xff]
      %v2800 = vld [vmem:[%s462 + $0x57] sm:$0xff]
      %v2801 = vld [vmem:[%s462 + $0x5f] sm:$0xff]
      %v2802 = vld [vmem:[%s462 + $0x67] sm:$0xff]
      %v2803 = vld [vmem:[%s462 + $0x6f] sm:$0xff]
      %v2804 = vld [vmem:[%s462 + $0x77] sm:$0xff]
      %v2805 = vld [vmem:[%s462 + $0x7f] sm:$0xff]
      %v2806 = vld [vmem:[%s462 + $0x87] sm:$0xff]
      %v2807 = vld [vmem:[%s462 + $0x8f] sm:$0xff]
      %v2808 = vld [vmem:[%s462 + $0x97] sm:$0xff]
      %v2809 = vld [vmem:[%s462 + $0x9f] sm:$0xff]
      %v2810 = vld [vmem:[%s462 + $0xa7] sm:$0xff]
      %v2811 = vld [vmem:[%s462 + $0xaf] sm:$0xff]
      %v2812 = vld [vmem:[%s462 + $0xb7] sm:$0xff]
      %v2813 = vld [vmem:[%s462 + $0xbf] sm:$0xff]
      %v2814 = vld [vmem:[%s462 + $0xc7] sm:$0xff]
      %v2815 = vld [vmem:[%s462 + $0xcf] sm:$0xff]
      %v2816 = vld [vmem:[%s462 + $0xd7] sm:$0xff]
      %v2817 = vld [vmem:[%s462 + $0xdf] sm:$0xff]
      %v2818 = vld [vmem:[%s462 + $0xe7] sm:$0xff]
      %v2819 = vld [vmem:[%s462 + $0xef] sm:$0xff]
      %v2820 = vld [vmem:[%s462 + $0xf7] sm:$0xff]
      %v2821 = vld [vmem:[%s462 + $0xff] sm:$0xff]
      %v2822 = vld [vmem:[%s462 + $0x107] sm:$0xff]
      %v2823 = vld [vmem:[%s462 + $0x10f] sm:$0xff]
      %v2824 = vld [vmem:[%s462 + $0x117] sm:$0xff]
      %v2825 = vld [vmem:[%s462 + $0x11f] sm:$0xff]
      %v2826 = vld [vmem:[%s462 + $0x127] sm:$0xff]
      %v2827 = vld [vmem:[%s462 + $0x12f] sm:$0xff]
      %v2828 = vld [vmem:[%s462 + $0x137] sm:$0xff]
      %v2829 = vld [vmem:[%s462 + $0x13f] sm:$0xff]
      %v2830 = vld [vmem:[%s462 + $0x147] sm:$0xff]
      %v2831 = vld [vmem:[%s462 + $0x14f] sm:$0xff]
      %v2832 = vld [vmem:[%s462 + $0x157] sm:$0xff]
      %v2833 = vld [vmem:[%s462 + $0x15f] sm:$0xff]
      %v2834 = vld [vmem:[%s462 + $0x167] sm:$0xff]
      %v2835 = vld [vmem:[%s462 + $0x16f] sm:$0xff]
      %v2836 = vld [vmem:[%s462 + $0x177] sm:$0xff]
      %v2837 = vld [vmem:[%s462 + $0x17f] sm:$0xff]
      %v2838 = vld [vmem:[%s462 + $0x187] sm:$0xff]
      %v2839 = vld [vmem:[%s462 + $0x18f] sm:$0xff]
      %v2840 = vld [vmem:[%s462 + $0x197] sm:$0xff]
      %v2841 = vld [vmem:[%s462 + $0x19f] sm:$0xff]
      %v2842 = vld [vmem:[%s462 + $0x1a7] sm:$0xff]
      %v2843 = vld [vmem:[%s462 + $0x1af] sm:$0xff]
      %s2844 = scalar_lea.vmem %s1, 96
      %v2845 = vld [vmem:[%s2844] sm:$0xff]
      %v2846 = vld [vmem:[%s2844 + $0x8] sm:$0xff]
      %v2848 = vsel %vm569, %v2796, 0
      %v2851 = vsel %vm569, %v2797, 0
      %v2854 = vsel %vm569, %v2798, 0
      %v2857 = vsel %vm569, %v2799, 0
      %v2860 = vsel %vm569, %v2800, 0
      %v2863 = vsel %vm569, %v2801, 0
      %v2866 = vsel %vm569, %v2802, 0
      %v2869 = vsel %vm569, %v2803, 0
      %v2872 = vsel %vm569, %v2804, 0
      %v2875 = vsel %vm569, %v2805, 0
      %v2878 = vsel %vm569, %v2806, 0
      %v2881 = vsel %vm569, %v2807, 0
      %v2884 = vsel %vm569, %v2808, 0
      %v2887 = vsel %vm569, %v2809, 0
      %v2890 = vsel %vm569, %v2810, 0
      %v2893 = vsel %vm569, %v2811, 0
      %v2896 = vsel %vm569, %v2812, 0
      %v2899 = vsel %vm569, %v2813, 0
      %v2902 = vsel %vm569, %v2814, 0
      %v2905 = vsel %vm569, %v2815, 0
      %v2908 = vsel %vm569, %v2816, 0
      %v2911 = vsel %vm569, %v2817, 0
      %v2914 = vsel %vm569, %v2818, 0
      %v2917 = vsel %vm569, %v2819, 0
      %v2920 = vsel %vm569, %v2820, 0
      %v2923 = vsel %vm569, %v2821, 0
      %v2926 = vsel %vm569, %v2822, 0
      %v2929 = vsel %vm569, %v2823, 0
      %v2932 = vsel %vm569, %v2824, 0
      %v2935 = vsel %vm569, %v2825, 0
      %v2938 = vsel %vm569, %v2826, 0
      %v2941 = vsel %vm569, %v2827, 0
      %v2944 = vsel %vm569, %v2828, 0
      %v2947 = vsel %vm569, %v2829, 0
      %v2950 = vsel %vm569, %v2830, 0
      %v2953 = vsel %vm569, %v2831, 0
      %v2956 = vsel %vm569, %v2832, 0
      %v2959 = vsel %vm569, %v2833, 0
      %v2962 = vsel %vm569, %v2834, 0
      %v2965 = vsel %vm569, %v2835, 0
      %v2968 = vsel %vm569, %v2836, 0
      %v2971 = vsel %vm569, %v2837, 0
      %v2974 = vsel %vm569, %v2838, 0
      %v2977 = vsel %vm569, %v2839, 0
      %v2980 = vsel %vm569, %v2840, 0
      %v2983 = vsel %vm569, %v2841, 0
      %v2986 = vsel %vm569, %v2842, 0
      %v2989 = vsel %vm569, %v2843, 0
      %2991 = vmatpush.msra.mxu0 0.0
      %2992 = vmatpush.msra.mxu0 0.0
      %2993 = vmatpush.msra.mxu0 0.0
      %2994 = vmatpush.msra.mxu0 0.0
      %2995 = vmatpush.msra.mxu0 0.0
      %2996 = vmatpush.msra.mxu0 0.0
      %2997 = vmatpush.msra.mxu0 0.0
      %2998 = vmatpush.msra.mxu0 0.0
      %2999 = vmatpush.msra.mxu0 0.0
      %3000 = vmatpush.msra.mxu0 0.0
      %3001 = vmatpush.msra.mxu0 0.0
      %3002 = vmatpush.msra.mxu0 0.0
      %3003 = vmatpush.msra.mxu0 0.0
      %3004 = vmatpush.msra.mxu0 0.0
      %3005 = vmatpush.msra.mxu0 %v2846
      %3006 = vmatpush.msra.mxu0 %v2845
      %3007 = vmatmul.f32.gmra.mxu0 %v2848
      %v3008 = vpop.f32.mrf.mxu0
      %v3009 = vadd.f32 0.0, %v3008
      %3010 = vmatmul.f32.gmra.mxu0 %v2851
      %v3011 = vpop.f32.mrf.mxu0
      %v3012 = vadd.f32 0.0, %v3011
      %3013 = vmatmul.f32.gmra.mxu0 %v2854
      %v3014 = vpop.f32.mrf.mxu0
      %v3015 = vadd.f32 0.0, %v3014
      %3016 = vmatmul.f32.gmra.mxu0 %v2857
      %v3017 = vpop.f32.mrf.mxu0
      %v3018 = vadd.f32 0.0, %v3017
      %3019 = vmatmul.f32.gmra.mxu0 %v2860
      %v3020 = vpop.f32.mrf.mxu0
      %v3021 = vadd.f32 0.0, %v3020
      %3022 = vmatmul.f32.gmra.mxu0 %v2863
      %v3023 = vpop.f32.mrf.mxu0
      %v3024 = vadd.f32 0.0, %v3023
      %3025 = vmatmul.f32.gmra.mxu0 %v2866
      %v3026 = vpop.f32.mrf.mxu0
      %v3027 = vadd.f32 0.0, %v3026
      %3028 = vmatmul.f32.gmra.mxu0 %v2869
      %v3029 = vpop.f32.mrf.mxu0
      %v3030 = vadd.f32 0.0, %v3029
      %3031 = vmatmul.f32.gmra.mxu0 %v2872
      %v3032 = vpop.f32.mrf.mxu0
      %v3033 = vadd.f32 0.0, %v3032
      %3034 = vmatmul.f32.gmra.mxu0 %v2875
      %v3035 = vpop.f32.mrf.mxu0
      %v3036 = vadd.f32 0.0, %v3035
      %3037 = vmatmul.f32.gmra.mxu0 %v2878
      %v3038 = vpop.f32.mrf.mxu0
      %v3039 = vadd.f32 0.0, %v3038
      %3040 = vmatmul.f32.gmra.mxu0 %v2881
      %v3041 = vpop.f32.mrf.mxu0
      %v3042 = vadd.f32 0.0, %v3041
      %3043 = vmatmul.f32.gmra.mxu0 %v2884
      %v3044 = vpop.f32.mrf.mxu0
      %v3045 = vadd.f32 0.0, %v3044
      %3046 = vmatmul.f32.gmra.mxu0 %v2887
      %v3047 = vpop.f32.mrf.mxu0
      %v3048 = vadd.f32 0.0, %v3047
      %3049 = vmatmul.f32.gmra.mxu0 %v2890
      %v3050 = vpop.f32.mrf.mxu0
      %v3051 = vadd.f32 0.0, %v3050
      %3052 = vmatmul.f32.gmra.mxu0 %v2893
      %v3053 = vpop.f32.mrf.mxu0
      %v3054 = vadd.f32 0.0, %v3053
      %3055 = vmatmul.f32.gmra.mxu0 %v2896
      %v3056 = vpop.f32.mrf.mxu0
      %v3057 = vadd.f32 0.0, %v3056
      %3058 = vmatmul.f32.gmra.mxu0 %v2899
      %v3059 = vpop.f32.mrf.mxu0
      %v3060 = vadd.f32 0.0, %v3059
      %3061 = vmatmul.f32.gmra.mxu0 %v2902
      %v3062 = vpop.f32.mrf.mxu0
      %v3063 = vadd.f32 0.0, %v3062
      %3064 = vmatmul.f32.gmra.mxu0 %v2905
      %v3065 = vpop.f32.mrf.mxu0
      %v3066 = vadd.f32 0.0, %v3065
      %3067 = vmatmul.f32.gmra.mxu0 %v2908
      %v3068 = vpop.f32.mrf.mxu0
      %v3069 = vadd.f32 0.0, %v3068
      %3070 = vmatmul.f32.gmra.mxu0 %v2911
      %v3071 = vpop.f32.mrf.mxu0
      %v3072 = vadd.f32 0.0, %v3071
      %3073 = vmatmul.f32.gmra.mxu0 %v2914
      %v3074 = vpop.f32.mrf.mxu0
      %v3075 = vadd.f32 0.0, %v3074
      %3076 = vmatmul.f32.gmra.mxu0 %v2917
      %v3077 = vpop.f32.mrf.mxu0
      %v3078 = vadd.f32 0.0, %v3077
      %3079 = vmatmul.f32.gmra.mxu0 %v2920
      %v3080 = vpop.f32.mrf.mxu0
      %v3081 = vadd.f32 0.0, %v3080
      %3082 = vmatmul.f32.gmra.mxu0 %v2923
      %v3083 = vpop.f32.mrf.mxu0
      %v3084 = vadd.f32 0.0, %v3083
      %3085 = vmatmul.f32.gmra.mxu0 %v2926
      %v3086 = vpop.f32.mrf.mxu0
      %v3087 = vadd.f32 0.0, %v3086
      %3088 = vmatmul.f32.gmra.mxu0 %v2929
      %v3089 = vpop.f32.mrf.mxu0
      %v3090 = vadd.f32 0.0, %v3089
      %3091 = vmatmul.f32.gmra.mxu0 %v2932
      %v3092 = vpop.f32.mrf.mxu0
      %v3093 = vadd.f32 0.0, %v3092
      %3094 = vmatmul.f32.gmra.mxu0 %v2935
      %v3095 = vpop.f32.mrf.mxu0
      %v3096 = vadd.f32 0.0, %v3095
      %3097 = vmatmul.f32.gmra.mxu0 %v2938
      %v3098 = vpop.f32.mrf.mxu0
      %v3099 = vadd.f32 0.0, %v3098
      %3100 = vmatmul.f32.gmra.mxu0 %v2941
      %v3101 = vpop.f32.mrf.mxu0
      %v3102 = vadd.f32 0.0, %v3101
      %3103 = vmatmul.f32.gmra.mxu0 %v2944
      %v3104 = vpop.f32.mrf.mxu0
      %v3105 = vadd.f32 0.0, %v3104
      %3106 = vmatmul.f32.gmra.mxu0 %v2947
      %v3107 = vpop.f32.mrf.mxu0
      %v3108 = vadd.f32 0.0, %v3107
      %3109 = vmatmul.f32.gmra.mxu0 %v2950
      %v3110 = vpop.f32.mrf.mxu0
      %v3111 = vadd.f32 0.0, %v3110
      %3112 = vmatmul.f32.gmra.mxu0 %v2953
      %v3113 = vpop.f32.mrf.mxu0
      %v3114 = vadd.f32 0.0, %v3113
      %3115 = vmatmul.f32.gmra.mxu0 %v2956
      %v3116 = vpop.f32.mrf.mxu0
      %v3117 = vadd.f32 0.0, %v3116
      %3118 = vmatmul.f32.gmra.mxu0 %v2959
      %v3119 = vpop.f32.mrf.mxu0
      %v3120 = vadd.f32 0.0, %v3119
      %3121 = vmatmul.f32.gmra.mxu0 %v2962
      %v3122 = vpop.f32.mrf.mxu0
      %v3123 = vadd.f32 0.0, %v3122
      %3124 = vmatmul.f32.gmra.mxu0 %v2965
      %v3125 = vpop.f32.mrf.mxu0
      %v3126 = vadd.f32 0.0, %v3125
      %3127 = vmatmul.f32.gmra.mxu0 %v2968
      %v3128 = vpop.f32.mrf.mxu0
      %v3129 = vadd.f32 0.0, %v3128
      %3130 = vmatmul.f32.gmra.mxu0 %v2971
      %v3131 = vpop.f32.mrf.mxu0
      %v3132 = vadd.f32 0.0, %v3131
      %3133 = vmatmul.f32.gmra.mxu0 %v2974
      %v3134 = vpop.f32.mrf.mxu0
      %v3135 = vadd.f32 0.0, %v3134
      %3136 = vmatmul.f32.gmra.mxu0 %v2977
      %v3137 = vpop.f32.mrf.mxu0
      %v3138 = vadd.f32 0.0, %v3137
      %3139 = vmatmul.f32.gmra.mxu0 %v2980
      %v3140 = vpop.f32.mrf.mxu0
      %v3141 = vadd.f32 0.0, %v3140
      %3142 = vmatmul.f32.gmra.mxu0 %v2983
      %v3143 = vpop.f32.mrf.mxu0
      %v3144 = vadd.f32 0.0, %v3143
      %3145 = vmatmul.f32.gmra.mxu0 %v2986
      %v3146 = vpop.f32.mrf.mxu0
      %v3147 = vadd.f32 0.0, %v3146
      %3148 = vmatmul.f32.gmra.mxu0 %v2989
      %v3149 = vpop.f32.mrf.mxu0
      %v3150 = vadd.f32 0.0, %v3149
      %3151 = vdwg.mxu0
      %v3152 = vadd.f32 %v2748, %v3009
      %v3153 = vadd.f32 %v2749, %v3012
      %v3154 = vadd.f32 %v2750, %v3015
      %v3155 = vadd.f32 %v2751, %v3018
      %v3156 = vadd.f32 %v2752, %v3021
      %v3157 = vadd.f32 %v2753, %v3024
      %v3158 = vadd.f32 %v2754, %v3027
      %v3159 = vadd.f32 %v2755, %v3030
      %v3160 = vadd.f32 %v2756, %v3033
      %v3161 = vadd.f32 %v2757, %v3036
      %v3162 = vadd.f32 %v2758, %v3039
      %v3163 = vadd.f32 %v2759, %v3042
      %v3164 = vadd.f32 %v2760, %v3045
      %v3165 = vadd.f32 %v2761, %v3048
      %v3166 = vadd.f32 %v2762, %v3051
      %v3167 = vadd.f32 %v2763, %v3054
      %v3168 = vadd.f32 %v2764, %v3057
      %v3169 = vadd.f32 %v2765, %v3060
      %v3170 = vadd.f32 %v2766, %v3063
      %v3171 = vadd.f32 %v2767, %v3066
      %v3172 = vadd.f32 %v2768, %v3069
      %v3173 = vadd.f32 %v2769, %v3072
      %v3174 = vadd.f32 %v2770, %v3075
      %v3175 = vadd.f32 %v2771, %v3078
      %v3176 = vadd.f32 %v2772, %v3081
      %v3177 = vadd.f32 %v2773, %v3084
      %v3178 = vadd.f32 %v2774, %v3087
      %v3179 = vadd.f32 %v2775, %v3090
      %v3180 = vadd.f32 %v2776, %v3093
      %v3181 = vadd.f32 %v2777, %v3096
      %v3182 = vadd.f32 %v2778, %v3099
      %v3183 = vadd.f32 %v2779, %v3102
      %v3184 = vadd.f32 %v2780, %v3105
      %v3185 = vadd.f32 %v2781, %v3108
      %v3186 = vadd.f32 %v2782, %v3111
      %v3187 = vadd.f32 %v2783, %v3114
      %v3188 = vadd.f32 %v2784, %v3117
      %v3189 = vadd.f32 %v2785, %v3120
      %v3190 = vadd.f32 %v2786, %v3123
      %v3191 = vadd.f32 %v2787, %v3126
      %v3192 = vadd.f32 %v2788, %v3129
      %v3193 = vadd.f32 %v2789, %v3132
      %v3194 = vadd.f32 %v2790, %v3135
      %v3195 = vadd.f32 %v2791, %v3138
      %v3196 = vadd.f32 %v2792, %v3141
      %v3197 = vadd.f32 %v2793, %v3144
      %v3198 = vadd.f32 %v2794, %v3147
      %v3199 = vadd.f32 %v2795, %v3150
      %v3200 = vld [vmem:[%s462 + $0x38] sm:$0xff]
      %v3201 = vld [vmem:[%s462 + $0x40] sm:$0xff]
      %v3202 = vld [vmem:[%s462 + $0x48] sm:$0xff]
      %v3203 = vld [vmem:[%s462 + $0x50] sm:$0xff]
      %v3204 = vld [vmem:[%s462 + $0x58] sm:$0xff]
      %v3205 = vld [vmem:[%s462 + $0x60] sm:$0xff]
      %v3206 = vld [vmem:[%s462 + $0x68] sm:$0xff]
      %v3207 = vld [vmem:[%s462 + $0x70] sm:$0xff]
      %v3208 = vld [vmem:[%s462 + $0x78] sm:$0xff]
      %v3209 = vld [vmem:[%s462 + $0x80] sm:$0xff]
      %v3210 = vld [vmem:[%s462 + $0x88] sm:$0xff]
      %v3211 = vld [vmem:[%s462 + $0x90] sm:$0xff]
      %v3212 = vld [vmem:[%s462 + $0x98] sm:$0xff]
      %v3213 = vld [vmem:[%s462 + $0xa0] sm:$0xff]
      %v3214 = vld [vmem:[%s462 + $0xa8] sm:$0xff]
      %v3215 = vld [vmem:[%s462 + $0xb0] sm:$0xff]
      %v3216 = vld [vmem:[%s462 + $0xb8] sm:$0xff]
      %v3217 = vld [vmem:[%s462 + $0xc0] sm:$0xff]
      %v3218 = vld [vmem:[%s462 + $0xc8] sm:$0xff]
      %v3219 = vld [vmem:[%s462 + $0xd0] sm:$0xff]
      %v3220 = vld [vmem:[%s462 + $0xd8] sm:$0xff]
      %v3221 = vld [vmem:[%s462 + $0xe0] sm:$0xff]
      %v3222 = vld [vmem:[%s462 + $0xe8] sm:$0xff]
      %v3223 = vld [vmem:[%s462 + $0xf0] sm:$0xff]
      %v3224 = vld [vmem:[%s462 + $0xf8] sm:$0xff]
      %v3225 = vld [vmem:[%s462 + $0x100] sm:$0xff]
      %v3226 = vld [vmem:[%s462 + $0x108] sm:$0xff]
      %v3227 = vld [vmem:[%s462 + $0x110] sm:$0xff]
      %v3228 = vld [vmem:[%s462 + $0x118] sm:$0xff]
      %v3229 = vld [vmem:[%s462 + $0x120] sm:$0xff]
      %v3230 = vld [vmem:[%s462 + $0x128] sm:$0xff]
      %v3231 = vld [vmem:[%s462 + $0x130] sm:$0xff]
      %v3232 = vld [vmem:[%s462 + $0x138] sm:$0xff]
      %v3233 = vld [vmem:[%s462 + $0x140] sm:$0xff]
      %v3234 = vld [vmem:[%s462 + $0x148] sm:$0xff]
      %v3235 = vld [vmem:[%s462 + $0x150] sm:$0xff]
      %v3236 = vld [vmem:[%s462 + $0x158] sm:$0xff]
      %v3237 = vld [vmem:[%s462 + $0x160] sm:$0xff]
      %v3238 = vld [vmem:[%s462 + $0x168] sm:$0xff]
      %v3239 = vld [vmem:[%s462 + $0x170] sm:$0xff]
      %v3240 = vld [vmem:[%s462 + $0x178] sm:$0xff]
      %v3241 = vld [vmem:[%s462 + $0x180] sm:$0xff]
      %v3242 = vld [vmem:[%s462 + $0x188] sm:$0xff]
      %v3243 = vld [vmem:[%s462 + $0x190] sm:$0xff]
      %v3244 = vld [vmem:[%s462 + $0x198] sm:$0xff]
      %v3245 = vld [vmem:[%s462 + $0x1a0] sm:$0xff]
      %v3246 = vld [vmem:[%s462 + $0x1a8] sm:$0xff]
      %v3247 = vld [vmem:[%s462 + $0x1b0] sm:$0xff]
      %s3248 = scalar_lea.vmem %s1, 112
      %v3249 = vld [vmem:[%s3248] sm:$0xff]
      %v3250 = vld [vmem:[%s3248 + $0x8] sm:$0xff]
      %v3252 = vsel %vm569, %v3200, 0
      %v3255 = vsel %vm569, %v3201, 0
      %v3258 = vsel %vm569, %v3202, 0
      %v3261 = vsel %vm569, %v3203, 0
      %v3264 = vsel %vm569, %v3204, 0
      %v3267 = vsel %vm569, %v3205, 0
      %v3270 = vsel %vm569, %v3206, 0
      %v3273 = vsel %vm569, %v3207, 0
      %v3276 = vsel %vm569, %v3208, 0
      %v3279 = vsel %vm569, %v3209, 0
      %v3282 = vsel %vm569, %v3210, 0
      %v3285 = vsel %vm569, %v3211, 0
      %v3288 = vsel %vm569, %v3212, 0
      %v3291 = vsel %vm569, %v3213, 0
      %v3294 = vsel %vm569, %v3214, 0
      %v3297 = vsel %vm569, %v3215, 0
      %v3300 = vsel %vm569, %v3216, 0
      %v3303 = vsel %vm569, %v3217, 0
      %v3306 = vsel %vm569, %v3218, 0
      %v3309 = vsel %vm569, %v3219, 0
      %v3312 = vsel %vm569, %v3220, 0
      %v3315 = vsel %vm569, %v3221, 0
      %v3318 = vsel %vm569, %v3222, 0
      %v3321 = vsel %vm569, %v3223, 0
      %v3324 = vsel %vm569, %v3224, 0
      %v3327 = vsel %vm569, %v3225, 0
      %v3330 = vsel %vm569, %v3226, 0
      %v3333 = vsel %vm569, %v3227, 0
      %v3336 = vsel %vm569, %v3228, 0
      %v3339 = vsel %vm569, %v3229, 0
      %v3342 = vsel %vm569, %v3230, 0
      %v3345 = vsel %vm569, %v3231, 0
      %v3348 = vsel %vm569, %v3232, 0
      %v3351 = vsel %vm569, %v3233, 0
      %v3354 = vsel %vm569, %v3234, 0
      %v3357 = vsel %vm569, %v3235, 0
      %v3360 = vsel %vm569, %v3236, 0
      %v3363 = vsel %vm569, %v3237, 0
      %v3366 = vsel %vm569, %v3238, 0
      %v3369 = vsel %vm569, %v3239, 0
      %v3372 = vsel %vm569, %v3240, 0
      %v3375 = vsel %vm569, %v3241, 0
      %v3378 = vsel %vm569, %v3242, 0
      %v3381 = vsel %vm569, %v3243, 0
      %v3384 = vsel %vm569, %v3244, 0
      %v3387 = vsel %vm569, %v3245, 0
      %v3390 = vsel %vm569, %v3246, 0
      %v3393 = vsel %vm569, %v3247, 0
      %3395 = vmatpush.msra.mxu0 0.0
      %3396 = vmatpush.msra.mxu0 0.0
      %3397 = vmatpush.msra.mxu0 0.0
      %3398 = vmatpush.msra.mxu0 0.0
      %3399 = vmatpush.msra.mxu0 0.0
      %3400 = vmatpush.msra.mxu0 0.0
      %3401 = vmatpush.msra.mxu0 0.0
      %3402 = vmatpush.msra.mxu0 0.0
      %3403 = vmatpush.msra.mxu0 0.0
      %3404 = vmatpush.msra.mxu0 0.0
      %3405 = vmatpush.msra.mxu0 0.0
      %3406 = vmatpush.msra.mxu0 0.0
      %3407 = vmatpush.msra.mxu0 0.0
      %3408 = vmatpush.msra.mxu0 0.0
      %3409 = vmatpush.msra.mxu0 %v3250
      %3410 = vmatpush.msra.mxu0 %v3249
      %3411 = vmatmul.f32.gmra.mxu0 %v3252
      %v3412 = vpop.f32.mrf.mxu0
      %v3413 = vadd.f32 0.0, %v3412
      %3414 = vmatmul.f32.gmra.mxu0 %v3255
      %v3415 = vpop.f32.mrf.mxu0
      %v3416 = vadd.f32 0.0, %v3415
      %3417 = vmatmul.f32.gmra.mxu0 %v3258
      %v3418 = vpop.f32.mrf.mxu0
      %v3419 = vadd.f32 0.0, %v3418
      %3420 = vmatmul.f32.gmra.mxu0 %v3261
      %v3421 = vpop.f32.mrf.mxu0
      %v3422 = vadd.f32 0.0, %v3421
      %3423 = vmatmul.f32.gmra.mxu0 %v3264
      %v3424 = vpop.f32.mrf.mxu0
      %v3425 = vadd.f32 0.0, %v3424
      %3426 = vmatmul.f32.gmra.mxu0 %v3267
      %v3427 = vpop.f32.mrf.mxu0
      %v3428 = vadd.f32 0.0, %v3427
      %3429 = vmatmul.f32.gmra.mxu0 %v3270
      %v3430 = vpop.f32.mrf.mxu0
      %v3431 = vadd.f32 0.0, %v3430
      %3432 = vmatmul.f32.gmra.mxu0 %v3273
      %v3433 = vpop.f32.mrf.mxu0
      %v3434 = vadd.f32 0.0, %v3433
      %3435 = vmatmul.f32.gmra.mxu0 %v3276
      %v3436 = vpop.f32.mrf.mxu0
      %v3437 = vadd.f32 0.0, %v3436
      %3438 = vmatmul.f32.gmra.mxu0 %v3279
      %v3439 = vpop.f32.mrf.mxu0
      %v3440 = vadd.f32 0.0, %v3439
      %3441 = vmatmul.f32.gmra.mxu0 %v3282
      %v3442 = vpop.f32.mrf.mxu0
      %v3443 = vadd.f32 0.0, %v3442
      %3444 = vmatmul.f32.gmra.mxu0 %v3285
      %v3445 = vpop.f32.mrf.mxu0
      %v3446 = vadd.f32 0.0, %v3445
      %3447 = vmatmul.f32.gmra.mxu0 %v3288
      %v3448 = vpop.f32.mrf.mxu0
      %v3449 = vadd.f32 0.0, %v3448
      %3450 = vmatmul.f32.gmra.mxu0 %v3291
      %v3451 = vpop.f32.mrf.mxu0
      %v3452 = vadd.f32 0.0, %v3451
      %3453 = vmatmul.f32.gmra.mxu0 %v3294
      %v3454 = vpop.f32.mrf.mxu0
      %v3455 = vadd.f32 0.0, %v3454
      %3456 = vmatmul.f32.gmra.mxu0 %v3297
      %v3457 = vpop.f32.mrf.mxu0
      %v3458 = vadd.f32 0.0, %v3457
      %3459 = vmatmul.f32.gmra.mxu0 %v3300
      %v3460 = vpop.f32.mrf.mxu0
      %v3461 = vadd.f32 0.0, %v3460
      %3462 = vmatmul.f32.gmra.mxu0 %v3303
      %v3463 = vpop.f32.mrf.mxu0
      %v3464 = vadd.f32 0.0, %v3463
      %3465 = vmatmul.f32.gmra.mxu0 %v3306
      %v3466 = vpop.f32.mrf.mxu0
      %v3467 = vadd.f32 0.0, %v3466
      %3468 = vmatmul.f32.gmra.mxu0 %v3309
      %v3469 = vpop.f32.mrf.mxu0
      %v3470 = vadd.f32 0.0, %v3469
      %3471 = vmatmul.f32.gmra.mxu0 %v3312
      %v3472 = vpop.f32.mrf.mxu0
      %v3473 = vadd.f32 0.0, %v3472
      %3474 = vmatmul.f32.gmra.mxu0 %v3315
      %v3475 = vpop.f32.mrf.mxu0
      %v3476 = vadd.f32 0.0, %v3475
      %3477 = vmatmul.f32.gmra.mxu0 %v3318
      %v3478 = vpop.f32.mrf.mxu0
      %v3479 = vadd.f32 0.0, %v3478
      %3480 = vmatmul.f32.gmra.mxu0 %v3321
      %v3481 = vpop.f32.mrf.mxu0
      %v3482 = vadd.f32 0.0, %v3481
      %3483 = vmatmul.f32.gmra.mxu0 %v3324
      %v3484 = vpop.f32.mrf.mxu0
      %v3485 = vadd.f32 0.0, %v3484
      %3486 = vmatmul.f32.gmra.mxu0 %v3327
      %v3487 = vpop.f32.mrf.mxu0
      %v3488 = vadd.f32 0.0, %v3487
      %3489 = vmatmul.f32.gmra.mxu0 %v3330
      %v3490 = vpop.f32.mrf.mxu0
      %v3491 = vadd.f32 0.0, %v3490
      %3492 = vmatmul.f32.gmra.mxu0 %v3333
      %v3493 = vpop.f32.mrf.mxu0
      %v3494 = vadd.f32 0.0, %v3493
      %3495 = vmatmul.f32.gmra.mxu0 %v3336
      %v3496 = vpop.f32.mrf.mxu0
      %v3497 = vadd.f32 0.0, %v3496
      %3498 = vmatmul.f32.gmra.mxu0 %v3339
      %v3499 = vpop.f32.mrf.mxu0
      %v3500 = vadd.f32 0.0, %v3499
      %3501 = vmatmul.f32.gmra.mxu0 %v3342
      %v3502 = vpop.f32.mrf.mxu0
      %v3503 = vadd.f32 0.0, %v3502
      %3504 = vmatmul.f32.gmra.mxu0 %v3345
      %v3505 = vpop.f32.mrf.mxu0
      %v3506 = vadd.f32 0.0, %v3505
      %3507 = vmatmul.f32.gmra.mxu0 %v3348
      %v3508 = vpop.f32.mrf.mxu0
      %v3509 = vadd.f32 0.0, %v3508
      %3510 = vmatmul.f32.gmra.mxu0 %v3351
      %v3511 = vpop.f32.mrf.mxu0
      %v3512 = vadd.f32 0.0, %v3511
      %3513 = vmatmul.f32.gmra.mxu0 %v3354
      %v3514 = vpop.f32.mrf.mxu0
      %v3515 = vadd.f32 0.0, %v3514
      %3516 = vmatmul.f32.gmra.mxu0 %v3357
      %v3517 = vpop.f32.mrf.mxu0
      %v3518 = vadd.f32 0.0, %v3517
      %3519 = vmatmul.f32.gmra.mxu0 %v3360
      %v3520 = vpop.f32.mrf.mxu0
      %v3521 = vadd.f32 0.0, %v3520
      %3522 = vmatmul.f32.gmra.mxu0 %v3363
      %v3523 = vpop.f32.mrf.mxu0
      %v3524 = vadd.f32 0.0, %v3523
      %3525 = vmatmul.f32.gmra.mxu0 %v3366
      %v3526 = vpop.f32.mrf.mxu0
      %v3527 = vadd.f32 0.0, %v3526
      %3528 = vmatmul.f32.gmra.mxu0 %v3369
      %v3529 = vpop.f32.mrf.mxu0
      %v3530 = vadd.f32 0.0, %v3529
      %3531 = vmatmul.f32.gmra.mxu0 %v3372
      %v3532 = vpop.f32.mrf.mxu0
      %v3533 = vadd.f32 0.0, %v3532
      %3534 = vmatmul.f32.gmra.mxu0 %v3375
      %v3535 = vpop.f32.mrf.mxu0
      %v3536 = vadd.f32 0.0, %v3535
      %3537 = vmatmul.f32.gmra.mxu0 %v3378
      %v3538 = vpop.f32.mrf.mxu0
      %v3539 = vadd.f32 0.0, %v3538
      %3540 = vmatmul.f32.gmra.mxu0 %v3381
      %v3541 = vpop.f32.mrf.mxu0
      %v3542 = vadd.f32 0.0, %v3541
      %3543 = vmatmul.f32.gmra.mxu0 %v3384
      %v3544 = vpop.f32.mrf.mxu0
      %v3545 = vadd.f32 0.0, %v3544
      %3546 = vmatmul.f32.gmra.mxu0 %v3387
      %v3547 = vpop.f32.mrf.mxu0
      %v3548 = vadd.f32 0.0, %v3547
      %3549 = vmatmul.f32.gmra.mxu0 %v3390
      %v3550 = vpop.f32.mrf.mxu0
      %v3551 = vadd.f32 0.0, %v3550
      %3552 = vmatmul.f32.gmra.mxu0 %v3393
      %v3553 = vpop.f32.mrf.mxu0
      %v3554 = vadd.f32 0.0, %v3553
      %3555 = vdwg.mxu0
      %v3556 = vadd.f32 %v3152, %v3413
      %v3557 = vadd.f32 %v3153, %v3416
      %v3558 = vadd.f32 %v3154, %v3419
      %v3559 = vadd.f32 %v3155, %v3422
      %v3560 = vadd.f32 %v3156, %v3425
      %v3561 = vadd.f32 %v3157, %v3428
      %v3562 = vadd.f32 %v3158, %v3431
      %v3563 = vadd.f32 %v3159, %v3434
      %v3564 = vadd.f32 %v3160, %v3437
      %v3565 = vadd.f32 %v3161, %v3440
      %v3566 = vadd.f32 %v3162, %v3443
      %v3567 = vadd.f32 %v3163, %v3446
      %v3568 = vadd.f32 %v3164, %v3449
      %v3569 = vadd.f32 %v3165, %v3452
      %v3570 = vadd.f32 %v3166, %v3455
      %v3571 = vadd.f32 %v3167, %v3458
      %v3572 = vadd.f32 %v3168, %v3461
      %v3573 = vadd.f32 %v3169, %v3464
      %v3574 = vadd.f32 %v3170, %v3467
      %v3575 = vadd.f32 %v3171, %v3470
      %v3576 = vadd.f32 %v3172, %v3473
      %v3577 = vadd.f32 %v3173, %v3476
      %v3578 = vadd.f32 %v3174, %v3479
      %v3579 = vadd.f32 %v3175, %v3482
      %v3580 = vadd.f32 %v3176, %v3485
      %v3581 = vadd.f32 %v3177, %v3488
      %v3582 = vadd.f32 %v3178, %v3491
      %v3583 = vadd.f32 %v3179, %v3494
      %v3584 = vadd.f32 %v3180, %v3497
      %v3585 = vadd.f32 %v3181, %v3500
      %v3586 = vadd.f32 %v3182, %v3503
      %v3587 = vadd.f32 %v3183, %v3506
      %v3588 = vadd.f32 %v3184, %v3509
      %v3589 = vadd.f32 %v3185, %v3512
      %v3590 = vadd.f32 %v3186, %v3515
      %v3591 = vadd.f32 %v3187, %v3518
      %v3592 = vadd.f32 %v3188, %v3521
      %v3593 = vadd.f32 %v3189, %v3524
      %v3594 = vadd.f32 %v3190, %v3527
      %v3595 = vadd.f32 %v3191, %v3530
      %v3596 = vadd.f32 %v3192, %v3533
      %v3597 = vadd.f32 %v3193, %v3536
      %v3598 = vadd.f32 %v3194, %v3539
      %v3599 = vadd.f32 %v3195, %v3542
      %v3600 = vadd.f32 %v3196, %v3545
      %v3601 = vadd.f32 %v3197, %v3548
      %v3602 = vadd.f32 %v3198, %v3551
      %v3603 = vadd.f32 %v3199, %v3554
      %v3604 = vld [vmem:[%s462 + $0x39] sm:$0xff]
      %v3605 = vld [vmem:[%s462 + $0x41] sm:$0xff]
      %v3606 = vld [vmem:[%s462 + $0x49] sm:$0xff]
      %v3607 = vld [vmem:[%s462 + $0x51] sm:$0xff]
      %v3608 = vld [vmem:[%s462 + $0x59] sm:$0xff]
      %v3609 = vld [vmem:[%s462 + $0x61] sm:$0xff]
      %v3610 = vld [vmem:[%s462 + $0x69] sm:$0xff]
      %v3611 = vld [vmem:[%s462 + $0x71] sm:$0xff]
      %v3612 = vld [vmem:[%s462 + $0x79] sm:$0xff]
      %v3613 = vld [vmem:[%s462 + $0x81] sm:$0xff]
      %v3614 = vld [vmem:[%s462 + $0x89] sm:$0xff]
      %v3615 = vld [vmem:[%s462 + $0x91] sm:$0xff]
      %v3616 = vld [vmem:[%s462 + $0x99] sm:$0xff]
      %v3617 = vld [vmem:[%s462 + $0xa1] sm:$0xff]
      %v3618 = vld [vmem:[%s462 + $0xa9] sm:$0xff]
      %v3619 = vld [vmem:[%s462 + $0xb1] sm:$0xff]
      %v3620 = vld [vmem:[%s462 + $0xb9] sm:$0xff]
      %v3621 = vld [vmem:[%s462 + $0xc1] sm:$0xff]
      %v3622 = vld [vmem:[%s462 + $0xc9] sm:$0xff]
      %v3623 = vld [vmem:[%s462 + $0xd1] sm:$0xff]
      %v3624 = vld [vmem:[%s462 + $0xd9] sm:$0xff]
      %v3625 = vld [vmem:[%s462 + $0xe1] sm:$0xff]
      %v3626 = vld [vmem:[%s462 + $0xe9] sm:$0xff]
      %v3627 = vld [vmem:[%s462 + $0xf1] sm:$0xff]
      %v3628 = vld [vmem:[%s462 + $0xf9] sm:$0xff]
      %v3629 = vld [vmem:[%s462 + $0x101] sm:$0xff]
      %v3630 = vld [vmem:[%s462 + $0x109] sm:$0xff]
      %v3631 = vld [vmem:[%s462 + $0x111] sm:$0xff]
      %v3632 = vld [vmem:[%s462 + $0x119] sm:$0xff]
      %v3633 = vld [vmem:[%s462 + $0x121] sm:$0xff]
      %v3634 = vld [vmem:[%s462 + $0x129] sm:$0xff]
      %v3635 = vld [vmem:[%s462 + $0x131] sm:$0xff]
      %v3636 = vld [vmem:[%s462 + $0x139] sm:$0xff]
      %v3637 = vld [vmem:[%s462 + $0x141] sm:$0xff]
      %v3638 = vld [vmem:[%s462 + $0x149] sm:$0xff]
      %v3639 = vld [vmem:[%s462 + $0x151] sm:$0xff]
      %v3640 = vld [vmem:[%s462 + $0x159] sm:$0xff]
      %v3641 = vld [vmem:[%s462 + $0x161] sm:$0xff]
      %v3642 = vld [vmem:[%s462 + $0x169] sm:$0xff]
      %v3643 = vld [vmem:[%s462 + $0x171] sm:$0xff]
      %v3644 = vld [vmem:[%s462 + $0x179] sm:$0xff]
      %v3645 = vld [vmem:[%s462 + $0x181] sm:$0xff]
      %v3646 = vld [vmem:[%s462 + $0x189] sm:$0xff]
      %v3647 = vld [vmem:[%s462 + $0x191] sm:$0xff]
      %v3648 = vld [vmem:[%s462 + $0x199] sm:$0xff]
      %v3649 = vld [vmem:[%s462 + $0x1a1] sm:$0xff]
      %v3650 = vld [vmem:[%s462 + $0x1a9] sm:$0xff]
      %v3651 = vld [vmem:[%s462 + $0x1b1] sm:$0xff]
      %s3652 = scalar_lea.vmem %s1, 128
      %v3653 = vld [vmem:[%s3652] sm:$0xff]
      %v3654 = vld [vmem:[%s3652 + $0x8] sm:$0xff]
      %v3656 = vsel %vm569, %v3604, 0
      %v3659 = vsel %vm569, %v3605, 0
      %v3662 = vsel %vm569, %v3606, 0
      %v3665 = vsel %vm569, %v3607, 0
      %v3668 = vsel %vm569, %v3608, 0
      %v3671 = vsel %vm569, %v3609, 0
      %v3674 = vsel %vm569, %v3610, 0
      %v3677 = vsel %vm569, %v3611, 0
      %v3680 = vsel %vm569, %v3612, 0
      %v3683 = vsel %vm569, %v3613, 0
      %v3686 = vsel %vm569, %v3614, 0
      %v3689 = vsel %vm569, %v3615, 0
      %v3692 = vsel %vm569, %v3616, 0
      %v3695 = vsel %vm569, %v3617, 0
      %v3698 = vsel %vm569, %v3618, 0
      %v3701 = vsel %vm569, %v3619, 0
      %v3704 = vsel %vm569, %v3620, 0
      %v3707 = vsel %vm569, %v3621, 0
      %v3710 = vsel %vm569, %v3622, 0
      %v3713 = vsel %vm569, %v3623, 0
      %v3716 = vsel %vm569, %v3624, 0
      %v3719 = vsel %vm569, %v3625, 0
      %v3722 = vsel %vm569, %v3626, 0
      %v3725 = vsel %vm569, %v3627, 0
      %v3728 = vsel %vm569, %v3628, 0
      %v3731 = vsel %vm569, %v3629, 0
      %v3734 = vsel %vm569, %v3630, 0
      %v3737 = vsel %vm569, %v3631, 0
      %v3740 = vsel %vm569, %v3632, 0
      %v3743 = vsel %vm569, %v3633, 0
      %v3746 = vsel %vm569, %v3634, 0
      %v3749 = vsel %vm569, %v3635, 0
      %v3752 = vsel %vm569, %v3636, 0
      %v3755 = vsel %vm569, %v3637, 0
      %v3758 = vsel %vm569, %v3638, 0
      %v3761 = vsel %vm569, %v3639, 0
      %v3764 = vsel %vm569, %v3640, 0
      %v3767 = vsel %vm569, %v3641, 0
      %v3770 = vsel %vm569, %v3642, 0
      %v3773 = vsel %vm569, %v3643, 0
      %v3776 = vsel %vm569, %v3644, 0
      %v3779 = vsel %vm569, %v3645, 0
      %v3782 = vsel %vm569, %v3646, 0
      %v3785 = vsel %vm569, %v3647, 0
      %v3788 = vsel %vm569, %v3648, 0
      %v3791 = vsel %vm569, %v3649, 0
      %v3794 = vsel %vm569, %v3650, 0
      %v3797 = vsel %vm569, %v3651, 0
      %3799 = vmatpush.msra.mxu0 0.0
      %3800 = vmatpush.msra.mxu0 0.0
      %3801 = vmatpush.msra.mxu0 0.0
      %3802 = vmatpush.msra.mxu0 0.0
      %3803 = vmatpush.msra.mxu0 0.0
      %3804 = vmatpush.msra.mxu0 0.0
      %3805 = vmatpush.msra.mxu0 0.0
      %3806 = vmatpush.msra.mxu0 0.0
      %3807 = vmatpush.msra.mxu0 0.0
      %3808 = vmatpush.msra.mxu0 0.0
      %3809 = vmatpush.msra.mxu0 0.0
      %3810 = vmatpush.msra.mxu0 0.0
      %3811 = vmatpush.msra.mxu0 0.0
      %3812 = vmatpush.msra.mxu0 0.0
      %3813 = vmatpush.msra.mxu0 %v3654
      %3814 = vmatpush.msra.mxu0 %v3653
      %3815 = vmatmul.f32.gmra.mxu0 %v3656
      %v3816 = vpop.f32.mrf.mxu0
      %v3817 = vadd.f32 0.0, %v3816
      %3818 = vmatmul.f32.gmra.mxu0 %v3659
      %v3819 = vpop.f32.mrf.mxu0
      %v3820 = vadd.f32 0.0, %v3819
      %3821 = vmatmul.f32.gmra.mxu0 %v3662
      %v3822 = vpop.f32.mrf.mxu0
      %v3823 = vadd.f32 0.0, %v3822
      %3824 = vmatmul.f32.gmra.mxu0 %v3665
      %v3825 = vpop.f32.mrf.mxu0
      %v3826 = vadd.f32 0.0, %v3825
      %3827 = vmatmul.f32.gmra.mxu0 %v3668
      %v3828 = vpop.f32.mrf.mxu0
      %v3829 = vadd.f32 0.0, %v3828
      %3830 = vmatmul.f32.gmra.mxu0 %v3671
      %v3831 = vpop.f32.mrf.mxu0
      %v3832 = vadd.f32 0.0, %v3831
      %3833 = vmatmul.f32.gmra.mxu0 %v3674
      %v3834 = vpop.f32.mrf.mxu0
      %v3835 = vadd.f32 0.0, %v3834
      %3836 = vmatmul.f32.gmra.mxu0 %v3677
      %v3837 = vpop.f32.mrf.mxu0
      %v3838 = vadd.f32 0.0, %v3837
      %3839 = vmatmul.f32.gmra.mxu0 %v3680
      %v3840 = vpop.f32.mrf.mxu0
      %v3841 = vadd.f32 0.0, %v3840
      %3842 = vmatmul.f32.gmra.mxu0 %v3683
      %v3843 = vpop.f32.mrf.mxu0
      %v3844 = vadd.f32 0.0, %v3843
      %3845 = vmatmul.f32.gmra.mxu0 %v3686
      %v3846 = vpop.f32.mrf.mxu0
      %v3847 = vadd.f32 0.0, %v3846
      %3848 = vmatmul.f32.gmra.mxu0 %v3689
      %v3849 = vpop.f32.mrf.mxu0
      %v3850 = vadd.f32 0.0, %v3849
      %3851 = vmatmul.f32.gmra.mxu0 %v3692
      %v3852 = vpop.f32.mrf.mxu0
      %v3853 = vadd.f32 0.0, %v3852
      %3854 = vmatmul.f32.gmra.mxu0 %v3695
      %v3855 = vpop.f32.mrf.mxu0
      %v3856 = vadd.f32 0.0, %v3855
      %3857 = vmatmul.f32.gmra.mxu0 %v3698
      %v3858 = vpop.f32.mrf.mxu0
      %v3859 = vadd.f32 0.0, %v3858
      %3860 = vmatmul.f32.gmra.mxu0 %v3701
      %v3861 = vpop.f32.mrf.mxu0
      %v3862 = vadd.f32 0.0, %v3861
      %3863 = vmatmul.f32.gmra.mxu0 %v3704
      %v3864 = vpop.f32.mrf.mxu0
      %v3865 = vadd.f32 0.0, %v3864
      %3866 = vmatmul.f32.gmra.mxu0 %v3707
      %v3867 = vpop.f32.mrf.mxu0
      %v3868 = vadd.f32 0.0, %v3867
      %3869 = vmatmul.f32.gmra.mxu0 %v3710
      %v3870 = vpop.f32.mrf.mxu0
      %v3871 = vadd.f32 0.0, %v3870
      %3872 = vmatmul.f32.gmra.mxu0 %v3713
      %v3873 = vpop.f32.mrf.mxu0
      %v3874 = vadd.f32 0.0, %v3873
      %3875 = vmatmul.f32.gmra.mxu0 %v3716
      %v3876 = vpop.f32.mrf.mxu0
      %v3877 = vadd.f32 0.0, %v3876
      %3878 = vmatmul.f32.gmra.mxu0 %v3719
      %v3879 = vpop.f32.mrf.mxu0
      %v3880 = vadd.f32 0.0, %v3879
      %3881 = vmatmul.f32.gmra.mxu0 %v3722
      %v3882 = vpop.f32.mrf.mxu0
      %v3883 = vadd.f32 0.0, %v3882
      %3884 = vmatmul.f32.gmra.mxu0 %v3725
      %v3885 = vpop.f32.mrf.mxu0
      %v3886 = vadd.f32 0.0, %v3885
      %3887 = vmatmul.f32.gmra.mxu0 %v3728
      %v3888 = vpop.f32.mrf.mxu0
      %v3889 = vadd.f32 0.0, %v3888
      %3890 = vmatmul.f32.gmra.mxu0 %v3731
      %v3891 = vpop.f32.mrf.mxu0
      %v3892 = vadd.f32 0.0, %v3891
      %3893 = vmatmul.f32.gmra.mxu0 %v3734
      %v3894 = vpop.f32.mrf.mxu0
      %v3895 = vadd.f32 0.0, %v3894
      %3896 = vmatmul.f32.gmra.mxu0 %v3737
      %v3897 = vpop.f32.mrf.mxu0
      %v3898 = vadd.f32 0.0, %v3897
      %3899 = vmatmul.f32.gmra.mxu0 %v3740
      %v3900 = vpop.f32.mrf.mxu0
      %v3901 = vadd.f32 0.0, %v3900
      %3902 = vmatmul.f32.gmra.mxu0 %v3743
      %v3903 = vpop.f32.mrf.mxu0
      %v3904 = vadd.f32 0.0, %v3903
      %3905 = vmatmul.f32.gmra.mxu0 %v3746
      %v3906 = vpop.f32.mrf.mxu0
      %v3907 = vadd.f32 0.0, %v3906
      %3908 = vmatmul.f32.gmra.mxu0 %v3749
      %v3909 = vpop.f32.mrf.mxu0
      %v3910 = vadd.f32 0.0, %v3909
      %3911 = vmatmul.f32.gmra.mxu0 %v3752
      %v3912 = vpop.f32.mrf.mxu0
      %v3913 = vadd.f32 0.0, %v3912
      %3914 = vmatmul.f32.gmra.mxu0 %v3755
      %v3915 = vpop.f32.mrf.mxu0
      %v3916 = vadd.f32 0.0, %v3915
      %3917 = vmatmul.f32.gmra.mxu0 %v3758
      %v3918 = vpop.f32.mrf.mxu0
      %v3919 = vadd.f32 0.0, %v3918
      %3920 = vmatmul.f32.gmra.mxu0 %v3761
      %v3921 = vpop.f32.mrf.mxu0
      %v3922 = vadd.f32 0.0, %v3921
      %3923 = vmatmul.f32.gmra.mxu0 %v3764
      %v3924 = vpop.f32.mrf.mxu0
      %v3925 = vadd.f32 0.0, %v3924
      %3926 = vmatmul.f32.gmra.mxu0 %v3767
      %v3927 = vpop.f32.mrf.mxu0
      %v3928 = vadd.f32 0.0, %v3927
      %3929 = vmatmul.f32.gmra.mxu0 %v3770
      %v3930 = vpop.f32.mrf.mxu0
      %v3931 = vadd.f32 0.0, %v3930
      %3932 = vmatmul.f32.gmra.mxu0 %v3773
      %v3933 = vpop.f32.mrf.mxu0
      %v3934 = vadd.f32 0.0, %v3933
      %3935 = vmatmul.f32.gmra.mxu0 %v3776
      %v3936 = vpop.f32.mrf.mxu0
      %v3937 = vadd.f32 0.0, %v3936
      %3938 = vmatmul.f32.gmra.mxu0 %v3779
      %v3939 = vpop.f32.mrf.mxu0
      %v3940 = vadd.f32 0.0, %v3939
      %3941 = vmatmul.f32.gmra.mxu0 %v3782
      %v3942 = vpop.f32.mrf.mxu0
      %v3943 = vadd.f32 0.0, %v3942
      %3944 = vmatmul.f32.gmra.mxu0 %v3785
      %v3945 = vpop.f32.mrf.mxu0
      %v3946 = vadd.f32 0.0, %v3945
      %3947 = vmatmul.f32.gmra.mxu0 %v3788
      %v3948 = vpop.f32.mrf.mxu0
      %v3949 = vadd.f32 0.0, %v3948
      %3950 = vmatmul.f32.gmra.mxu0 %v3791
      %v3951 = vpop.f32.mrf.mxu0
      %v3952 = vadd.f32 0.0, %v3951
      %3953 = vmatmul.f32.gmra.mxu0 %v3794
      %v3954 = vpop.f32.mrf.mxu0
      %v3955 = vadd.f32 0.0, %v3954
      %3956 = vmatmul.f32.gmra.mxu0 %v3797
      %v3957 = vpop.f32.mrf.mxu0
      %v3958 = vadd.f32 0.0, %v3957
      %3959 = vdwg.mxu0
      %v3960 = vadd.f32 %v3556, %v3817
      %v3961 = vadd.f32 %v3557, %v3820
      %v3962 = vadd.f32 %v3558, %v3823
      %v3963 = vadd.f32 %v3559, %v3826
      %v3964 = vadd.f32 %v3560, %v3829
      %v3965 = vadd.f32 %v3561, %v3832
      %v3966 = vadd.f32 %v3562, %v3835
      %v3967 = vadd.f32 %v3563, %v3838
      %v3968 = vadd.f32 %v3564, %v3841
      %v3969 = vadd.f32 %v3565, %v3844
      %v3970 = vadd.f32 %v3566, %v3847
      %v3971 = vadd.f32 %v3567, %v3850
      %v3972 = vadd.f32 %v3568, %v3853
      %v3973 = vadd.f32 %v3569, %v3856
      %v3974 = vadd.f32 %v3570, %v3859
      %v3975 = vadd.f32 %v3571, %v3862
      %v3976 = vadd.f32 %v3572, %v3865
      %v3977 = vadd.f32 %v3573, %v3868
      %v3978 = vadd.f32 %v3574, %v3871
      %v3979 = vadd.f32 %v3575, %v3874
      %v3980 = vadd.f32 %v3576, %v3877
      %v3981 = vadd.f32 %v3577, %v3880
      %v3982 = vadd.f32 %v3578, %v3883
      %v3983 = vadd.f32 %v3579, %v3886
      %v3984 = vadd.f32 %v3580, %v3889
      %v3985 = vadd.f32 %v3581, %v3892
      %v3986 = vadd.f32 %v3582, %v3895
      %v3987 = vadd.f32 %v3583, %v3898
      %v3988 = vadd.f32 %v3584, %v3901
      %v3989 = vadd.f32 %v3585, %v3904
      %v3990 = vadd.f32 %v3586, %v3907
      %v3991 = vadd.f32 %v3587, %v3910
      %v3992 = vadd.f32 %v3588, %v3913
      %v3993 = vadd.f32 %v3589, %v3916
      %v3994 = vadd.f32 %v3590, %v3919
      %v3995 = vadd.f32 %v3591, %v3922
      %v3996 = vadd.f32 %v3592, %v3925
      %v3997 = vadd.f32 %v3593, %v3928
      %v3998 = vadd.f32 %v3594, %v3931
      %v3999 = vadd.f32 %v3595, %v3934
      %v4000 = vadd.f32 %v3596, %v3937
      %v4001 = vadd.f32 %v3597, %v3940
      %v4002 = vadd.f32 %v3598, %v3943
      %v4003 = vadd.f32 %v3599, %v3946
      %v4004 = vadd.f32 %v3600, %v3949
      %v4005 = vadd.f32 %v3601, %v3952
      %v4006 = vadd.f32 %v3602, %v3955
      %v4007 = vadd.f32 %v3603, %v3958
      %v4008 = vld [vmem:[%s2] sm:$0x1]
      %v4010 = vperm.slane %v4008, 0
      %v4012 = vadd.f32 %v3960, %v4010
      %v4013 = vadd.f32 %v3961, %v4010
      %v4014 = vadd.f32 %v3962, %v4010
      %v4015 = vadd.f32 %v3963, %v4010
      %v4016 = vadd.f32 %v3964, %v4010
      %v4017 = vadd.f32 %v3965, %v4010
      %v4018 = vadd.f32 %v3966, %v4010
      %v4019 = vadd.f32 %v3967, %v4010
      %v4020 = vadd.f32 %v3968, %v4010
      %v4021 = vadd.f32 %v3969, %v4010
      %v4022 = vadd.f32 %v3970, %v4010
      %v4023 = vadd.f32 %v3971, %v4010
      %v4024 = vadd.f32 %v3972, %v4010
      %v4025 = vadd.f32 %v3973, %v4010
      %v4026 = vadd.f32 %v3974, %v4010
      %v4027 = vadd.f32 %v3975, %v4010
      %v4028 = vadd.f32 %v3976, %v4010
      %v4029 = vadd.f32 %v3977, %v4010
      %v4030 = vadd.f32 %v3978, %v4010
      %v4031 = vadd.f32 %v3979, %v4010
      %v4032 = vadd.f32 %v3980, %v4010
      %v4033 = vadd.f32 %v3981, %v4010
      %v4034 = vadd.f32 %v3982, %v4010
      %v4035 = vadd.f32 %v3983, %v4010
      %v4036 = vadd.f32 %v3984, %v4010
      %v4037 = vadd.f32 %v3985, %v4010
      %v4038 = vadd.f32 %v3986, %v4010
      %v4039 = vadd.f32 %v3987, %v4010
      %v4040 = vadd.f32 %v3988, %v4010
      %v4041 = vadd.f32 %v3989, %v4010
      %v4042 = vadd.f32 %v3990, %v4010
      %v4043 = vadd.f32 %v3991, %v4010
      %v4044 = vadd.f32 %v3992, %v4010
      %v4045 = vadd.f32 %v3993, %v4010
      %v4046 = vadd.f32 %v3994, %v4010
      %v4047 = vadd.f32 %v3995, %v4010
      %v4048 = vadd.f32 %v3996, %v4010
      %v4049 = vadd.f32 %v3997, %v4010
      %v4050 = vadd.f32 %v3998, %v4010
      %v4051 = vadd.f32 %v3999, %v4010
      %v4052 = vadd.f32 %v4000, %v4010
      %v4053 = vadd.f32 %v4001, %v4010
      %v4054 = vadd.f32 %v4002, %v4010
      %v4055 = vadd.f32 %v4003, %v4010
      %v4056 = vadd.f32 %v4004, %v4010
      %v4057 = vadd.f32 %v4005, %v4010
      %v4058 = vadd.f32 %v4006, %v4010
      %v4059 = vadd.f32 %v4007, %v4010
      %v4060 = vmax.f32 %v4012, 0.0
      %v4061 = vmax.f32 %v4013, 0.0
      %v4062 = vmax.f32 %v4014, 0.0
      %v4063 = vmax.f32 %v4015, 0.0
      %v4064 = vmax.f32 %v4016, 0.0
      %v4065 = vmax.f32 %v4017, 0.0
      %v4066 = vmax.f32 %v4018, 0.0
      %v4067 = vmax.f32 %v4019, 0.0
      %v4068 = vmax.f32 %v4020, 0.0
      %v4069 = vmax.f32 %v4021, 0.0
      %v4070 = vmax.f32 %v4022, 0.0
      %v4071 = vmax.f32 %v4023, 0.0
      %v4072 = vmax.f32 %v4024, 0.0
      %v4073 = vmax.f32 %v4025, 0.0
      %v4074 = vmax.f32 %v4026, 0.0
      %v4075 = vmax.f32 %v4027, 0.0
      %v4076 = vmax.f32 %v4028, 0.0
      %v4077 = vmax.f32 %v4029, 0.0
      %v4078 = vmax.f32 %v4030, 0.0
      %v4079 = vmax.f32 %v4031, 0.0
      %v4080 = vmax.f32 %v4032, 0.0
      %v4081 = vmax.f32 %v4033, 0.0
      %v4082 = vmax.f32 %v4034, 0.0
      %v4083 = vmax.f32 %v4035, 0.0
      %v4084 = vmax.f32 %v4036, 0.0
      %v4085 = vmax.f32 %v4037, 0.0
      %v4086 = vmax.f32 %v4038, 0.0
      %v4087 = vmax.f32 %v4039, 0.0
      %v4088 = vmax.f32 %v4040, 0.0
      %v4089 = vmax.f32 %v4041, 0.0
      %v4090 = vmax.f32 %v4042, 0.0
      %v4091 = vmax.f32 %v4043, 0.0
      %v4092 = vmax.f32 %v4044, 0.0
      %v4093 = vmax.f32 %v4045, 0.0
      %v4094 = vmax.f32 %v4046, 0.0
      %v4095 = vmax.f32 %v4047, 0.0
      %v4096 = vmax.f32 %v4048, 0.0
      %v4097 = vmax.f32 %v4049, 0.0
      %v4098 = vmax.f32 %v4050, 0.0
      %v4099 = vmax.f32 %v4051, 0.0
      %v4100 = vmax.f32 %v4052, 0.0
      %v4101 = vmax.f32 %v4053, 0.0
      %v4102 = vmax.f32 %v4054, 0.0
      %v4103 = vmax.f32 %v4055, 0.0
      %v4104 = vmax.f32 %v4056, 0.0
      %v4105 = vmax.f32 %v4057, 0.0
      %v4106 = vmax.f32 %v4058, 0.0
      %v4107 = vmax.f32 %v4059, 0.0
      %v4108 = vld [vmem:[%s10] sm:$0xff]
      %v4109 = vld [vmem:[%s10 + $0x8] sm:$0xff]
      %v4110 = vld [vmem:[%s10 + $0x10] sm:$0xff]
      %v4111 = vld [vmem:[%s10 + $0x18] sm:$0xff]
      %v4112 = vld [vmem:[%s10 + $0x20] sm:$0xff]
      %v4113 = vld [vmem:[%s10 + $0x28] sm:$0xff]
      %v4114 = vld [vmem:[%s10 + $0x30] sm:$0xff]
      %v4115 = vld [vmem:[%s10 + $0x38] sm:$0xff]
      %v4116 = vld [vmem:[%s10 + $0x40] sm:$0xff]
      %v4117 = vld [vmem:[%s10 + $0x48] sm:$0xff]
      %v4118 = vld [vmem:[%s10 + $0x50] sm:$0xff]
      %v4119 = vld [vmem:[%s10 + $0x58] sm:$0xff]
      %v4120 = vld [vmem:[%s10 + $0x60] sm:$0xff]
      %v4121 = vld [vmem:[%s10 + $0x68] sm:$0xff]
      %v4122 = vld [vmem:[%s10 + $0x70] sm:$0xff]
      %v4123 = vld [vmem:[%s10 + $0x78] sm:$0xff]
      %v4124 = vld [vmem:[%s10 + $0x80] sm:$0xff]
      %v4125 = vld [vmem:[%s10 + $0x88] sm:$0xff]
      %v4126 = vld [vmem:[%s10 + $0x90] sm:$0xff]
      %v4127 = vld [vmem:[%s10 + $0x98] sm:$0xff]
      %v4128 = vld [vmem:[%s10 + $0xa0] sm:$0xff]
      %v4129 = vld [vmem:[%s10 + $0xa8] sm:$0xff]
      %v4130 = vld [vmem:[%s10 + $0xb0] sm:$0xff]
      %v4131 = vld [vmem:[%s10 + $0xb8] sm:$0xff]
      %v4132 = vld [vmem:[%s10 + $0xc0] sm:$0xff]
      %v4133 = vld [vmem:[%s10 + $0xc8] sm:$0xff]
      %v4134 = vld [vmem:[%s10 + $0xd0] sm:$0xff]
      %v4135 = vld [vmem:[%s10 + $0xd8] sm:$0xff]
      %v4136 = vld [vmem:[%s10 + $0xe0] sm:$0xff]
      %v4137 = vld [vmem:[%s10 + $0xe8] sm:$0xff]
      %v4138 = vld [vmem:[%s10 + $0xf0] sm:$0xff]
      %v4139 = vld [vmem:[%s10 + $0xf8] sm:$0xff]
      %v4140 = vld [vmem:[%s10 + $0x100] sm:$0xff]
      %v4141 = vld [vmem:[%s10 + $0x108] sm:$0xff]
      %v4142 = vld [vmem:[%s10 + $0x110] sm:$0xff]
      %v4143 = vld [vmem:[%s10 + $0x118] sm:$0xff]
      %v4144 = vld [vmem:[%s10 + $0x120] sm:$0xff]
      %v4145 = vld [vmem:[%s10 + $0x128] sm:$0xff]
      %v4146 = vld [vmem:[%s10 + $0x130] sm:$0xff]
      %v4147 = vld [vmem:[%s10 + $0x138] sm:$0xff]
      %v4148 = vld [vmem:[%s10 + $0x140] sm:$0xff]
      %v4149 = vld [vmem:[%s10 + $0x148] sm:$0xff]
      %v4150 = vld [vmem:[%s10 + $0x150] sm:$0xff]
      %v4151 = vld [vmem:[%s10 + $0x158] sm:$0xff]
      %v4152 = vld [vmem:[%s10 + $0x160] sm:$0xff]
      %v4153 = vld [vmem:[%s10 + $0x168] sm:$0xff]
      %v4154 = vld [vmem:[%s10 + $0x170] sm:$0xff]
      %v4155 = vld [vmem:[%s10 + $0x178] sm:$0xff]
      %4157 = vset.pattern.permute.xlu0 0
      %4158 = vperm.xlu0 %4157, %v4108
      %v4159 = vpop.permute.xlu0 %4158
      %4162 = vset.pattern.permute.xlu0 0
      %4163 = vperm.xlu0 %4162, %v4109
      %v4164 = vpop.permute.xlu0 %4163
      %4167 = vset.pattern.permute.xlu0 0
      %4168 = vperm.xlu0 %4167, %v4110
      %v4169 = vpop.permute.xlu0 %4168
      %4172 = vset.pattern.permute.xlu0 0
      %4173 = vperm.xlu0 %4172, %v4111
      %v4174 = vpop.permute.xlu0 %4173
      %4177 = vset.pattern.permute.xlu0 0
      %4178 = vperm.xlu0 %4177, %v4112
      %v4179 = vpop.permute.xlu0 %4178
      %4182 = vset.pattern.permute.xlu0 0
      %4183 = vperm.xlu0 %4182, %v4113
      %v4184 = vpop.permute.xlu0 %4183
      %4187 = vset.pattern.permute.xlu0 0
      %4188 = vperm.xlu0 %4187, %v4114
      %v4189 = vpop.permute.xlu0 %4188
      %4192 = vset.pattern.permute.xlu0 0
      %4193 = vperm.xlu0 %4192, %v4115
      %v4194 = vpop.permute.xlu0 %4193
      %4197 = vset.pattern.permute.xlu0 0
      %4198 = vperm.xlu0 %4197, %v4116
      %v4199 = vpop.permute.xlu0 %4198
      %4202 = vset.pattern.permute.xlu0 0
      %4203 = vperm.xlu0 %4202, %v4117
      %v4204 = vpop.permute.xlu0 %4203
      %4207 = vset.pattern.permute.xlu0 0
      %4208 = vperm.xlu0 %4207, %v4118
      %v4209 = vpop.permute.xlu0 %4208
      %4212 = vset.pattern.permute.xlu0 0
      %4213 = vperm.xlu0 %4212, %v4119
      %v4214 = vpop.permute.xlu0 %4213
      %4217 = vset.pattern.permute.xlu0 0
      %4218 = vperm.xlu0 %4217, %v4120
      %v4219 = vpop.permute.xlu0 %4218
      %4222 = vset.pattern.permute.xlu0 0
      %4223 = vperm.xlu0 %4222, %v4121
      %v4224 = vpop.permute.xlu0 %4223
      %4227 = vset.pattern.permute.xlu0 0
      %4228 = vperm.xlu0 %4227, %v4122
      %v4229 = vpop.permute.xlu0 %4228
      %4232 = vset.pattern.permute.xlu0 0
      %4233 = vperm.xlu0 %4232, %v4123
      %v4234 = vpop.permute.xlu0 %4233
      %4237 = vset.pattern.permute.xlu0 0
      %4238 = vperm.xlu0 %4237, %v4124
      %v4239 = vpop.permute.xlu0 %4238
      %4242 = vset.pattern.permute.xlu0 0
      %4243 = vperm.xlu0 %4242, %v4125
      %v4244 = vpop.permute.xlu0 %4243
      %4247 = vset.pattern.permute.xlu0 0
      %4248 = vperm.xlu0 %4247, %v4126
      %v4249 = vpop.permute.xlu0 %4248
      %4252 = vset.pattern.permute.xlu0 0
      %4253 = vperm.xlu0 %4252, %v4127
      %v4254 = vpop.permute.xlu0 %4253
      %4257 = vset.pattern.permute.xlu0 0
      %4258 = vperm.xlu0 %4257, %v4128
      %v4259 = vpop.permute.xlu0 %4258
      %4262 = vset.pattern.permute.xlu0 0
      %4263 = vperm.xlu0 %4262, %v4129
      %v4264 = vpop.permute.xlu0 %4263
      %4267 = vset.pattern.permute.xlu0 0
      %4268 = vperm.xlu0 %4267, %v4130
      %v4269 = vpop.permute.xlu0 %4268
      %4272 = vset.pattern.permute.xlu0 0
      %4273 = vperm.xlu0 %4272, %v4131
      %v4274 = vpop.permute.xlu0 %4273
      %4277 = vset.pattern.permute.xlu0 0
      %4278 = vperm.xlu0 %4277, %v4132
      %v4279 = vpop.permute.xlu0 %4278
      %4282 = vset.pattern.permute.xlu0 0
      %4283 = vperm.xlu0 %4282, %v4133
      %v4284 = vpop.permute.xlu0 %4283
      %4287 = vset.pattern.permute.xlu0 0
      %4288 = vperm.xlu0 %4287, %v4134
      %v4289 = vpop.permute.xlu0 %4288
      %4292 = vset.pattern.permute.xlu0 0
      %4293 = vperm.xlu0 %4292, %v4135
      %v4294 = vpop.permute.xlu0 %4293
      %4297 = vset.pattern.permute.xlu0 0
      %4298 = vperm.xlu0 %4297, %v4136
      %v4299 = vpop.permute.xlu0 %4298
      %4302 = vset.pattern.permute.xlu0 0
      %4303 = vperm.xlu0 %4302, %v4137
      %v4304 = vpop.permute.xlu0 %4303
      %4307 = vset.pattern.permute.xlu0 0
      %4308 = vperm.xlu0 %4307, %v4138
      %v4309 = vpop.permute.xlu0 %4308
      %4312 = vset.pattern.permute.xlu0 0
      %4313 = vperm.xlu0 %4312, %v4139
      %v4314 = vpop.permute.xlu0 %4313
      %4317 = vset.pattern.permute.xlu0 0
      %4318 = vperm.xlu0 %4317, %v4140
      %v4319 = vpop.permute.xlu0 %4318
      %4322 = vset.pattern.permute.xlu0 0
      %4323 = vperm.xlu0 %4322, %v4141
      %v4324 = vpop.permute.xlu0 %4323
      %4327 = vset.pattern.permute.xlu0 0
      %4328 = vperm.xlu0 %4327, %v4142
      %v4329 = vpop.permute.xlu0 %4328
      %4332 = vset.pattern.permute.xlu0 0
      %4333 = vperm.xlu0 %4332, %v4143
      %v4334 = vpop.permute.xlu0 %4333
      %4337 = vset.pattern.permute.xlu0 0
      %4338 = vperm.xlu0 %4337, %v4144
      %v4339 = vpop.permute.xlu0 %4338
      %4342 = vset.pattern.permute.xlu0 0
      %4343 = vperm.xlu0 %4342, %v4145
      %v4344 = vpop.permute.xlu0 %4343
      %4347 = vset.pattern.permute.xlu0 0
      %4348 = vperm.xlu0 %4347, %v4146
      %v4349 = vpop.permute.xlu0 %4348
      %4352 = vset.pattern.permute.xlu0 0
      %4353 = vperm.xlu0 %4352, %v4147
      %v4354 = vpop.permute.xlu0 %4353
      %4357 = vset.pattern.permute.xlu0 0
      %4358 = vperm.xlu0 %4357, %v4148
      %v4359 = vpop.permute.xlu0 %4358
      %4362 = vset.pattern.permute.xlu0 0
      %4363 = vperm.xlu0 %4362, %v4149
      %v4364 = vpop.permute.xlu0 %4363
      %4367 = vset.pattern.permute.xlu0 0
      %4368 = vperm.xlu0 %4367, %v4150
      %v4369 = vpop.permute.xlu0 %4368
      %4372 = vset.pattern.permute.xlu0 0
      %4373 = vperm.xlu0 %4372, %v4151
      %v4374 = vpop.permute.xlu0 %4373
      %4377 = vset.pattern.permute.xlu0 0
      %4378 = vperm.xlu0 %4377, %v4152
      %v4379 = vpop.permute.xlu0 %4378
      %4382 = vset.pattern.permute.xlu0 0
      %4383 = vperm.xlu0 %4382, %v4153
      %v4384 = vpop.permute.xlu0 %4383
      %4387 = vset.pattern.permute.xlu0 0
      %4388 = vperm.xlu0 %4387, %v4154
      %v4389 = vpop.permute.xlu0 %4388
      %4392 = vset.pattern.permute.xlu0 0
      %4393 = vperm.xlu0 %4392, %v4155
      %v4394 = vpop.permute.xlu0 %4393
      %v4396 = vmul.f32 %v4060, %v4159
      %v4397 = vmul.f32 %v4061, %v4164
      %v4398 = vmul.f32 %v4062, %v4169
      %v4399 = vmul.f32 %v4063, %v4174
      %v4400 = vmul.f32 %v4064, %v4179
      %v4401 = vmul.f32 %v4065, %v4184
      %v4402 = vmul.f32 %v4066, %v4189
      %v4403 = vmul.f32 %v4067, %v4194
      %v4404 = vmul.f32 %v4068, %v4199
      %v4405 = vmul.f32 %v4069, %v4204
      %v4406 = vmul.f32 %v4070, %v4209
      %v4407 = vmul.f32 %v4071, %v4214
      %v4408 = vmul.f32 %v4072, %v4219
      %v4409 = vmul.f32 %v4073, %v4224
      %v4410 = vmul.f32 %v4074, %v4229
      %v4411 = vmul.f32 %v4075, %v4234
      %v4412 = vmul.f32 %v4076, %v4239
      %v4413 = vmul.f32 %v4077, %v4244
      %v4414 = vmul.f32 %v4078, %v4249
      %v4415 = vmul.f32 %v4079, %v4254
      %v4416 = vmul.f32 %v4080, %v4259
      %v4417 = vmul.f32 %v4081, %v4264
      %v4418 = vmul.f32 %v4082, %v4269
      %v4419 = vmul.f32 %v4083, %v4274
      %v4420 = vmul.f32 %v4084, %v4279
      %v4421 = vmul.f32 %v4085, %v4284
      %v4422 = vmul.f32 %v4086, %v4289
      %v4423 = vmul.f32 %v4087, %v4294
      %v4424 = vmul.f32 %v4088, %v4299
      %v4425 = vmul.f32 %v4089, %v4304
      %v4426 = vmul.f32 %v4090, %v4309
      %v4427 = vmul.f32 %v4091, %v4314
      %v4428 = vmul.f32 %v4092, %v4319
      %v4429 = vmul.f32 %v4093, %v4324
      %v4430 = vmul.f32 %v4094, %v4329
      %v4431 = vmul.f32 %v4095, %v4334
      %v4432 = vmul.f32 %v4096, %v4339
      %v4433 = vmul.f32 %v4097, %v4344
      %v4434 = vmul.f32 %v4098, %v4349
      %v4435 = vmul.f32 %v4099, %v4354
      %v4436 = vmul.f32 %v4100, %v4359
      %v4437 = vmul.f32 %v4101, %v4364
      %v4438 = vmul.f32 %v4102, %v4369
      %v4439 = vmul.f32 %v4103, %v4374
      %v4440 = vmul.f32 %v4104, %v4379
      %v4441 = vmul.f32 %v4105, %v4384
      %v4442 = vmul.f32 %v4106, %v4389
      %v4443 = vmul.f32 %v4107, %v4394
      %vm4444 = vcmask 785408
      %4445 = vst.msk [vmem:[#allocation2] sm:$0xff] %vm4444, 0.0
      %4446 = vst.msk [vmem:[#allocation2 + $0x8] sm:$0xff] %vm4444, 0.0
      %4447 = vst.msk [vmem:[#allocation2 + $0x10] sm:$0xff] %vm4444, 0.0
      %4448 = vst.msk [vmem:[#allocation2 + $0x18] sm:$0xff] %vm4444, 0.0
      %4449 = vst.msk [vmem:[#allocation2 + $0x1a0] sm:$0xff] %vm4444, 0.0
      %4450 = vst.msk [vmem:[#allocation2 + $0x1a8] sm:$0xff] %vm4444, 0.0
      %4451 = vst.msk [vmem:[#allocation2 + $0x1b0] sm:$0xff] %vm4444, 0.0
      %4452 = vst.msk [vmem:[#allocation2 + $0x1b8] sm:$0xff] %vm4444, 0.0
      %4453 = vst.msk [vmem:[#allocation2 + $0x20] sm:$0xff] %vm4444, %v4396
      %4454 = vst.msk [vmem:[#allocation2 + $0x28] sm:$0xff] %vm4444, %v4397
      %4455 = vst.msk [vmem:[#allocation2 + $0x30] sm:$0xff] %vm4444, %v4398
      %4456 = vst.msk [vmem:[#allocation2 + $0x38] sm:$0xff] %vm4444, %v4399
      %4457 = vst.msk [vmem:[#allocation2 + $0x40] sm:$0xff] %vm4444, %v4400
      %4458 = vst.msk [vmem:[#allocation2 + $0x48] sm:$0xff] %vm4444, %v4401
      %4459 = vst.msk [vmem:[#allocation2 + $0x50] sm:$0xff] %vm4444, %v4402
      %4460 = vst.msk [vmem:[#allocation2 + $0x58] sm:$0xff] %vm4444, %v4403
      %4461 = vst.msk [vmem:[#allocation2 + $0x60] sm:$0xff] %vm4444, %v4404
      %4462 = vst.msk [vmem:[#allocation2 + $0x68] sm:$0xff] %vm4444, %v4405
      %4463 = vst.msk [vmem:[#allocation2 + $0x70] sm:$0xff] %vm4444, %v4406
      %4464 = vst.msk [vmem:[#allocation2 + $0x78] sm:$0xff] %vm4444, %v4407
      %4465 = vst.msk [vmem:[#allocation2 + $0x80] sm:$0xff] %vm4444, %v4408
      %4466 = vst.msk [vmem:[#allocation2 + $0x88] sm:$0xff] %vm4444, %v4409
      %4467 = vst.msk [vmem:[#allocation2 + $0x90] sm:$0xff] %vm4444, %v4410
      %4468 = vst.msk [vmem:[#allocation2 + $0x98] sm:$0xff] %vm4444, %v4411
      %4469 = vst.msk [vmem:[#allocation2 + $0xa0] sm:$0xff] %vm4444, %v4412
      %4470 = vst.msk [vmem:[#allocation2 + $0xa8] sm:$0xff] %vm4444, %v4413
      %4471 = vst.msk [vmem:[#allocation2 + $0xb0] sm:$0xff] %vm4444, %v4414
      %4472 = vst.msk [vmem:[#allocation2 + $0xb8] sm:$0xff] %vm4444, %v4415
      %4473 = vst.msk [vmem:[#allocation2 + $0xc0] sm:$0xff] %vm4444, %v4416
      %4474 = vst.msk [vmem:[#allocation2 + $0xc8] sm:$0xff] %vm4444, %v4417
      %4475 = vst.msk [vmem:[#allocation2 + $0xd0] sm:$0xff] %vm4444, %v4418
      %4476 = vst.msk [vmem:[#allocation2 + $0xd8] sm:$0xff] %vm4444, %v4419
      %4477 = vst.msk [vmem:[#allocation2 + $0xe0] sm:$0xff] %vm4444, %v4420
      %4478 = vst.msk [vmem:[#allocation2 + $0xe8] sm:$0xff] %vm4444, %v4421
      %4479 = vst.msk [vmem:[#allocation2 + $0xf0] sm:$0xff] %vm4444, %v4422
      %4480 = vst.msk [vmem:[#allocation2 + $0xf8] sm:$0xff] %vm4444, %v4423
      %4481 = vst.msk [vmem:[#allocation2 + $0x100] sm:$0xff] %vm4444, %v4424
      %4482 = vst.msk [vmem:[#allocation2 + $0x108] sm:$0xff] %vm4444, %v4425
      %4483 = vst.msk [vmem:[#allocation2 + $0x110] sm:$0xff] %vm4444, %v4426
      %4484 = vst.msk [vmem:[#allocation2 + $0x118] sm:$0xff] %vm4444, %v4427
      %4485 = vst.msk [vmem:[#allocation2 + $0x120] sm:$0xff] %vm4444, %v4428
      %4486 = vst.msk [vmem:[#allocation2 + $0x128] sm:$0xff] %vm4444, %v4429
      %4487 = vst.msk [vmem:[#allocation2 + $0x130] sm:$0xff] %vm4444, %v4430
      %4488 = vst.msk [vmem:[#allocation2 + $0x138] sm:$0xff] %vm4444, %v4431
      %4489 = vst.msk [vmem:[#allocation2 + $0x140] sm:$0xff] %vm4444, %v4432
      %4490 = vst.msk [vmem:[#allocation2 + $0x148] sm:$0xff] %vm4444, %v4433
      %4491 = vst.msk [vmem:[#allocation2 + $0x150] sm:$0xff] %vm4444, %v4434
      %4492 = vst.msk [vmem:[#allocation2 + $0x158] sm:$0xff] %vm4444, %v4435
      %4493 = vst.msk [vmem:[#allocation2 + $0x160] sm:$0xff] %vm4444, %v4436
      %4494 = vst.msk [vmem:[#allocation2 + $0x168] sm:$0xff] %vm4444, %v4437
      %4495 = vst.msk [vmem:[#allocation2 + $0x170] sm:$0xff] %vm4444, %v4438
      %4496 = vst.msk [vmem:[#allocation2 + $0x178] sm:$0xff] %vm4444, %v4439
      %4497 = vst.msk [vmem:[#allocation2 + $0x180] sm:$0xff] %vm4444, %v4440
      %4498 = vst.msk [vmem:[#allocation2 + $0x188] sm:$0xff] %vm4444, %v4441
      %4499 = vst.msk [vmem:[#allocation2 + $0x190] sm:$0xff] %vm4444, %v4442
      %4500 = vst.msk [vmem:[#allocation2 + $0x198] sm:$0xff] %vm4444, %v4443
      %v4501 = vld [vmem:[#allocation2 + $0x7] sm:$0xff]
      %v4502 = vld [vmem:[#allocation2 + $0xf] sm:$0xff]
      %v4503 = vld [vmem:[#allocation2 + $0x17] sm:$0xff]
      %v4504 = vld [vmem:[#allocation2 + $0x1f] sm:$0xff]
      %v4505 = vld [vmem:[#allocation2 + $0x27] sm:$0xff]
      %v4506 = vld [vmem:[#allocation2 + $0x2f] sm:$0xff]
      %v4507 = vld [vmem:[#allocation2 + $0x37] sm:$0xff]
      %v4508 = vld [vmem:[#allocation2 + $0x3f] sm:$0xff]
      %v4509 = vld [vmem:[#allocation2 + $0x47] sm:$0xff]
      %v4510 = vld [vmem:[#allocation2 + $0x4f] sm:$0xff]
      %v4511 = vld [vmem:[#allocation2 + $0x57] sm:$0xff]
      %v4512 = vld [vmem:[#allocation2 + $0x5f] sm:$0xff]
      %v4513 = vld [vmem:[#allocation2 + $0x67] sm:$0xff]
      %v4514 = vld [vmem:[#allocation2 + $0x6f] sm:$0xff]
      %v4515 = vld [vmem:[#allocation2 + $0x77] sm:$0xff]
      %v4516 = vld [vmem:[#allocation2 + $0x7f] sm:$0xff]
      %v4517 = vld [vmem:[#allocation2 + $0x87] sm:$0xff]
      %v4518 = vld [vmem:[#allocation2 + $0x8f] sm:$0xff]
      %v4519 = vld [vmem:[#allocation2 + $0x97] sm:$0xff]
      %v4520 = vld [vmem:[#allocation2 + $0x9f] sm:$0xff]
      %v4521 = vld [vmem:[#allocation2 + $0xa7] sm:$0xff]
      %v4522 = vld [vmem:[#allocation2 + $0xaf] sm:$0xff]
      %v4523 = vld [vmem:[#allocation2 + $0xb7] sm:$0xff]
      %v4524 = vld [vmem:[#allocation2 + $0xbf] sm:$0xff]
      %v4525 = vld [vmem:[#allocation2 + $0xc7] sm:$0xff]
      %v4526 = vld [vmem:[#allocation2 + $0xcf] sm:$0xff]
      %v4527 = vld [vmem:[#allocation2 + $0xd7] sm:$0xff]
      %v4528 = vld [vmem:[#allocation2 + $0xdf] sm:$0xff]
      %v4529 = vld [vmem:[#allocation2 + $0xe7] sm:$0xff]
      %v4530 = vld [vmem:[#allocation2 + $0xef] sm:$0xff]
      %v4531 = vld [vmem:[#allocation2 + $0xf7] sm:$0xff]
      %v4532 = vld [vmem:[#allocation2 + $0xff] sm:$0xff]
      %v4533 = vld [vmem:[#allocation2 + $0x107] sm:$0xff]
      %v4534 = vld [vmem:[#allocation2 + $0x10f] sm:$0xff]
      %v4535 = vld [vmem:[#allocation2 + $0x117] sm:$0xff]
      %v4536 = vld [vmem:[#allocation2 + $0x11f] sm:$0xff]
      %v4537 = vld [vmem:[#allocation2 + $0x127] sm:$0xff]
      %v4538 = vld [vmem:[#allocation2 + $0x12f] sm:$0xff]
      %v4539 = vld [vmem:[#allocation2 + $0x137] sm:$0xff]
      %v4540 = vld [vmem:[#allocation2 + $0x13f] sm:$0xff]
      %v4541 = vld [vmem:[#allocation2 + $0x147] sm:$0xff]
      %v4542 = vld [vmem:[#allocation2 + $0x14f] sm:$0xff]
      %v4543 = vld [vmem:[#allocation2 + $0x157] sm:$0xff]
      %v4544 = vld [vmem:[#allocation2 + $0x15f] sm:$0xff]
      %v4545 = vld [vmem:[#allocation2 + $0x167] sm:$0xff]
      %v4546 = vld [vmem:[#allocation2 + $0x16f] sm:$0xff]
      %v4547 = vld [vmem:[#allocation2 + $0x177] sm:$0xff]
      %v4548 = vld [vmem:[#allocation2 + $0x17f] sm:$0xff]
      %v4549 = vld [vmem:[%s3] sm:$0x1]
      %v4551 = vperm.slane %v4549, 0
      %v4553 = vmul.f32 %v4501, %v4551
      %v4554 = vmul.f32 %v4502, %v4551
      %v4555 = vmul.f32 %v4503, %v4551
      %v4556 = vmul.f32 %v4504, %v4551
      %v4557 = vmul.f32 %v4505, %v4551
      %v4558 = vmul.f32 %v4506, %v4551
      %v4559 = vmul.f32 %v4507, %v4551
      %v4560 = vmul.f32 %v4508, %v4551
      %v4561 = vmul.f32 %v4509, %v4551
      %v4562 = vmul.f32 %v4510, %v4551
      %v4563 = vmul.f32 %v4511, %v4551
      %v4564 = vmul.f32 %v4512, %v4551
      %v4565 = vmul.f32 %v4513, %v4551
      %v4566 = vmul.f32 %v4514, %v4551
      %v4567 = vmul.f32 %v4515, %v4551
      %v4568 = vmul.f32 %v4516, %v4551
      %v4569 = vmul.f32 %v4517, %v4551
      %v4570 = vmul.f32 %v4518, %v4551
      %v4571 = vmul.f32 %v4519, %v4551
      %v4572 = vmul.f32 %v4520, %v4551
      %v4573 = vmul.f32 %v4521, %v4551
      %v4574 = vmul.f32 %v4522, %v4551
      %v4575 = vmul.f32 %v4523, %v4551
      %v4576 = vmul.f32 %v4524, %v4551
      %v4577 = vmul.f32 %v4525, %v4551
      %v4578 = vmul.f32 %v4526, %v4551
      %v4579 = vmul.f32 %v4527, %v4551
      %v4580 = vmul.f32 %v4528, %v4551
      %v4581 = vmul.f32 %v4529, %v4551
      %v4582 = vmul.f32 %v4530, %v4551
      %v4583 = vmul.f32 %v4531, %v4551
      %v4584 = vmul.f32 %v4532, %v4551
      %v4585 = vmul.f32 %v4533, %v4551
      %v4586 = vmul.f32 %v4534, %v4551
      %v4587 = vmul.f32 %v4535, %v4551
      %v4588 = vmul.f32 %v4536, %v4551
      %v4589 = vmul.f32 %v4537, %v4551
      %v4590 = vmul.f32 %v4538, %v4551
      %v4591 = vmul.f32 %v4539, %v4551
      %v4592 = vmul.f32 %v4540, %v4551
      %v4593 = vmul.f32 %v4541, %v4551
      %v4594 = vmul.f32 %v4542, %v4551
      %v4595 = vmul.f32 %v4543, %v4551
      %v4596 = vmul.f32 %v4544, %v4551
      %v4597 = vmul.f32 %v4545, %v4551
      %v4598 = vmul.f32 %v4546, %v4551
      %v4599 = vmul.f32 %v4547, %v4551
      %v4600 = vmul.f32 %v4548, %v4551
      %v4601 = vadd.f32 %v4553, 0.0
      %v4602 = vadd.f32 %v4554, 0.0
      %v4603 = vadd.f32 %v4555, 0.0
      %v4604 = vadd.f32 %v4556, 0.0
      %v4605 = vadd.f32 %v4557, 0.0
      %v4606 = vadd.f32 %v4558, 0.0
      %v4607 = vadd.f32 %v4559, 0.0
      %v4608 = vadd.f32 %v4560, 0.0
      %v4609 = vadd.f32 %v4561, 0.0
      %v4610 = vadd.f32 %v4562, 0.0
      %v4611 = vadd.f32 %v4563, 0.0
      %v4612 = vadd.f32 %v4564, 0.0
      %v4613 = vadd.f32 %v4565, 0.0
      %v4614 = vadd.f32 %v4566, 0.0
      %v4615 = vadd.f32 %v4567, 0.0
      %v4616 = vadd.f32 %v4568, 0.0
      %v4617 = vadd.f32 %v4569, 0.0
      %v4618 = vadd.f32 %v4570, 0.0
      %v4619 = vadd.f32 %v4571, 0.0
      %v4620 = vadd.f32 %v4572, 0.0
      %v4621 = vadd.f32 %v4573, 0.0
      %v4622 = vadd.f32 %v4574, 0.0
      %v4623 = vadd.f32 %v4575, 0.0
      %v4624 = vadd.f32 %v4576, 0.0
      %v4625 = vadd.f32 %v4577, 0.0
      %v4626 = vadd.f32 %v4578, 0.0
      %v4627 = vadd.f32 %v4579, 0.0
      %v4628 = vadd.f32 %v4580, 0.0
      %v4629 = vadd.f32 %v4581, 0.0
      %v4630 = vadd.f32 %v4582, 0.0
      %v4631 = vadd.f32 %v4583, 0.0
      %v4632 = vadd.f32 %v4584, 0.0
      %v4633 = vadd.f32 %v4585, 0.0
      %v4634 = vadd.f32 %v4586, 0.0
      %v4635 = vadd.f32 %v4587, 0.0
      %v4636 = vadd.f32 %v4588, 0.0
      %v4637 = vadd.f32 %v4589, 0.0
      %v4638 = vadd.f32 %v4590, 0.0
      %v4639 = vadd.f32 %v4591, 0.0
      %v4640 = vadd.f32 %v4592, 0.0
      %v4641 = vadd.f32 %v4593, 0.0
      %v4642 = vadd.f32 %v4594, 0.0
      %v4643 = vadd.f32 %v4595, 0.0
      %v4644 = vadd.f32 %v4596, 0.0
      %v4645 = vadd.f32 %v4597, 0.0
      %v4646 = vadd.f32 %v4598, 0.0
      %v4647 = vadd.f32 %v4599, 0.0
      %v4648 = vadd.f32 %v4600, 0.0
      %v4649 = vld [vmem:[#allocation2 + $0x8] sm:$0xff]
      %v4650 = vld [vmem:[#allocation2 + $0x10] sm:$0xff]
      %v4651 = vld [vmem:[#allocation2 + $0x18] sm:$0xff]
      %v4652 = vld [vmem:[#allocation2 + $0x20] sm:$0xff]
      %v4653 = vld [vmem:[#allocation2 + $0x28] sm:$0xff]
      %v4654 = vld [vmem:[#allocation2 + $0x30] sm:$0xff]
      %v4655 = vld [vmem:[#allocation2 + $0x38] sm:$0xff]
      %v4656 = vld [vmem:[#allocation2 + $0x40] sm:$0xff]
      %v4657 = vld [vmem:[#allocation2 + $0x48] sm:$0xff]
      %v4658 = vld [vmem:[#allocation2 + $0x50] sm:$0xff]
      %v4659 = vld [vmem:[#allocation2 + $0x58] sm:$0xff]
      %v4660 = vld [vmem:[#allocation2 + $0x60] sm:$0xff]
      %v4661 = vld [vmem:[#allocation2 + $0x68] sm:$0xff]
      %v4662 = vld [vmem:[#allocation2 + $0x70] sm:$0xff]
      %v4663 = vld [vmem:[#allocation2 + $0x78] sm:$0xff]
      %v4664 = vld [vmem:[#allocation2 + $0x80] sm:$0xff]
      %v4665 = vld [vmem:[#allocation2 + $0x88] sm:$0xff]
      %v4666 = vld [vmem:[#allocation2 + $0x90] sm:$0xff]
      %v4667 = vld [vmem:[#allocation2 + $0x98] sm:$0xff]
      %v4668 = vld [vmem:[#allocation2 + $0xa0] sm:$0xff]
      %v4669 = vld [vmem:[#allocation2 + $0xa8] sm:$0xff]
      %v4670 = vld [vmem:[#allocation2 + $0xb0] sm:$0xff]
      %v4671 = vld [vmem:[#allocation2 + $0xb8] sm:$0xff]
      %v4672 = vld [vmem:[#allocation2 + $0xc0] sm:$0xff]
      %v4673 = vld [vmem:[#allocation2 + $0xc8] sm:$0xff]
      %v4674 = vld [vmem:[#allocation2 + $0xd0] sm:$0xff]
      %v4675 = vld [vmem:[#allocation2 + $0xd8] sm:$0xff]
      %v4676 = vld [vmem:[#allocation2 + $0xe0] sm:$0xff]
      %v4677 = vld [vmem:[#allocation2 + $0xe8] sm:$0xff]
      %v4678 = vld [vmem:[#allocation2 + $0xf0] sm:$0xff]
      %v4679 = vld [vmem:[#allocation2 + $0xf8] sm:$0xff]
      %v4680 = vld [vmem:[#allocation2 + $0x100] sm:$0xff]
      %v4681 = vld [vmem:[#allocation2 + $0x108] sm:$0xff]
      %v4682 = vld [vmem:[#allocation2 + $0x110] sm:$0xff]
      %v4683 = vld [vmem:[#allocation2 + $0x118] sm:$0xff]
      %v4684 = vld [vmem:[#allocation2 + $0x120] sm:$0xff]
      %v4685 = vld [vmem:[#allocation2 + $0x128] sm:$0xff]
      %v4686 = vld [vmem:[#allocation2 + $0x130] sm:$0xff]
      %v4687 = vld [vmem:[#allocation2 + $0x138] sm:$0xff]
      %v4688 = vld [vmem:[#allocation2 + $0x140] sm:$0xff]
      %v4689 = vld [vmem:[#allocation2 + $0x148] sm:$0xff]
      %v4690 = vld [vmem:[#allocation2 + $0x150] sm:$0xff]
      %v4691 = vld [vmem:[#allocation2 + $0x158] sm:$0xff]
      %v4692 = vld [vmem:[#allocation2 + $0x160] sm:$0xff]
      %v4693 = vld [vmem:[#allocation2 + $0x168] sm:$0xff]
      %v4694 = vld [vmem:[#allocation2 + $0x170] sm:$0xff]
      %v4695 = vld [vmem:[#allocation2 + $0x178] sm:$0xff]
      %v4696 = vld [vmem:[#allocation2 + $0x180] sm:$0xff]
      %s4697 = scalar_lea.vmem %s3, 1
      %v4698 = vld [vmem:[%s4697] sm:$0x1]
      %v4700 = vperm.slane %v4698, 0
      %v4702 = vmul.f32 %v4649, %v4700
      %v4703 = vmul.f32 %v4650, %v4700
      %v4704 = vmul.f32 %v4651, %v4700
      %v4705 = vmul.f32 %v4652, %v4700
      %v4706 = vmul.f32 %v4653, %v4700
      %v4707 = vmul.f32 %v4654, %v4700
      %v4708 = vmul.f32 %v4655, %v4700
      %v4709 = vmul.f32 %v4656, %v4700
      %v4710 = vmul.f32 %v4657, %v4700
      %v4711 = vmul.f32 %v4658, %v4700
      %v4712 = vmul.f32 %v4659, %v4700
      %v4713 = vmul.f32 %v4660, %v4700
      %v4714 = vmul.f32 %v4661, %v4700
      %v4715 = vmul.f32 %v4662, %v4700
      %v4716 = vmul.f32 %v4663, %v4700
      %v4717 = vmul.f32 %v4664, %v4700
      %v4718 = vmul.f32 %v4665, %v4700
      %v4719 = vmul.f32 %v4666, %v4700
      %v4720 = vmul.f32 %v4667, %v4700
      %v4721 = vmul.f32 %v4668, %v4700
      %v4722 = vmul.f32 %v4669, %v4700
      %v4723 = vmul.f32 %v4670, %v4700
      %v4724 = vmul.f32 %v4671, %v4700
      %v4725 = vmul.f32 %v4672, %v4700
      %v4726 = vmul.f32 %v4673, %v4700
      %v4727 = vmul.f32 %v4674, %v4700
      %v4728 = vmul.f32 %v4675, %v4700
      %v4729 = vmul.f32 %v4676, %v4700
      %v4730 = vmul.f32 %v4677, %v4700
      %v4731 = vmul.f32 %v4678, %v4700
      %v4732 = vmul.f32 %v4679, %v4700
      %v4733 = vmul.f32 %v4680, %v4700
      %v4734 = vmul.f32 %v4681, %v4700
      %v4735 = vmul.f32 %v4682, %v4700
      %v4736 = vmul.f32 %v4683, %v4700
      %v4737 = vmul.f32 %v4684, %v4700
      %v4738 = vmul.f32 %v4685, %v4700
      %v4739 = vmul.f32 %v4686, %v4700
      %v4740 = vmul.f32 %v4687, %v4700
      %v4741 = vmul.f32 %v4688, %v4700
      %v4742 = vmul.f32 %v4689, %v4700
      %v4743 = vmul.f32 %v4690, %v4700
      %v4744 = vmul.f32 %v4691, %v4700
      %v4745 = vmul.f32 %v4692, %v4700
      %v4746 = vmul.f32 %v4693, %v4700
      %v4747 = vmul.f32 %v4694, %v4700
      %v4748 = vmul.f32 %v4695, %v4700
      %v4749 = vmul.f32 %v4696, %v4700
      %v4750 = vadd.f32 %v4601, %v4702
      %v4751 = vadd.f32 %v4602, %v4703
      %v4752 = vadd.f32 %v4603, %v4704
      %v4753 = vadd.f32 %v4604, %v4705
      %v4754 = vadd.f32 %v4605, %v4706
      %v4755 = vadd.f32 %v4606, %v4707
      %v4756 = vadd.f32 %v4607, %v4708
      %v4757 = vadd.f32 %v4608, %v4709
      %v4758 = vadd.f32 %v4609, %v4710
      %v4759 = vadd.f32 %v4610, %v4711
      %v4760 = vadd.f32 %v4611, %v4712
      %v4761 = vadd.f32 %v4612, %v4713
      %v4762 = vadd.f32 %v4613, %v4714
      %v4763 = vadd.f32 %v4614, %v4715
      %v4764 = vadd.f32 %v4615, %v4716
      %v4765 = vadd.f32 %v4616, %v4717
      %v4766 = vadd.f32 %v4617, %v4718
      %v4767 = vadd.f32 %v4618, %v4719
      %v4768 = vadd.f32 %v4619, %v4720
      %v4769 = vadd.f32 %v4620, %v4721
      %v4770 = vadd.f32 %v4621, %v4722
      %v4771 = vadd.f32 %v4622, %v4723
      %v4772 = vadd.f32 %v4623, %v4724
      %v4773 = vadd.f32 %v4624, %v4725
      %v4774 = vadd.f32 %v4625, %v4726
      %v4775 = vadd.f32 %v4626, %v4727
      %v4776 = vadd.f32 %v4627, %v4728
      %v4777 = vadd.f32 %v4628, %v4729
      %v4778 = vadd.f32 %v4629, %v4730
      %v4779 = vadd.f32 %v4630, %v4731
      %v4780 = vadd.f32 %v4631, %v4732
      %v4781 = vadd.f32 %v4632, %v4733
      %v4782 = vadd.f32 %v4633, %v4734
      %v4783 = vadd.f32 %v4634, %v4735
      %v4784 = vadd.f32 %v4635, %v4736
      %v4785 = vadd.f32 %v4636, %v4737
      %v4786 = vadd.f32 %v4637, %v4738
      %v4787 = vadd.f32 %v4638, %v4739
      %v4788 = vadd.f32 %v4639, %v4740
      %v4789 = vadd.f32 %v4640, %v4741
      %v4790 = vadd.f32 %v4641, %v4742
      %v4791 = vadd.f32 %v4642, %v4743
      %v4792 = vadd.f32 %v4643, %v4744
      %v4793 = vadd.f32 %v4644, %v4745
      %v4794 = vadd.f32 %v4645, %v4746
      %v4795 = vadd.f32 %v4646, %v4747
      %v4796 = vadd.f32 %v4647, %v4748
      %v4797 = vadd.f32 %v4648, %v4749
      %v4798 = vld [vmem:[#allocation2 + $0x9] sm:$0xff]
      %v4799 = vld [vmem:[#allocation2 + $0x11] sm:$0xff]
      %v4800 = vld [vmem:[#allocation2 + $0x19] sm:$0xff]
      %v4801 = vld [vmem:[#allocation2 + $0x21] sm:$0xff]
      %v4802 = vld [vmem:[#allocation2 + $0x29] sm:$0xff]
      %v4803 = vld [vmem:[#allocation2 + $0x31] sm:$0xff]
      %v4804 = vld [vmem:[#allocation2 + $0x39] sm:$0xff]
      %v4805 = vld [vmem:[#allocation2 + $0x41] sm:$0xff]
      %v4806 = vld [vmem:[#allocation2 + $0x49] sm:$0xff]
      %v4807 = vld [vmem:[#allocation2 + $0x51] sm:$0xff]
      %v4808 = vld [vmem:[#allocation2 + $0x59] sm:$0xff]
      %v4809 = vld [vmem:[#allocation2 + $0x61] sm:$0xff]
      %v4810 = vld [vmem:[#allocation2 + $0x69] sm:$0xff]
      %v4811 = vld [vmem:[#allocation2 + $0x71] sm:$0xff]
      %v4812 = vld [vmem:[#allocation2 + $0x79] sm:$0xff]
      %v4813 = vld [vmem:[#allocation2 + $0x81] sm:$0xff]
      %v4814 = vld [vmem:[#allocation2 + $0x89] sm:$0xff]
      %v4815 = vld [vmem:[#allocation2 + $0x91] sm:$0xff]
      %v4816 = vld [vmem:[#allocation2 + $0x99] sm:$0xff]
      %v4817 = vld [vmem:[#allocation2 + $0xa1] sm:$0xff]
      %v4818 = vld [vmem:[#allocation2 + $0xa9] sm:$0xff]
      %v4819 = vld [vmem:[#allocation2 + $0xb1] sm:$0xff]
      %v4820 = vld [vmem:[#allocation2 + $0xb9] sm:$0xff]
      %v4821 = vld [vmem:[#allocation2 + $0xc1] sm:$0xff]
      %v4822 = vld [vmem:[#allocation2 + $0xc9] sm:$0xff]
      %v4823 = vld [vmem:[#allocation2 + $0xd1] sm:$0xff]
      %v4824 = vld [vmem:[#allocation2 + $0xd9] sm:$0xff]
      %v4825 = vld [vmem:[#allocation2 + $0xe1] sm:$0xff]
      %v4826 = vld [vmem:[#allocation2 + $0xe9] sm:$0xff]
      %v4827 = vld [vmem:[#allocation2 + $0xf1] sm:$0xff]
      %v4828 = vld [vmem:[#allocation2 + $0xf9] sm:$0xff]
      %v4829 = vld [vmem:[#allocation2 + $0x101] sm:$0xff]
      %v4830 = vld [vmem:[#allocation2 + $0x109] sm:$0xff]
      %v4831 = vld [vmem:[#allocation2 + $0x111] sm:$0xff]
      %v4832 = vld [vmem:[#allocation2 + $0x119] sm:$0xff]
      %v4833 = vld [vmem:[#allocation2 + $0x121] sm:$0xff]
      %v4834 = vld [vmem:[#allocation2 + $0x129] sm:$0xff]
      %v4835 = vld [vmem:[#allocation2 + $0x131] sm:$0xff]
      %v4836 = vld [vmem:[#allocation2 + $0x139] sm:$0xff]
      %v4837 = vld [vmem:[#allocation2 + $0x141] sm:$0xff]
      %v4838 = vld [vmem:[#allocation2 + $0x149] sm:$0xff]
      %v4839 = vld [vmem:[#allocation2 + $0x151] sm:$0xff]
      %v4840 = vld [vmem:[#allocation2 + $0x159] sm:$0xff]
      %v4841 = vld [vmem:[#allocation2 + $0x161] sm:$0xff]
      %v4842 = vld [vmem:[#allocation2 + $0x169] sm:$0xff]
      %v4843 = vld [vmem:[#allocation2 + $0x171] sm:$0xff]
      %v4844 = vld [vmem:[#allocation2 + $0x179] sm:$0xff]
      %v4845 = vld [vmem:[#allocation2 + $0x181] sm:$0xff]
      %s4846 = scalar_lea.vmem %s3, 2
      %v4847 = vld [vmem:[%s4846] sm:$0x1]
      %v4849 = vperm.slane %v4847, 0
      %v4851 = vmul.f32 %v4798, %v4849
      %v4852 = vmul.f32 %v4799, %v4849
      %v4853 = vmul.f32 %v4800, %v4849
      %v4854 = vmul.f32 %v4801, %v4849
      %v4855 = vmul.f32 %v4802, %v4849
      %v4856 = vmul.f32 %v4803, %v4849
      %v4857 = vmul.f32 %v4804, %v4849
      %v4858 = vmul.f32 %v4805, %v4849
      %v4859 = vmul.f32 %v4806, %v4849
      %v4860 = vmul.f32 %v4807, %v4849
      %v4861 = vmul.f32 %v4808, %v4849
      %v4862 = vmul.f32 %v4809, %v4849
      %v4863 = vmul.f32 %v4810, %v4849
      %v4864 = vmul.f32 %v4811, %v4849
      %v4865 = vmul.f32 %v4812, %v4849
      %v4866 = vmul.f32 %v4813, %v4849
      %v4867 = vmul.f32 %v4814, %v4849
      %v4868 = vmul.f32 %v4815, %v4849
      %v4869 = vmul.f32 %v4816, %v4849
      %v4870 = vmul.f32 %v4817, %v4849
      %v4871 = vmul.f32 %v4818, %v4849
      %v4872 = vmul.f32 %v4819, %v4849
      %v4873 = vmul.f32 %v4820, %v4849
      %v4874 = vmul.f32 %v4821, %v4849
      %v4875 = vmul.f32 %v4822, %v4849
      %v4876 = vmul.f32 %v4823, %v4849
      %v4877 = vmul.f32 %v4824, %v4849
      %v4878 = vmul.f32 %v4825, %v4849
      %v4879 = vmul.f32 %v4826, %v4849
      %v4880 = vmul.f32 %v4827, %v4849
      %v4881 = vmul.f32 %v4828, %v4849
      %v4882 = vmul.f32 %v4829, %v4849
      %v4883 = vmul.f32 %v4830, %v4849
      %v4884 = vmul.f32 %v4831, %v4849
      %v4885 = vmul.f32 %v4832, %v4849
      %v4886 = vmul.f32 %v4833, %v4849
      %v4887 = vmul.f32 %v4834, %v4849
      %v4888 = vmul.f32 %v4835, %v4849
      %v4889 = vmul.f32 %v4836, %v4849
      %v4890 = vmul.f32 %v4837, %v4849
      %v4891 = vmul.f32 %v4838, %v4849
      %v4892 = vmul.f32 %v4839, %v4849
      %v4893 = vmul.f32 %v4840, %v4849
      %v4894 = vmul.f32 %v4841, %v4849
      %v4895 = vmul.f32 %v4842, %v4849
      %v4896 = vmul.f32 %v4843, %v4849
      %v4897 = vmul.f32 %v4844, %v4849
      %v4898 = vmul.f32 %v4845, %v4849
      %v4899 = vadd.f32 %v4750, %v4851
      %v4900 = vadd.f32 %v4751, %v4852
      %v4901 = vadd.f32 %v4752, %v4853
      %v4902 = vadd.f32 %v4753, %v4854
      %v4903 = vadd.f32 %v4754, %v4855
      %v4904 = vadd.f32 %v4755, %v4856
      %v4905 = vadd.f32 %v4756, %v4857
      %v4906 = vadd.f32 %v4757, %v4858
      %v4907 = vadd.f32 %v4758, %v4859
      %v4908 = vadd.f32 %v4759, %v4860
      %v4909 = vadd.f32 %v4760, %v4861
      %v4910 = vadd.f32 %v4761, %v4862
      %v4911 = vadd.f32 %v4762, %v4863
      %v4912 = vadd.f32 %v4763, %v4864
      %v4913 = vadd.f32 %v4764, %v4865
      %v4914 = vadd.f32 %v4765, %v4866
      %v4915 = vadd.f32 %v4766, %v4867
      %v4916 = vadd.f32 %v4767, %v4868
      %v4917 = vadd.f32 %v4768, %v4869
      %v4918 = vadd.f32 %v4769, %v4870
      %v4919 = vadd.f32 %v4770, %v4871
      %v4920 = vadd.f32 %v4771, %v4872
      %v4921 = vadd.f32 %v4772, %v4873
      %v4922 = vadd.f32 %v4773, %v4874
      %v4923 = vadd.f32 %v4774, %v4875
      %v4924 = vadd.f32 %v4775, %v4876
      %v4925 = vadd.f32 %v4776, %v4877
      %v4926 = vadd.f32 %v4777, %v4878
      %v4927 = vadd.f32 %v4778, %v4879
      %v4928 = vadd.f32 %v4779, %v4880
      %v4929 = vadd.f32 %v4780, %v4881
      %v4930 = vadd.f32 %v4781, %v4882
      %v4931 = vadd.f32 %v4782, %v4883
      %v4932 = vadd.f32 %v4783, %v4884
      %v4933 = vadd.f32 %v4784, %v4885
      %v4934 = vadd.f32 %v4785, %v4886
      %v4935 = vadd.f32 %v4786, %v4887
      %v4936 = vadd.f32 %v4787, %v4888
      %v4937 = vadd.f32 %v4788, %v4889
      %v4938 = vadd.f32 %v4789, %v4890
      %v4939 = vadd.f32 %v4790, %v4891
      %v4940 = vadd.f32 %v4791, %v4892
      %v4941 = vadd.f32 %v4792, %v4893
      %v4942 = vadd.f32 %v4793, %v4894
      %v4943 = vadd.f32 %v4794, %v4895
      %v4944 = vadd.f32 %v4795, %v4896
      %v4945 = vadd.f32 %v4796, %v4897
      %v4946 = vadd.f32 %v4797, %v4898
      %v4947 = vld [vmem:[#allocation2 + $0x187] sm:$0xff]
      %v4948 = vld [vmem:[#allocation2 + $0x18f] sm:$0xff]
      %v4949 = vld [vmem:[#allocation2 + $0x197] sm:$0xff]
      %s4950 = scalar_lea.vmem %s3, 3
      %v4951 = vld [vmem:[%s4950] sm:$0x1]
      %v4953 = vperm.slane %v4951, 0
      %v4955 = vmul.f32 %v4504, %v4953
      %v4956 = vmul.f32 %v4505, %v4953
      %v4957 = vmul.f32 %v4506, %v4953
      %v4958 = vmul.f32 %v4507, %v4953
      %v4959 = vmul.f32 %v4508, %v4953
      %v4960 = vmul.f32 %v4509, %v4953
      %v4961 = vmul.f32 %v4510, %v4953
      %v4962 = vmul.f32 %v4511, %v4953
      %v4963 = vmul.f32 %v4512, %v4953
      %v4964 = vmul.f32 %v4513, %v4953
      %v4965 = vmul.f32 %v4514, %v4953
      %v4966 = vmul.f32 %v4515, %v4953
      %v4967 = vmul.f32 %v4516, %v4953
      %v4968 = vmul.f32 %v4517, %v4953
      %v4969 = vmul.f32 %v4518, %v4953
      %v4970 = vmul.f32 %v4519, %v4953
      %v4971 = vmul.f32 %v4520, %v4953
      %v4972 = vmul.f32 %v4521, %v4953
      %v4973 = vmul.f32 %v4522, %v4953
      %v4974 = vmul.f32 %v4523, %v4953
      %v4975 = vmul.f32 %v4524, %v4953
      %v4976 = vmul.f32 %v4525, %v4953
      %v4977 = vmul.f32 %v4526, %v4953
      %v4978 = vmul.f32 %v4527, %v4953
      %v4979 = vmul.f32 %v4528, %v4953
      %v4980 = vmul.f32 %v4529, %v4953
      %v4981 = vmul.f32 %v4530, %v4953
      %v4982 = vmul.f32 %v4531, %v4953
      %v4983 = vmul.f32 %v4532, %v4953
      %v4984 = vmul.f32 %v4533, %v4953
      %v4985 = vmul.f32 %v4534, %v4953
      %v4986 = vmul.f32 %v4535, %v4953
      %v4987 = vmul.f32 %v4536, %v4953
      %v4988 = vmul.f32 %v4537, %v4953
      %v4989 = vmul.f32 %v4538, %v4953
      %v4990 = vmul.f32 %v4539, %v4953
      %v4991 = vmul.f32 %v4540, %v4953
      %v4992 = vmul.f32 %v4541, %v4953
      %v4993 = vmul.f32 %v4542, %v4953
      %v4994 = vmul.f32 %v4543, %v4953
      %v4995 = vmul.f32 %v4544, %v4953
      %v4996 = vmul.f32 %v4545, %v4953
      %v4997 = vmul.f32 %v4546, %v4953
      %v4998 = vmul.f32 %v4547, %v4953
      %v4999 = vmul.f32 %v4548, %v4953
      %v5000 = vmul.f32 %v4947, %v4953
      %v5001 = vmul.f32 %v4948, %v4953
      %v5002 = vmul.f32 %v4949, %v4953
      %v5003 = vadd.f32 %v4899, %v4955
      %v5004 = vadd.f32 %v4900, %v4956
      %v5005 = vadd.f32 %v4901, %v4957
      %v5006 = vadd.f32 %v4902, %v4958
      %v5007 = vadd.f32 %v4903, %v4959
      %v5008 = vadd.f32 %v4904, %v4960
      %v5009 = vadd.f32 %v4905, %v4961
      %v5010 = vadd.f32 %v4906, %v4962
      %v5011 = vadd.f32 %v4907, %v4963
      %v5012 = vadd.f32 %v4908, %v4964
      %v5013 = vadd.f32 %v4909, %v4965
      %v5014 = vadd.f32 %v4910, %v4966
      %v5015 = vadd.f32 %v4911, %v4967
      %v5016 = vadd.f32 %v4912, %v4968
      %v5017 = vadd.f32 %v4913, %v4969
      %v5018 = vadd.f32 %v4914, %v4970
      %v5019 = vadd.f32 %v4915, %v4971
      %v5020 = vadd.f32 %v4916, %v4972
      %v5021 = vadd.f32 %v4917, %v4973
      %v5022 = vadd.f32 %v4918, %v4974
      %v5023 = vadd.f32 %v4919, %v4975
      %v5024 = vadd.f32 %v4920, %v4976
      %v5025 = vadd.f32 %v4921, %v4977
      %v5026 = vadd.f32 %v4922, %v4978
      %v5027 = vadd.f32 %v4923, %v4979
      %v5028 = vadd.f32 %v4924, %v4980
      %v5029 = vadd.f32 %v4925, %v4981
      %v5030 = vadd.f32 %v4926, %v4982
      %v5031 = vadd.f32 %v4927, %v4983
      %v5032 = vadd.f32 %v4928, %v4984
      %v5033 = vadd.f32 %v4929, %v4985
      %v5034 = vadd.f32 %v4930, %v4986
      %v5035 = vadd.f32 %v4931, %v4987
      %v5036 = vadd.f32 %v4932, %v4988
      %v5037 = vadd.f32 %v4933, %v4989
      %v5038 = vadd.f32 %v4934, %v4990
      %v5039 = vadd.f32 %v4935, %v4991
      %v5040 = vadd.f32 %v4936, %v4992
      %v5041 = vadd.f32 %v4937, %v4993
      %v5042 = vadd.f32 %v4938, %v4994
      %v5043 = vadd.f32 %v4939, %v4995
      %v5044 = vadd.f32 %v4940, %v4996
      %v5045 = vadd.f32 %v4941, %v4997
      %v5046 = vadd.f32 %v4942, %v4998
      %v5047 = vadd.f32 %v4943, %v4999
      %v5048 = vadd.f32 %v4944, %v5000
      %v5049 = vadd.f32 %v4945, %v5001
      %v5050 = vadd.f32 %v4946, %v5002
      %v5051 = vld [vmem:[#allocation2 + $0x188] sm:$0xff]
      %v5052 = vld [vmem:[#allocation2 + $0x190] sm:$0xff]
      %v5053 = vld [vmem:[#allocation2 + $0x198] sm:$0xff]
      %s5054 = scalar_lea.vmem %s3, 4
      %v5055 = vld [vmem:[%s5054] sm:$0x1]
      %v5057 = vperm.slane %v5055, 0
      %v5059 = vmul.f32 %v4652, %v5057
      %v5060 = vmul.f32 %v4653, %v5057
      %v5061 = vmul.f32 %v4654, %v5057
      %v5062 = vmul.f32 %v4655, %v5057
      %v5063 = vmul.f32 %v4656, %v5057
      %v5064 = vmul.f32 %v4657, %v5057
      %v5065 = vmul.f32 %v4658, %v5057
      %v5066 = vmul.f32 %v4659, %v5057
      %v5067 = vmul.f32 %v4660, %v5057
      %v5068 = vmul.f32 %v4661, %v5057
      %v5069 = vmul.f32 %v4662, %v5057
      %v5070 = vmul.f32 %v4663, %v5057
      %v5071 = vmul.f32 %v4664, %v5057
      %v5072 = vmul.f32 %v4665, %v5057
      %v5073 = vmul.f32 %v4666, %v5057
      %v5074 = vmul.f32 %v4667, %v5057
      %v5075 = vmul.f32 %v4668, %v5057
      %v5076 = vmul.f32 %v4669, %v5057
      %v5077 = vmul.f32 %v4670, %v5057
      %v5078 = vmul.f32 %v4671, %v5057
      %v5079 = vmul.f32 %v4672, %v5057
      %v5080 = vmul.f32 %v4673, %v5057
      %v5081 = vmul.f32 %v4674, %v5057
      %v5082 = vmul.f32 %v4675, %v5057
      %v5083 = vmul.f32 %v4676, %v5057
      %v5084 = vmul.f32 %v4677, %v5057
      %v5085 = vmul.f32 %v4678, %v5057
      %v5086 = vmul.f32 %v4679, %v5057
      %v5087 = vmul.f32 %v4680, %v5057
      %v5088 = vmul.f32 %v4681, %v5057
      %v5089 = vmul.f32 %v4682, %v5057
      %v5090 = vmul.f32 %v4683, %v5057
      %v5091 = vmul.f32 %v4684, %v5057
      %v5092 = vmul.f32 %v4685, %v5057
      %v5093 = vmul.f32 %v4686, %v5057
      %v5094 = vmul.f32 %v4687, %v5057
      %v5095 = vmul.f32 %v4688, %v5057
      %v5096 = vmul.f32 %v4689, %v5057
      %v5097 = vmul.f32 %v4690, %v5057
      %v5098 = vmul.f32 %v4691, %v5057
      %v5099 = vmul.f32 %v4692, %v5057
      %v5100 = vmul.f32 %v4693, %v5057
      %v5101 = vmul.f32 %v4694, %v5057
      %v5102 = vmul.f32 %v4695, %v5057
      %v5103 = vmul.f32 %v4696, %v5057
      %v5104 = vmul.f32 %v5051, %v5057
      %v5105 = vmul.f32 %v5052, %v5057
      %v5106 = vmul.f32 %v5053, %v5057
      %v5107 = vadd.f32 %v5003, %v5059
      %v5108 = vadd.f32 %v5004, %v5060
      %v5109 = vadd.f32 %v5005, %v5061
      %v5110 = vadd.f32 %v5006, %v5062
      %v5111 = vadd.f32 %v5007, %v5063
      %v5112 = vadd.f32 %v5008, %v5064
      %v5113 = vadd.f32 %v5009, %v5065
      %v5114 = vadd.f32 %v5010, %v5066
      %v5115 = vadd.f32 %v5011, %v5067
      %v5116 = vadd.f32 %v5012, %v5068
      %v5117 = vadd.f32 %v5013, %v5069
      %v5118 = vadd.f32 %v5014, %v5070
      %v5119 = vadd.f32 %v5015, %v5071
      %v5120 = vadd.f32 %v5016, %v5072
      %v5121 = vadd.f32 %v5017, %v5073
      %v5122 = vadd.f32 %v5018, %v5074
      %v5123 = vadd.f32 %v5019, %v5075
      %v5124 = vadd.f32 %v5020, %v5076
      %v5125 = vadd.f32 %v5021, %v5077
      %v5126 = vadd.f32 %v5022, %v5078
      %v5127 = vadd.f32 %v5023, %v5079
      %v5128 = vadd.f32 %v5024, %v5080
      %v5129 = vadd.f32 %v5025, %v5081
      %v5130 = vadd.f32 %v5026, %v5082
      %v5131 = vadd.f32 %v5027, %v5083
      %v5132 = vadd.f32 %v5028, %v5084
      %v5133 = vadd.f32 %v5029, %v5085
      %v5134 = vadd.f32 %v5030, %v5086
      %v5135 = vadd.f32 %v5031, %v5087
      %v5136 = vadd.f32 %v5032, %v5088
      %v5137 = vadd.f32 %v5033, %v5089
      %v5138 = vadd.f32 %v5034, %v5090
      %v5139 = vadd.f32 %v5035, %v5091
      %v5140 = vadd.f32 %v5036, %v5092
      %v5141 = vadd.f32 %v5037, %v5093
      %v5142 = vadd.f32 %v5038, %v5094
      %v5143 = vadd.f32 %v5039, %v5095
      %v5144 = vadd.f32 %v5040, %v5096
      %v5145 = vadd.f32 %v5041, %v5097
      %v5146 = vadd.f32 %v5042, %v5098
      %v5147 = vadd.f32 %v5043, %v5099
      %v5148 = vadd.f32 %v5044, %v5100
      %v5149 = vadd.f32 %v5045, %v5101
      %v5150 = vadd.f32 %v5046, %v5102
      %v5151 = vadd.f32 %v5047, %v5103
      %v5152 = vadd.f32 %v5048, %v5104
      %v5153 = vadd.f32 %v5049, %v5105
      %v5154 = vadd.f32 %v5050, %v5106
      %v5155 = vld [vmem:[#allocation2 + $0x189] sm:$0xff]
      %v5156 = vld [vmem:[#allocation2 + $0x191] sm:$0xff]
      %v5157 = vld [vmem:[#allocation2 + $0x199] sm:$0xff]
      %s5158 = scalar_lea.vmem %s3, 5
      %v5159 = vld [vmem:[%s5158] sm:$0x1]
      %v5161 = vperm.slane %v5159, 0
      %v5163 = vmul.f32 %v4801, %v5161
      %v5164 = vmul.f32 %v4802, %v5161
      %v5165 = vmul.f32 %v4803, %v5161
      %v5166 = vmul.f32 %v4804, %v5161
      %v5167 = vmul.f32 %v4805, %v5161
      %v5168 = vmul.f32 %v4806, %v5161
      %v5169 = vmul.f32 %v4807, %v5161
      %v5170 = vmul.f32 %v4808, %v5161
      %v5171 = vmul.f32 %v4809, %v5161
      %v5172 = vmul.f32 %v4810, %v5161
      %v5173 = vmul.f32 %v4811, %v5161
      %v5174 = vmul.f32 %v4812, %v5161
      %v5175 = vmul.f32 %v4813, %v5161
      %v5176 = vmul.f32 %v4814, %v5161
      %v5177 = vmul.f32 %v4815, %v5161
      %v5178 = vmul.f32 %v4816, %v5161
      %v5179 = vmul.f32 %v4817, %v5161
      %v5180 = vmul.f32 %v4818, %v5161
      %v5181 = vmul.f32 %v4819, %v5161
      %v5182 = vmul.f32 %v4820, %v5161
      %v5183 = vmul.f32 %v4821, %v5161
      %v5184 = vmul.f32 %v4822, %v5161
      %v5185 = vmul.f32 %v4823, %v5161
      %v5186 = vmul.f32 %v4824, %v5161
      %v5187 = vmul.f32 %v4825, %v5161
      %v5188 = vmul.f32 %v4826, %v5161
      %v5189 = vmul.f32 %v4827, %v5161
      %v5190 = vmul.f32 %v4828, %v5161
      %v5191 = vmul.f32 %v4829, %v5161
      %v5192 = vmul.f32 %v4830, %v5161
      %v5193 = vmul.f32 %v4831, %v5161
      %v5194 = vmul.f32 %v4832, %v5161
      %v5195 = vmul.f32 %v4833, %v5161
      %v5196 = vmul.f32 %v4834, %v5161
      %v5197 = vmul.f32 %v4835, %v5161
      %v5198 = vmul.f32 %v4836, %v5161
      %v5199 = vmul.f32 %v4837, %v5161
      %v5200 = vmul.f32 %v4838, %v5161
      %v5201 = vmul.f32 %v4839, %v5161
      %v5202 = vmul.f32 %v4840, %v5161
      %v5203 = vmul.f32 %v4841, %v5161
      %v5204 = vmul.f32 %v4842, %v5161
      %v5205 = vmul.f32 %v4843, %v5161
      %v5206 = vmul.f32 %v4844, %v5161
      %v5207 = vmul.f32 %v4845, %v5161
      %v5208 = vmul.f32 %v5155, %v5161
      %v5209 = vmul.f32 %v5156, %v5161
      %v5210 = vmul.f32 %v5157, %v5161
      %v5211 = vadd.f32 %v5107, %v5163
      %v5212 = vadd.f32 %v5108, %v5164
      %v5213 = vadd.f32 %v5109, %v5165
      %v5214 = vadd.f32 %v5110, %v5166
      %v5215 = vadd.f32 %v5111, %v5167
      %v5216 = vadd.f32 %v5112, %v5168
      %v5217 = vadd.f32 %v5113, %v5169
      %v5218 = vadd.f32 %v5114, %v5170
      %v5219 = vadd.f32 %v5115, %v5171
      %v5220 = vadd.f32 %v5116, %v5172
      %v5221 = vadd.f32 %v5117, %v5173
      %v5222 = vadd.f32 %v5118, %v5174
      %v5223 = vadd.f32 %v5119, %v5175
      %v5224 = vadd.f32 %v5120, %v5176
      %v5225 = vadd.f32 %v5121, %v5177
      %v5226 = vadd.f32 %v5122, %v5178
      %v5227 = vadd.f32 %v5123, %v5179
      %v5228 = vadd.f32 %v5124, %v5180
      %v5229 = vadd.f32 %v5125, %v5181
      %v5230 = vadd.f32 %v5126, %v5182
      %v5231 = vadd.f32 %v5127, %v5183
      %v5232 = vadd.f32 %v5128, %v5184
      %v5233 = vadd.f32 %v5129, %v5185
      %v5234 = vadd.f32 %v5130, %v5186
      %v5235 = vadd.f32 %v5131, %v5187
      %v5236 = vadd.f32 %v5132, %v5188
      %v5237 = vadd.f32 %v5133, %v5189
      %v5238 = vadd.f32 %v5134, %v5190
      %v5239 = vadd.f32 %v5135, %v5191
      %v5240 = vadd.f32 %v5136, %v5192
      %v5241 = vadd.f32 %v5137, %v5193
      %v5242 = vadd.f32 %v5138, %v5194
      %v5243 = vadd.f32 %v5139, %v5195
      %v5244 = vadd.f32 %v5140, %v5196
      %v5245 = vadd.f32 %v5141, %v5197
      %v5246 = vadd.f32 %v5142, %v5198
      %v5247 = vadd.f32 %v5143, %v5199
      %v5248 = vadd.f32 %v5144, %v5200
      %v5249 = vadd.f32 %v5145, %v5201
      %v5250 = vadd.f32 %v5146, %v5202
      %v5251 = vadd.f32 %v5147, %v5203
      %v5252 = vadd.f32 %v5148, %v5204
      %v5253 = vadd.f32 %v5149, %v5205
      %v5254 = vadd.f32 %v5150, %v5206
      %v5255 = vadd.f32 %v5151, %v5207
      %v5256 = vadd.f32 %v5152, %v5208
      %v5257 = vadd.f32 %v5153, %v5209
      %v5258 = vadd.f32 %v5154, %v5210
      %v5259 = vld [vmem:[#allocation2 + $0x19f] sm:$0xff]
      %v5260 = vld [vmem:[#allocation2 + $0x1a7] sm:$0xff]
      %v5261 = vld [vmem:[#allocation2 + $0x1af] sm:$0xff]
      %s5262 = scalar_lea.vmem %s3, 6
      %v5263 = vld [vmem:[%s5262] sm:$0x1]
      %v5265 = vperm.slane %v5263, 0
      %v5267 = vmul.f32 %v4507, %v5265
      %v5268 = vmul.f32 %v4508, %v5265
      %v5269 = vmul.f32 %v4509, %v5265
      %v5270 = vmul.f32 %v4510, %v5265
      %v5271 = vmul.f32 %v4511, %v5265
      %v5272 = vmul.f32 %v4512, %v5265
      %v5273 = vmul.f32 %v4513, %v5265
      %v5274 = vmul.f32 %v4514, %v5265
      %v5275 = vmul.f32 %v4515, %v5265
      %v5276 = vmul.f32 %v4516, %v5265
      %v5277 = vmul.f32 %v4517, %v5265
      %v5278 = vmul.f32 %v4518, %v5265
      %v5279 = vmul.f32 %v4519, %v5265
      %v5280 = vmul.f32 %v4520, %v5265
      %v5281 = vmul.f32 %v4521, %v5265
      %v5282 = vmul.f32 %v4522, %v5265
      %v5283 = vmul.f32 %v4523, %v5265
      %v5284 = vmul.f32 %v4524, %v5265
      %v5285 = vmul.f32 %v4525, %v5265
      %v5286 = vmul.f32 %v4526, %v5265
      %v5287 = vmul.f32 %v4527, %v5265
      %v5288 = vmul.f32 %v4528, %v5265
      %v5289 = vmul.f32 %v4529, %v5265
      %v5290 = vmul.f32 %v4530, %v5265
      %v5291 = vmul.f32 %v4531, %v5265
      %v5292 = vmul.f32 %v4532, %v5265
      %v5293 = vmul.f32 %v4533, %v5265
      %v5294 = vmul.f32 %v4534, %v5265
      %v5295 = vmul.f32 %v4535, %v5265
      %v5296 = vmul.f32 %v4536, %v5265
      %v5297 = vmul.f32 %v4537, %v5265
      %v5298 = vmul.f32 %v4538, %v5265
      %v5299 = vmul.f32 %v4539, %v5265
      %v5300 = vmul.f32 %v4540, %v5265
      %v5301 = vmul.f32 %v4541, %v5265
      %v5302 = vmul.f32 %v4542, %v5265
      %v5303 = vmul.f32 %v4543, %v5265
      %v5304 = vmul.f32 %v4544, %v5265
      %v5305 = vmul.f32 %v4545, %v5265
      %v5306 = vmul.f32 %v4546, %v5265
      %v5307 = vmul.f32 %v4547, %v5265
      %v5308 = vmul.f32 %v4548, %v5265
      %v5309 = vmul.f32 %v4947, %v5265
      %v5310 = vmul.f32 %v4948, %v5265
      %v5311 = vmul.f32 %v4949, %v5265
      %v5312 = vmul.f32 %v5259, %v5265
      %v5313 = vmul.f32 %v5260, %v5265
      %v5314 = vmul.f32 %v5261, %v5265
      %v5315 = vadd.f32 %v5211, %v5267
      %v5316 = vadd.f32 %v5212, %v5268
      %v5317 = vadd.f32 %v5213, %v5269
      %v5318 = vadd.f32 %v5214, %v5270
      %v5319 = vadd.f32 %v5215, %v5271
      %v5320 = vadd.f32 %v5216, %v5272
      %v5321 = vadd.f32 %v5217, %v5273
      %v5322 = vadd.f32 %v5218, %v5274
      %v5323 = vadd.f32 %v5219, %v5275
      %v5324 = vadd.f32 %v5220, %v5276
      %v5325 = vadd.f32 %v5221, %v5277
      %v5326 = vadd.f32 %v5222, %v5278
      %v5327 = vadd.f32 %v5223, %v5279
      %v5328 = vadd.f32 %v5224, %v5280
      %v5329 = vadd.f32 %v5225, %v5281
      %v5330 = vadd.f32 %v5226, %v5282
      %v5331 = vadd.f32 %v5227, %v5283
      %v5332 = vadd.f32 %v5228, %v5284
      %v5333 = vadd.f32 %v5229, %v5285
      %v5334 = vadd.f32 %v5230, %v5286
      %v5335 = vadd.f32 %v5231, %v5287
      %v5336 = vadd.f32 %v5232, %v5288
      %v5337 = vadd.f32 %v5233, %v5289
      %v5338 = vadd.f32 %v5234, %v5290
      %v5339 = vadd.f32 %v5235, %v5291
      %v5340 = vadd.f32 %v5236, %v5292
      %v5341 = vadd.f32 %v5237, %v5293
      %v5342 = vadd.f32 %v5238, %v5294
      %v5343 = vadd.f32 %v5239, %v5295
      %v5344 = vadd.f32 %v5240, %v5296
      %v5345 = vadd.f32 %v5241, %v5297
      %v5346 = vadd.f32 %v5242, %v5298
      %v5347 = vadd.f32 %v5243, %v5299
      %v5348 = vadd.f32 %v5244, %v5300
      %v5349 = vadd.f32 %v5245, %v5301
      %v5350 = vadd.f32 %v5246, %v5302
      %v5351 = vadd.f32 %v5247, %v5303
      %v5352 = vadd.f32 %v5248, %v5304
      %v5353 = vadd.f32 %v5249, %v5305
      %v5354 = vadd.f32 %v5250, %v5306
      %v5355 = vadd.f32 %v5251, %v5307
      %v5356 = vadd.f32 %v5252, %v5308
      %v5357 = vadd.f32 %v5253, %v5309
      %v5358 = vadd.f32 %v5254, %v5310
      %v5359 = vadd.f32 %v5255, %v5311
      %v5360 = vadd.f32 %v5256, %v5312
      %v5361 = vadd.f32 %v5257, %v5313
      %v5362 = vadd.f32 %v5258, %v5314
      %v5363 = vld [vmem:[#allocation2 + $0x1a0] sm:$0xff]
      %v5364 = vld [vmem:[#allocation2 + $0x1a8] sm:$0xff]
      %v5365 = vld [vmem:[#allocation2 + $0x1b0] sm:$0xff]
      %s5366 = scalar_lea.vmem %s3, 7
      %v5367 = vld [vmem:[%s5366] sm:$0x1]
      %v5369 = vperm.slane %v5367, 0
      %v5371 = vmul.f32 %v4655, %v5369
      %v5372 = vmul.f32 %v4656, %v5369
      %v5373 = vmul.f32 %v4657, %v5369
      %v5374 = vmul.f32 %v4658, %v5369
      %v5375 = vmul.f32 %v4659, %v5369
      %v5376 = vmul.f32 %v4660, %v5369
      %v5377 = vmul.f32 %v4661, %v5369
      %v5378 = vmul.f32 %v4662, %v5369
      %v5379 = vmul.f32 %v4663, %v5369
      %v5380 = vmul.f32 %v4664, %v5369
      %v5381 = vmul.f32 %v4665, %v5369
      %v5382 = vmul.f32 %v4666, %v5369
      %v5383 = vmul.f32 %v4667, %v5369
      %v5384 = vmul.f32 %v4668, %v5369
      %v5385 = vmul.f32 %v4669, %v5369
      %v5386 = vmul.f32 %v4670, %v5369
      %v5387 = vmul.f32 %v4671, %v5369
      %v5388 = vmul.f32 %v4672, %v5369
      %v5389 = vmul.f32 %v4673, %v5369
      %v5390 = vmul.f32 %v4674, %v5369
      %v5391 = vmul.f32 %v4675, %v5369
      %v5392 = vmul.f32 %v4676, %v5369
      %v5393 = vmul.f32 %v4677, %v5369
      %v5394 = vmul.f32 %v4678, %v5369
      %v5395 = vmul.f32 %v4679, %v5369
      %v5396 = vmul.f32 %v4680, %v5369
      %v5397 = vmul.f32 %v4681, %v5369
      %v5398 = vmul.f32 %v4682, %v5369
      %v5399 = vmul.f32 %v4683, %v5369
      %v5400 = vmul.f32 %v4684, %v5369
      %v5401 = vmul.f32 %v4685, %v5369
      %v5402 = vmul.f32 %v4686, %v5369
      %v5403 = vmul.f32 %v4687, %v5369
      %v5404 = vmul.f32 %v4688, %v5369
      %v5405 = vmul.f32 %v4689, %v5369
      %v5406 = vmul.f32 %v4690, %v5369
      %v5407 = vmul.f32 %v4691, %v5369
      %v5408 = vmul.f32 %v4692, %v5369
      %v5409 = vmul.f32 %v4693, %v5369
      %v5410 = vmul.f32 %v4694, %v5369
      %v5411 = vmul.f32 %v4695, %v5369
      %v5412 = vmul.f32 %v4696, %v5369
      %v5413 = vmul.f32 %v5051, %v5369
      %v5414 = vmul.f32 %v5052, %v5369
      %v5415 = vmul.f32 %v5053, %v5369
      %v5416 = vmul.f32 %v5363, %v5369
      %v5417 = vmul.f32 %v5364, %v5369
      %v5418 = vmul.f32 %v5365, %v5369
      %v5419 = vadd.f32 %v5315, %v5371
      %v5420 = vadd.f32 %v5316, %v5372
      %v5421 = vadd.f32 %v5317, %v5373
      %v5422 = vadd.f32 %v5318, %v5374
      %v5423 = vadd.f32 %v5319, %v5375
      %v5424 = vadd.f32 %v5320, %v5376
      %v5425 = vadd.f32 %v5321, %v5377
      %v5426 = vadd.f32 %v5322, %v5378
      %v5427 = vadd.f32 %v5323, %v5379
      %v5428 = vadd.f32 %v5324, %v5380
      %v5429 = vadd.f32 %v5325, %v5381
      %v5430 = vadd.f32 %v5326, %v5382
      %v5431 = vadd.f32 %v5327, %v5383
      %v5432 = vadd.f32 %v5328, %v5384
      %v5433 = vadd.f32 %v5329, %v5385
      %v5434 = vadd.f32 %v5330, %v5386
      %v5435 = vadd.f32 %v5331, %v5387
      %v5436 = vadd.f32 %v5332, %v5388
      %v5437 = vadd.f32 %v5333, %v5389
      %v5438 = vadd.f32 %v5334, %v5390
      %v5439 = vadd.f32 %v5335, %v5391
      %v5440 = vadd.f32 %v5336, %v5392
      %v5441 = vadd.f32 %v5337, %v5393
      %v5442 = vadd.f32 %v5338, %v5394
      %v5443 = vadd.f32 %v5339, %v5395
      %v5444 = vadd.f32 %v5340, %v5396
      %v5445 = vadd.f32 %v5341, %v5397
      %v5446 = vadd.f32 %v5342, %v5398
      %v5447 = vadd.f32 %v5343, %v5399
      %v5448 = vadd.f32 %v5344, %v5400
      %v5449 = vadd.f32 %v5345, %v5401
      %v5450 = vadd.f32 %v5346, %v5402
      %v5451 = vadd.f32 %v5347, %v5403
      %v5452 = vadd.f32 %v5348, %v5404
      %v5453 = vadd.f32 %v5349, %v5405
      %v5454 = vadd.f32 %v5350, %v5406
      %v5455 = vadd.f32 %v5351, %v5407
      %v5456 = vadd.f32 %v5352, %v5408
      %v5457 = vadd.f32 %v5353, %v5409
      %v5458 = vadd.f32 %v5354, %v5410
      %v5459 = vadd.f32 %v5355, %v5411
      %v5460 = vadd.f32 %v5356, %v5412
      %v5461 = vadd.f32 %v5357, %v5413
      %v5462 = vadd.f32 %v5358, %v5414
      %v5463 = vadd.f32 %v5359, %v5415
      %v5464 = vadd.f32 %v5360, %v5416
      %v5465 = vadd.f32 %v5361, %v5417
      %v5466 = vadd.f32 %v5362, %v5418
      %v5467 = vld [vmem:[#allocation2 + $0x1a1] sm:$0xff]
      %v5468 = vld [vmem:[#allocation2 + $0x1a9] sm:$0xff]
      %v5469 = vld [vmem:[#allocation2 + $0x1b1] sm:$0xff]
      %s5470 = scalar_lea.vmem %s3, 8
      %v5471 = vld [vmem:[%s5470] sm:$0x1]
      %v5473 = vperm.slane %v5471, 0
      %v5475 = vmul.f32 %v4804, %v5473
      %v5476 = vmul.f32 %v4805, %v5473
      %v5477 = vmul.f32 %v4806, %v5473
      %v5478 = vmul.f32 %v4807, %v5473
      %v5479 = vmul.f32 %v4808, %v5473
      %v5480 = vmul.f32 %v4809, %v5473
      %v5481 = vmul.f32 %v4810, %v5473
      %v5482 = vmul.f32 %v4811, %v5473
      %v5483 = vmul.f32 %v4812, %v5473
      %v5484 = vmul.f32 %v4813, %v5473
      %v5485 = vmul.f32 %v4814, %v5473
      %v5486 = vmul.f32 %v4815, %v5473
      %v5487 = vmul.f32 %v4816, %v5473
      %v5488 = vmul.f32 %v4817, %v5473
      %v5489 = vmul.f32 %v4818, %v5473
      %v5490 = vmul.f32 %v4819, %v5473
      %v5491 = vmul.f32 %v4820, %v5473
      %v5492 = vmul.f32 %v4821, %v5473
      %v5493 = vmul.f32 %v4822, %v5473
      %v5494 = vmul.f32 %v4823, %v5473
      %v5495 = vmul.f32 %v4824, %v5473
      %v5496 = vmul.f32 %v4825, %v5473
      %v5497 = vmul.f32 %v4826, %v5473
      %v5498 = vmul.f32 %v4827, %v5473
      %v5499 = vmul.f32 %v4828, %v5473
      %v5500 = vmul.f32 %v4829, %v5473
      %v5501 = vmul.f32 %v4830, %v5473
      %v5502 = vmul.f32 %v4831, %v5473
      %v5503 = vmul.f32 %v4832, %v5473
      %v5504 = vmul.f32 %v4833, %v5473
      %v5505 = vmul.f32 %v4834, %v5473
      %v5506 = vmul.f32 %v4835, %v5473
      %v5507 = vmul.f32 %v4836, %v5473
      %v5508 = vmul.f32 %v4837, %v5473
      %v5509 = vmul.f32 %v4838, %v5473
      %v5510 = vmul.f32 %v4839, %v5473
      %v5511 = vmul.f32 %v4840, %v5473
      %v5512 = vmul.f32 %v4841, %v5473
      %v5513 = vmul.f32 %v4842, %v5473
      %v5514 = vmul.f32 %v4843, %v5473
      %v5515 = vmul.f32 %v4844, %v5473
      %v5516 = vmul.f32 %v4845, %v5473
      %v5517 = vmul.f32 %v5155, %v5473
      %v5518 = vmul.f32 %v5156, %v5473
      %v5519 = vmul.f32 %v5157, %v5473
      %v5520 = vmul.f32 %v5467, %v5473
      %v5521 = vmul.f32 %v5468, %v5473
      %v5522 = vmul.f32 %v5469, %v5473
      %v5523 = vadd.f32 %v5419, %v5475
      %v5524 = vadd.f32 %v5420, %v5476
      %v5525 = vadd.f32 %v5421, %v5477
      %v5526 = vadd.f32 %v5422, %v5478
      %v5527 = vadd.f32 %v5423, %v5479
      %v5528 = vadd.f32 %v5424, %v5480
      %v5529 = vadd.f32 %v5425, %v5481
      %v5530 = vadd.f32 %v5426, %v5482
      %v5531 = vadd.f32 %v5427, %v5483
      %v5532 = vadd.f32 %v5428, %v5484
      %v5533 = vadd.f32 %v5429, %v5485
      %v5534 = vadd.f32 %v5430, %v5486
      %v5535 = vadd.f32 %v5431, %v5487
      %v5536 = vadd.f32 %v5432, %v5488
      %v5537 = vadd.f32 %v5433, %v5489
      %v5538 = vadd.f32 %v5434, %v5490
      %v5539 = vadd.f32 %v5435, %v5491
      %v5540 = vadd.f32 %v5436, %v5492
      %v5541 = vadd.f32 %v5437, %v5493
      %v5542 = vadd.f32 %v5438, %v5494
      %v5543 = vadd.f32 %v5439, %v5495
      %v5544 = vadd.f32 %v5440, %v5496
      %v5545 = vadd.f32 %v5441, %v5497
      %v5546 = vadd.f32 %v5442, %v5498
      %v5547 = vadd.f32 %v5443, %v5499
      %v5548 = vadd.f32 %v5444, %v5500
      %v5549 = vadd.f32 %v5445, %v5501
      %v5550 = vadd.f32 %v5446, %v5502
      %v5551 = vadd.f32 %v5447, %v5503
      %v5552 = vadd.f32 %v5448, %v5504
      %v5553 = vadd.f32 %v5449, %v5505
      %v5554 = vadd.f32 %v5450, %v5506
      %v5555 = vadd.f32 %v5451, %v5507
      %v5556 = vadd.f32 %v5452, %v5508
      %v5557 = vadd.f32 %v5453, %v5509
      %v5558 = vadd.f32 %v5454, %v5510
      %v5559 = vadd.f32 %v5455, %v5511
      %v5560 = vadd.f32 %v5456, %v5512
      %v5561 = vadd.f32 %v5457, %v5513
      %v5562 = vadd.f32 %v5458, %v5514
      %v5563 = vadd.f32 %v5459, %v5515
      %v5564 = vadd.f32 %v5460, %v5516
      %v5565 = vadd.f32 %v5461, %v5517
      %v5566 = vadd.f32 %v5462, %v5518
      %v5567 = vadd.f32 %v5463, %v5519
      %v5568 = vadd.f32 %v5464, %v5520
      %v5569 = vadd.f32 %v5465, %v5521
      %v5570 = vadd.f32 %v5466, %v5522
      %v5571 = vld [vmem:[%s9] sm:$0xff]
      %v5572 = vld [vmem:[%s9 + $0x8] sm:$0xff]
      %v5573 = vld [vmem:[%s9 + $0x10] sm:$0xff]
      %v5574 = vld [vmem:[%s9 + $0x18] sm:$0xff]
      %v5575 = vld [vmem:[%s9 + $0x20] sm:$0xff]
      %v5576 = vld [vmem:[%s9 + $0x28] sm:$0xff]
      %v5577 = vld [vmem:[%s9 + $0x30] sm:$0xff]
      %v5578 = vld [vmem:[%s9 + $0x38] sm:$0xff]
      %v5579 = vld [vmem:[%s9 + $0x40] sm:$0xff]
      %v5580 = vld [vmem:[%s9 + $0x48] sm:$0xff]
      %v5581 = vld [vmem:[%s9 + $0x50] sm:$0xff]
      %v5582 = vld [vmem:[%s9 + $0x58] sm:$0xff]
      %v5583 = vld [vmem:[%s9 + $0x60] sm:$0xff]
      %v5584 = vld [vmem:[%s9 + $0x68] sm:$0xff]
      %v5585 = vld [vmem:[%s9 + $0x70] sm:$0xff]
      %v5586 = vld [vmem:[%s9 + $0x78] sm:$0xff]
      %v5587 = vld [vmem:[%s9 + $0x80] sm:$0xff]
      %v5588 = vld [vmem:[%s9 + $0x88] sm:$0xff]
      %v5589 = vld [vmem:[%s9 + $0x90] sm:$0xff]
      %v5590 = vld [vmem:[%s9 + $0x98] sm:$0xff]
      %v5591 = vld [vmem:[%s9 + $0xa0] sm:$0xff]
      %v5592 = vld [vmem:[%s9 + $0xa8] sm:$0xff]
      %v5593 = vld [vmem:[%s9 + $0xb0] sm:$0xff]
      %v5594 = vld [vmem:[%s9 + $0xb8] sm:$0xff]
      %v5595 = vld [vmem:[%s9 + $0xc0] sm:$0xff]
      %v5596 = vld [vmem:[%s9 + $0xc8] sm:$0xff]
      %v5597 = vld [vmem:[%s9 + $0xd0] sm:$0xff]
      %v5598 = vld [vmem:[%s9 + $0xd8] sm:$0xff]
      %v5599 = vld [vmem:[%s9 + $0xe0] sm:$0xff]
      %v5600 = vld [vmem:[%s9 + $0xe8] sm:$0xff]
      %v5601 = vld [vmem:[%s9 + $0xf0] sm:$0xff]
      %v5602 = vld [vmem:[%s9 + $0xf8] sm:$0xff]
      %v5603 = vld [vmem:[%s9 + $0x100] sm:$0xff]
      %v5604 = vld [vmem:[%s9 + $0x108] sm:$0xff]
      %v5605 = vld [vmem:[%s9 + $0x110] sm:$0xff]
      %v5606 = vld [vmem:[%s9 + $0x118] sm:$0xff]
      %v5607 = vld [vmem:[%s9 + $0x120] sm:$0xff]
      %v5608 = vld [vmem:[%s9 + $0x128] sm:$0xff]
      %v5609 = vld [vmem:[%s9 + $0x130] sm:$0xff]
      %v5610 = vld [vmem:[%s9 + $0x138] sm:$0xff]
      %v5611 = vld [vmem:[%s9 + $0x140] sm:$0xff]
      %v5612 = vld [vmem:[%s9 + $0x148] sm:$0xff]
      %v5613 = vld [vmem:[%s9 + $0x150] sm:$0xff]
      %v5614 = vld [vmem:[%s9 + $0x158] sm:$0xff]
      %v5615 = vld [vmem:[%s9 + $0x160] sm:$0xff]
      %v5616 = vld [vmem:[%s9 + $0x168] sm:$0xff]
      %v5617 = vld [vmem:[%s9 + $0x170] sm:$0xff]
      %v5618 = vld [vmem:[%s9 + $0x178] sm:$0xff]
      %v5619 = vld [vmem:[%s4] sm:$0x1]
      %v5621 = vperm.slane %v5619, 0
      %5623 = vmatpush.msra.mxu0 %v5538
      %5624 = vmatpush.msra.mxu0 %v5537
      %5625 = vmatpush.msra.mxu0 %v5536
      %5626 = vmatpush.msra.mxu0 %v5535
      %5627 = vmatpush.msra.mxu0 %v5534
      %5628 = vmatpush.msra.mxu0 %v5533
      %5629 = vmatpush.msra.mxu0 %v5532
      %5630 = vmatpush.msra.mxu0 %v5531
      %5631 = vmatpush.msra.mxu0 %v5530
      %5632 = vmatpush.msra.mxu0 %v5529
      %5633 = vmatpush.msra.mxu0 %v5528
      %5634 = vmatpush.msra.mxu0 %v5527
      %5635 = vmatpush.msra.mxu0 %v5526
      %5636 = vmatpush.msra.mxu0 %v5525
      %5637 = vmatpush.msra.mxu0 %v5524
      %5638 = vmatpush.msra.mxu0 %v5523
      %5639 = vmatmul.f32.gmra.mxu0 %v5571
      %v5640 = vpop.f32.mrf.mxu0
      %v5641 = vadd.f32 %v5621, %v5640
      %5642 = vmatmul.f32.gmra.mxu0 %v5574
      %v5643 = vpop.f32.mrf.mxu0
      %v5644 = vadd.f32 %v5621, %v5643
      %5645 = vmatmul.f32.gmra.mxu0 %v5577
      %v5646 = vpop.f32.mrf.mxu0
      %v5647 = vadd.f32 %v5621, %v5646
      %5648 = vmatmul.f32.gmra.mxu0 %v5580
      %v5649 = vpop.f32.mrf.mxu0
      %v5650 = vadd.f32 %v5621, %v5649
      %5651 = vmatmul.f32.gmra.mxu0 %v5583
      %v5652 = vpop.f32.mrf.mxu0
      %v5653 = vadd.f32 %v5621, %v5652
      %5654 = vmatmul.f32.gmra.mxu0 %v5586
      %v5655 = vpop.f32.mrf.mxu0
      %v5656 = vadd.f32 %v5621, %v5655
      %5657 = vmatmul.f32.gmra.mxu0 %v5589
      %v5658 = vpop.f32.mrf.mxu0
      %v5659 = vadd.f32 %v5621, %v5658
      %5660 = vmatmul.f32.gmra.mxu0 %v5592
      %v5661 = vpop.f32.mrf.mxu0
      %v5662 = vadd.f32 %v5621, %v5661
      %5663 = vmatmul.f32.gmra.mxu0 %v5595
      %v5664 = vpop.f32.mrf.mxu0
      %v5665 = vadd.f32 %v5621, %v5664
      %5666 = vmatmul.f32.gmra.mxu0 %v5598
      %v5667 = vpop.f32.mrf.mxu0
      %v5668 = vadd.f32 %v5621, %v5667
      %5669 = vmatmul.f32.gmra.mxu0 %v5601
      %v5670 = vpop.f32.mrf.mxu0
      %v5671 = vadd.f32 %v5621, %v5670
      %5672 = vmatmul.f32.gmra.mxu0 %v5604
      %v5673 = vpop.f32.mrf.mxu0
      %v5674 = vadd.f32 %v5621, %v5673
      %5675 = vmatmul.f32.gmra.mxu0 %v5607
      %v5676 = vpop.f32.mrf.mxu0
      %v5677 = vadd.f32 %v5621, %v5676
      %5678 = vmatmul.f32.gmra.mxu0 %v5610
      %v5679 = vpop.f32.mrf.mxu0
      %v5680 = vadd.f32 %v5621, %v5679
      %5681 = vmatmul.f32.gmra.mxu0 %v5613
      %v5682 = vpop.f32.mrf.mxu0
      %v5683 = vadd.f32 %v5621, %v5682
      %5684 = vmatmul.f32.gmra.mxu0 %v5616
      %v5685 = vpop.f32.mrf.mxu0
      %v5686 = vadd.f32 %v5621, %v5685
      %5687 = vdwg.mxu0
      %5688 = vmatpush.msra.mxu0 %v5554
      %5689 = vmatpush.msra.mxu0 %v5553
      %5690 = vmatpush.msra.mxu0 %v5552
      %5691 = vmatpush.msra.mxu0 %v5551
      %5692 = vmatpush.msra.mxu0 %v5550
      %5693 = vmatpush.msra.mxu0 %v5549
      %5694 = vmatpush.msra.mxu0 %v5548
      %5695 = vmatpush.msra.mxu0 %v5547
      %5696 = vmatpush.msra.mxu0 %v5546
      %5697 = vmatpush.msra.mxu0 %v5545
      %5698 = vmatpush.msra.mxu0 %v5544
      %5699 = vmatpush.msra.mxu0 %v5543
      %5700 = vmatpush.msra.mxu0 %v5542
      %5701 = vmatpush.msra.mxu0 %v5541
      %5702 = vmatpush.msra.mxu0 %v5540
      %5703 = vmatpush.msra.mxu0 %v5539
      %5704 = vmatmul.f32.gmra.mxu0 %v5572
      %v5705 = vpop.f32.mrf.mxu0
      %v5706 = vadd.f32 %v5641, %v5705
      %5707 = vmatmul.f32.gmra.mxu0 %v5575
      %v5708 = vpop.f32.mrf.mxu0
      %v5709 = vadd.f32 %v5644, %v5708
      %5710 = vmatmul.f32.gmra.mxu0 %v5578
      %v5711 = vpop.f32.mrf.mxu0
      %v5712 = vadd.f32 %v5647, %v5711
      %5713 = vmatmul.f32.gmra.mxu0 %v5581
      %v5714 = vpop.f32.mrf.mxu0
      %v5715 = vadd.f32 %v5650, %v5714
      %5716 = vmatmul.f32.gmra.mxu0 %v5584
      %v5717 = vpop.f32.mrf.mxu0
      %v5718 = vadd.f32 %v5653, %v5717
      %5719 = vmatmul.f32.gmra.mxu0 %v5587
      %v5720 = vpop.f32.mrf.mxu0
      %v5721 = vadd.f32 %v5656, %v5720
      %5722 = vmatmul.f32.gmra.mxu0 %v5590
      %v5723 = vpop.f32.mrf.mxu0
      %v5724 = vadd.f32 %v5659, %v5723
      %5725 = vmatmul.f32.gmra.mxu0 %v5593
      %v5726 = vpop.f32.mrf.mxu0
      %v5727 = vadd.f32 %v5662, %v5726
      %5728 = vmatmul.f32.gmra.mxu0 %v5596
      %v5729 = vpop.f32.mrf.mxu0
      %v5730 = vadd.f32 %v5665, %v5729
      %5731 = vmatmul.f32.gmra.mxu0 %v5599
      %v5732 = vpop.f32.mrf.mxu0
      %v5733 = vadd.f32 %v5668, %v5732
      %5734 = vmatmul.f32.gmra.mxu0 %v5602
      %v5735 = vpop.f32.mrf.mxu0
      %v5736 = vadd.f32 %v5671, %v5735
      %5737 = vmatmul.f32.gmra.mxu0 %v5605
      %v5738 = vpop.f32.mrf.mxu0
      %v5739 = vadd.f32 %v5674, %v5738
      %5740 = vmatmul.f32.gmra.mxu0 %v5608
      %v5741 = vpop.f32.mrf.mxu0
      %v5742 = vadd.f32 %v5677, %v5741
      %5743 = vmatmul.f32.gmra.mxu0 %v5611
      %v5744 = vpop.f32.mrf.mxu0
      %v5745 = vadd.f32 %v5680, %v5744
      %5746 = vmatmul.f32.gmra.mxu0 %v5614
      %v5747 = vpop.f32.mrf.mxu0
      %v5748 = vadd.f32 %v5683, %v5747
      %5749 = vmatmul.f32.gmra.mxu0 %v5617
      %v5750 = vpop.f32.mrf.mxu0
      %v5751 = vadd.f32 %v5686, %v5750
      %5752 = vdwg.mxu0
      %5753 = vmatpush.msra.mxu0 %v5570
      %5754 = vmatpush.msra.mxu0 %v5569
      %5755 = vmatpush.msra.mxu0 %v5568
      %5756 = vmatpush.msra.mxu0 %v5567
      %5757 = vmatpush.msra.mxu0 %v5566
      %5758 = vmatpush.msra.mxu0 %v5565
      %5759 = vmatpush.msra.mxu0 %v5564
      %5760 = vmatpush.msra.mxu0 %v5563
      %5761 = vmatpush.msra.mxu0 %v5562
      %5762 = vmatpush.msra.mxu0 %v5561
      %5763 = vmatpush.msra.mxu0 %v5560
      %5764 = vmatpush.msra.mxu0 %v5559
      %5765 = vmatpush.msra.mxu0 %v5558
      %5766 = vmatpush.msra.mxu0 %v5557
      %5767 = vmatpush.msra.mxu0 %v5556
      %5768 = vmatpush.msra.mxu0 %v5555
      %5769 = vmatmul.f32.gmra.mxu0 %v5573
      %v5770 = vpop.f32.mrf.mxu0
      %v5771 = vadd.f32 %v5706, %v5770
      %5772 = vmatmul.f32.gmra.mxu0 %v5576
      %v5773 = vpop.f32.mrf.mxu0
      %v5774 = vadd.f32 %v5709, %v5773
      %5775 = vmatmul.f32.gmra.mxu0 %v5579
      %v5776 = vpop.f32.mrf.mxu0
      %v5777 = vadd.f32 %v5712, %v5776
      %5778 = vmatmul.f32.gmra.mxu0 %v5582
      %v5779 = vpop.f32.mrf.mxu0
      %v5780 = vadd.f32 %v5715, %v5779
      %5781 = vmatmul.f32.gmra.mxu0 %v5585
      %v5782 = vpop.f32.mrf.mxu0
      %v5783 = vadd.f32 %v5718, %v5782
      %5784 = vmatmul.f32.gmra.mxu0 %v5588
      %v5785 = vpop.f32.mrf.mxu0
      %v5786 = vadd.f32 %v5721, %v5785
      %5787 = vmatmul.f32.gmra.mxu0 %v5591
      %v5788 = vpop.f32.mrf.mxu0
      %v5789 = vadd.f32 %v5724, %v5788
      %5790 = vmatmul.f32.gmra.mxu0 %v5594
      %v5791 = vpop.f32.mrf.mxu0
      %v5792 = vadd.f32 %v5727, %v5791
      %5793 = vmatmul.f32.gmra.mxu0 %v5597
      %v5794 = vpop.f32.mrf.mxu0
      %v5795 = vadd.f32 %v5730, %v5794
      %5796 = vmatmul.f32.gmra.mxu0 %v5600
      %v5797 = vpop.f32.mrf.mxu0
      %v5798 = vadd.f32 %v5733, %v5797
      %5799 = vmatmul.f32.gmra.mxu0 %v5603
      %v5800 = vpop.f32.mrf.mxu0
      %v5801 = vadd.f32 %v5736, %v5800
      %5802 = vmatmul.f32.gmra.mxu0 %v5606
      %v5803 = vpop.f32.mrf.mxu0
      %v5804 = vadd.f32 %v5739, %v5803
      %5805 = vmatmul.f32.gmra.mxu0 %v5609
      %v5806 = vpop.f32.mrf.mxu0
      %v5807 = vadd.f32 %v5742, %v5806
      %5808 = vmatmul.f32.gmra.mxu0 %v5612
      %v5809 = vpop.f32.mrf.mxu0
      %v5810 = vadd.f32 %v5745, %v5809
      %5811 = vmatmul.f32.gmra.mxu0 %v5615
      %v5812 = vpop.f32.mrf.mxu0
      %v5813 = vadd.f32 %v5748, %v5812
      %5814 = vmatmul.f32.gmra.mxu0 %v5618
      %v5815 = vpop.f32.mrf.mxu0
      %v5816 = vadd.f32 %v5751, %v5815
      %5817 = vdwg.mxu0
      %v5818 = vld [vmem:[%s11] sm:$0xff]
      %v5819 = vld [vmem:[%s11 + $0x8] sm:$0xff]
      %v5820 = vld [vmem:[%s11 + $0x10] sm:$0xff]
      %v5821 = vld [vmem:[%s11 + $0x18] sm:$0xff]
      %v5822 = vld [vmem:[%s11 + $0x20] sm:$0xff]
      %v5823 = vld [vmem:[%s11 + $0x28] sm:$0xff]
      %v5824 = vld [vmem:[%s11 + $0x30] sm:$0xff]
      %v5825 = vld [vmem:[%s11 + $0x38] sm:$0xff]
      %v5826 = vld [vmem:[%s11 + $0x40] sm:$0xff]
      %v5827 = vld [vmem:[%s11 + $0x48] sm:$0xff]
      %v5828 = vld [vmem:[%s11 + $0x50] sm:$0xff]
      %v5829 = vld [vmem:[%s11 + $0x58] sm:$0xff]
      %v5830 = vld [vmem:[%s11 + $0x60] sm:$0xff]
      %v5831 = vld [vmem:[%s11 + $0x68] sm:$0xff]
      %v5832 = vld [vmem:[%s11 + $0x70] sm:$0xff]
      %v5833 = vld [vmem:[%s11 + $0x78] sm:$0xff]
      %5835 = vset.pattern.permute.xlu0 0
      %5836 = vperm.xlu0 %5835, %v5818
      %v5837 = vpop.permute.xlu0 %5836
      %5840 = vset.pattern.permute.xlu0 0
      %5841 = vperm.xlu0 %5840, %v5819
      %v5842 = vpop.permute.xlu0 %5841
      %5845 = vset.pattern.permute.xlu0 0
      %5846 = vperm.xlu0 %5845, %v5820
      %v5847 = vpop.permute.xlu0 %5846
      %5850 = vset.pattern.permute.xlu0 0
      %5851 = vperm.xlu0 %5850, %v5821
      %v5852 = vpop.permute.xlu0 %5851
      %5855 = vset.pattern.permute.xlu0 0
      %5856 = vperm.xlu0 %5855, %v5822
      %v5857 = vpop.permute.xlu0 %5856
      %5860 = vset.pattern.permute.xlu0 0
      %5861 = vperm.xlu0 %5860, %v5823
      %v5862 = vpop.permute.xlu0 %5861
      %5865 = vset.pattern.permute.xlu0 0
      %5866 = vperm.xlu0 %5865, %v5824
      %v5867 = vpop.permute.xlu0 %5866
      %5870 = vset.pattern.permute.xlu0 0
      %5871 = vperm.xlu0 %5870, %v5825
      %v5872 = vpop.permute.xlu0 %5871
      %5875 = vset.pattern.permute.xlu0 0
      %5876 = vperm.xlu0 %5875, %v5826
      %v5877 = vpop.permute.xlu0 %5876
      %5880 = vset.pattern.permute.xlu0 0
      %5881 = vperm.xlu0 %5880, %v5827
      %v5882 = vpop.permute.xlu0 %5881
      %5885 = vset.pattern.permute.xlu0 0
      %5886 = vperm.xlu0 %5885, %v5828
      %v5887 = vpop.permute.xlu0 %5886
      %5890 = vset.pattern.permute.xlu0 0
      %5891 = vperm.xlu0 %5890, %v5829
      %v5892 = vpop.permute.xlu0 %5891
      %5895 = vset.pattern.permute.xlu0 0
      %5896 = vperm.xlu0 %5895, %v5830
      %v5897 = vpop.permute.xlu0 %5896
      %5900 = vset.pattern.permute.xlu0 0
      %5901 = vperm.xlu0 %5900, %v5831
      %v5902 = vpop.permute.xlu0 %5901
      %5905 = vset.pattern.permute.xlu0 0
      %5906 = vperm.xlu0 %5905, %v5832
      %v5907 = vpop.permute.xlu0 %5906
      %5910 = vset.pattern.permute.xlu0 0
      %5911 = vperm.xlu0 %5910, %v5833
      %v5912 = vpop.permute.xlu0 %5911
      %v5914 = vmul.f32 %v5771, %v5837
      %v5915 = vmul.f32 %v5774, %v5842
      %v5916 = vmul.f32 %v5777, %v5847
      %v5917 = vmul.f32 %v5780, %v5852
      %v5918 = vmul.f32 %v5783, %v5857
      %v5919 = vmul.f32 %v5786, %v5862
      %v5920 = vmul.f32 %v5789, %v5867
      %v5921 = vmul.f32 %v5792, %v5872
      %v5922 = vmul.f32 %v5795, %v5877
      %v5923 = vmul.f32 %v5798, %v5882
      %v5924 = vmul.f32 %v5801, %v5887
      %v5925 = vmul.f32 %v5804, %v5892
      %v5926 = vmul.f32 %v5807, %v5897
      %v5927 = vmul.f32 %v5810, %v5902
      %v5928 = vmul.f32 %v5813, %v5907
      %v5929 = vmul.f32 %v5816, %v5912
      %5930 = vst.msk [vmem:[#allocation3] sm:$0xff] %vm4444, 0.0
      %5931 = vst.msk [vmem:[#allocation3 + $0x8] sm:$0xff] %vm4444, 0.0
      %5932 = vst.msk [vmem:[#allocation3 + $0x10] sm:$0xff] %vm4444, 0.0
      %5933 = vst.msk [vmem:[#allocation3 + $0x18] sm:$0xff] %vm4444, 0.0
      %5934 = vst.msk [vmem:[#allocation3 + $0xa0] sm:$0xff] %vm4444, 0.0
      %5935 = vst.msk [vmem:[#allocation3 + $0xa8] sm:$0xff] %vm4444, 0.0
      %5936 = vst.msk [vmem:[#allocation3 + $0xb0] sm:$0xff] %vm4444, 0.0
      %5937 = vst.msk [vmem:[#allocation3 + $0xb8] sm:$0xff] %vm4444, 0.0
      %5938 = vst.msk [vmem:[#allocation3 + $0x20] sm:$0xff] %vm4444, %v5914
      %5939 = vst.msk [vmem:[#allocation3 + $0x28] sm:$0xff] %vm4444, %v5915
      %5940 = vst.msk [vmem:[#allocation3 + $0x30] sm:$0xff] %vm4444, %v5916
      %5941 = vst.msk [vmem:[#allocation3 + $0x38] sm:$0xff] %vm4444, %v5917
      %5942 = vst.msk [vmem:[#allocation3 + $0x40] sm:$0xff] %vm4444, %v5918
      %5943 = vst.msk [vmem:[#allocation3 + $0x48] sm:$0xff] %vm4444, %v5919
      %5944 = vst.msk [vmem:[#allocation3 + $0x50] sm:$0xff] %vm4444, %v5920
      %5945 = vst.msk [vmem:[#allocation3 + $0x58] sm:$0xff] %vm4444, %v5921
      %5946 = vst.msk [vmem:[#allocation3 + $0x60] sm:$0xff] %vm4444, %v5922
      %5947 = vst.msk [vmem:[#allocation3 + $0x68] sm:$0xff] %vm4444, %v5923
      %5948 = vst.msk [vmem:[#allocation3 + $0x70] sm:$0xff] %vm4444, %v5924
      %5949 = vst.msk [vmem:[#allocation3 + $0x78] sm:$0xff] %vm4444, %v5925
      %5950 = vst.msk [vmem:[#allocation3 + $0x80] sm:$0xff] %vm4444, %v5926
      %5951 = vst.msk [vmem:[#allocation3 + $0x88] sm:$0xff] %vm4444, %v5927
      %5952 = vst.msk [vmem:[#allocation3 + $0x90] sm:$0xff] %vm4444, %v5928
      %5953 = vst.msk [vmem:[#allocation3 + $0x98] sm:$0xff] %vm4444, %v5929
      %v5954 = vld [vmem:[#allocation3 + $0xf] sm:$0xff]
      %v5955 = vld [vmem:[#allocation3 + $0x17] sm:$0xff]
      %v5956 = vld [vmem:[#allocation3 + $0x1f] sm:$0xff]
      %v5957 = vld [vmem:[#allocation3 + $0x27] sm:$0xff]
      %v5958 = vld [vmem:[#allocation3 + $0x2f] sm:$0xff]
      %v5959 = vld [vmem:[#allocation3 + $0x37] sm:$0xff]
      %v5960 = vld [vmem:[#allocation3 + $0x3f] sm:$0xff]
      %v5961 = vld [vmem:[#allocation3 + $0x47] sm:$0xff]
      %v5962 = vld [vmem:[#allocation3 + $0x4f] sm:$0xff]
      %v5963 = vld [vmem:[#allocation3 + $0x57] sm:$0xff]
      %v5964 = vld [vmem:[#allocation3 + $0x5f] sm:$0xff]
      %v5965 = vld [vmem:[#allocation3 + $0x67] sm:$0xff]
      %v5966 = vld [vmem:[#allocation3 + $0x6f] sm:$0xff]
      %v5967 = vld [vmem:[#allocation3 + $0x77] sm:$0xff]
      %v5968 = vld [vmem:[#allocation3 + $0x7f] sm:$0xff]
      %v5969 = vld [vmem:[#allocation3 + $0x87] sm:$0xff]
      %v5970 = vld [vmem:[%s5] sm:$0x1]
      %v5972 = vperm.slane %v5970, 0
      %v5974 = vmul.f32 %v5954, %v5972
      %v5975 = vmul.f32 %v5955, %v5972
      %v5976 = vmul.f32 %v5956, %v5972
      %v5977 = vmul.f32 %v5957, %v5972
      %v5978 = vmul.f32 %v5958, %v5972
      %v5979 = vmul.f32 %v5959, %v5972
      %v5980 = vmul.f32 %v5960, %v5972
      %v5981 = vmul.f32 %v5961, %v5972
      %v5982 = vmul.f32 %v5962, %v5972
      %v5983 = vmul.f32 %v5963, %v5972
      %v5984 = vmul.f32 %v5964, %v5972
      %v5985 = vmul.f32 %v5965, %v5972
      %v5986 = vmul.f32 %v5966, %v5972
      %v5987 = vmul.f32 %v5967, %v5972
      %v5988 = vmul.f32 %v5968, %v5972
      %v5989 = vmul.f32 %v5969, %v5972
      %v5990 = vadd.f32 %v5974, 0.0
      %v5991 = vadd.f32 %v5975, 0.0
      %v5992 = vadd.f32 %v5976, 0.0
      %v5993 = vadd.f32 %v5977, 0.0
      %v5994 = vadd.f32 %v5978, 0.0
      %v5995 = vadd.f32 %v5979, 0.0
      %v5996 = vadd.f32 %v5980, 0.0
      %v5997 = vadd.f32 %v5981, 0.0
      %v5998 = vadd.f32 %v5982, 0.0
      %v5999 = vadd.f32 %v5983, 0.0
      %v6000 = vadd.f32 %v5984, 0.0
      %v6001 = vadd.f32 %v5985, 0.0
      %v6002 = vadd.f32 %v5986, 0.0
      %v6003 = vadd.f32 %v5987, 0.0
      %v6004 = vadd.f32 %v5988, 0.0
      %v6005 = vadd.f32 %v5989, 0.0
      %v6006 = vld [vmem:[#allocation3 + $0x10] sm:$0xff]
      %v6007 = vld [vmem:[#allocation3 + $0x18] sm:$0xff]
      %v6008 = vld [vmem:[#allocation3 + $0x20] sm:$0xff]
      %v6009 = vld [vmem:[#allocation3 + $0x28] sm:$0xff]
      %v6010 = vld [vmem:[#allocation3 + $0x30] sm:$0xff]
      %v6011 = vld [vmem:[#allocation3 + $0x38] sm:$0xff]
      %v6012 = vld [vmem:[#allocation3 + $0x40] sm:$0xff]
      %v6013 = vld [vmem:[#allocation3 + $0x48] sm:$0xff]
      %v6014 = vld [vmem:[#allocation3 + $0x50] sm:$0xff]
      %v6015 = vld [vmem:[#allocation3 + $0x58] sm:$0xff]
      %v6016 = vld [vmem:[#allocation3 + $0x60] sm:$0xff]
      %v6017 = vld [vmem:[#allocation3 + $0x68] sm:$0xff]
      %v6018 = vld [vmem:[#allocation3 + $0x70] sm:$0xff]
      %v6019 = vld [vmem:[#allocation3 + $0x78] sm:$0xff]
      %v6020 = vld [vmem:[#allocation3 + $0x80] sm:$0xff]
      %v6021 = vld [vmem:[#allocation3 + $0x88] sm:$0xff]
      %s6022 = scalar_lea.vmem %s5, 1
      %v6023 = vld [vmem:[%s6022] sm:$0x1]
      %v6025 = vperm.slane %v6023, 0
      %v6027 = vmul.f32 %v6006, %v6025
      %v6028 = vmul.f32 %v6007, %v6025
      %v6029 = vmul.f32 %v6008, %v6025
      %v6030 = vmul.f32 %v6009, %v6025
      %v6031 = vmul.f32 %v6010, %v6025
      %v6032 = vmul.f32 %v6011, %v6025
      %v6033 = vmul.f32 %v6012, %v6025
      %v6034 = vmul.f32 %v6013, %v6025
      %v6035 = vmul.f32 %v6014, %v6025
      %v6036 = vmul.f32 %v6015, %v6025
      %v6037 = vmul.f32 %v6016, %v6025
      %v6038 = vmul.f32 %v6017, %v6025
      %v6039 = vmul.f32 %v6018, %v6025
      %v6040 = vmul.f32 %v6019, %v6025
      %v6041 = vmul.f32 %v6020, %v6025
      %v6042 = vmul.f32 %v6021, %v6025
      %v6043 = vadd.f32 %v5990, %v6027
      %v6044 = vadd.f32 %v5991, %v6028
      %v6045 = vadd.f32 %v5992, %v6029
      %v6046 = vadd.f32 %v5993, %v6030
      %v6047 = vadd.f32 %v5994, %v6031
      %v6048 = vadd.f32 %v5995, %v6032
      %v6049 = vadd.f32 %v5996, %v6033
      %v6050 = vadd.f32 %v5997, %v6034
      %v6051 = vadd.f32 %v5998, %v6035
      %v6052 = vadd.f32 %v5999, %v6036
      %v6053 = vadd.f32 %v6000, %v6037
      %v6054 = vadd.f32 %v6001, %v6038
      %v6055 = vadd.f32 %v6002, %v6039
      %v6056 = vadd.f32 %v6003, %v6040
      %v6057 = vadd.f32 %v6004, %v6041
      %v6058 = vadd.f32 %v6005, %v6042
      %v6059 = vld [vmem:[#allocation3 + $0x11] sm:$0xff]
      %v6060 = vld [vmem:[#allocation3 + $0x19] sm:$0xff]
      %v6061 = vld [vmem:[#allocation3 + $0x21] sm:$0xff]
      %v6062 = vld [vmem:[#allocation3 + $0x29] sm:$0xff]
      %v6063 = vld [vmem:[#allocation3 + $0x31] sm:$0xff]
      %v6064 = vld [vmem:[#allocation3 + $0x39] sm:$0xff]
      %v6065 = vld [vmem:[#allocation3 + $0x41] sm:$0xff]
      %v6066 = vld [vmem:[#allocation3 + $0x49] sm:$0xff]
      %v6067 = vld [vmem:[#allocation3 + $0x51] sm:$0xff]
      %v6068 = vld [vmem:[#allocation3 + $0x59] sm:$0xff]
      %v6069 = vld [vmem:[#allocation3 + $0x61] sm:$0xff]
      %v6070 = vld [vmem:[#allocation3 + $0x69] sm:$0xff]
      %v6071 = vld [vmem:[#allocation3 + $0x71] sm:$0xff]
      %v6072 = vld [vmem:[#allocation3 + $0x79] sm:$0xff]
      %v6073 = vld [vmem:[#allocation3 + $0x81] sm:$0xff]
      %v6074 = vld [vmem:[#allocation3 + $0x89] sm:$0xff]
      %s6075 = scalar_lea.vmem %s5, 2
      %v6076 = vld [vmem:[%s6075] sm:$0x1]
      %v6078 = vperm.slane %v6076, 0
      %v6080 = vmul.f32 %v6059, %v6078
      %v6081 = vmul.f32 %v6060, %v6078
      %v6082 = vmul.f32 %v6061, %v6078
      %v6083 = vmul.f32 %v6062, %v6078
      %v6084 = vmul.f32 %v6063, %v6078
      %v6085 = vmul.f32 %v6064, %v6078
      %v6086 = vmul.f32 %v6065, %v6078
      %v6087 = vmul.f32 %v6066, %v6078
      %v6088 = vmul.f32 %v6067, %v6078
      %v6089 = vmul.f32 %v6068, %v6078
      %v6090 = vmul.f32 %v6069, %v6078
      %v6091 = vmul.f32 %v6070, %v6078
      %v6092 = vmul.f32 %v6071, %v6078
      %v6093 = vmul.f32 %v6072, %v6078
      %v6094 = vmul.f32 %v6073, %v6078
      %v6095 = vmul.f32 %v6074, %v6078
      %v6096 = vadd.f32 %v6043, %v6080
      %v6097 = vadd.f32 %v6044, %v6081
      %v6098 = vadd.f32 %v6045, %v6082
      %v6099 = vadd.f32 %v6046, %v6083
      %v6100 = vadd.f32 %v6047, %v6084
      %v6101 = vadd.f32 %v6048, %v6085
      %v6102 = vadd.f32 %v6049, %v6086
      %v6103 = vadd.f32 %v6050, %v6087
      %v6104 = vadd.f32 %v6051, %v6088
      %v6105 = vadd.f32 %v6052, %v6089
      %v6106 = vadd.f32 %v6053, %v6090
      %v6107 = vadd.f32 %v6054, %v6091
      %v6108 = vadd.f32 %v6055, %v6092
      %v6109 = vadd.f32 %v6056, %v6093
      %v6110 = vadd.f32 %v6057, %v6094
      %v6111 = vadd.f32 %v6058, %v6095
      %v6112 = vld [vmem:[#allocation3 + $0x8f] sm:$0xff]
      %v6113 = vld [vmem:[#allocation3 + $0x97] sm:$0xff]
      %s6114 = scalar_lea.vmem %s5, 3
      %v6115 = vld [vmem:[%s6114] sm:$0x1]
      %v6117 = vperm.slane %v6115, 0
      %v6119 = vmul.f32 %v5956, %v6117
      %v6120 = vmul.f32 %v5957, %v6117
      %v6121 = vmul.f32 %v5958, %v6117
      %v6122 = vmul.f32 %v5959, %v6117
      %v6123 = vmul.f32 %v5960, %v6117
      %v6124 = vmul.f32 %v5961, %v6117
      %v6125 = vmul.f32 %v5962, %v6117
      %v6126 = vmul.f32 %v5963, %v6117
      %v6127 = vmul.f32 %v5964, %v6117
      %v6128 = vmul.f32 %v5965, %v6117
      %v6129 = vmul.f32 %v5966, %v6117
      %v6130 = vmul.f32 %v5967, %v6117
      %v6131 = vmul.f32 %v5968, %v6117
      %v6132 = vmul.f32 %v5969, %v6117
      %v6133 = vmul.f32 %v6112, %v6117
      %v6134 = vmul.f32 %v6113, %v6117
      %v6135 = vadd.f32 %v6096, %v6119
      %v6136 = vadd.f32 %v6097, %v6120
      %v6137 = vadd.f32 %v6098, %v6121
      %v6138 = vadd.f32 %v6099, %v6122
      %v6139 = vadd.f32 %v6100, %v6123
      %v6140 = vadd.f32 %v6101, %v6124
      %v6141 = vadd.f32 %v6102, %v6125
      %v6142 = vadd.f32 %v6103, %v6126
      %v6143 = vadd.f32 %v6104, %v6127
      %v6144 = vadd.f32 %v6105, %v6128
      %v6145 = vadd.f32 %v6106, %v6129
      %v6146 = vadd.f32 %v6107, %v6130
      %v6147 = vadd.f32 %v6108, %v6131
      %v6148 = vadd.f32 %v6109, %v6132
      %v6149 = vadd.f32 %v6110, %v6133
      %v6150 = vadd.f32 %v6111, %v6134
      %v6151 = vld [vmem:[#allocation3 + $0x90] sm:$0xff]
      %v6152 = vld [vmem:[#allocation3 + $0x98] sm:$0xff]
      %s6153 = scalar_lea.vmem %s5, 4
      %v6154 = vld [vmem:[%s6153] sm:$0x1]
      %v6156 = vperm.slane %v6154, 0
      %v6158 = vmul.f32 %v6008, %v6156
      %v6159 = vmul.f32 %v6009, %v6156
      %v6160 = vmul.f32 %v6010, %v6156
      %v6161 = vmul.f32 %v6011, %v6156
      %v6162 = vmul.f32 %v6012, %v6156
      %v6163 = vmul.f32 %v6013, %v6156
      %v6164 = vmul.f32 %v6014, %v6156
      %v6165 = vmul.f32 %v6015, %v6156
      %v6166 = vmul.f32 %v6016, %v6156
      %v6167 = vmul.f32 %v6017, %v6156
      %v6168 = vmul.f32 %v6018, %v6156
      %v6169 = vmul.f32 %v6019, %v6156
      %v6170 = vmul.f32 %v6020, %v6156
      %v6171 = vmul.f32 %v6021, %v6156
      %v6172 = vmul.f32 %v6151, %v6156
      %v6173 = vmul.f32 %v6152, %v6156
      %v6174 = vadd.f32 %v6135, %v6158
      %v6175 = vadd.f32 %v6136, %v6159
      %v6176 = vadd.f32 %v6137, %v6160
      %v6177 = vadd.f32 %v6138, %v6161
      %v6178 = vadd.f32 %v6139, %v6162
      %v6179 = vadd.f32 %v6140, %v6163
      %v6180 = vadd.f32 %v6141, %v6164
      %v6181 = vadd.f32 %v6142, %v6165
      %v6182 = vadd.f32 %v6143, %v6166
      %v6183 = vadd.f32 %v6144, %v6167
      %v6184 = vadd.f32 %v6145, %v6168
      %v6185 = vadd.f32 %v6146, %v6169
      %v6186 = vadd.f32 %v6147, %v6170
      %v6187 = vadd.f32 %v6148, %v6171
      %v6188 = vadd.f32 %v6149, %v6172
      %v6189 = vadd.f32 %v6150, %v6173
      %v6190 = vld [vmem:[#allocation3 + $0x91] sm:$0xff]
      %v6191 = vld [vmem:[#allocation3 + $0x99] sm:$0xff]
      %s6192 = scalar_lea.vmem %s5, 5
      %v6193 = vld [vmem:[%s6192] sm:$0x1]
      %v6195 = vperm.slane %v6193, 0
      %v6197 = vmul.f32 %v6061, %v6195
      %v6198 = vmul.f32 %v6062, %v6195
      %v6199 = vmul.f32 %v6063, %v6195
      %v6200 = vmul.f32 %v6064, %v6195
      %v6201 = vmul.f32 %v6065, %v6195
      %v6202 = vmul.f32 %v6066, %v6195
      %v6203 = vmul.f32 %v6067, %v6195
      %v6204 = vmul.f32 %v6068, %v6195
      %v6205 = vmul.f32 %v6069, %v6195
      %v6206 = vmul.f32 %v6070, %v6195
      %v6207 = vmul.f32 %v6071, %v6195
      %v6208 = vmul.f32 %v6072, %v6195
      %v6209 = vmul.f32 %v6073, %v6195
      %v6210 = vmul.f32 %v6074, %v6195
      %v6211 = vmul.f32 %v6190, %v6195
      %v6212 = vmul.f32 %v6191, %v6195
      %v6213 = vadd.f32 %v6174, %v6197
      %v6214 = vadd.f32 %v6175, %v6198
      %v6215 = vadd.f32 %v6176, %v6199
      %v6216 = vadd.f32 %v6177, %v6200
      %v6217 = vadd.f32 %v6178, %v6201
      %v6218 = vadd.f32 %v6179, %v6202
      %v6219 = vadd.f32 %v6180, %v6203
      %v6220 = vadd.f32 %v6181, %v6204
      %v6221 = vadd.f32 %v6182, %v6205
      %v6222 = vadd.f32 %v6183, %v6206
      %v6223 = vadd.f32 %v6184, %v6207
      %v6224 = vadd.f32 %v6185, %v6208
      %v6225 = vadd.f32 %v6186, %v6209
      %v6226 = vadd.f32 %v6187, %v6210
      %v6227 = vadd.f32 %v6188, %v6211
      %v6228 = vadd.f32 %v6189, %v6212
      %v6229 = vld [vmem:[#allocation3 + $0x9f] sm:$0xff]
      %v6230 = vld [vmem:[#allocation3 + $0xa7] sm:$0xff]
      %s6231 = scalar_lea.vmem %s5, 6
      %v6232 = vld [vmem:[%s6231] sm:$0x1]
      %v6234 = vperm.slane %v6232, 0
      %v6236 = vmul.f32 %v5958, %v6234
      %v6237 = vmul.f32 %v5959, %v6234
      %v6238 = vmul.f32 %v5960, %v6234
      %v6239 = vmul.f32 %v5961, %v6234
      %v6240 = vmul.f32 %v5962, %v6234
      %v6241 = vmul.f32 %v5963, %v6234
      %v6242 = vmul.f32 %v5964, %v6234
      %v6243 = vmul.f32 %v5965, %v6234
      %v6244 = vmul.f32 %v5966, %v6234
      %v6245 = vmul.f32 %v5967, %v6234
      %v6246 = vmul.f32 %v5968, %v6234
      %v6247 = vmul.f32 %v5969, %v6234
      %v6248 = vmul.f32 %v6112, %v6234
      %v6249 = vmul.f32 %v6113, %v6234
      %v6250 = vmul.f32 %v6229, %v6234
      %v6251 = vmul.f32 %v6230, %v6234
      %v6252 = vadd.f32 %v6213, %v6236
      %v6253 = vadd.f32 %v6214, %v6237
      %v6254 = vadd.f32 %v6215, %v6238
      %v6255 = vadd.f32 %v6216, %v6239
      %v6256 = vadd.f32 %v6217, %v6240
      %v6257 = vadd.f32 %v6218, %v6241
      %v6258 = vadd.f32 %v6219, %v6242
      %v6259 = vadd.f32 %v6220, %v6243
      %v6260 = vadd.f32 %v6221, %v6244
      %v6261 = vadd.f32 %v6222, %v6245
      %v6262 = vadd.f32 %v6223, %v6246
      %v6263 = vadd.f32 %v6224, %v6247
      %v6264 = vadd.f32 %v6225, %v6248
      %v6265 = vadd.f32 %v6226, %v6249
      %v6266 = vadd.f32 %v6227, %v6250
      %v6267 = vadd.f32 %v6228, %v6251
      %v6268 = vld [vmem:[#allocation3 + $0xa0] sm:$0xff]
      %v6269 = vld [vmem:[#allocation3 + $0xa8] sm:$0xff]
      %s6270 = scalar_lea.vmem %s5, 7
      %v6271 = vld [vmem:[%s6270] sm:$0x1]
      %v6273 = vperm.slane %v6271, 0
      %v6275 = vmul.f32 %v6010, %v6273
      %v6276 = vmul.f32 %v6011, %v6273
      %v6277 = vmul.f32 %v6012, %v6273
      %v6278 = vmul.f32 %v6013, %v6273
      %v6279 = vmul.f32 %v6014, %v6273
      %v6280 = vmul.f32 %v6015, %v6273
      %v6281 = vmul.f32 %v6016, %v6273
      %v6282 = vmul.f32 %v6017, %v6273
      %v6283 = vmul.f32 %v6018, %v6273
      %v6284 = vmul.f32 %v6019, %v6273
      %v6285 = vmul.f32 %v6020, %v6273
      %v6286 = vmul.f32 %v6021, %v6273
      %v6287 = vmul.f32 %v6151, %v6273
      %v6288 = vmul.f32 %v6152, %v6273
      %v6289 = vmul.f32 %v6268, %v6273
      %v6290 = vmul.f32 %v6269, %v6273
      %v6291 = vadd.f32 %v6252, %v6275
      %v6292 = vadd.f32 %v6253, %v6276
      %v6293 = vadd.f32 %v6254, %v6277
      %v6294 = vadd.f32 %v6255, %v6278
      %v6295 = vadd.f32 %v6256, %v6279
      %v6296 = vadd.f32 %v6257, %v6280
      %v6297 = vadd.f32 %v6258, %v6281
      %v6298 = vadd.f32 %v6259, %v6282
      %v6299 = vadd.f32 %v6260, %v6283
      %v6300 = vadd.f32 %v6261, %v6284
      %v6301 = vadd.f32 %v6262, %v6285
      %v6302 = vadd.f32 %v6263, %v6286
      %v6303 = vadd.f32 %v6264, %v6287
      %v6304 = vadd.f32 %v6265, %v6288
      %v6305 = vadd.f32 %v6266, %v6289
      %v6306 = vadd.f32 %v6267, %v6290
      %v6307 = vld [vmem:[#allocation3 + $0xa1] sm:$0xff]
      %v6308 = vld [vmem:[#allocation3 + $0xa9] sm:$0xff]
      %s6309 = scalar_lea.vmem %s5, 8
      %v6310 = vld [vmem:[%s6309] sm:$0x1]
      %v6312 = vperm.slane %v6310, 0
      %v6314 = vmul.f32 %v6063, %v6312
      %v6315 = vmul.f32 %v6064, %v6312
      %v6316 = vmul.f32 %v6065, %v6312
      %v6317 = vmul.f32 %v6066, %v6312
      %v6318 = vmul.f32 %v6067, %v6312
      %v6319 = vmul.f32 %v6068, %v6312
      %v6320 = vmul.f32 %v6069, %v6312
      %v6321 = vmul.f32 %v6070, %v6312
      %v6322 = vmul.f32 %v6071, %v6312
      %v6323 = vmul.f32 %v6072, %v6312
      %v6324 = vmul.f32 %v6073, %v6312
      %v6325 = vmul.f32 %v6074, %v6312
      %v6326 = vmul.f32 %v6190, %v6312
      %v6327 = vmul.f32 %v6191, %v6312
      %v6328 = vmul.f32 %v6307, %v6312
      %v6329 = vmul.f32 %v6308, %v6312
      %v6330 = vadd.f32 %v6291, %v6314
      %v6331 = vadd.f32 %v6292, %v6315
      %v6332 = vadd.f32 %v6293, %v6316
      %v6333 = vadd.f32 %v6294, %v6317
      %v6334 = vadd.f32 %v6295, %v6318
      %v6335 = vadd.f32 %v6296, %v6319
      %v6336 = vadd.f32 %v6297, %v6320
      %v6337 = vadd.f32 %v6298, %v6321
      %v6338 = vadd.f32 %v6299, %v6322
      %v6339 = vadd.f32 %v6300, %v6323
      %v6340 = vadd.f32 %v6301, %v6324
      %v6341 = vadd.f32 %v6302, %v6325
      %v6342 = vadd.f32 %v6303, %v6326
      %v6343 = vadd.f32 %v6304, %v6327
      %v6344 = vadd.f32 %v6305, %v6328
      %v6345 = vadd.f32 %v6306, %v6329
      %v6346 = vld [vmem:[%s6] sm:$0x1]
      %v6348 = vperm.slane %v6346, 0
      %v6350 = vadd.f32 %v6330, %v6348
      %v6351 = vadd.f32 %v6331, %v6348
      %v6352 = vadd.f32 %v6332, %v6348
      %v6353 = vadd.f32 %v6333, %v6348
      %v6354 = vadd.f32 %v6334, %v6348
      %v6355 = vadd.f32 %v6335, %v6348
      %v6356 = vadd.f32 %v6336, %v6348
      %v6357 = vadd.f32 %v6337, %v6348
      %v6358 = vadd.f32 %v6338, %v6348
      %v6359 = vadd.f32 %v6339, %v6348
      %v6360 = vadd.f32 %v6340, %v6348
      %v6361 = vadd.f32 %v6341, %v6348
      %v6362 = vadd.f32 %v6342, %v6348
      %v6363 = vadd.f32 %v6343, %v6348
      %v6364 = vadd.f32 %v6344, %v6348
      %v6365 = vadd.f32 %v6345, %v6348
      %v6366 = vmax.f32 %v6350, 0.0
      %v6367 = vmax.f32 %v6351, 0.0
      %v6368 = vmax.f32 %v6352, 0.0
      %v6369 = vmax.f32 %v6353, 0.0
      %v6370 = vmax.f32 %v6354, 0.0
      %v6371 = vmax.f32 %v6355, 0.0
      %v6372 = vmax.f32 %v6356, 0.0
      %v6373 = vmax.f32 %v6357, 0.0
      %v6374 = vmax.f32 %v6358, 0.0
      %v6375 = vmax.f32 %v6359, 0.0
      %v6376 = vmax.f32 %v6360, 0.0
      %v6377 = vmax.f32 %v6361, 0.0
      %v6378 = vmax.f32 %v6362, 0.0
      %v6379 = vmax.f32 %v6363, 0.0
      %v6380 = vmax.f32 %v6364, 0.0
      %v6381 = vmax.f32 %v6365, 0.0
      %v6382 = vld [vmem:[%s11] sm:$0xff]
      %v6383 = vld [vmem:[%s11 + $0x8] sm:$0xff]
      %v6384 = vld [vmem:[%s11 + $0x10] sm:$0xff]
      %v6385 = vld [vmem:[%s11 + $0x18] sm:$0xff]
      %v6386 = vld [vmem:[%s11 + $0x20] sm:$0xff]
      %v6387 = vld [vmem:[%s11 + $0x28] sm:$0xff]
      %v6388 = vld [vmem:[%s11 + $0x30] sm:$0xff]
      %v6389 = vld [vmem:[%s11 + $0x38] sm:$0xff]
      %v6390 = vld [vmem:[%s11 + $0x40] sm:$0xff]
      %v6391 = vld [vmem:[%s11 + $0x48] sm:$0xff]
      %v6392 = vld [vmem:[%s11 + $0x50] sm:$0xff]
      %v6393 = vld [vmem:[%s11 + $0x58] sm:$0xff]
      %v6394 = vld [vmem:[%s11 + $0x60] sm:$0xff]
      %v6395 = vld [vmem:[%s11 + $0x68] sm:$0xff]
      %v6396 = vld [vmem:[%s11 + $0x70] sm:$0xff]
      %v6397 = vld [vmem:[%s11 + $0x78] sm:$0xff]
      %6399 = vset.pattern.permute.xlu0 0
      %6400 = vperm.xlu0 %6399, %v6382
      %v6401 = vpop.permute.xlu0 %6400
      %6404 = vset.pattern.permute.xlu0 0
      %6405 = vperm.xlu0 %6404, %v6383
      %v6406 = vpop.permute.xlu0 %6405
      %6409 = vset.pattern.permute.xlu0 0
      %6410 = vperm.xlu0 %6409, %v6384
      %v6411 = vpop.permute.xlu0 %6410
      %6414 = vset.pattern.permute.xlu0 0
      %6415 = vperm.xlu0 %6414, %v6385
      %v6416 = vpop.permute.xlu0 %6415
      %6419 = vset.pattern.permute.xlu0 0
      %6420 = vperm.xlu0 %6419, %v6386
      %v6421 = vpop.permute.xlu0 %6420
      %6424 = vset.pattern.permute.xlu0 0
      %6425 = vperm.xlu0 %6424, %v6387
      %v6426 = vpop.permute.xlu0 %6425
      %6429 = vset.pattern.permute.xlu0 0
      %6430 = vperm.xlu0 %6429, %v6388
      %v6431 = vpop.permute.xlu0 %6430
      %6434 = vset.pattern.permute.xlu0 0
      %6435 = vperm.xlu0 %6434, %v6389
      %v6436 = vpop.permute.xlu0 %6435
      %6439 = vset.pattern.permute.xlu0 0
      %6440 = vperm.xlu0 %6439, %v6390
      %v6441 = vpop.permute.xlu0 %6440
      %6444 = vset.pattern.permute.xlu0 0
      %6445 = vperm.xlu0 %6444, %v6391
      %v6446 = vpop.permute.xlu0 %6445
      %6449 = vset.pattern.permute.xlu0 0
      %6450 = vperm.xlu0 %6449, %v6392
      %v6451 = vpop.permute.xlu0 %6450
      %6454 = vset.pattern.permute.xlu0 0
      %6455 = vperm.xlu0 %6454, %v6393
      %v6456 = vpop.permute.xlu0 %6455
      %6459 = vset.pattern.permute.xlu0 0
      %6460 = vperm.xlu0 %6459, %v6394
      %v6461 = vpop.permute.xlu0 %6460
      %6464 = vset.pattern.permute.xlu0 0
      %6465 = vperm.xlu0 %6464, %v6395
      %v6466 = vpop.permute.xlu0 %6465
      %6469 = vset.pattern.permute.xlu0 0
      %6470 = vperm.xlu0 %6469, %v6396
      %v6471 = vpop.permute.xlu0 %6470
      %6474 = vset.pattern.permute.xlu0 0
      %6475 = vperm.xlu0 %6474, %v6397
      %v6476 = vpop.permute.xlu0 %6475
      %v6478 = vmul.f32 %v6366, %v6401
      %v6479 = vmul.f32 %v6367, %v6406
      %v6480 = vmul.f32 %v6368, %v6411
      %v6481 = vmul.f32 %v6369, %v6416
      %v6482 = vmul.f32 %v6370, %v6421
      %v6483 = vmul.f32 %v6371, %v6426
      %v6484 = vmul.f32 %v6372, %v6431
      %v6485 = vmul.f32 %v6373, %v6436
      %v6486 = vmul.f32 %v6374, %v6441
      %v6487 = vmul.f32 %v6375, %v6446
      %v6488 = vmul.f32 %v6376, %v6451
      %v6489 = vmul.f32 %v6377, %v6456
      %v6490 = vmul.f32 %v6378, %v6461
      %v6491 = vmul.f32 %v6379, %v6466
      %v6492 = vmul.f32 %v6380, %v6471
      %v6493 = vmul.f32 %v6381, %v6476
      %v6494 = vld [vmem:[%s462 + $0x7] sm:$0xff]
      %v6495 = vld [vmem:[%s462 + $0xf] sm:$0xff]
      %v6496 = vld [vmem:[%s462 + $0x17] sm:$0xff]
      %v6497 = vld [vmem:[%s462 + $0x1f] sm:$0xff]
      %v6498 = vld [vmem:[%s462 + $0x27] sm:$0xff]
      %v6499 = vld [vmem:[%s462 + $0x2f] sm:$0xff]
      %v6500 = vld [vmem:[%s462 + $0x37] sm:$0xff]
      %v6501 = vld [vmem:[%s462 + $0x3f] sm:$0xff]
      %v6502 = vld [vmem:[%s462 + $0x47] sm:$0xff]
      %v6503 = vld [vmem:[%s462 + $0x4f] sm:$0xff]
      %v6504 = vld [vmem:[%s462 + $0x57] sm:$0xff]
      %v6505 = vld [vmem:[%s462 + $0x5f] sm:$0xff]
      %v6506 = vld [vmem:[%s462 + $0x67] sm:$0xff]
      %v6507 = vld [vmem:[%s462 + $0x6f] sm:$0xff]
      %v6508 = vld [vmem:[%s462 + $0x77] sm:$0xff]
      %v6509 = vld [vmem:[%s462 + $0x7f] sm:$0xff]
      %v6510 = vld [vmem:[%s462 + $0x87] sm:$0xff]
      %v6511 = vld [vmem:[%s462 + $0x8f] sm:$0xff]
      %v6512 = vld [vmem:[%s462 + $0x97] sm:$0xff]
      %v6513 = vld [vmem:[%s462 + $0x9f] sm:$0xff]
      %v6514 = vld [vmem:[%s462 + $0xa7] sm:$0xff]
      %v6515 = vld [vmem:[%s462 + $0xaf] sm:$0xff]
      %v6516 = vld [vmem:[%s462 + $0xb7] sm:$0xff]
      %v6517 = vld [vmem:[%s462 + $0xbf] sm:$0xff]
      %v6518 = vld [vmem:[%s462 + $0xc7] sm:$0xff]
      %v6519 = vld [vmem:[%s462 + $0xcf] sm:$0xff]
      %v6520 = vld [vmem:[%s462 + $0xd7] sm:$0xff]
      %v6521 = vld [vmem:[%s462 + $0xdf] sm:$0xff]
      %v6522 = vld [vmem:[%s462 + $0xe7] sm:$0xff]
      %v6523 = vld [vmem:[%s462 + $0xef] sm:$0xff]
      %v6524 = vld [vmem:[%s462 + $0xf7] sm:$0xff]
      %v6525 = vld [vmem:[%s462 + $0xff] sm:$0xff]
      %v6526 = vld [vmem:[%s462 + $0x107] sm:$0xff]
      %v6527 = vld [vmem:[%s462 + $0x10f] sm:$0xff]
      %v6528 = vld [vmem:[%s462 + $0x117] sm:$0xff]
      %v6529 = vld [vmem:[%s462 + $0x11f] sm:$0xff]
      %v6530 = vld [vmem:[%s462 + $0x127] sm:$0xff]
      %v6531 = vld [vmem:[%s462 + $0x12f] sm:$0xff]
      %v6532 = vld [vmem:[%s462 + $0x137] sm:$0xff]
      %v6533 = vld [vmem:[%s462 + $0x13f] sm:$0xff]
      %v6534 = vld [vmem:[%s462 + $0x147] sm:$0xff]
      %v6535 = vld [vmem:[%s462 + $0x14f] sm:$0xff]
      %v6536 = vld [vmem:[%s462 + $0x157] sm:$0xff]
      %v6537 = vld [vmem:[%s462 + $0x15f] sm:$0xff]
      %v6538 = vld [vmem:[%s462 + $0x167] sm:$0xff]
      %v6539 = vld [vmem:[%s462 + $0x16f] sm:$0xff]
      %v6540 = vld [vmem:[%s462 + $0x177] sm:$0xff]
      %v6541 = vld [vmem:[%s462 + $0x17f] sm:$0xff]
      %v6542 = vld [vmem:[%s7] sm:$0x1]
      %v6544 = vperm.slane %v6542, 0
      %v6546 = vmul.f32 %v6494, %v6544
      %v6547 = vmul.f32 %v6495, %v6544
      %v6548 = vmul.f32 %v6496, %v6544
      %v6549 = vmul.f32 %v6497, %v6544
      %v6550 = vmul.f32 %v6498, %v6544
      %v6551 = vmul.f32 %v6499, %v6544
      %v6552 = vmul.f32 %v6500, %v6544
      %v6553 = vmul.f32 %v6501, %v6544
      %v6554 = vmul.f32 %v6502, %v6544
      %v6555 = vmul.f32 %v6503, %v6544
      %v6556 = vmul.f32 %v6504, %v6544
      %v6557 = vmul.f32 %v6505, %v6544
      %v6558 = vmul.f32 %v6506, %v6544
      %v6559 = vmul.f32 %v6507, %v6544
      %v6560 = vmul.f32 %v6508, %v6544
      %v6561 = vmul.f32 %v6509, %v6544
      %v6562 = vmul.f32 %v6510, %v6544
      %v6563 = vmul.f32 %v6511, %v6544
      %v6564 = vmul.f32 %v6512, %v6544
      %v6565 = vmul.f32 %v6513, %v6544
      %v6566 = vmul.f32 %v6514, %v6544
      %v6567 = vmul.f32 %v6515, %v6544
      %v6568 = vmul.f32 %v6516, %v6544
      %v6569 = vmul.f32 %v6517, %v6544
      %v6570 = vmul.f32 %v6518, %v6544
      %v6571 = vmul.f32 %v6519, %v6544
      %v6572 = vmul.f32 %v6520, %v6544
      %v6573 = vmul.f32 %v6521, %v6544
      %v6574 = vmul.f32 %v6522, %v6544
      %v6575 = vmul.f32 %v6523, %v6544
      %v6576 = vmul.f32 %v6524, %v6544
      %v6577 = vmul.f32 %v6525, %v6544
      %v6578 = vmul.f32 %v6526, %v6544
      %v6579 = vmul.f32 %v6527, %v6544
      %v6580 = vmul.f32 %v6528, %v6544
      %v6581 = vmul.f32 %v6529, %v6544
      %v6582 = vmul.f32 %v6530, %v6544
      %v6583 = vmul.f32 %v6531, %v6544
      %v6584 = vmul.f32 %v6532, %v6544
      %v6585 = vmul.f32 %v6533, %v6544
      %v6586 = vmul.f32 %v6534, %v6544
      %v6587 = vmul.f32 %v6535, %v6544
      %v6588 = vmul.f32 %v6536, %v6544
      %v6589 = vmul.f32 %v6537, %v6544
      %v6590 = vmul.f32 %v6538, %v6544
      %v6591 = vmul.f32 %v6539, %v6544
      %v6592 = vmul.f32 %v6540, %v6544
      %v6593 = vmul.f32 %v6541, %v6544
      %v6594 = vadd.f32 %v6546, 0.0
      %v6595 = vadd.f32 %v6547, 0.0
      %v6596 = vadd.f32 %v6548, 0.0
      %v6597 = vadd.f32 %v6549, 0.0
      %v6598 = vadd.f32 %v6550, 0.0
      %v6599 = vadd.f32 %v6551, 0.0
      %v6600 = vadd.f32 %v6552, 0.0
      %v6601 = vadd.f32 %v6553, 0.0
      %v6602 = vadd.f32 %v6554, 0.0
      %v6603 = vadd.f32 %v6555, 0.0
      %v6604 = vadd.f32 %v6556, 0.0
      %v6605 = vadd.f32 %v6557, 0.0
      %v6606 = vadd.f32 %v6558, 0.0
      %v6607 = vadd.f32 %v6559, 0.0
      %v6608 = vadd.f32 %v6560, 0.0
      %v6609 = vadd.f32 %v6561, 0.0
      %v6610 = vadd.f32 %v6562, 0.0
      %v6611 = vadd.f32 %v6563, 0.0
      %v6612 = vadd.f32 %v6564, 0.0
      %v6613 = vadd.f32 %v6565, 0.0
      %v6614 = vadd.f32 %v6566, 0.0
      %v6615 = vadd.f32 %v6567, 0.0
      %v6616 = vadd.f32 %v6568, 0.0
      %v6617 = vadd.f32 %v6569, 0.0
      %v6618 = vadd.f32 %v6570, 0.0
      %v6619 = vadd.f32 %v6571, 0.0
      %v6620 = vadd.f32 %v6572, 0.0
      %v6621 = vadd.f32 %v6573, 0.0
      %v6622 = vadd.f32 %v6574, 0.0
      %v6623 = vadd.f32 %v6575, 0.0
      %v6624 = vadd.f32 %v6576, 0.0
      %v6625 = vadd.f32 %v6577, 0.0
      %v6626 = vadd.f32 %v6578, 0.0
      %v6627 = vadd.f32 %v6579, 0.0
      %v6628 = vadd.f32 %v6580, 0.0
      %v6629 = vadd.f32 %v6581, 0.0
      %v6630 = vadd.f32 %v6582, 0.0
      %v6631 = vadd.f32 %v6583, 0.0
      %v6632 = vadd.f32 %v6584, 0.0
      %v6633 = vadd.f32 %v6585, 0.0
      %v6634 = vadd.f32 %v6586, 0.0
      %v6635 = vadd.f32 %v6587, 0.0
      %v6636 = vadd.f32 %v6588, 0.0
      %v6637 = vadd.f32 %v6589, 0.0
      %v6638 = vadd.f32 %v6590, 0.0
      %v6639 = vadd.f32 %v6591, 0.0
      %v6640 = vadd.f32 %v6592, 0.0
      %v6641 = vadd.f32 %v6593, 0.0
      %v6642 = vld [vmem:[%s462 + $0x8] sm:$0xff]
      %v6643 = vld [vmem:[%s462 + $0x10] sm:$0xff]
      %v6644 = vld [vmem:[%s462 + $0x18] sm:$0xff]
      %v6645 = vld [vmem:[%s462 + $0x20] sm:$0xff]
      %v6646 = vld [vmem:[%s462 + $0x28] sm:$0xff]
      %v6647 = vld [vmem:[%s462 + $0x30] sm:$0xff]
      %v6648 = vld [vmem:[%s462 + $0x38] sm:$0xff]
      %v6649 = vld [vmem:[%s462 + $0x40] sm:$0xff]
      %v6650 = vld [vmem:[%s462 + $0x48] sm:$0xff]
      %v6651 = vld [vmem:[%s462 + $0x50] sm:$0xff]
      %v6652 = vld [vmem:[%s462 + $0x58] sm:$0xff]
      %v6653 = vld [vmem:[%s462 + $0x60] sm:$0xff]
      %v6654 = vld [vmem:[%s462 + $0x68] sm:$0xff]
      %v6655 = vld [vmem:[%s462 + $0x70] sm:$0xff]
      %v6656 = vld [vmem:[%s462 + $0x78] sm:$0xff]
      %v6657 = vld [vmem:[%s462 + $0x80] sm:$0xff]
      %v6658 = vld [vmem:[%s462 + $0x88] sm:$0xff]
      %v6659 = vld [vmem:[%s462 + $0x90] sm:$0xff]
      %v6660 = vld [vmem:[%s462 + $0x98] sm:$0xff]
      %v6661 = vld [vmem:[%s462 + $0xa0] sm:$0xff]
      %v6662 = vld [vmem:[%s462 + $0xa8] sm:$0xff]
      %v6663 = vld [vmem:[%s462 + $0xb0] sm:$0xff]
      %v6664 = vld [vmem:[%s462 + $0xb8] sm:$0xff]
      %v6665 = vld [vmem:[%s462 + $0xc0] sm:$0xff]
      %v6666 = vld [vmem:[%s462 + $0xc8] sm:$0xff]
      %v6667 = vld [vmem:[%s462 + $0xd0] sm:$0xff]
      %v6668 = vld [vmem:[%s462 + $0xd8] sm:$0xff]
      %v6669 = vld [vmem:[%s462 + $0xe0] sm:$0xff]
      %v6670 = vld [vmem:[%s462 + $0xe8] sm:$0xff]
      %v6671 = vld [vmem:[%s462 + $0xf0] sm:$0xff]
      %v6672 = vld [vmem:[%s462 + $0xf8] sm:$0xff]
      %v6673 = vld [vmem:[%s462 + $0x100] sm:$0xff]
      %v6674 = vld [vmem:[%s462 + $0x108] sm:$0xff]
      %v6675 = vld [vmem:[%s462 + $0x110] sm:$0xff]
      %v6676 = vld [vmem:[%s462 + $0x118] sm:$0xff]
      %v6677 = vld [vmem:[%s462 + $0x120] sm:$0xff]
      %v6678 = vld [vmem:[%s462 + $0x128] sm:$0xff]
      %v6679 = vld [vmem:[%s462 + $0x130] sm:$0xff]
      %v6680 = vld [vmem:[%s462 + $0x138] sm:$0xff]
      %v6681 = vld [vmem:[%s462 + $0x140] sm:$0xff]
      %v6682 = vld [vmem:[%s462 + $0x148] sm:$0xff]
      %v6683 = vld [vmem:[%s462 + $0x150] sm:$0xff]
      %v6684 = vld [vmem:[%s462 + $0x158] sm:$0xff]
      %v6685 = vld [vmem:[%s462 + $0x160] sm:$0xff]
      %v6686 = vld [vmem:[%s462 + $0x168] sm:$0xff]
      %v6687 = vld [vmem:[%s462 + $0x170] sm:$0xff]
      %v6688 = vld [vmem:[%s462 + $0x178] sm:$0xff]
      %v6689 = vld [vmem:[%s462 + $0x180] sm:$0xff]
      %s6690 = scalar_lea.vmem %s7, 1
      %v6691 = vld [vmem:[%s6690] sm:$0x1]
      %v6693 = vperm.slane %v6691, 0
      %v6695 = vmul.f32 %v6642, %v6693
      %v6696 = vmul.f32 %v6643, %v6693
      %v6697 = vmul.f32 %v6644, %v6693
      %v6698 = vmul.f32 %v6645, %v6693
      %v6699 = vmul.f32 %v6646, %v6693
      %v6700 = vmul.f32 %v6647, %v6693
      %v6701 = vmul.f32 %v6648, %v6693
      %v6702 = vmul.f32 %v6649, %v6693
      %v6703 = vmul.f32 %v6650, %v6693
      %v6704 = vmul.f32 %v6651, %v6693
      %v6705 = vmul.f32 %v6652, %v6693
      %v6706 = vmul.f32 %v6653, %v6693
      %v6707 = vmul.f32 %v6654, %v6693
      %v6708 = vmul.f32 %v6655, %v6693
      %v6709 = vmul.f32 %v6656, %v6693
      %v6710 = vmul.f32 %v6657, %v6693
      %v6711 = vmul.f32 %v6658, %v6693
      %v6712 = vmul.f32 %v6659, %v6693
      %v6713 = vmul.f32 %v6660, %v6693
      %v6714 = vmul.f32 %v6661, %v6693
      %v6715 = vmul.f32 %v6662, %v6693
      %v6716 = vmul.f32 %v6663, %v6693
      %v6717 = vmul.f32 %v6664, %v6693
      %v6718 = vmul.f32 %v6665, %v6693
      %v6719 = vmul.f32 %v6666, %v6693
      %v6720 = vmul.f32 %v6667, %v6693
      %v6721 = vmul.f32 %v6668, %v6693
      %v6722 = vmul.f32 %v6669, %v6693
      %v6723 = vmul.f32 %v6670, %v6693
      %v6724 = vmul.f32 %v6671, %v6693
      %v6725 = vmul.f32 %v6672, %v6693
      %v6726 = vmul.f32 %v6673, %v6693
      %v6727 = vmul.f32 %v6674, %v6693
      %v6728 = vmul.f32 %v6675, %v6693
      %v6729 = vmul.f32 %v6676, %v6693
      %v6730 = vmul.f32 %v6677, %v6693
      %v6731 = vmul.f32 %v6678, %v6693
      %v6732 = vmul.f32 %v6679, %v6693
      %v6733 = vmul.f32 %v6680, %v6693
      %v6734 = vmul.f32 %v6681, %v6693
      %v6735 = vmul.f32 %v6682, %v6693
      %v6736 = vmul.f32 %v6683, %v6693
      %v6737 = vmul.f32 %v6684, %v6693
      %v6738 = vmul.f32 %v6685, %v6693
      %v6739 = vmul.f32 %v6686, %v6693
      %v6740 = vmul.f32 %v6687, %v6693
      %v6741 = vmul.f32 %v6688, %v6693
      %v6742 = vmul.f32 %v6689, %v6693
      %v6743 = vadd.f32 %v6594, %v6695
      %v6744 = vadd.f32 %v6595, %v6696
      %v6745 = vadd.f32 %v6596, %v6697
      %v6746 = vadd.f32 %v6597, %v6698
      %v6747 = vadd.f32 %v6598, %v6699
      %v6748 = vadd.f32 %v6599, %v6700
      %v6749 = vadd.f32 %v6600, %v6701
      %v6750 = vadd.f32 %v6601, %v6702
      %v6751 = vadd.f32 %v6602, %v6703
      %v6752 = vadd.f32 %v6603, %v6704
      %v6753 = vadd.f32 %v6604, %v6705
      %v6754 = vadd.f32 %v6605, %v6706
      %v6755 = vadd.f32 %v6606, %v6707
      %v6756 = vadd.f32 %v6607, %v6708
      %v6757 = vadd.f32 %v6608, %v6709
      %v6758 = vadd.f32 %v6609, %v6710
      %v6759 = vadd.f32 %v6610, %v6711
      %v6760 = vadd.f32 %v6611, %v6712
      %v6761 = vadd.f32 %v6612, %v6713
      %v6762 = vadd.f32 %v6613, %v6714
      %v6763 = vadd.f32 %v6614, %v6715
      %v6764 = vadd.f32 %v6615, %v6716
      %v6765 = vadd.f32 %v6616, %v6717
      %v6766 = vadd.f32 %v6617, %v6718
      %v6767 = vadd.f32 %v6618, %v6719
      %v6768 = vadd.f32 %v6619, %v6720
      %v6769 = vadd.f32 %v6620, %v6721
      %v6770 = vadd.f32 %v6621, %v6722
      %v6771 = vadd.f32 %v6622, %v6723
      %v6772 = vadd.f32 %v6623, %v6724
      %v6773 = vadd.f32 %v6624, %v6725
      %v6774 = vadd.f32 %v6625, %v6726
      %v6775 = vadd.f32 %v6626, %v6727
      %v6776 = vadd.f32 %v6627, %v6728
      %v6777 = vadd.f32 %v6628, %v6729
      %v6778 = vadd.f32 %v6629, %v6730
      %v6779 = vadd.f32 %v6630, %v6731
      %v6780 = vadd.f32 %v6631, %v6732
      %v6781 = vadd.f32 %v6632, %v6733
      %v6782 = vadd.f32 %v6633, %v6734
      %v6783 = vadd.f32 %v6634, %v6735
      %v6784 = vadd.f32 %v6635, %v6736
      %v6785 = vadd.f32 %v6636, %v6737
      %v6786 = vadd.f32 %v6637, %v6738
      %v6787 = vadd.f32 %v6638, %v6739
      %v6788 = vadd.f32 %v6639, %v6740
      %v6789 = vadd.f32 %v6640, %v6741
      %v6790 = vadd.f32 %v6641, %v6742
      %v6791 = vld [vmem:[%s462 + $0x9] sm:$0xff]
      %v6792 = vld [vmem:[%s462 + $0x11] sm:$0xff]
      %v6793 = vld [vmem:[%s462 + $0x19] sm:$0xff]
      %v6794 = vld [vmem:[%s462 + $0x21] sm:$0xff]
      %v6795 = vld [vmem:[%s462 + $0x29] sm:$0xff]
      %v6796 = vld [vmem:[%s462 + $0x31] sm:$0xff]
      %v6797 = vld [vmem:[%s462 + $0x39] sm:$0xff]
      %v6798 = vld [vmem:[%s462 + $0x41] sm:$0xff]
      %v6799 = vld [vmem:[%s462 + $0x49] sm:$0xff]
      %v6800 = vld [vmem:[%s462 + $0x51] sm:$0xff]
      %v6801 = vld [vmem:[%s462 + $0x59] sm:$0xff]
      %v6802 = vld [vmem:[%s462 + $0x61] sm:$0xff]
      %v6803 = vld [vmem:[%s462 + $0x69] sm:$0xff]
      %v6804 = vld [vmem:[%s462 + $0x71] sm:$0xff]
      %v6805 = vld [vmem:[%s462 + $0x79] sm:$0xff]
      %v6806 = vld [vmem:[%s462 + $0x81] sm:$0xff]
      %v6807 = vld [vmem:[%s462 + $0x89] sm:$0xff]
      %v6808 = vld [vmem:[%s462 + $0x91] sm:$0xff]
      %v6809 = vld [vmem:[%s462 + $0x99] sm:$0xff]
      %v6810 = vld [vmem:[%s462 + $0xa1] sm:$0xff]
      %v6811 = vld [vmem:[%s462 + $0xa9] sm:$0xff]
      %v6812 = vld [vmem:[%s462 + $0xb1] sm:$0xff]
      %v6813 = vld [vmem:[%s462 + $0xb9] sm:$0xff]
      %v6814 = vld [vmem:[%s462 + $0xc1] sm:$0xff]
      %v6815 = vld [vmem:[%s462 + $0xc9] sm:$0xff]
      %v6816 = vld [vmem:[%s462 + $0xd1] sm:$0xff]
      %v6817 = vld [vmem:[%s462 + $0xd9] sm:$0xff]
      %v6818 = vld [vmem:[%s462 + $0xe1] sm:$0xff]
      %v6819 = vld [vmem:[%s462 + $0xe9] sm:$0xff]
      %v6820 = vld [vmem:[%s462 + $0xf1] sm:$0xff]
      %v6821 = vld [vmem:[%s462 + $0xf9] sm:$0xff]
      %v6822 = vld [vmem:[%s462 + $0x101] sm:$0xff]
      %v6823 = vld [vmem:[%s462 + $0x109] sm:$0xff]
      %v6824 = vld [vmem:[%s462 + $0x111] sm:$0xff]
      %v6825 = vld [vmem:[%s462 + $0x119] sm:$0xff]
      %v6826 = vld [vmem:[%s462 + $0x121] sm:$0xff]
      %v6827 = vld [vmem:[%s462 + $0x129] sm:$0xff]
      %v6828 = vld [vmem:[%s462 + $0x131] sm:$0xff]
      %v6829 = vld [vmem:[%s462 + $0x139] sm:$0xff]
      %v6830 = vld [vmem:[%s462 + $0x141] sm:$0xff]
      %v6831 = vld [vmem:[%s462 + $0x149] sm:$0xff]
      %v6832 = vld [vmem:[%s462 + $0x151] sm:$0xff]
      %v6833 = vld [vmem:[%s462 + $0x159] sm:$0xff]
      %v6834 = vld [vmem:[%s462 + $0x161] sm:$0xff]
      %v6835 = vld [vmem:[%s462 + $0x169] sm:$0xff]
      %v6836 = vld [vmem:[%s462 + $0x171] sm:$0xff]
      %v6837 = vld [vmem:[%s462 + $0x179] sm:$0xff]
      %v6838 = vld [vmem:[%s462 + $0x181] sm:$0xff]
      %s6839 = scalar_lea.vmem %s7, 2
      %v6840 = vld [vmem:[%s6839] sm:$0x1]
      %v6842 = vperm.slane %v6840, 0
      %v6844 = vmul.f32 %v6791, %v6842
      %v6845 = vmul.f32 %v6792, %v6842
      %v6846 = vmul.f32 %v6793, %v6842
      %v6847 = vmul.f32 %v6794, %v6842
      %v6848 = vmul.f32 %v6795, %v6842
      %v6849 = vmul.f32 %v6796, %v6842
      %v6850 = vmul.f32 %v6797, %v6842
      %v6851 = vmul.f32 %v6798, %v6842
      %v6852 = vmul.f32 %v6799, %v6842
      %v6853 = vmul.f32 %v6800, %v6842
      %v6854 = vmul.f32 %v6801, %v6842
      %v6855 = vmul.f32 %v6802, %v6842
      %v6856 = vmul.f32 %v6803, %v6842
      %v6857 = vmul.f32 %v6804, %v6842
      %v6858 = vmul.f32 %v6805, %v6842
      %v6859 = vmul.f32 %v6806, %v6842
      %v6860 = vmul.f32 %v6807, %v6842
      %v6861 = vmul.f32 %v6808, %v6842
      %v6862 = vmul.f32 %v6809, %v6842
      %v6863 = vmul.f32 %v6810, %v6842
      %v6864 = vmul.f32 %v6811, %v6842
      %v6865 = vmul.f32 %v6812, %v6842
      %v6866 = vmul.f32 %v6813, %v6842
      %v6867 = vmul.f32 %v6814, %v6842
      %v6868 = vmul.f32 %v6815, %v6842
      %v6869 = vmul.f32 %v6816, %v6842
      %v6870 = vmul.f32 %v6817, %v6842
      %v6871 = vmul.f32 %v6818, %v6842
      %v6872 = vmul.f32 %v6819, %v6842
      %v6873 = vmul.f32 %v6820, %v6842
      %v6874 = vmul.f32 %v6821, %v6842
      %v6875 = vmul.f32 %v6822, %v6842
      %v6876 = vmul.f32 %v6823, %v6842
      %v6877 = vmul.f32 %v6824, %v6842
      %v6878 = vmul.f32 %v6825, %v6842
      %v6879 = vmul.f32 %v6826, %v6842
      %v6880 = vmul.f32 %v6827, %v6842
      %v6881 = vmul.f32 %v6828, %v6842
      %v6882 = vmul.f32 %v6829, %v6842
      %v6883 = vmul.f32 %v6830, %v6842
      %v6884 = vmul.f32 %v6831, %v6842
      %v6885 = vmul.f32 %v6832, %v6842
      %v6886 = vmul.f32 %v6833, %v6842
      %v6887 = vmul.f32 %v6834, %v6842
      %v6888 = vmul.f32 %v6835, %v6842
      %v6889 = vmul.f32 %v6836, %v6842
      %v6890 = vmul.f32 %v6837, %v6842
      %v6891 = vmul.f32 %v6838, %v6842
      %v6892 = vadd.f32 %v6743, %v6844
      %v6893 = vadd.f32 %v6744, %v6845
      %v6894 = vadd.f32 %v6745, %v6846
      %v6895 = vadd.f32 %v6746, %v6847
      %v6896 = vadd.f32 %v6747, %v6848
      %v6897 = vadd.f32 %v6748, %v6849
      %v6898 = vadd.f32 %v6749, %v6850
      %v6899 = vadd.f32 %v6750, %v6851
      %v6900 = vadd.f32 %v6751, %v6852
      %v6901 = vadd.f32 %v6752, %v6853
      %v6902 = vadd.f32 %v6753, %v6854
      %v6903 = vadd.f32 %v6754, %v6855
      %v6904 = vadd.f32 %v6755, %v6856
      %v6905 = vadd.f32 %v6756, %v6857
      %v6906 = vadd.f32 %v6757, %v6858
      %v6907 = vadd.f32 %v6758, %v6859
      %v6908 = vadd.f32 %v6759, %v6860
      %v6909 = vadd.f32 %v6760, %v6861
      %v6910 = vadd.f32 %v6761, %v6862
      %v6911 = vadd.f32 %v6762, %v6863
      %v6912 = vadd.f32 %v6763, %v6864
      %v6913 = vadd.f32 %v6764, %v6865
      %v6914 = vadd.f32 %v6765, %v6866
      %v6915 = vadd.f32 %v6766, %v6867
      %v6916 = vadd.f32 %v6767, %v6868
      %v6917 = vadd.f32 %v6768, %v6869
      %v6918 = vadd.f32 %v6769, %v6870
      %v6919 = vadd.f32 %v6770, %v6871
      %v6920 = vadd.f32 %v6771, %v6872
      %v6921 = vadd.f32 %v6772, %v6873
      %v6922 = vadd.f32 %v6773, %v6874
      %v6923 = vadd.f32 %v6774, %v6875
      %v6924 = vadd.f32 %v6775, %v6876
      %v6925 = vadd.f32 %v6776, %v6877
      %v6926 = vadd.f32 %v6777, %v6878
      %v6927 = vadd.f32 %v6778, %v6879
      %v6928 = vadd.f32 %v6779, %v6880
      %v6929 = vadd.f32 %v6780, %v6881
      %v6930 = vadd.f32 %v6781, %v6882
      %v6931 = vadd.f32 %v6782, %v6883
      %v6932 = vadd.f32 %v6783, %v6884
      %v6933 = vadd.f32 %v6784, %v6885
      %v6934 = vadd.f32 %v6785, %v6886
      %v6935 = vadd.f32 %v6786, %v6887
      %v6936 = vadd.f32 %v6787, %v6888
      %v6937 = vadd.f32 %v6788, %v6889
      %v6938 = vadd.f32 %v6789, %v6890
      %v6939 = vadd.f32 %v6790, %v6891
      %v6940 = vld [vmem:[%s462 + $0x187] sm:$0xff]
      %v6941 = vld [vmem:[%s462 + $0x18f] sm:$0xff]
      %v6942 = vld [vmem:[%s462 + $0x197] sm:$0xff]
      %s6943 = scalar_lea.vmem %s7, 3
      %v6944 = vld [vmem:[%s6943] sm:$0x1]
      %v6946 = vperm.slane %v6944, 0
      %v6948 = vmul.f32 %v6497, %v6946
      %v6949 = vmul.f32 %v6498, %v6946
      %v6950 = vmul.f32 %v6499, %v6946
      %v6951 = vmul.f32 %v6500, %v6946
      %v6952 = vmul.f32 %v6501, %v6946
      %v6953 = vmul.f32 %v6502, %v6946
      %v6954 = vmul.f32 %v6503, %v6946
      %v6955 = vmul.f32 %v6504, %v6946
      %v6956 = vmul.f32 %v6505, %v6946
      %v6957 = vmul.f32 %v6506, %v6946
      %v6958 = vmul.f32 %v6507, %v6946
      %v6959 = vmul.f32 %v6508, %v6946
      %v6960 = vmul.f32 %v6509, %v6946
      %v6961 = vmul.f32 %v6510, %v6946
      %v6962 = vmul.f32 %v6511, %v6946
      %v6963 = vmul.f32 %v6512, %v6946
      %v6964 = vmul.f32 %v6513, %v6946
      %v6965 = vmul.f32 %v6514, %v6946
      %v6966 = vmul.f32 %v6515, %v6946
      %v6967 = vmul.f32 %v6516, %v6946
      %v6968 = vmul.f32 %v6517, %v6946
      %v6969 = vmul.f32 %v6518, %v6946
      %v6970 = vmul.f32 %v6519, %v6946
      %v6971 = vmul.f32 %v6520, %v6946
      %v6972 = vmul.f32 %v6521, %v6946
      %v6973 = vmul.f32 %v6522, %v6946
      %v6974 = vmul.f32 %v6523, %v6946
      %v6975 = vmul.f32 %v6524, %v6946
      %v6976 = vmul.f32 %v6525, %v6946
      %v6977 = vmul.f32 %v6526, %v6946
      %v6978 = vmul.f32 %v6527, %v6946
      %v6979 = vmul.f32 %v6528, %v6946
      %v6980 = vmul.f32 %v6529, %v6946
      %v6981 = vmul.f32 %v6530, %v6946
      %v6982 = vmul.f32 %v6531, %v6946
      %v6983 = vmul.f32 %v6532, %v6946
      %v6984 = vmul.f32 %v6533, %v6946
      %v6985 = vmul.f32 %v6534, %v6946
      %v6986 = vmul.f32 %v6535, %v6946
      %v6987 = vmul.f32 %v6536, %v6946
      %v6988 = vmul.f32 %v6537, %v6946
      %v6989 = vmul.f32 %v6538, %v6946
      %v6990 = vmul.f32 %v6539, %v6946
      %v6991 = vmul.f32 %v6540, %v6946
      %v6992 = vmul.f32 %v6541, %v6946
      %v6993 = vmul.f32 %v6940, %v6946
      %v6994 = vmul.f32 %v6941, %v6946
      %v6995 = vmul.f32 %v6942, %v6946
      %v6996 = vadd.f32 %v6892, %v6948
      %v6997 = vadd.f32 %v6893, %v6949
      %v6998 = vadd.f32 %v6894, %v6950
      %v6999 = vadd.f32 %v6895, %v6951
      %v7000 = vadd.f32 %v6896, %v6952
      %v7001 = vadd.f32 %v6897, %v6953
      %v7002 = vadd.f32 %v6898, %v6954
      %v7003 = vadd.f32 %v6899, %v6955
      %v7004 = vadd.f32 %v6900, %v6956
      %v7005 = vadd.f32 %v6901, %v6957
      %v7006 = vadd.f32 %v6902, %v6958
      %v7007 = vadd.f32 %v6903, %v6959
      %v7008 = vadd.f32 %v6904, %v6960
      %v7009 = vadd.f32 %v6905, %v6961
      %v7010 = vadd.f32 %v6906, %v6962
      %v7011 = vadd.f32 %v6907, %v6963
      %v7012 = vadd.f32 %v6908, %v6964
      %v7013 = vadd.f32 %v6909, %v6965
      %v7014 = vadd.f32 %v6910, %v6966
      %v7015 = vadd.f32 %v6911, %v6967
      %v7016 = vadd.f32 %v6912, %v6968
      %v7017 = vadd.f32 %v6913, %v6969
      %v7018 = vadd.f32 %v6914, %v6970
      %v7019 = vadd.f32 %v6915, %v6971
      %v7020 = vadd.f32 %v6916, %v6972
      %v7021 = vadd.f32 %v6917, %v6973
      %v7022 = vadd.f32 %v6918, %v6974
      %v7023 = vadd.f32 %v6919, %v6975
      %v7024 = vadd.f32 %v6920, %v6976
      %v7025 = vadd.f32 %v6921, %v6977
      %v7026 = vadd.f32 %v6922, %v6978
      %v7027 = vadd.f32 %v6923, %v6979
      %v7028 = vadd.f32 %v6924, %v6980
      %v7029 = vadd.f32 %v6925, %v6981
      %v7030 = vadd.f32 %v6926, %v6982
      %v7031 = vadd.f32 %v6927, %v6983
      %v7032 = vadd.f32 %v6928, %v6984
      %v7033 = vadd.f32 %v6929, %v6985
      %v7034 = vadd.f32 %v6930, %v6986
      %v7035 = vadd.f32 %v6931, %v6987
      %v7036 = vadd.f32 %v6932, %v6988
      %v7037 = vadd.f32 %v6933, %v6989
      %v7038 = vadd.f32 %v6934, %v6990
      %v7039 = vadd.f32 %v6935, %v6991
      %v7040 = vadd.f32 %v6936, %v6992
      %v7041 = vadd.f32 %v6937, %v6993
      %v7042 = vadd.f32 %v6938, %v6994
      %v7043 = vadd.f32 %v6939, %v6995
      %v7044 = vld [vmem:[%s462 + $0x188] sm:$0xff]
      %v7045 = vld [vmem:[%s462 + $0x190] sm:$0xff]
      %v7046 = vld [vmem:[%s462 + $0x198] sm:$0xff]
      %s7047 = scalar_lea.vmem %s7, 4
      %v7048 = vld [vmem:[%s7047] sm:$0x1]
      %v7050 = vperm.slane %v7048, 0
      %v7052 = vmul.f32 %v6645, %v7050
      %v7053 = vmul.f32 %v6646, %v7050
      %v7054 = vmul.f32 %v6647, %v7050
      %v7055 = vmul.f32 %v6648, %v7050
      %v7056 = vmul.f32 %v6649, %v7050
      %v7057 = vmul.f32 %v6650, %v7050
      %v7058 = vmul.f32 %v6651, %v7050
      %v7059 = vmul.f32 %v6652, %v7050
      %v7060 = vmul.f32 %v6653, %v7050
      %v7061 = vmul.f32 %v6654, %v7050
      %v7062 = vmul.f32 %v6655, %v7050
      %v7063 = vmul.f32 %v6656, %v7050
      %v7064 = vmul.f32 %v6657, %v7050
      %v7065 = vmul.f32 %v6658, %v7050
      %v7066 = vmul.f32 %v6659, %v7050
      %v7067 = vmul.f32 %v6660, %v7050
      %v7068 = vmul.f32 %v6661, %v7050
      %v7069 = vmul.f32 %v6662, %v7050
      %v7070 = vmul.f32 %v6663, %v7050
      %v7071 = vmul.f32 %v6664, %v7050
      %v7072 = vmul.f32 %v6665, %v7050
      %v7073 = vmul.f32 %v6666, %v7050
      %v7074 = vmul.f32 %v6667, %v7050
      %v7075 = vmul.f32 %v6668, %v7050
      %v7076 = vmul.f32 %v6669, %v7050
      %v7077 = vmul.f32 %v6670, %v7050
      %v7078 = vmul.f32 %v6671, %v7050
      %v7079 = vmul.f32 %v6672, %v7050
      %v7080 = vmul.f32 %v6673, %v7050
      %v7081 = vmul.f32 %v6674, %v7050
      %v7082 = vmul.f32 %v6675, %v7050
      %v7083 = vmul.f32 %v6676, %v7050
      %v7084 = vmul.f32 %v6677, %v7050
      %v7085 = vmul.f32 %v6678, %v7050
      %v7086 = vmul.f32 %v6679, %v7050
      %v7087 = vmul.f32 %v6680, %v7050
      %v7088 = vmul.f32 %v6681, %v7050
      %v7089 = vmul.f32 %v6682, %v7050
      %v7090 = vmul.f32 %v6683, %v7050
      %v7091 = vmul.f32 %v6684, %v7050
      %v7092 = vmul.f32 %v6685, %v7050
      %v7093 = vmul.f32 %v6686, %v7050
      %v7094 = vmul.f32 %v6687, %v7050
      %v7095 = vmul.f32 %v6688, %v7050
      %v7096 = vmul.f32 %v6689, %v7050
      %v7097 = vmul.f32 %v7044, %v7050
      %v7098 = vmul.f32 %v7045, %v7050
      %v7099 = vmul.f32 %v7046, %v7050
      %v7100 = vadd.f32 %v6996, %v7052
      %v7101 = vadd.f32 %v6997, %v7053
      %v7102 = vadd.f32 %v6998, %v7054
      %v7103 = vadd.f32 %v6999, %v7055
      %v7104 = vadd.f32 %v7000, %v7056
      %v7105 = vadd.f32 %v7001, %v7057
      %v7106 = vadd.f32 %v7002, %v7058
      %v7107 = vadd.f32 %v7003, %v7059
      %v7108 = vadd.f32 %v7004, %v7060
      %v7109 = vadd.f32 %v7005, %v7061
      %v7110 = vadd.f32 %v7006, %v7062
      %v7111 = vadd.f32 %v7007, %v7063
      %v7112 = vadd.f32 %v7008, %v7064
      %v7113 = vadd.f32 %v7009, %v7065
      %v7114 = vadd.f32 %v7010, %v7066
      %v7115 = vadd.f32 %v7011, %v7067
      %v7116 = vadd.f32 %v7012, %v7068
      %v7117 = vadd.f32 %v7013, %v7069
      %v7118 = vadd.f32 %v7014, %v7070
      %v7119 = vadd.f32 %v7015, %v7071
      %v7120 = vadd.f32 %v7016, %v7072
      %v7121 = vadd.f32 %v7017, %v7073
      %v7122 = vadd.f32 %v7018, %v7074
      %v7123 = vadd.f32 %v7019, %v7075
      %v7124 = vadd.f32 %v7020, %v7076
      %v7125 = vadd.f32 %v7021, %v7077
      %v7126 = vadd.f32 %v7022, %v7078
      %v7127 = vadd.f32 %v7023, %v7079
      %v7128 = vadd.f32 %v7024, %v7080
      %v7129 = vadd.f32 %v7025, %v7081
      %v7130 = vadd.f32 %v7026, %v7082
      %v7131 = vadd.f32 %v7027, %v7083
      %v7132 = vadd.f32 %v7028, %v7084
      %v7133 = vadd.f32 %v7029, %v7085
      %v7134 = vadd.f32 %v7030, %v7086
      %v7135 = vadd.f32 %v7031, %v7087
      %v7136 = vadd.f32 %v7032, %v7088
      %v7137 = vadd.f32 %v7033, %v7089
      %v7138 = vadd.f32 %v7034, %v7090
      %v7139 = vadd.f32 %v7035, %v7091
      %v7140 = vadd.f32 %v7036, %v7092
      %v7141 = vadd.f32 %v7037, %v7093
      %v7142 = vadd.f32 %v7038, %v7094
      %v7143 = vadd.f32 %v7039, %v7095
      %v7144 = vadd.f32 %v7040, %v7096
      %v7145 = vadd.f32 %v7041, %v7097
      %v7146 = vadd.f32 %v7042, %v7098
      %v7147 = vadd.f32 %v7043, %v7099
      %v7148 = vld [vmem:[%s462 + $0x189] sm:$0xff]
      %v7149 = vld [vmem:[%s462 + $0x191] sm:$0xff]
      %v7150 = vld [vmem:[%s462 + $0x199] sm:$0xff]
      %s7151 = scalar_lea.vmem %s7, 5
      %v7152 = vld [vmem:[%s7151] sm:$0x1]
      %v7154 = vperm.slane %v7152, 0
      %v7156 = vmul.f32 %v6794, %v7154
      %v7157 = vmul.f32 %v6795, %v7154
      %v7158 = vmul.f32 %v6796, %v7154
      %v7159 = vmul.f32 %v6797, %v7154
      %v7160 = vmul.f32 %v6798, %v7154
      %v7161 = vmul.f32 %v6799, %v7154
      %v7162 = vmul.f32 %v6800, %v7154
      %v7163 = vmul.f32 %v6801, %v7154
      %v7164 = vmul.f32 %v6802, %v7154
      %v7165 = vmul.f32 %v6803, %v7154
      %v7166 = vmul.f32 %v6804, %v7154
      %v7167 = vmul.f32 %v6805, %v7154
      %v7168 = vmul.f32 %v6806, %v7154
      %v7169 = vmul.f32 %v6807, %v7154
      %v7170 = vmul.f32 %v6808, %v7154
      %v7171 = vmul.f32 %v6809, %v7154
      %v7172 = vmul.f32 %v6810, %v7154
      %v7173 = vmul.f32 %v6811, %v7154
      %v7174 = vmul.f32 %v6812, %v7154
      %v7175 = vmul.f32 %v6813, %v7154
      %v7176 = vmul.f32 %v6814, %v7154
      %v7177 = vmul.f32 %v6815, %v7154
      %v7178 = vmul.f32 %v6816, %v7154
      %v7179 = vmul.f32 %v6817, %v7154
      %v7180 = vmul.f32 %v6818, %v7154
      %v7181 = vmul.f32 %v6819, %v7154
      %v7182 = vmul.f32 %v6820, %v7154
      %v7183 = vmul.f32 %v6821, %v7154
      %v7184 = vmul.f32 %v6822, %v7154
      %v7185 = vmul.f32 %v6823, %v7154
      %v7186 = vmul.f32 %v6824, %v7154
      %v7187 = vmul.f32 %v6825, %v7154
      %v7188 = vmul.f32 %v6826, %v7154
      %v7189 = vmul.f32 %v6827, %v7154
      %v7190 = vmul.f32 %v6828, %v7154
      %v7191 = vmul.f32 %v6829, %v7154
      %v7192 = vmul.f32 %v6830, %v7154
      %v7193 = vmul.f32 %v6831, %v7154
      %v7194 = vmul.f32 %v6832, %v7154
      %v7195 = vmul.f32 %v6833, %v7154
      %v7196 = vmul.f32 %v6834, %v7154
      %v7197 = vmul.f32 %v6835, %v7154
      %v7198 = vmul.f32 %v6836, %v7154
      %v7199 = vmul.f32 %v6837, %v7154
      %v7200 = vmul.f32 %v6838, %v7154
      %v7201 = vmul.f32 %v7148, %v7154
      %v7202 = vmul.f32 %v7149, %v7154
      %v7203 = vmul.f32 %v7150, %v7154
      %v7204 = vadd.f32 %v7100, %v7156
      %v7205 = vadd.f32 %v7101, %v7157
      %v7206 = vadd.f32 %v7102, %v7158
      %v7207 = vadd.f32 %v7103, %v7159
      %v7208 = vadd.f32 %v7104, %v7160
      %v7209 = vadd.f32 %v7105, %v7161
      %v7210 = vadd.f32 %v7106, %v7162
      %v7211 = vadd.f32 %v7107, %v7163
      %v7212 = vadd.f32 %v7108, %v7164
      %v7213 = vadd.f32 %v7109, %v7165
      %v7214 = vadd.f32 %v7110, %v7166
      %v7215 = vadd.f32 %v7111, %v7167
      %v7216 = vadd.f32 %v7112, %v7168
      %v7217 = vadd.f32 %v7113, %v7169
      %v7218 = vadd.f32 %v7114, %v7170
      %v7219 = vadd.f32 %v7115, %v7171
      %v7220 = vadd.f32 %v7116, %v7172
      %v7221 = vadd.f32 %v7117, %v7173
      %v7222 = vadd.f32 %v7118, %v7174
      %v7223 = vadd.f32 %v7119, %v7175
      %v7224 = vadd.f32 %v7120, %v7176
      %v7225 = vadd.f32 %v7121, %v7177
      %v7226 = vadd.f32 %v7122, %v7178
      %v7227 = vadd.f32 %v7123, %v7179
      %v7228 = vadd.f32 %v7124, %v7180
      %v7229 = vadd.f32 %v7125, %v7181
      %v7230 = vadd.f32 %v7126, %v7182
      %v7231 = vadd.f32 %v7127, %v7183
      %v7232 = vadd.f32 %v7128, %v7184
      %v7233 = vadd.f32 %v7129, %v7185
      %v7234 = vadd.f32 %v7130, %v7186
      %v7235 = vadd.f32 %v7131, %v7187
      %v7236 = vadd.f32 %v7132, %v7188
      %v7237 = vadd.f32 %v7133, %v7189
      %v7238 = vadd.f32 %v7134, %v7190
      %v7239 = vadd.f32 %v7135, %v7191
      %v7240 = vadd.f32 %v7136, %v7192
      %v7241 = vadd.f32 %v7137, %v7193
      %v7242 = vadd.f32 %v7138, %v7194
      %v7243 = vadd.f32 %v7139, %v7195
      %v7244 = vadd.f32 %v7140, %v7196
      %v7245 = vadd.f32 %v7141, %v7197
      %v7246 = vadd.f32 %v7142, %v7198
      %v7247 = vadd.f32 %v7143, %v7199
      %v7248 = vadd.f32 %v7144, %v7200
      %v7249 = vadd.f32 %v7145, %v7201
      %v7250 = vadd.f32 %v7146, %v7202
      %v7251 = vadd.f32 %v7147, %v7203
      %v7252 = vld [vmem:[%s462 + $0x19f] sm:$0xff]
      %v7253 = vld [vmem:[%s462 + $0x1a7] sm:$0xff]
      %v7254 = vld [vmem:[%s462 + $0x1af] sm:$0xff]
      %s7255 = scalar_lea.vmem %s7, 6
      %v7256 = vld [vmem:[%s7255] sm:$0x1]
      %v7258 = vperm.slane %v7256, 0
      %v7260 = vmul.f32 %v6500, %v7258
      %v7261 = vmul.f32 %v6501, %v7258
      %v7262 = vmul.f32 %v6502, %v7258
      %v7263 = vmul.f32 %v6503, %v7258
      %v7264 = vmul.f32 %v6504, %v7258
      %v7265 = vmul.f32 %v6505, %v7258
      %v7266 = vmul.f32 %v6506, %v7258
      %v7267 = vmul.f32 %v6507, %v7258
      %v7268 = vmul.f32 %v6508, %v7258
      %v7269 = vmul.f32 %v6509, %v7258
      %v7270 = vmul.f32 %v6510, %v7258
      %v7271 = vmul.f32 %v6511, %v7258
      %v7272 = vmul.f32 %v6512, %v7258
      %v7273 = vmul.f32 %v6513, %v7258
      %v7274 = vmul.f32 %v6514, %v7258
      %v7275 = vmul.f32 %v6515, %v7258
      %v7276 = vmul.f32 %v6516, %v7258
      %v7277 = vmul.f32 %v6517, %v7258
      %v7278 = vmul.f32 %v6518, %v7258
      %v7279 = vmul.f32 %v6519, %v7258
      %v7280 = vmul.f32 %v6520, %v7258
      %v7281 = vmul.f32 %v6521, %v7258
      %v7282 = vmul.f32 %v6522, %v7258
      %v7283 = vmul.f32 %v6523, %v7258
      %v7284 = vmul.f32 %v6524, %v7258
      %v7285 = vmul.f32 %v6525, %v7258
      %v7286 = vmul.f32 %v6526, %v7258
      %v7287 = vmul.f32 %v6527, %v7258
      %v7288 = vmul.f32 %v6528, %v7258
      %v7289 = vmul.f32 %v6529, %v7258
      %v7290 = vmul.f32 %v6530, %v7258
      %v7291 = vmul.f32 %v6531, %v7258
      %v7292 = vmul.f32 %v6532, %v7258
      %v7293 = vmul.f32 %v6533, %v7258
      %v7294 = vmul.f32 %v6534, %v7258
      %v7295 = vmul.f32 %v6535, %v7258
      %v7296 = vmul.f32 %v6536, %v7258
      %v7297 = vmul.f32 %v6537, %v7258
      %v7298 = vmul.f32 %v6538, %v7258
      %v7299 = vmul.f32 %v6539, %v7258
      %v7300 = vmul.f32 %v6540, %v7258
      %v7301 = vmul.f32 %v6541, %v7258
      %v7302 = vmul.f32 %v6940, %v7258
      %v7303 = vmul.f32 %v6941, %v7258
      %v7304 = vmul.f32 %v6942, %v7258
      %v7305 = vmul.f32 %v7252, %v7258
      %v7306 = vmul.f32 %v7253, %v7258
      %v7307 = vmul.f32 %v7254, %v7258
      %v7308 = vadd.f32 %v7204, %v7260
      %v7309 = vadd.f32 %v7205, %v7261
      %v7310 = vadd.f32 %v7206, %v7262
      %v7311 = vadd.f32 %v7207, %v7263
      %v7312 = vadd.f32 %v7208, %v7264
      %v7313 = vadd.f32 %v7209, %v7265
      %v7314 = vadd.f32 %v7210, %v7266
      %v7315 = vadd.f32 %v7211, %v7267
      %v7316 = vadd.f32 %v7212, %v7268
      %v7317 = vadd.f32 %v7213, %v7269
      %v7318 = vadd.f32 %v7214, %v7270
      %v7319 = vadd.f32 %v7215, %v7271
      %v7320 = vadd.f32 %v7216, %v7272
      %v7321 = vadd.f32 %v7217, %v7273
      %v7322 = vadd.f32 %v7218, %v7274
      %v7323 = vadd.f32 %v7219, %v7275
      %v7324 = vadd.f32 %v7220, %v7276
      %v7325 = vadd.f32 %v7221, %v7277
      %v7326 = vadd.f32 %v7222, %v7278
      %v7327 = vadd.f32 %v7223, %v7279
      %v7328 = vadd.f32 %v7224, %v7280
      %v7329 = vadd.f32 %v7225, %v7281
      %v7330 = vadd.f32 %v7226, %v7282
      %v7331 = vadd.f32 %v7227, %v7283
      %v7332 = vadd.f32 %v7228, %v7284
      %v7333 = vadd.f32 %v7229, %v7285
      %v7334 = vadd.f32 %v7230, %v7286
      %v7335 = vadd.f32 %v7231, %v7287
      %v7336 = vadd.f32 %v7232, %v7288
      %v7337 = vadd.f32 %v7233, %v7289
      %v7338 = vadd.f32 %v7234, %v7290
      %v7339 = vadd.f32 %v7235, %v7291
      %v7340 = vadd.f32 %v7236, %v7292
      %v7341 = vadd.f32 %v7237, %v7293
      %v7342 = vadd.f32 %v7238, %v7294
      %v7343 = vadd.f32 %v7239, %v7295
      %v7344 = vadd.f32 %v7240, %v7296
      %v7345 = vadd.f32 %v7241, %v7297
      %v7346 = vadd.f32 %v7242, %v7298
      %v7347 = vadd.f32 %v7243, %v7299
      %v7348 = vadd.f32 %v7244, %v7300
      %v7349 = vadd.f32 %v7245, %v7301
      %v7350 = vadd.f32 %v7246, %v7302
      %v7351 = vadd.f32 %v7247, %v7303
      %v7352 = vadd.f32 %v7248, %v7304
      %v7353 = vadd.f32 %v7249, %v7305
      %v7354 = vadd.f32 %v7250, %v7306
      %v7355 = vadd.f32 %v7251, %v7307
      %v7356 = vld [vmem:[%s462 + $0x1a0] sm:$0xff]
      %v7357 = vld [vmem:[%s462 + $0x1a8] sm:$0xff]
      %v7358 = vld [vmem:[%s462 + $0x1b0] sm:$0xff]
      %s7359 = scalar_lea.vmem %s7, 7
      %v7360 = vld [vmem:[%s7359] sm:$0x1]
      %v7362 = vperm.slane %v7360, 0
      %v7364 = vmul.f32 %v6648, %v7362
      %v7365 = vmul.f32 %v6649, %v7362
      %v7366 = vmul.f32 %v6650, %v7362
      %v7367 = vmul.f32 %v6651, %v7362
      %v7368 = vmul.f32 %v6652, %v7362
      %v7369 = vmul.f32 %v6653, %v7362
      %v7370 = vmul.f32 %v6654, %v7362
      %v7371 = vmul.f32 %v6655, %v7362
      %v7372 = vmul.f32 %v6656, %v7362
      %v7373 = vmul.f32 %v6657, %v7362
      %v7374 = vmul.f32 %v6658, %v7362
      %v7375 = vmul.f32 %v6659, %v7362
      %v7376 = vmul.f32 %v6660, %v7362
      %v7377 = vmul.f32 %v6661, %v7362
      %v7378 = vmul.f32 %v6662, %v7362
      %v7379 = vmul.f32 %v6663, %v7362
      %v7380 = vmul.f32 %v6664, %v7362
      %v7381 = vmul.f32 %v6665, %v7362
      %v7382 = vmul.f32 %v6666, %v7362
      %v7383 = vmul.f32 %v6667, %v7362
      %v7384 = vmul.f32 %v6668, %v7362
      %v7385 = vmul.f32 %v6669, %v7362
      %v7386 = vmul.f32 %v6670, %v7362
      %v7387 = vmul.f32 %v6671, %v7362
      %v7388 = vmul.f32 %v6672, %v7362
      %v7389 = vmul.f32 %v6673, %v7362
      %v7390 = vmul.f32 %v6674, %v7362
      %v7391 = vmul.f32 %v6675, %v7362
      %v7392 = vmul.f32 %v6676, %v7362
      %v7393 = vmul.f32 %v6677, %v7362
      %v7394 = vmul.f32 %v6678, %v7362
      %v7395 = vmul.f32 %v6679, %v7362
      %v7396 = vmul.f32 %v6680, %v7362
      %v7397 = vmul.f32 %v6681, %v7362
      %v7398 = vmul.f32 %v6682, %v7362
      %v7399 = vmul.f32 %v6683, %v7362
      %v7400 = vmul.f32 %v6684, %v7362
      %v7401 = vmul.f32 %v6685, %v7362
      %v7402 = vmul.f32 %v6686, %v7362
      %v7403 = vmul.f32 %v6687, %v7362
      %v7404 = vmul.f32 %v6688, %v7362
      %v7405 = vmul.f32 %v6689, %v7362
      %v7406 = vmul.f32 %v7044, %v7362
      %v7407 = vmul.f32 %v7045, %v7362
      %v7408 = vmul.f32 %v7046, %v7362
      %v7409 = vmul.f32 %v7356, %v7362
      %v7410 = vmul.f32 %v7357, %v7362
      %v7411 = vmul.f32 %v7358, %v7362
      %v7412 = vadd.f32 %v7308, %v7364
      %v7413 = vadd.f32 %v7309, %v7365
      %v7414 = vadd.f32 %v7310, %v7366
      %v7415 = vadd.f32 %v7311, %v7367
      %v7416 = vadd.f32 %v7312, %v7368
      %v7417 = vadd.f32 %v7313, %v7369
      %v7418 = vadd.f32 %v7314, %v7370
      %v7419 = vadd.f32 %v7315, %v7371
      %v7420 = vadd.f32 %v7316, %v7372
      %v7421 = vadd.f32 %v7317, %v7373
      %v7422 = vadd.f32 %v7318, %v7374
      %v7423 = vadd.f32 %v7319, %v7375
      %v7424 = vadd.f32 %v7320, %v7376
      %v7425 = vadd.f32 %v7321, %v7377
      %v7426 = vadd.f32 %v7322, %v7378
      %v7427 = vadd.f32 %v7323, %v7379
      %v7428 = vadd.f32 %v7324, %v7380
      %v7429 = vadd.f32 %v7325, %v7381
      %v7430 = vadd.f32 %v7326, %v7382
      %v7431 = vadd.f32 %v7327, %v7383
      %v7432 = vadd.f32 %v7328, %v7384
      %v7433 = vadd.f32 %v7329, %v7385
      %v7434 = vadd.f32 %v7330, %v7386
      %v7435 = vadd.f32 %v7331, %v7387
      %v7436 = vadd.f32 %v7332, %v7388
      %v7437 = vadd.f32 %v7333, %v7389
      %v7438 = vadd.f32 %v7334, %v7390
      %v7439 = vadd.f32 %v7335, %v7391
      %v7440 = vadd.f32 %v7336, %v7392
      %v7441 = vadd.f32 %v7337, %v7393
      %v7442 = vadd.f32 %v7338, %v7394
      %v7443 = vadd.f32 %v7339, %v7395
      %v7444 = vadd.f32 %v7340, %v7396
      %v7445 = vadd.f32 %v7341, %v7397
      %v7446 = vadd.f32 %v7342, %v7398
      %v7447 = vadd.f32 %v7343, %v7399
      %v7448 = vadd.f32 %v7344, %v7400
      %v7449 = vadd.f32 %v7345, %v7401
      %v7450 = vadd.f32 %v7346, %v7402
      %v7451 = vadd.f32 %v7347, %v7403
      %v7452 = vadd.f32 %v7348, %v7404
      %v7453 = vadd.f32 %v7349, %v7405
      %v7454 = vadd.f32 %v7350, %v7406
      %v7455 = vadd.f32 %v7351, %v7407
      %v7456 = vadd.f32 %v7352, %v7408
      %v7457 = vadd.f32 %v7353, %v7409
      %v7458 = vadd.f32 %v7354, %v7410
      %v7459 = vadd.f32 %v7355, %v7411
      %v7460 = vld [vmem:[%s462 + $0x1a1] sm:$0xff]
      %v7461 = vld [vmem:[%s462 + $0x1a9] sm:$0xff]
      %v7462 = vld [vmem:[%s462 + $0x1b1] sm:$0xff]
      %s7463 = scalar_lea.vmem %s7, 8
      %v7464 = vld [vmem:[%s7463] sm:$0x1]
      %v7466 = vperm.slane %v7464, 0
      %v7468 = vmul.f32 %v6797, %v7466
      %v7469 = vmul.f32 %v6798, %v7466
      %v7470 = vmul.f32 %v6799, %v7466
      %v7471 = vmul.f32 %v6800, %v7466
      %v7472 = vmul.f32 %v6801, %v7466
      %v7473 = vmul.f32 %v6802, %v7466
      %v7474 = vmul.f32 %v6803, %v7466
      %v7475 = vmul.f32 %v6804, %v7466
      %v7476 = vmul.f32 %v6805, %v7466
      %v7477 = vmul.f32 %v6806, %v7466
      %v7478 = vmul.f32 %v6807, %v7466
      %v7479 = vmul.f32 %v6808, %v7466
      %v7480 = vmul.f32 %v6809, %v7466
      %v7481 = vmul.f32 %v6810, %v7466
      %v7482 = vmul.f32 %v6811, %v7466
      %v7483 = vmul.f32 %v6812, %v7466
      %v7484 = vmul.f32 %v6813, %v7466
      %v7485 = vmul.f32 %v6814, %v7466
      %v7486 = vmul.f32 %v6815, %v7466
      %v7487 = vmul.f32 %v6816, %v7466
      %v7488 = vmul.f32 %v6817, %v7466
      %v7489 = vmul.f32 %v6818, %v7466
      %v7490 = vmul.f32 %v6819, %v7466
      %v7491 = vmul.f32 %v6820, %v7466
      %v7492 = vmul.f32 %v6821, %v7466
      %v7493 = vmul.f32 %v6822, %v7466
      %v7494 = vmul.f32 %v6823, %v7466
      %v7495 = vmul.f32 %v6824, %v7466
      %v7496 = vmul.f32 %v6825, %v7466
      %v7497 = vmul.f32 %v6826, %v7466
      %v7498 = vmul.f32 %v6827, %v7466
      %v7499 = vmul.f32 %v6828, %v7466
      %v7500 = vmul.f32 %v6829, %v7466
      %v7501 = vmul.f32 %v6830, %v7466
      %v7502 = vmul.f32 %v6831, %v7466
      %v7503 = vmul.f32 %v6832, %v7466
      %v7504 = vmul.f32 %v6833, %v7466
      %v7505 = vmul.f32 %v6834, %v7466
      %v7506 = vmul.f32 %v6835, %v7466
      %v7507 = vmul.f32 %v6836, %v7466
      %v7508 = vmul.f32 %v6837, %v7466
      %v7509 = vmul.f32 %v6838, %v7466
      %v7510 = vmul.f32 %v7148, %v7466
      %v7511 = vmul.f32 %v7149, %v7466
      %v7512 = vmul.f32 %v7150, %v7466
      %v7513 = vmul.f32 %v7460, %v7466
      %v7514 = vmul.f32 %v7461, %v7466
      %v7515 = vmul.f32 %v7462, %v7466
      %v7516 = vadd.f32 %v7412, %v7468
      %v7517 = vadd.f32 %v7413, %v7469
      %v7518 = vadd.f32 %v7414, %v7470
      %v7519 = vadd.f32 %v7415, %v7471
      %v7520 = vadd.f32 %v7416, %v7472
      %v7521 = vadd.f32 %v7417, %v7473
      %v7522 = vadd.f32 %v7418, %v7474
      %v7523 = vadd.f32 %v7419, %v7475
      %v7524 = vadd.f32 %v7420, %v7476
      %v7525 = vadd.f32 %v7421, %v7477
      %v7526 = vadd.f32 %v7422, %v7478
      %v7527 = vadd.f32 %v7423, %v7479
      %v7528 = vadd.f32 %v7424, %v7480
      %v7529 = vadd.f32 %v7425, %v7481
      %v7530 = vadd.f32 %v7426, %v7482
      %v7531 = vadd.f32 %v7427, %v7483
      %v7532 = vadd.f32 %v7428, %v7484
      %v7533 = vadd.f32 %v7429, %v7485
      %v7534 = vadd.f32 %v7430, %v7486
      %v7535 = vadd.f32 %v7431, %v7487
      %v7536 = vadd.f32 %v7432, %v7488
      %v7537 = vadd.f32 %v7433, %v7489
      %v7538 = vadd.f32 %v7434, %v7490
      %v7539 = vadd.f32 %v7435, %v7491
      %v7540 = vadd.f32 %v7436, %v7492
      %v7541 = vadd.f32 %v7437, %v7493
      %v7542 = vadd.f32 %v7438, %v7494
      %v7543 = vadd.f32 %v7439, %v7495
      %v7544 = vadd.f32 %v7440, %v7496
      %v7545 = vadd.f32 %v7441, %v7497
      %v7546 = vadd.f32 %v7442, %v7498
      %v7547 = vadd.f32 %v7443, %v7499
      %v7548 = vadd.f32 %v7444, %v7500
      %v7549 = vadd.f32 %v7445, %v7501
      %v7550 = vadd.f32 %v7446, %v7502
      %v7551 = vadd.f32 %v7447, %v7503
      %v7552 = vadd.f32 %v7448, %v7504
      %v7553 = vadd.f32 %v7449, %v7505
      %v7554 = vadd.f32 %v7450, %v7506
      %v7555 = vadd.f32 %v7451, %v7507
      %v7556 = vadd.f32 %v7452, %v7508
      %v7557 = vadd.f32 %v7453, %v7509
      %v7558 = vadd.f32 %v7454, %v7510
      %v7559 = vadd.f32 %v7455, %v7511
      %v7560 = vadd.f32 %v7456, %v7512
      %v7561 = vadd.f32 %v7457, %v7513
      %v7562 = vadd.f32 %v7458, %v7514
      %v7563 = vadd.f32 %v7459, %v7515
      %v7564 = vld [vmem:[%s9] sm:$0xff]
      %v7565 = vld [vmem:[%s9 + $0x8] sm:$0xff]
      %v7566 = vld [vmem:[%s9 + $0x10] sm:$0xff]
      %v7567 = vld [vmem:[%s9 + $0x18] sm:$0xff]
      %v7568 = vld [vmem:[%s9 + $0x20] sm:$0xff]
      %v7569 = vld [vmem:[%s9 + $0x28] sm:$0xff]
      %v7570 = vld [vmem:[%s9 + $0x30] sm:$0xff]
      %v7571 = vld [vmem:[%s9 + $0x38] sm:$0xff]
      %v7572 = vld [vmem:[%s9 + $0x40] sm:$0xff]
      %v7573 = vld [vmem:[%s9 + $0x48] sm:$0xff]
      %v7574 = vld [vmem:[%s9 + $0x50] sm:$0xff]
      %v7575 = vld [vmem:[%s9 + $0x58] sm:$0xff]
      %v7576 = vld [vmem:[%s9 + $0x60] sm:$0xff]
      %v7577 = vld [vmem:[%s9 + $0x68] sm:$0xff]
      %v7578 = vld [vmem:[%s9 + $0x70] sm:$0xff]
      %v7579 = vld [vmem:[%s9 + $0x78] sm:$0xff]
      %v7580 = vld [vmem:[%s9 + $0x80] sm:$0xff]
      %v7581 = vld [vmem:[%s9 + $0x88] sm:$0xff]
      %v7582 = vld [vmem:[%s9 + $0x90] sm:$0xff]
      %v7583 = vld [vmem:[%s9 + $0x98] sm:$0xff]
      %v7584 = vld [vmem:[%s9 + $0xa0] sm:$0xff]
      %v7585 = vld [vmem:[%s9 + $0xa8] sm:$0xff]
      %v7586 = vld [vmem:[%s9 + $0xb0] sm:$0xff]
      %v7587 = vld [vmem:[%s9 + $0xb8] sm:$0xff]
      %v7588 = vld [vmem:[%s9 + $0xc0] sm:$0xff]
      %v7589 = vld [vmem:[%s9 + $0xc8] sm:$0xff]
      %v7590 = vld [vmem:[%s9 + $0xd0] sm:$0xff]
      %v7591 = vld [vmem:[%s9 + $0xd8] sm:$0xff]
      %v7592 = vld [vmem:[%s9 + $0xe0] sm:$0xff]
      %v7593 = vld [vmem:[%s9 + $0xe8] sm:$0xff]
      %v7594 = vld [vmem:[%s9 + $0xf0] sm:$0xff]
      %v7595 = vld [vmem:[%s9 + $0xf8] sm:$0xff]
      %v7596 = vld [vmem:[%s9 + $0x100] sm:$0xff]
      %v7597 = vld [vmem:[%s9 + $0x108] sm:$0xff]
      %v7598 = vld [vmem:[%s9 + $0x110] sm:$0xff]
      %v7599 = vld [vmem:[%s9 + $0x118] sm:$0xff]
      %v7600 = vld [vmem:[%s9 + $0x120] sm:$0xff]
      %v7601 = vld [vmem:[%s9 + $0x128] sm:$0xff]
      %v7602 = vld [vmem:[%s9 + $0x130] sm:$0xff]
      %v7603 = vld [vmem:[%s9 + $0x138] sm:$0xff]
      %v7604 = vld [vmem:[%s9 + $0x140] sm:$0xff]
      %v7605 = vld [vmem:[%s9 + $0x148] sm:$0xff]
      %v7606 = vld [vmem:[%s9 + $0x150] sm:$0xff]
      %v7607 = vld [vmem:[%s9 + $0x158] sm:$0xff]
      %v7608 = vld [vmem:[%s9 + $0x160] sm:$0xff]
      %v7609 = vld [vmem:[%s9 + $0x168] sm:$0xff]
      %v7610 = vld [vmem:[%s9 + $0x170] sm:$0xff]
      %v7611 = vld [vmem:[%s9 + $0x178] sm:$0xff]
      %v7612 = vld [vmem:[%s8] sm:$0x1]
      %v7614 = vperm.slane %v7612, 0
      %7616 = vmatpush.msra.mxu0 %v7531
      %7617 = vmatpush.msra.mxu0 %v7530
      %7618 = vmatpush.msra.mxu0 %v7529
      %7619 = vmatpush.msra.mxu0 %v7528
      %7620 = vmatpush.msra.mxu0 %v7527
      %7621 = vmatpush.msra.mxu0 %v7526
      %7622 = vmatpush.msra.mxu0 %v7525
      %7623 = vmatpush.msra.mxu0 %v7524
      %7624 = vmatpush.msra.mxu0 %v7523
      %7625 = vmatpush.msra.mxu0 %v7522
      %7626 = vmatpush.msra.mxu0 %v7521
      %7627 = vmatpush.msra.mxu0 %v7520
      %7628 = vmatpush.msra.mxu0 %v7519
      %7629 = vmatpush.msra.mxu0 %v7518
      %7630 = vmatpush.msra.mxu0 %v7517
      %7631 = vmatpush.msra.mxu0 %v7516
      %7632 = vmatmul.f32.gmra.mxu0 %v7564
      %v7633 = vpop.f32.mrf.mxu0
      %v7634 = vadd.f32 %v7614, %v7633
      %7635 = vmatmul.f32.gmra.mxu0 %v7567
      %v7636 = vpop.f32.mrf.mxu0
      %v7637 = vadd.f32 %v7614, %v7636
      %7638 = vmatmul.f32.gmra.mxu0 %v7570
      %v7639 = vpop.f32.mrf.mxu0
      %v7640 = vadd.f32 %v7614, %v7639
      %7641 = vmatmul.f32.gmra.mxu0 %v7573
      %v7642 = vpop.f32.mrf.mxu0
      %v7643 = vadd.f32 %v7614, %v7642
      %7644 = vmatmul.f32.gmra.mxu0 %v7576
      %v7645 = vpop.f32.mrf.mxu0
      %v7646 = vadd.f32 %v7614, %v7645
      %7647 = vmatmul.f32.gmra.mxu0 %v7579
      %v7648 = vpop.f32.mrf.mxu0
      %v7649 = vadd.f32 %v7614, %v7648
      %7650 = vmatmul.f32.gmra.mxu0 %v7582
      %v7651 = vpop.f32.mrf.mxu0
      %v7652 = vadd.f32 %v7614, %v7651
      %7653 = vmatmul.f32.gmra.mxu0 %v7585
      %v7654 = vpop.f32.mrf.mxu0
      %v7655 = vadd.f32 %v7614, %v7654
      %7656 = vmatmul.f32.gmra.mxu0 %v7588
      %v7657 = vpop.f32.mrf.mxu0
      %v7658 = vadd.f32 %v7614, %v7657
      %7659 = vmatmul.f32.gmra.mxu0 %v7591
      %v7660 = vpop.f32.mrf.mxu0
      %v7661 = vadd.f32 %v7614, %v7660
      %7662 = vmatmul.f32.gmra.mxu0 %v7594
      %v7663 = vpop.f32.mrf.mxu0
      %v7664 = vadd.f32 %v7614, %v7663
      %7665 = vmatmul.f32.gmra.mxu0 %v7597
      %v7666 = vpop.f32.mrf.mxu0
      %v7667 = vadd.f32 %v7614, %v7666
      %7668 = vmatmul.f32.gmra.mxu0 %v7600
      %v7669 = vpop.f32.mrf.mxu0
      %v7670 = vadd.f32 %v7614, %v7669
      %7671 = vmatmul.f32.gmra.mxu0 %v7603
      %v7672 = vpop.f32.mrf.mxu0
      %v7673 = vadd.f32 %v7614, %v7672
      %7674 = vmatmul.f32.gmra.mxu0 %v7606
      %v7675 = vpop.f32.mrf.mxu0
      %v7676 = vadd.f32 %v7614, %v7675
      %7677 = vmatmul.f32.gmra.mxu0 %v7609
      %v7678 = vpop.f32.mrf.mxu0
      %v7679 = vadd.f32 %v7614, %v7678
      %7680 = vdwg.mxu0
      %7681 = vmatpush.msra.mxu0 %v7547
      %7682 = vmatpush.msra.mxu0 %v7546
      %7683 = vmatpush.msra.mxu0 %v7545
      %7684 = vmatpush.msra.mxu0 %v7544
      %7685 = vmatpush.msra.mxu0 %v7543
      %7686 = vmatpush.msra.mxu0 %v7542
      %7687 = vmatpush.msra.mxu0 %v7541
      %7688 = vmatpush.msra.mxu0 %v7540
      %7689 = vmatpush.msra.mxu0 %v7539
      %7690 = vmatpush.msra.mxu0 %v7538
      %7691 = vmatpush.msra.mxu0 %v7537
      %7692 = vmatpush.msra.mxu0 %v7536
      %7693 = vmatpush.msra.mxu0 %v7535
      %7694 = vmatpush.msra.mxu0 %v7534
      %7695 = vmatpush.msra.mxu0 %v7533
      %7696 = vmatpush.msra.mxu0 %v7532
      %7697 = vmatmul.f32.gmra.mxu0 %v7565
      %v7698 = vpop.f32.mrf.mxu0
      %v7699 = vadd.f32 %v7634, %v7698
      %7700 = vmatmul.f32.gmra.mxu0 %v7568
      %v7701 = vpop.f32.mrf.mxu0
      %v7702 = vadd.f32 %v7637, %v7701
      %7703 = vmatmul.f32.gmra.mxu0 %v7571
      %v7704 = vpop.f32.mrf.mxu0
      %v7705 = vadd.f32 %v7640, %v7704
      %7706 = vmatmul.f32.gmra.mxu0 %v7574
      %v7707 = vpop.f32.mrf.mxu0
      %v7708 = vadd.f32 %v7643, %v7707
      %7709 = vmatmul.f32.gmra.mxu0 %v7577
      %v7710 = vpop.f32.mrf.mxu0
      %v7711 = vadd.f32 %v7646, %v7710
      %7712 = vmatmul.f32.gmra.mxu0 %v7580
      %v7713 = vpop.f32.mrf.mxu0
      %v7714 = vadd.f32 %v7649, %v7713
      %7715 = vmatmul.f32.gmra.mxu0 %v7583
      %v7716 = vpop.f32.mrf.mxu0
      %v7717 = vadd.f32 %v7652, %v7716
      %7718 = vmatmul.f32.gmra.mxu0 %v7586
      %v7719 = vpop.f32.mrf.mxu0
      %v7720 = vadd.f32 %v7655, %v7719
      %7721 = vmatmul.f32.gmra.mxu0 %v7589
      %v7722 = vpop.f32.mrf.mxu0
      %v7723 = vadd.f32 %v7658, %v7722
      %7724 = vmatmul.f32.gmra.mxu0 %v7592
      %v7725 = vpop.f32.mrf.mxu0
      %v7726 = vadd.f32 %v7661, %v7725
      %7727 = vmatmul.f32.gmra.mxu0 %v7595
      %v7728 = vpop.f32.mrf.mxu0
      %v7729 = vadd.f32 %v7664, %v7728
      %7730 = vmatmul.f32.gmra.mxu0 %v7598
      %v7731 = vpop.f32.mrf.mxu0
      %v7732 = vadd.f32 %v7667, %v7731
      %7733 = vmatmul.f32.gmra.mxu0 %v7601
      %v7734 = vpop.f32.mrf.mxu0
      %v7735 = vadd.f32 %v7670, %v7734
      %7736 = vmatmul.f32.gmra.mxu0 %v7604
      %v7737 = vpop.f32.mrf.mxu0
      %v7738 = vadd.f32 %v7673, %v7737
      %7739 = vmatmul.f32.gmra.mxu0 %v7607
      %v7740 = vpop.f32.mrf.mxu0
      %v7741 = vadd.f32 %v7676, %v7740
      %7742 = vmatmul.f32.gmra.mxu0 %v7610
      %v7743 = vpop.f32.mrf.mxu0
      %v7744 = vadd.f32 %v7679, %v7743
      %7745 = vdwg.mxu0
      %7746 = vmatpush.msra.mxu0 %v7563
      %7747 = vmatpush.msra.mxu0 %v7562
      %7748 = vmatpush.msra.mxu0 %v7561
      %7749 = vmatpush.msra.mxu0 %v7560
      %7750 = vmatpush.msra.mxu0 %v7559
      %7751 = vmatpush.msra.mxu0 %v7558
      %7752 = vmatpush.msra.mxu0 %v7557
      %7753 = vmatpush.msra.mxu0 %v7556
      %7754 = vmatpush.msra.mxu0 %v7555
      %7755 = vmatpush.msra.mxu0 %v7554
      %7756 = vmatpush.msra.mxu0 %v7553
      %7757 = vmatpush.msra.mxu0 %v7552
      %7758 = vmatpush.msra.mxu0 %v7551
      %7759 = vmatpush.msra.mxu0 %v7550
      %7760 = vmatpush.msra.mxu0 %v7549
      %7761 = vmatpush.msra.mxu0 %v7548
      %7762 = vmatmul.f32.gmra.mxu0 %v7566
      %v7763 = vpop.f32.mrf.mxu0
      %v7764 = vadd.f32 %v7699, %v7763
      %7765 = vmatmul.f32.gmra.mxu0 %v7569
      %v7766 = vpop.f32.mrf.mxu0
      %v7767 = vadd.f32 %v7702, %v7766
      %7768 = vmatmul.f32.gmra.mxu0 %v7572
      %v7769 = vpop.f32.mrf.mxu0
      %v7770 = vadd.f32 %v7705, %v7769
      %7771 = vmatmul.f32.gmra.mxu0 %v7575
      %v7772 = vpop.f32.mrf.mxu0
      %v7773 = vadd.f32 %v7708, %v7772
      %7774 = vmatmul.f32.gmra.mxu0 %v7578
      %v7775 = vpop.f32.mrf.mxu0
      %v7776 = vadd.f32 %v7711, %v7775
      %7777 = vmatmul.f32.gmra.mxu0 %v7581
      %v7778 = vpop.f32.mrf.mxu0
      %v7779 = vadd.f32 %v7714, %v7778
      %7780 = vmatmul.f32.gmra.mxu0 %v7584
      %v7781 = vpop.f32.mrf.mxu0
      %v7782 = vadd.f32 %v7717, %v7781
      %7783 = vmatmul.f32.gmra.mxu0 %v7587
      %v7784 = vpop.f32.mrf.mxu0
      %v7785 = vadd.f32 %v7720, %v7784
      %7786 = vmatmul.f32.gmra.mxu0 %v7590
      %v7787 = vpop.f32.mrf.mxu0
      %v7788 = vadd.f32 %v7723, %v7787
      %7789 = vmatmul.f32.gmra.mxu0 %v7593
      %v7790 = vpop.f32.mrf.mxu0
      %v7791 = vadd.f32 %v7726, %v7790
      %7792 = vmatmul.f32.gmra.mxu0 %v7596
      %v7793 = vpop.f32.mrf.mxu0
      %v7794 = vadd.f32 %v7729, %v7793
      %7795 = vmatmul.f32.gmra.mxu0 %v7599
      %v7796 = vpop.f32.mrf.mxu0
      %v7797 = vadd.f32 %v7732, %v7796
      %7798 = vmatmul.f32.gmra.mxu0 %v7602
      %v7799 = vpop.f32.mrf.mxu0
      %v7800 = vadd.f32 %v7735, %v7799
      %7801 = vmatmul.f32.gmra.mxu0 %v7605
      %v7802 = vpop.f32.mrf.mxu0
      %v7803 = vadd.f32 %v7738, %v7802
      %7804 = vmatmul.f32.gmra.mxu0 %v7608
      %v7805 = vpop.f32.mrf.mxu0
      %v7806 = vadd.f32 %v7741, %v7805
      %7807 = vmatmul.f32.gmra.mxu0 %v7611
      %v7808 = vpop.f32.mrf.mxu0
      %v7809 = vadd.f32 %v7744, %v7808
      %7810 = vdwg.mxu0
      %v7811 = vmul.f32 %v7764, %v6401
      %v7812 = vmul.f32 %v7767, %v6406
      %v7813 = vmul.f32 %v7770, %v6411
      %v7814 = vmul.f32 %v7773, %v6416
      %v7815 = vmul.f32 %v7776, %v6421
      %v7816 = vmul.f32 %v7779, %v6426
      %v7817 = vmul.f32 %v7782, %v6431
      %v7818 = vmul.f32 %v7785, %v6436
      %v7819 = vmul.f32 %v7788, %v6441
      %v7820 = vmul.f32 %v7791, %v6446
      %v7821 = vmul.f32 %v7794, %v6451
      %v7822 = vmul.f32 %v7797, %v6456
      %v7823 = vmul.f32 %v7800, %v6461
      %v7824 = vmul.f32 %v7803, %v6466
      %v7825 = vmul.f32 %v7806, %v6471
      %v7826 = vmul.f32 %v7809, %v6476
      %7827 = vst [vmem:[#allocation4] sm:$0xff] 0.0
      %7828 = vst [vmem:[#allocation4 + $0x8] sm:$0xff] 0.0
      %7829 = vst [vmem:[#allocation4 + $0x10] sm:$0xff] 0.0
      %7830 = vst [vmem:[#allocation4 + $0x18] sm:$0xff] 0.0
      %7831 = vst [vmem:[#allocation4 + $0x20] sm:$0xff] 0.0
      %7832 = vst [vmem:[#allocation4 + $0x28] sm:$0xff] 0.0
      %7833 = vst [vmem:[#allocation4 + $0x30] sm:$0xff] 0.0
      %7834 = vst [vmem:[#allocation4 + $0x38] sm:$0xff] 0.0
      %7835 = vst [vmem:[#allocation4 + $0x40] sm:$0xff] 0.0
      %7836 = vst [vmem:[#allocation4 + $0x48] sm:$0xff] 0.0
      %7837 = vst [vmem:[#allocation4 + $0x50] sm:$0xff] 0.0
      %7838 = vst [vmem:[#allocation4 + $0x58] sm:$0xff] 0.0
      %7839 = vst [vmem:[#allocation4 + $0x60] sm:$0xff] 0.0
      %7840 = vst [vmem:[#allocation4 + $0x68] sm:$0xff] 0.0
      %7841 = vst [vmem:[#allocation4 + $0x70] sm:$0xff] 0.0
      %7842 = vst [vmem:[#allocation4 + $0x78] sm:$0xff] 0.0
      %7843 = vst [vmem:[#allocation4 + $0x80] sm:$0xff] 0.0
      %7844 = vst [vmem:[#allocation4 + $0x88] sm:$0xff] 0.0
      %7845 = vst [vmem:[#allocation4 + $0x90] sm:$0xff] 0.0
      %7846 = vst [vmem:[#allocation4 + $0x98] sm:$0xff] 0.0
      %7847 = vst [vmem:[#allocation4 + $0xa0] sm:$0xff] 0.0
      %7848 = vst [vmem:[#allocation4 + $0xa8] sm:$0xff] 0.0
      %7849 = vst [vmem:[#allocation4 + $0xb0] sm:$0xff] 0.0
      %7850 = vst [vmem:[#allocation4 + $0xb8] sm:$0xff] 0.0
      %7851 = vst [vmem:[#allocation4 + $0xc0] sm:$0xff] 0.0
      %7852 = vst [vmem:[#allocation4 + $0xc8] sm:$0xff] 0.0
      %7853 = vst [vmem:[#allocation4 + $0xd0] sm:$0xff] 0.0
      %7854 = vst [vmem:[#allocation4 + $0xd8] sm:$0xff] 0.0
      %7855 = vst [vmem:[#allocation4 + $0xe0] sm:$0xff] 0.0
      %7856 = vst [vmem:[#allocation4 + $0xe8] sm:$0xff] 0.0
      %7857 = vst [vmem:[#allocation4 + $0xf0] sm:$0xff] 0.0
      %7858 = vst [vmem:[#allocation4 + $0xf8] sm:$0xff] 0.0
      %7859 = vst.msk [vmem:[#allocation4] sm:$0xff] %vm4444, %v6478
      %7860 = vst.msk [vmem:[#allocation4 + $0x10] sm:$0xff] %vm4444, %v6479
      %7861 = vst.msk [vmem:[#allocation4 + $0x20] sm:$0xff] %vm4444, %v6480
      %7862 = vst.msk [vmem:[#allocation4 + $0x30] sm:$0xff] %vm4444, %v6481
      %7863 = vst.msk [vmem:[#allocation4 + $0x40] sm:$0xff] %vm4444, %v6482
      %7864 = vst.msk [vmem:[#allocation4 + $0x50] sm:$0xff] %vm4444, %v6483
      %7865 = vst.msk [vmem:[#allocation4 + $0x60] sm:$0xff] %vm4444, %v6484
      %7866 = vst.msk [vmem:[#allocation4 + $0x70] sm:$0xff] %vm4444, %v6485
      %7867 = vst.msk [vmem:[#allocation4 + $0x80] sm:$0xff] %vm4444, %v6486
      %7868 = vst.msk [vmem:[#allocation4 + $0x90] sm:$0xff] %vm4444, %v6487
      %7869 = vst.msk [vmem:[#allocation4 + $0xa0] sm:$0xff] %vm4444, %v6488
      %7870 = vst.msk [vmem:[#allocation4 + $0xb0] sm:$0xff] %vm4444, %v6489
      %7871 = vst.msk [vmem:[#allocation4 + $0xc0] sm:$0xff] %vm4444, %v6490
      %7872 = vst.msk [vmem:[#allocation4 + $0xd0] sm:$0xff] %vm4444, %v6491
      %7873 = vst.msk [vmem:[#allocation4 + $0xe0] sm:$0xff] %vm4444, %v6492
      %7874 = vst.msk [vmem:[#allocation4 + $0xf0] sm:$0xff] %vm4444, %v6493
      %7875 = vst.msk [vmem:[#allocation4 + $0x8] sm:$0xff] %vm569, %v7811
      %7876 = vst.msk [vmem:[#allocation4 + $0x18] sm:$0xff] %vm569, %v7812
      %7877 = vst.msk [vmem:[#allocation4 + $0x28] sm:$0xff] %vm569, %v7813
      %7878 = vst.msk [vmem:[#allocation4 + $0x38] sm:$0xff] %vm569, %v7814
      %7879 = vst.msk [vmem:[#allocation4 + $0x48] sm:$0xff] %vm569, %v7815
      %7880 = vst.msk [vmem:[#allocation4 + $0x58] sm:$0xff] %vm569, %v7816
      %7881 = vst.msk [vmem:[#allocation4 + $0x68] sm:$0xff] %vm569, %v7817
      %7882 = vst.msk [vmem:[#allocation4 + $0x78] sm:$0xff] %vm569, %v7818
      %7883 = vst.msk [vmem:[#allocation4 + $0x88] sm:$0xff] %vm569, %v7819
      %7884 = vst.msk [vmem:[#allocation4 + $0x98] sm:$0xff] %vm569, %v7820
      %7885 = vst.msk [vmem:[#allocation4 + $0xa8] sm:$0xff] %vm569, %v7821
      %7886 = vst.msk [vmem:[#allocation4 + $0xb8] sm:$0xff] %vm569, %v7822
      %7887 = vst.msk [vmem:[#allocation4 + $0xc8] sm:$0xff] %vm569, %v7823
      %7888 = vst.msk [vmem:[#allocation4 + $0xd8] sm:$0xff] %vm569, %v7824
      %7889 = vst.msk [vmem:[#allocation4 + $0xe8] sm:$0xff] %vm569, %v7825
      %7890 = vst.msk [vmem:[#allocation4 + $0xf8] sm:$0xff] %vm569, %v7826
      %v7891 = vld [vmem:[#allocation4] sm:$0xff]
      %v7892 = vld [vmem:[#allocation4 + $0x8] sm:$0xff]
      %v7893 = vld [vmem:[#allocation4 + $0x10] sm:$0xff]
      %v7894 = vld [vmem:[#allocation4 + $0x18] sm:$0xff]
      %v7895 = vld [vmem:[#allocation4 + $0x20] sm:$0xff]
      %v7896 = vld [vmem:[#allocation4 + $0x28] sm:$0xff]
      %v7897 = vld [vmem:[#allocation4 + $0x30] sm:$0xff]
      %v7898 = vld [vmem:[#allocation4 + $0x38] sm:$0xff]
      %v7899 = vld [vmem:[#allocation4 + $0x40] sm:$0xff]
      %v7900 = vld [vmem:[#allocation4 + $0x48] sm:$0xff]
      %v7901 = vld [vmem:[#allocation4 + $0x50] sm:$0xff]
      %v7902 = vld [vmem:[#allocation4 + $0x58] sm:$0xff]
      %v7903 = vld [vmem:[#allocation4 + $0x60] sm:$0xff]
      %v7904 = vld [vmem:[#allocation4 + $0x68] sm:$0xff]
      %v7905 = vld [vmem:[#allocation4 + $0x70] sm:$0xff]
      %v7906 = vld [vmem:[#allocation4 + $0x78] sm:$0xff]
      %v7907 = vld [vmem:[#allocation4 + $0x80] sm:$0xff]
      %v7908 = vld [vmem:[#allocation4 + $0x88] sm:$0xff]
      %v7909 = vld [vmem:[#allocation4 + $0x90] sm:$0xff]
      %v7910 = vld [vmem:[#allocation4 + $0x98] sm:$0xff]
      %v7911 = vld [vmem:[#allocation4 + $0xa0] sm:$0xff]
      %v7912 = vld [vmem:[#allocation4 + $0xa8] sm:$0xff]
      %v7913 = vld [vmem:[#allocation4 + $0xb0] sm:$0xff]
      %v7914 = vld [vmem:[#allocation4 + $0xb8] sm:$0xff]
      %v7915 = vld [vmem:[#allocation4 + $0xc0] sm:$0xff]
      %v7916 = vld [vmem:[#allocation4 + $0xc8] sm:$0xff]
      %v7917 = vld [vmem:[#allocation4 + $0xd0] sm:$0xff]
      %v7918 = vld [vmem:[#allocation4 + $0xd8] sm:$0xff]
      %v7919 = vld [vmem:[#allocation4 + $0xe0] sm:$0xff]
      %v7920 = vld [vmem:[#allocation4 + $0xe8] sm:$0xff]
      %v7921 = vld [vmem:[#allocation4 + $0xf0] sm:$0xff]
      %v7922 = vld [vmem:[#allocation4 + $0xf8] sm:$0xff]
      %v7923 = vld [vmem:[%s12] sm:$0xff]
      %v7924 = vld [vmem:[%s12 + $0x8] sm:$0xff]
      %v7925 = vld [vmem:[%s12 + $0x10] sm:$0xff]
      %v7926 = vld [vmem:[%s12 + $0x18] sm:$0xff]
      %v7927 = vld [vmem:[%s12 + $0x20] sm:$0xff]
      %v7928 = vld [vmem:[%s12 + $0x28] sm:$0xff]
      %v7929 = vld [vmem:[%s12 + $0x30] sm:$0xff]
      %v7930 = vld [vmem:[%s12 + $0x38] sm:$0xff]
      %v7931 = vld [vmem:[%s12 + $0x40] sm:$0xff]
      %v7932 = vld [vmem:[%s12 + $0x48] sm:$0xff]
      %v7933 = vld [vmem:[%s12 + $0x50] sm:$0xff]
      %v7934 = vld [vmem:[%s12 + $0x58] sm:$0xff]
      %v7935 = vld [vmem:[%s12 + $0x60] sm:$0xff]
      %v7936 = vld [vmem:[%s12 + $0x68] sm:$0xff]
      %v7937 = vld [vmem:[%s12 + $0x70] sm:$0xff]
      %v7938 = vld [vmem:[%s12 + $0x78] sm:$0xff]
      %v7939 = vld [vmem:[%s12 + $0x80] sm:$0xff]
      %v7940 = vld [vmem:[%s12 + $0x88] sm:$0xff]
      %v7941 = vld [vmem:[%s12 + $0x90] sm:$0xff]
      %v7942 = vld [vmem:[%s12 + $0x98] sm:$0xff]
      %v7943 = vld [vmem:[%s12 + $0xa0] sm:$0xff]
      %v7944 = vld [vmem:[%s12 + $0xa8] sm:$0xff]
      %v7945 = vld [vmem:[%s12 + $0xb0] sm:$0xff]
      %v7946 = vld [vmem:[%s12 + $0xb8] sm:$0xff]
      %v7947 = vld [vmem:[%s12 + $0xc0] sm:$0xff]
      %v7948 = vld [vmem:[%s12 + $0xc8] sm:$0xff]
      %v7949 = vld [vmem:[%s12 + $0xd0] sm:$0xff]
      %v7950 = vld [vmem:[%s12 + $0xd8] sm:$0xff]
      %v7951 = vld [vmem:[%s12 + $0xe0] sm:$0xff]
      %v7952 = vld [vmem:[%s12 + $0xe8] sm:$0xff]
      %v7953 = vld [vmem:[%s12 + $0xf0] sm:$0xff]
      %v7954 = vld [vmem:[%s12 + $0xf8] sm:$0xff]
      %v7955 = vld [vmem:[%s13] sm:$0x1]
      %v7957 = vperm.slane %v7955, 0
      %7959 = vmatpush.msra.mxu0 %v7938
      %7960 = vmatpush.msra.mxu0 %v7937
      %7961 = vmatpush.msra.mxu0 %v7936
      %7962 = vmatpush.msra.mxu0 %v7935
      %7963 = vmatpush.msra.mxu0 %v7934
      %7964 = vmatpush.msra.mxu0 %v7933
      %7965 = vmatpush.msra.mxu0 %v7932
      %7966 = vmatpush.msra.mxu0 %v7931
      %7967 = vmatpush.msra.mxu0 %v7930
      %7968 = vmatpush.msra.mxu0 %v7929
      %7969 = vmatpush.msra.mxu0 %v7928
      %7970 = vmatpush.msra.mxu0 %v7927
      %7971 = vmatpush.msra.mxu0 %v7926
      %7972 = vmatpush.msra.mxu0 %v7925
      %7973 = vmatpush.msra.mxu0 %v7924
      %7974 = vmatpush.msra.mxu0 %v7923
      %7975 = vmatmul.f32.gmra.mxu0 %v7891
      %v7976 = vpop.f32.mrf.mxu0
      %v7977 = vadd.f32 %v7957, %v7976
      %7978 = vmatmul.f32.gmra.mxu0 %v7893
      %v7979 = vpop.f32.mrf.mxu0
      %v7980 = vadd.f32 %v7957, %v7979
      %7981 = vmatmul.f32.gmra.mxu0 %v7895
      %v7982 = vpop.f32.mrf.mxu0
      %v7983 = vadd.f32 %v7957, %v7982
      %7984 = vmatmul.f32.gmra.mxu0 %v7897
      %v7985 = vpop.f32.mrf.mxu0
      %v7986 = vadd.f32 %v7957, %v7985
      %7987 = vmatmul.f32.gmra.mxu0 %v7899
      %v7988 = vpop.f32.mrf.mxu0
      %v7989 = vadd.f32 %v7957, %v7988
      %7990 = vmatmul.f32.gmra.mxu0 %v7901
      %v7991 = vpop.f32.mrf.mxu0
      %v7992 = vadd.f32 %v7957, %v7991
      %7993 = vmatmul.f32.gmra.mxu0 %v7903
      %v7994 = vpop.f32.mrf.mxu0
      %v7995 = vadd.f32 %v7957, %v7994
      %7996 = vmatmul.f32.gmra.mxu0 %v7905
      %v7997 = vpop.f32.mrf.mxu0
      %v7998 = vadd.f32 %v7957, %v7997
      %7999 = vmatmul.f32.gmra.mxu0 %v7907
      %v8000 = vpop.f32.mrf.mxu0
      %v8001 = vadd.f32 %v7957, %v8000
      %8002 = vmatmul.f32.gmra.mxu0 %v7909
      %v8003 = vpop.f32.mrf.mxu0
      %v8004 = vadd.f32 %v7957, %v8003
      %8005 = vmatmul.f32.gmra.mxu0 %v7911
      %v8006 = vpop.f32.mrf.mxu0
      %v8007 = vadd.f32 %v7957, %v8006
      %8008 = vmatmul.f32.gmra.mxu0 %v7913
      %v8009 = vpop.f32.mrf.mxu0
      %v8010 = vadd.f32 %v7957, %v8009
      %8011 = vmatmul.f32.gmra.mxu0 %v7915
      %v8012 = vpop.f32.mrf.mxu0
      %v8013 = vadd.f32 %v7957, %v8012
      %8014 = vmatmul.f32.gmra.mxu0 %v7917
      %v8015 = vpop.f32.mrf.mxu0
      %v8016 = vadd.f32 %v7957, %v8015
      %8017 = vmatmul.f32.gmra.mxu0 %v7919
      %v8018 = vpop.f32.mrf.mxu0
      %v8019 = vadd.f32 %v7957, %v8018
      %8020 = vmatmul.f32.gmra.mxu0 %v7921
      %v8021 = vpop.f32.mrf.mxu0
      %v8022 = vadd.f32 %v7957, %v8021
      %8023 = vdwg.mxu0
      %8024 = vmatpush.msra.mxu0 %v7954
      %8025 = vmatpush.msra.mxu0 %v7953
      %8026 = vmatpush.msra.mxu0 %v7952
      %8027 = vmatpush.msra.mxu0 %v7951
      %8028 = vmatpush.msra.mxu0 %v7950
      %8029 = vmatpush.msra.mxu0 %v7949
      %8030 = vmatpush.msra.mxu0 %v7948
      %8031 = vmatpush.msra.mxu0 %v7947
      %8032 = vmatpush.msra.mxu0 %v7946
      %8033 = vmatpush.msra.mxu0 %v7945
      %8034 = vmatpush.msra.mxu0 %v7944
      %8035 = vmatpush.msra.mxu0 %v7943
      %8036 = vmatpush.msra.mxu0 %v7942
      %8037 = vmatpush.msra.mxu0 %v7941
      %8038 = vmatpush.msra.mxu0 %v7940
      %8039 = vmatpush.msra.mxu0 %v7939
      %8040 = vmatmul.f32.gmra.mxu0 %v7892
      %v8041 = vpop.f32.mrf.mxu0
      %v8042 = vadd.f32 %v7977, %v8041
      %8043 = vmatmul.f32.gmra.mxu0 %v7894
      %v8044 = vpop.f32.mrf.mxu0
      %v8045 = vadd.f32 %v7980, %v8044
      %8046 = vmatmul.f32.gmra.mxu0 %v7896
      %v8047 = vpop.f32.mrf.mxu0
      %v8048 = vadd.f32 %v7983, %v8047
      %8049 = vmatmul.f32.gmra.mxu0 %v7898
      %v8050 = vpop.f32.mrf.mxu0
      %v8051 = vadd.f32 %v7986, %v8050
      %8052 = vmatmul.f32.gmra.mxu0 %v7900
      %v8053 = vpop.f32.mrf.mxu0
      %v8054 = vadd.f32 %v7989, %v8053
      %8055 = vmatmul.f32.gmra.mxu0 %v7902
      %v8056 = vpop.f32.mrf.mxu0
      %v8057 = vadd.f32 %v7992, %v8056
      %8058 = vmatmul.f32.gmra.mxu0 %v7904
      %v8059 = vpop.f32.mrf.mxu0
      %v8060 = vadd.f32 %v7995, %v8059
      %8061 = vmatmul.f32.gmra.mxu0 %v7906
      %v8062 = vpop.f32.mrf.mxu0
      %v8063 = vadd.f32 %v7998, %v8062
      %8064 = vmatmul.f32.gmra.mxu0 %v7908
      %v8065 = vpop.f32.mrf.mxu0
      %v8066 = vadd.f32 %v8001, %v8065
      %8067 = vmatmul.f32.gmra.mxu0 %v7910
      %v8068 = vpop.f32.mrf.mxu0
      %v8069 = vadd.f32 %v8004, %v8068
      %8070 = vmatmul.f32.gmra.mxu0 %v7912
      %v8071 = vpop.f32.mrf.mxu0
      %v8072 = vadd.f32 %v8007, %v8071
      %8073 = vmatmul.f32.gmra.mxu0 %v7914
      %v8074 = vpop.f32.mrf.mxu0
      %v8075 = vadd.f32 %v8010, %v8074
      %8076 = vmatmul.f32.gmra.mxu0 %v7916
      %v8077 = vpop.f32.mrf.mxu0
      %v8078 = vadd.f32 %v8013, %v8077
      %8079 = vmatmul.f32.gmra.mxu0 %v7918
      %v8080 = vpop.f32.mrf.mxu0
      %v8081 = vadd.f32 %v8016, %v8080
      %8082 = vmatmul.f32.gmra.mxu0 %v7920
      %v8083 = vpop.f32.mrf.mxu0
      %v8084 = vadd.f32 %v8019, %v8083
      %8085 = vmatmul.f32.gmra.mxu0 %v7922
      %v8086 = vpop.f32.mrf.mxu0
      %v8087 = vadd.f32 %v8022, %v8086
      %8088 = vdwg.mxu0
      %v8089 = vmax.f32 %v8042, 0.0
      %v8090 = vmax.f32 %v8045, 0.0
      %v8091 = vmax.f32 %v8048, 0.0
      %v8092 = vmax.f32 %v8051, 0.0
      %v8093 = vmax.f32 %v8054, 0.0
      %v8094 = vmax.f32 %v8057, 0.0
      %v8095 = vmax.f32 %v8060, 0.0
      %v8096 = vmax.f32 %v8063, 0.0
      %v8097 = vmax.f32 %v8066, 0.0
      %v8098 = vmax.f32 %v8069, 0.0
      %v8099 = vmax.f32 %v8072, 0.0
      %v8100 = vmax.f32 %v8075, 0.0
      %v8101 = vmax.f32 %v8078, 0.0
      %v8102 = vmax.f32 %v8081, 0.0
      %v8103 = vmax.f32 %v8084, 0.0
      %v8104 = vmax.f32 %v8087, 0.0
      %vm8105 = vcmask 261120
      %8106 = vst.msk [vmem:[%s467] sm:$0xff] %vm8105, %v8089
      %8107 = vst.msk [vmem:[%s467 + $0x8] sm:$0xff] %vm8105, %v8090
      %8108 = vst.msk [vmem:[%s467 + $0x10] sm:$0xff] %vm8105, %v8091
      %8109 = vst.msk [vmem:[%s467 + $0x18] sm:$0xff] %vm8105, %v8092
      %8110 = vst.msk [vmem:[%s467 + $0x20] sm:$0xff] %vm8105, %v8093
      %8111 = vst.msk [vmem:[%s467 + $0x28] sm:$0xff] %vm8105, %v8094
      %8112 = vst.msk [vmem:[%s467 + $0x30] sm:$0xff] %vm8105, %v8095
      %8113 = vst.msk [vmem:[%s467 + $0x38] sm:$0xff] %vm8105, %v8096
      %8114 = vst.msk [vmem:[%s467 + $0x40] sm:$0xff] %vm8105, %v8097
      %8115 = vst.msk [vmem:[%s467 + $0x48] sm:$0xff] %vm8105, %v8098
      %8116 = vst.msk [vmem:[%s467 + $0x50] sm:$0xff] %vm8105, %v8099
      %8117 = vst.msk [vmem:[%s467 + $0x58] sm:$0xff] %vm8105, %v8100
      %8118 = vst.msk [vmem:[%s467 + $0x60] sm:$0xff] %vm8105, %v8101
      %8119 = vst.msk [vmem:[%s467 + $0x68] sm:$0xff] %vm8105, %v8102
      %8120 = vst.msk [vmem:[%s467 + $0x70] sm:$0xff] %vm8105, %v8103
      %8121 = vst.msk [vmem:[%s467 + $0x78] sm:$0xff] %vm8105, %v8104
      %p8122 = scmp.lt.s32.totalorder %s25, 1
      %s8123 = scalar_select %p8122, %s25, 1
      %s8124 = smul.addr %s8123, 16
      %s8125 = smul.addr %s8124, 8
      %s8126 = scalar_lea.vmem %s14, %s8125
      // Predicated region
      $region77: #{gelayer_s2_forward.1} parent=75 // pred_check
        %p8127 = pneg %p342
      $region78: #{gelayer_s2_forward.1} parent=75 // pred_check_branch
        %8129 = sbr.rel (%p8127) target = $region80
      $region79: #{gelayer_s2_forward.1} parent=75 // pred_region
        _
      $region80: #{gelayer_s2_forward.1} parent=75 // pred_fallthru
        _
    $region76: #{gelayer_s2_forward.1} parent=5 // pred_fallthru
      _
    %p8130 = scmp.le.s32.totalorder 2, %s20
    // Predicated region
    $region81: #{gelayer_s2_forward.1} parent=5 // pred_check
      %p8131 = pneg %p8130
    $region82: #{gelayer_s2_forward.1} parent=5 // pred_check_branch
      %8133 = sbr.rel (%p8131) target = $region84
    $region83: #{gelayer_s2_forward.1} parent=5 // pred_region
      %s8134 = ssub.s32 %s20, 2
      // Predicated region
      $region85: #{gelayer_s2_forward.1} parent=83 // pred_check
        %p8135 = pneg %p348
      $region86: #{gelayer_s2_forward.1} parent=83 // pred_check_branch
        %8137 = sbr.rel (%p8135) target = $region88
      $region87: #{gelayer_s2_forward.1} parent=83 // pred_region
        %p8138 = scmp.lt.s32.totalorder %s26, 1
        %s8139 = scalar_select %p8138, %s26, 1
        %s8140 = smul.addr %s8139, 16
        %s8141 = smul.addr %s8140, 8
        %s8142 = scalar_lea.vmem %s14, %s8141
      $region88: #{gelayer_s2_forward.1} parent=83 // pred_fallthru
        _
    $region84: #{gelayer_s2_forward.1} parent=5 // pred_fallthru
      _
  $region6: #{gelayer_s2_forward.1} parent=0 // loop_footer
    %s24 = sadd.s32 1, %s20
  $region7: #{gelayer_s2_forward.1} parent=0 // loop_footer_branch
    %19 = sbr.rel target = $region3
  $region8: #{gelayer_s2_forward.1} parent=0 // loop_exit
    _

</llo_original>
